<compile_context>
chip_gen: v7x
topology: tpu7x:2x2x1
jax: 0.10.0
libtpu: 0.0.40
codegen_flags: <defaults>
</compile_context>

<pallas_src>
import numpy as np
import jax
import jax.numpy as jnp
from jax.experimental import pallas as pl
from jax.experimental.pallas import tpu as pltpu

# ---- model hyper-parameters (ParaModel) ------------------------------------
HIDDEN = 768          # hidden_size
FNN_DIM = 2048        # fnn_dim
LN_EPS = 1e-5         # torch.nn.LayerNorm default


def _ffn_kernel(x_ref, w1_ref, w2_ref, gamma_ref, beta_ref, out_ref):
    """One M-tile of: LayerNorm(x + ReLU(x @ W1) @ W2).  Whole FNN dim in one
    pass (no accumulator), bf16 MXU matmuls with f32 accumulation, f32 LN."""
    x = x_ref[...]                                     # (TM, H) f32
    x_bf16 = x.astype(jnp.bfloat16)

    h = jnp.dot(x_bf16, w1_ref[...], preferred_element_type=jnp.float32)
    h = jnp.maximum(h, 0.0)                            # ReLU, (TM, FNN_DIM) f32

    o = jnp.dot(h.astype(jnp.bfloat16), w2_ref[...],
                preferred_element_type=jnp.float32)    # (TM, H) f32

    y = o + x                                          # residual
    mean = jnp.mean(y, axis=-1, keepdims=True)
    var = jnp.mean((y - mean) ** 2, axis=-1, keepdims=True)
    y_norm = (y - mean) * jax.lax.rsqrt(var + LN_EPS)
    out_ref[...] = (y_norm * gamma_ref[...] + beta_ref[...]).astype(out_ref.dtype)


def _pick_m_tile(bs):
    """Largest of {512, 256, 128} dividing bs, else the full M extent
    (full-dim blocks are always legal regardless of the (8,128) rule)."""
    for tm in (512, 256, 128):
        if bs % tm == 0:
            return tm
    return bs


def fully_connected_network(input_vecs, params):
    """input_vecs: (..., HIDDEN) f32.  Returns LayerNorm(x + FFN(x)), same shape."""
    orig_shape = input_vecs.shape
    H = orig_shape[-1]
    assert H == HIDDEN
    x2d = input_vecs.reshape(-1, H)                    # flatten batch into M dim
    BS = x2d.shape[0]
    TM = _pick_m_tile(BS)
    n_m = BS // TM

    w1 = params["w1"]                                  # (HIDDEN, FNN_DIM) bf16
    w2 = params["w2"]                                  # (FNN_DIM, HIDDEN) bf16
    gamma2d = params["gamma"].reshape(1, H)
    beta2d = params["beta"].reshape(1, H)

    grid_spec = pltpu.PrefetchScalarGridSpec(
        num_scalar_prefetch=0,
        grid=(n_m,),
        in_specs=[
            pl.BlockSpec((TM, H), lambda i: (i, 0)),          # x tile
            pl.BlockSpec((H, FNN_DIM), lambda i: (0, 0)),     # w1 (resident)
            pl.BlockSpec((FNN_DIM, H), lambda i: (0, 0)),     # w2 (resident)
            pl.BlockSpec((1, H), lambda i: (0, 0)),           # LN gamma
            pl.BlockSpec((1, H), lambda i: (0, 0)),           # LN beta
        ],
        out_specs=pl.BlockSpec((TM, H), lambda i: (i, 0)),
    )

    # Advisory cost hint: memory-bound (bf16 weight stream dominates), tiny
    # compute — lets XLA overlap neighbouring ops with this kernel's DMA.
    weight_bytes = 2 * HIDDEN * FNN_DIM * 2            # two bf16 weight matrices
    act_bytes = 2 * BS * HIDDEN * 4                    # x in + out, f32
    cost = pl.CostEstimate(
        flops=2 * BS * HIDDEN * FNN_DIM * 2,
        transcendentals=0,
        bytes_accessed=weight_bytes + act_bytes,
    )

    out = pl.pallas_call(
        _ffn_kernel,
        out_shape=jax.ShapeDtypeStruct((BS, H), jnp.float32),
        grid_spec=grid_spec,
        compiler_params=pltpu.CompilerParams(
            dimension_semantics=("parallel",),         # independent M tiles
            vmem_limit_bytes=48 << 20,                 # whole-weight blocks > v5e 16 MiB default
        ),
        cost_estimate=cost,
    )(x2d, w1, w2, gamma2d, beta2d)
    return out.reshape(orig_shape)


def init_params(key):
    """Mimic torch defaults: Linear weight ~ U(-1/sqrt(fan_in), 1/sqrt(fan_in)),
    stored transposed as (in, out) so the kernel does plain x @ W.  Weights are
    kept in bfloat16 (DMA-bandwidth optimization); LN params stay f32."""
    k1, k2 = jax.random.split(key)
    b1 = 1.0 / np.sqrt(HIDDEN)
    b2 = 1.0 / np.sqrt(FNN_DIM)
    w1 = jax.random.uniform(k1, (HIDDEN, FNN_DIM), jnp.float32, -b1, b1)
    w2 = jax.random.uniform(k2, (FNN_DIM, HIDDEN), jnp.float32, -b2, b2)
    return {
        "w1": w1.astype(jnp.bfloat16),
        "w2": w2.astype(jnp.bfloat16),
        "gamma": jnp.ones((HIDDEN,), jnp.float32),     # LayerNorm weight
        "beta": jnp.zeros((HIDDEN,), jnp.float32),     # LayerNorm bias
    }


def reference(input_vecs, params):
    """Pure-JAX reference mirroring the kernel's numerics (bf16 matmul inputs,
    f32 accumulation, f32 LayerNorm)."""
    xf = input_vecs.reshape(-1, HIDDEN)
    h = jnp.dot(xf.astype(jnp.bfloat16), params["w1"],
                preferred_element_type=jnp.float32)
    h = jnp.maximum(h, 0.0)
    o = jnp.dot(h.astype(jnp.bfloat16), params["w2"],
                preferred_element_type=jnp.float32)
    y = o + xf
    mean = jnp.mean(y, axis=-1, keepdims=True)
    var = jnp.mean((y - mean) ** 2, axis=-1, keepdims=True)
    out = (y - mean) * jax.lax.rsqrt(var + LN_EPS) * params["gamma"] + params["beta"]
    return out.reshape(input_vecs.shape)


if __name__ == "__main__":
    B, S = 2, 8
    key = jax.random.PRNGKey(0)
    k_in, k_param = jax.random.split(key)

    input_vecs = jax.random.normal(k_in, (B, S, HIDDEN), jnp.float32)
    params = init_params(k_param)

    out = fully_connected_network(input_vecs, params)
    out = jax.block_until_ready(out)

    ref_out = reference(input_vecs, params)
    np.testing.assert_allclose(np.asarray(out), np.asarray(ref_out),
                               atol=2e-3, rtol=2e-3)

    print("KERNEL_OK")
</pallas_src>

<mosaic_0001>
module attributes {stable_mosaic.version = 11 : i64} {
  func.func @_ffn_kernel(%arg0: i32, %arg1: memref<16x768xf32, #tpu.memory_space<vmem>>, %arg2: memref<768x2048xbf16, #tpu.memory_space<vmem>>, %arg3: memref<2048x768xbf16, #tpu.memory_space<vmem>>, %arg4: memref<1x768xf32, #tpu.memory_space<vmem>>, %arg5: memref<1x768xf32, #tpu.memory_space<vmem>>, %arg6: memref<16x768xf32, #tpu.memory_space<vmem>>) attributes {dimension_semantics = [#tpu.dimension_semantics<parallel>], iteration_bounds = array<i64: 1>, scalar_prefetch = 0 : i64, scratch_operands = 0 : i64, tpu.core_type = #tpu.core_type<tc>, window_params = [{transform_indices = @transform_0, window_bounds = array<i64: 16, 768>}, {pipeline_mode = #tpu.pipeline_mode<synchronous>, transform_indices = @transform_1, window_bounds = array<i64: 768, 2048>}, {pipeline_mode = #tpu.pipeline_mode<synchronous>, transform_indices = @transform_2, window_bounds = array<i64: 2048, 768>}, {pipeline_mode = #tpu.pipeline_mode<synchronous>, transform_indices = @transform_3, window_bounds = array<i64: 1, 768>}, {pipeline_mode = #tpu.pipeline_mode<synchronous>, transform_indices = @transform_4, window_bounds = array<i64: 1, 768>}, {transform_indices = @transform_5, window_bounds = array<i64: 16, 768>}]} {
    %c0 = arith.constant 0 : index
    %c0_0 = arith.constant 0 : index
    %0 = vector.load %arg1[%c0, %c0_0] : memref<16x768xf32, #tpu.memory_space<vmem>>, vector<16x768xf32>
    %1 = arith.truncf %0 : vector<16x768xf32> to vector<16x768xbf16>
    %c0_1 = arith.constant 0 : index
    %c0_2 = arith.constant 0 : index
    %2 = vector.load %arg2[%c0_1, %c0_2] : memref<768x2048xbf16, #tpu.memory_space<vmem>>, vector<768x2048xbf16>
    %cst = arith.constant dense<0.000000e+00> : vector<16x2048xf32>
    %3 = tpu.matmul %1, %2, %cst {dimension_numbers = #tpu.dot_dimension_numbers<[1], [0], [0], [1], [0, 0, 1, 1], [], []>} : vector<16x768xbf16>, vector<768x2048xbf16>, vector<16x2048xf32> -> vector<16x2048xf32>
    %cst_3 = arith.constant 0.000000e+00 : f32
    %4 = vector.broadcast %cst_3 : f32 to vector<16x2048xf32>
    %5 = arith.maximumf %3, %4 : vector<16x2048xf32>
    %6 = arith.truncf %5 : vector<16x2048xf32> to vector<16x2048xbf16>
    %c0_4 = arith.constant 0 : index
    %c0_5 = arith.constant 0 : index
    %7 = vector.load %arg3[%c0_4, %c0_5] : memref<2048x768xbf16, #tpu.memory_space<vmem>>, vector<2048x768xbf16>
    %cst_6 = arith.constant dense<0.000000e+00> : vector<16x768xf32>
    %8 = tpu.matmul %6, %7, %cst_6 {dimension_numbers = #tpu.dot_dimension_numbers<[1], [0], [0], [1], [0, 0, 1, 1], [], []>} : vector<16x2048xbf16>, vector<2048x768xbf16>, vector<16x768xf32> -> vector<16x768xf32>
    %9 = arith.addf %8, %0 : vector<16x768xf32>
    %cst_7 = arith.constant dense<0.000000e+00> : vector<16xf32>
    %10 = vector.multi_reduction <add>, %9, %cst_7 [1] : vector<16x768xf32> to vector<16xf32>
    %11 = vector.shape_cast %10 : vector<16xf32> to vector<16x1xf32>
    %cst_8 = arith.constant 7.680000e+02 : f32
    %12 = vector.broadcast %cst_8 : f32 to vector<16x1xf32>
    %13 = arith.divf %11, %12 : vector<16x1xf32>
    %14 = vector.broadcast %13 : vector<16x1xf32> to vector<16x768xf32>
    %15 = arith.subf %9, %14 : vector<16x768xf32>
    %16 = arith.mulf %15, %15 : vector<16x768xf32>
    %cst_9 = arith.constant dense<0.000000e+00> : vector<16xf32>
    %17 = vector.multi_reduction <add>, %16, %cst_9 [1] : vector<16x768xf32> to vector<16xf32>
    %18 = vector.shape_cast %17 : vector<16xf32> to vector<16x1xf32>
    %cst_10 = arith.constant 7.680000e+02 : f32
    %19 = vector.broadcast %cst_10 : f32 to vector<16x1xf32>
    %20 = arith.divf %18, %19 : vector<16x1xf32>
    %21 = vector.broadcast %13 : vector<16x1xf32> to vector<16x768xf32>
    %22 = arith.subf %9, %21 : vector<16x768xf32>
    %cst_11 = arith.constant 9.99999974E-6 : f32
    %23 = vector.broadcast %cst_11 : f32 to vector<16x1xf32>
    %24 = arith.addf %20, %23 : vector<16x1xf32>
    %25 = math.rsqrt %24 : vector<16x1xf32>
    %26 = vector.broadcast %25 : vector<16x1xf32> to vector<16x768xf32>
    %27 = arith.mulf %22, %26 : vector<16x768xf32>
    %c0_12 = arith.constant 0 : index
    %c0_13 = arith.constant 0 : index
    %28 = vector.load %arg4[%c0_12, %c0_13] : memref<1x768xf32, #tpu.memory_space<vmem>>, vector<1x768xf32>
    %29 = vector.broadcast %28 : vector<1x768xf32> to vector<16x768xf32>
    %30 = arith.mulf %27, %29 : vector<16x768xf32>
    %c0_14 = arith.constant 0 : index
    %c0_15 = arith.constant 0 : index
    %31 = vector.load %arg5[%c0_14, %c0_15] : memref<1x768xf32, #tpu.memory_space<vmem>>, vector<1x768xf32>
    %32 = vector.broadcast %31 : vector<1x768xf32> to vector<16x768xf32>
    %33 = arith.addf %30, %32 : vector<16x768xf32>
    %c0_16 = arith.constant 0 : index
    %c0_17 = arith.constant 0 : index
    %34 = vector.load %arg6[%c0_16, %c0_17] : memref<16x768xf32, #tpu.memory_space<vmem>>, vector<16x768xf32>
    tpu.vector_store %arg6[%c0_16, %c0_17], %33 {strides = array<i32>} : memref<16x768xf32, #tpu.memory_space<vmem>>, vector<16x768xf32>,
    return
  }
  func.func @transform_0(%arg0: i32) -> (i32, i32) {
    %c0_i32 = arith.constant 0 : i32
    %c0_i32_0 = arith.constant 0 : i32
    return %arg0, %c0_i32 : i32, i32
  }
  func.func @transform_1(%arg0: i32) -> (i32, i32) {
    %c0_i32 = arith.constant 0 : i32
    %c0_i32_0 = arith.constant 0 : i32
    %c0_i32_1 = arith.constant 0 : i32
    return %c0_i32, %c0_i32_0 : i32, i32
  }
  func.func @transform_2(%arg0: i32) -> (i32, i32) {
    %c0_i32 = arith.constant 0 : i32
    %c0_i32_0 = arith.constant 0 : i32
    %c0_i32_1 = arith.constant 0 : i32
    return %c0_i32, %c0_i32_0 : i32, i32
  }
  func.func @transform_3(%arg0: i32) -> (i32, i32) {
    %c0_i32 = arith.constant 0 : i32
    %c0_i32_0 = arith.constant 0 : i32
    %c0_i32_1 = arith.constant 0 : i32
    return %c0_i32, %c0_i32_0 : i32, i32
  }
  func.func @transform_4(%arg0: i32) -> (i32, i32) {
    %c0_i32 = arith.constant 0 : i32
    %c0_i32_0 = arith.constant 0 : i32
    %c0_i32_1 = arith.constant 0 : i32
    return %c0_i32, %c0_i32_0 : i32, i32
  }
  func.func @transform_5(%arg0: i32) -> (i32, i32) {
    %c0_i32 = arith.constant 0 : i32
    %c0_i32_0 = arith.constant 0 : i32
    return %arg0, %c0_i32 : i32, i32
  }
}

</mosaic_0001>

<llo_original>
// kernel: tpu_custom_call.1
$region0: #{tpu_custom_call.1}
  #allocation0 [shape = 'u32[]', space=smem, size = 0x4, offset = 0x4, fixed_abs, tag = 'smem constant byte address 0x4 - core index']
  #allocation1 [shape = 'u32[144,128]{1,0:T(1,128)}', space=vmem, size = 0x12000, scoped, tag = 'internal scratch']
  %s0 = inlined_call_operand.hbm [shape: f32[16,768], index: 0, kind: input, shape index: {}]
  %s1 = inlined_call_operand.hbm [shape: bf16[768,2048], index: 1, kind: input, shape index: {}]
  %s2 = inlined_call_operand.hbm [shape: bf16[2048,768], index: 2, kind: input, shape index: {}]
  %s3 = inlined_call_operand.hbm [shape: f32[1,768], index: 3, kind: input, shape index: {}]
  %s4 = inlined_call_operand.hbm [shape: f32[1,768], index: 4, kind: input, shape index: {}]
  %s5 = inlined_call_operand.hbm [shape: f32[16,768], index: 5, kind: output, shape index: {}]
  %s6 = sld [smem:[#allocation0]]
  $region50: #{tpu_custom_call.1} parent=0
    _
  %s8 = ssub.s32 1, %s6
  %s9 = scalar_select 0, %s8, %s6
  $region1: #{tpu_custom_call.1} parent=0
    #allocation2 [shape = 'u8[49152]{0}', space=vmem, size = 0xc000, scoped, tag = 'input window, operand 0, single buffered']
    #allocation3 [shape = 's32[1]{0}', space=sflag, size = 0x4, scoped, tag = 'scoped memory for tpu_custom_call.1']
    #allocation4 [shape = 's32[1]{0}', space=sflag, size = 0x4, scoped, tag = 'scoped memory for tpu_custom_call.1']
    #allocation5 [shape = 'u8[3145728]{0}', space=vmem, size = 0x300000, scoped, tag = 'input window, operand 1, single buffered']
    #allocation6 [shape = 's32[1]{0}', space=sflag, size = 0x4, scoped, tag = 'scoped memory for tpu_custom_call.1']
    #allocation7 [shape = 'u8[3145728]{0}', space=vmem, size = 0x300000, scoped, tag = 'input window, operand 2, single buffered']
    #allocation8 [shape = 'u8[3072]{0}', space=vmem, size = 0xc00, scoped, tag = 'input window, operand 3, single buffered']
    #allocation9 [shape = 's32[1]{0}', space=sflag, size = 0x4, scoped, tag = 'scoped memory for tpu_custom_call.1']
    #allocation10 [shape = 'u8[3072]{0}', space=vmem, size = 0xc00, scoped, tag = 'input window, operand 4, single buffered']
    #allocation11 [shape = 'u8[49152]{0}', space=vmem, size = 0xc000, scoped, tag = 'output window, operand 0, single buffered']
    %10 = vsyncpa [#allocation3], 0
    %11 = vsyncpa [#allocation6], 0
    %12 = vsyncpa [#allocation9], 0
    %13 = vsyncpa [#allocation4], 0
    // Predicated region
    $region2: #{tpu_custom_call.1} parent=1 // pred_check
      _
    $region3: #{tpu_custom_call.1} parent=1 // pred_check_branch
      %15 = sbr.rel (0) target = $region5
    $region4: #{tpu_custom_call.1} parent=1 // pred_region
      %s17 = ssub.s32 1536, 1536
      %18 = vsyncadd [#allocation3], %s17
      %s19 = sshll.u32 [#allocation2], 4
      %s20 = int_to_ptr.vmem [resolvable:$true] %s19
      %25 = dma.hbm_to_vmem [thread:$0]  %s0, 1536, %s20, [#allocation3], 768, 768, 48
    $region5: #{tpu_custom_call.1} parent=1 // pred_fallthru
      _
    // Predicated region
    $region6: #{tpu_custom_call.1} parent=1 // pred_check
      _
    $region7: #{tpu_custom_call.1} parent=1 // pred_check_branch
      %27 = sbr.rel (0) target = $region9
    $region8: #{tpu_custom_call.1} parent=1 // pred_region
      %s29 = ssub.s32 98304, 98304
      %30 = vsyncadd [#allocation6], %s29
      %s31 = sshll.u32 [#allocation5], 4
      %s32 = int_to_ptr.vmem [resolvable:$true] %s31
      %37 = dma.hbm_to_vmem [thread:$0]  %s1, 98304, %s32, [#allocation6], 1024, 1024, 64
    $region9: #{tpu_custom_call.1} parent=1 // pred_fallthru
      _
    // Predicated region
    $region10: #{tpu_custom_call.1} parent=1 // pred_check
      _
    $region11: #{tpu_custom_call.1} parent=1 // pred_check_branch
      %39 = sbr.rel (0) target = $region13
    $region12: #{tpu_custom_call.1} parent=1 // pred_region
      %s41 = ssub.s32 98304, 98304
      %42 = vsyncadd [#allocation6], %s41
      %s43 = sshll.u32 [#allocation7], 4
      %s44 = int_to_ptr.vmem [resolvable:$true] %s43
      %49 = dma.hbm_to_vmem [thread:$0]  %s2, 98304, %s44, [#allocation6], 384, 384, 24
    $region13: #{tpu_custom_call.1} parent=1 // pred_fallthru
      _
    // Predicated region
    $region14: #{tpu_custom_call.1} parent=1 // pred_check
      _
    $region15: #{tpu_custom_call.1} parent=1 // pred_check_branch
      %51 = sbr.rel (0) target = $region17
    $region16: #{tpu_custom_call.1} parent=1 // pred_region
      %s53 = ssub.s32 96, 96
      %54 = vsyncadd [#allocation9], %s53
      %s56 = sshll.u32 [#allocation8], 4
      %s57 = int_to_ptr.vmem [resolvable:$true] %s56
      %59 = dma.hbm_to_vmem [thread:$0]  %s3, 96, %s57, [#allocation9]
    $region17: #{tpu_custom_call.1} parent=1 // pred_fallthru
      _
    // Predicated region
    $region18: #{tpu_custom_call.1} parent=1 // pred_check
      _
    $region19: #{tpu_custom_call.1} parent=1 // pred_check_branch
      %61 = sbr.rel (0) target = $region21
    $region20: #{tpu_custom_call.1} parent=1 // pred_region
      %s63 = ssub.s32 96, 96
      %64 = vsyncadd [#allocation9], %s63
      %s66 = sshll.u32 [#allocation10], 4
      %s67 = int_to_ptr.vmem [resolvable:$true] %s66
      %69 = dma.hbm_to_vmem [thread:$0]  %s4, 96, %s67, [#allocation9]
    $region21: #{tpu_custom_call.1} parent=1 // pred_fallthru
      _
    // Predicated region
    $region22: #{tpu_custom_call.1} parent=1 // pred_check
      _
    $region23: #{tpu_custom_call.1} parent=1 // pred_check_branch
      %71 = sbr.rel (0) target = $region25
    $region24: #{tpu_custom_call.1} parent=1 // pred_region
      %72 = dma.done [#allocation3], 1536
    $region25: #{tpu_custom_call.1} parent=1 // pred_fallthru
      _
    // Predicated region
    $region26: #{tpu_custom_call.1} parent=1 // pred_check
      _
    $region27: #{tpu_custom_call.1} parent=1 // pred_check_branch
      %74 = sbr.rel (0) target = $region29
    $region28: #{tpu_custom_call.1} parent=1 // pred_region
      %75 = dma.done [#allocation6], 98304
    $region29: #{tpu_custom_call.1} parent=1 // pred_fallthru
      _
    // Predicated region
    $region30: #{tpu_custom_call.1} parent=1 // pred_check
      _
    $region31: #{tpu_custom_call.1} parent=1 // pred_check_branch
      %77 = sbr.rel (0) target = $region33
    $region32: #{tpu_custom_call.1} parent=1 // pred_region
      %78 = dma.done [#allocation6], 98304
    $region33: #{tpu_custom_call.1} parent=1 // pred_fallthru
      _
    // Predicated region
    $region34: #{tpu_custom_call.1} parent=1 // pred_check
      _
    $region35: #{tpu_custom_call.1} parent=1 // pred_check_branch
      %80 = sbr.rel (0) target = $region37
    $region36: #{tpu_custom_call.1} parent=1 // pred_region
      %81 = dma.done [#allocation9], 96
    $region37: #{tpu_custom_call.1} parent=1 // pred_fallthru
      _
    // Predicated region
    $region38: #{tpu_custom_call.1} parent=1 // pred_check
      _
    $region39: #{tpu_custom_call.1} parent=1 // pred_check_branch
      %83 = sbr.rel (0) target = $region41
    $region40: #{tpu_custom_call.1} parent=1 // pred_region
      %84 = dma.done [#allocation9], 96
    $region41: #{tpu_custom_call.1} parent=1 // pred_fallthru
      _
    %v85 = vld [vmem:[#allocation2] sm:$0xff]
    %v86 = vld [vmem:[#allocation2 + $0x8] sm:$0xff]
    %v87 = vld [vmem:[#allocation2 + $0x10] sm:$0xff]
    %v88 = vld [vmem:[#allocation2 + $0x18] sm:$0xff]
    %v89 = vld [vmem:[#allocation2 + $0x20] sm:$0xff]
    %v90 = vld [vmem:[#allocation2 + $0x28] sm:$0xff]
    %v91 = vld [vmem:[#allocation2 + $0x30] sm:$0xff]
    %v92 = vld [vmem:[#allocation2 + $0x38] sm:$0xff]
    %v93 = vld [vmem:[#allocation2 + $0x40] sm:$0xff]
    %v94 = vld [vmem:[#allocation2 + $0x48] sm:$0xff]
    %v95 = vld [vmem:[#allocation2 + $0x50] sm:$0xff]
    %v96 = vld [vmem:[#allocation2 + $0x58] sm:$0xff]
    %v97 = vpack.c.bf16 %v91, %v85
    %v98 = vpack.c.bf16 %v92, %v86
    %v99 = vpack.c.bf16 %v93, %v87
    %v100 = vpack.c.bf16 %v94, %v88
    %v101 = vpack.c.bf16 %v95, %v89
    %v102 = vpack.c.bf16 %v96, %v90
    %v103 = vld [vmem:[#allocation5] sm:$0xff]
    %v104 = vld [vmem:[#allocation5 + $0x8] sm:$0xff]
    %v105 = vld [vmem:[#allocation5 + $0x10] sm:$0xff]
    %v106 = vld [vmem:[#allocation5 + $0x18] sm:$0xff]
    %v107 = vld [vmem:[#allocation5 + $0x20] sm:$0xff]
    %v108 = vld [vmem:[#allocation5 + $0x28] sm:$0xff]
    %v109 = vld [vmem:[#allocation5 + $0x30] sm:$0xff]
    %v110 = vld [vmem:[#allocation5 + $0x38] sm:$0xff]
    %v111 = vld [vmem:[#allocation5 + $0x40] sm:$0xff]
    %v112 = vld [vmem:[#allocation5 + $0x48] sm:$0xff]
    %v113 = vld [vmem:[#allocation5 + $0x50] sm:$0xff]
    %v114 = vld [vmem:[#allocation5 + $0x58] sm:$0xff]
    %v115 = vld [vmem:[#allocation5 + $0x60] sm:$0xff]
    %v116 = vld [vmem:[#allocation5 + $0x68] sm:$0xff]
    %v117 = vld [vmem:[#allocation5 + $0x70] sm:$0xff]
    %v118 = vld [vmem:[#allocation5 + $0x78] sm:$0xff]
    %v119 = vld [vmem:[#allocation5 + $0x80] sm:$0xff]
    %v120 = vld [vmem:[#allocation5 + $0x88] sm:$0xff]
    %v121 = vld [vmem:[#allocation5 + $0x90] sm:$0xff]
    %v122 = vld [vmem:[#allocation5 + $0x98] sm:$0xff]
    %v123 = vld [vmem:[#allocation5 + $0xa0] sm:$0xff]
    %v124 = vld [vmem:[#allocation5 + $0xa8] sm:$0xff]
    %v125 = vld [vmem:[#allocation5 + $0xb0] sm:$0xff]
    %v126 = vld [vmem:[#allocation5 + $0xb8] sm:$0xff]
    %v127 = vld [vmem:[#allocation5 + $0xc0] sm:$0xff]
    %v128 = vld [vmem:[#allocation5 + $0xc8] sm:$0xff]
    %v129 = vld [vmem:[#allocation5 + $0xd0] sm:$0xff]
    %v130 = vld [vmem:[#allocation5 + $0xd8] sm:$0xff]
    %v131 = vld [vmem:[#allocation5 + $0xe0] sm:$0xff]
    %v132 = vld [vmem:[#allocation5 + $0xe8] sm:$0xff]
    %v133 = vld [vmem:[#allocation5 + $0xf0] sm:$0xff]
    %v134 = vld [vmem:[#allocation5 + $0xf8] sm:$0xff]
    %v135 = vld [vmem:[#allocation5 + $0x100] sm:$0xff]
    %v136 = vld [vmem:[#allocation5 + $0x108] sm:$0xff]
    %v137 = vld [vmem:[#allocation5 + $0x110] sm:$0xff]
    %v138 = vld [vmem:[#allocation5 + $0x118] sm:$0xff]
    %v139 = vld [vmem:[#allocation5 + $0x120] sm:$0xff]
    %v140 = vld [vmem:[#allocation5 + $0x128] sm:$0xff]
    %v141 = vld [vmem:[#allocation5 + $0x130] sm:$0xff]
    %v142 = vld [vmem:[#allocation5 + $0x138] sm:$0xff]
    %v143 = vld [vmem:[#allocation5 + $0x140] sm:$0xff]
    %v144 = vld [vmem:[#allocation5 + $0x148] sm:$0xff]
    %v145 = vld [vmem:[#allocation5 + $0x150] sm:$0xff]
    %v146 = vld [vmem:[#allocation5 + $0x158] sm:$0xff]
    %v147 = vld [vmem:[#allocation5 + $0x160] sm:$0xff]
    %v148 = vld [vmem:[#allocation5 + $0x168] sm:$0xff]
    %v149 = vld [vmem:[#allocation5 + $0x170] sm:$0xff]
    %v150 = vld [vmem:[#allocation5 + $0x178] sm:$0xff]
    %v151 = vld [vmem:[#allocation5 + $0x180] sm:$0xff]
    %v152 = vld [vmem:[#allocation5 + $0x188] sm:$0xff]
    %v153 = vld [vmem:[#allocation5 + $0x190] sm:$0xff]
    %v154 = vld [vmem:[#allocation5 + $0x198] sm:$0xff]
    %v155 = vld [vmem:[#allocation5 + $0x1a0] sm:$0xff]
    %v156 = vld [vmem:[#allocation5 + $0x1a8] sm:$0xff]
    %v157 = vld [vmem:[#allocation5 + $0x1b0] sm:$0xff]
    %v158 = vld [vmem:[#allocation5 + $0x1b8] sm:$0xff]
    %v159 = vld [vmem:[#allocation5 + $0x1c0] sm:$0xff]
    %v160 = vld [vmem:[#allocation5 + $0x1c8] sm:$0xff]
    %v161 = vld [vmem:[#allocation5 + $0x1d0] sm:$0xff]
    %v162 = vld [vmem:[#allocation5 + $0x1d8] sm:$0xff]
    %v163 = vld [vmem:[#allocation5 + $0x1e0] sm:$0xff]
    %v164 = vld [vmem:[#allocation5 + $0x1e8] sm:$0xff]
    %v165 = vld [vmem:[#allocation5 + $0x1f0] sm:$0xff]
    %v166 = vld [vmem:[#allocation5 + $0x1f8] sm:$0xff]
    %v167 = vld [vmem:[#allocation5 + $0x200] sm:$0xff]
    %v168 = vld [vmem:[#allocation5 + $0x208] sm:$0xff]
    %v169 = vld [vmem:[#allocation5 + $0x210] sm:$0xff]
    %v170 = vld [vmem:[#allocation5 + $0x218] sm:$0xff]
    %v171 = vld [vmem:[#allocation5 + $0x220] sm:$0xff]
    %v172 = vld [vmem:[#allocation5 + $0x228] sm:$0xff]
    %v173 = vld [vmem:[#allocation5 + $0x230] sm:$0xff]
    %v174 = vld [vmem:[#allocation5 + $0x238] sm:$0xff]
    %v175 = vld [vmem:[#allocation5 + $0x240] sm:$0xff]
    %v176 = vld [vmem:[#allocation5 + $0x248] sm:$0xff]
    %v177 = vld [vmem:[#allocation5 + $0x250] sm:$0xff]
    %v178 = vld [vmem:[#allocation5 + $0x258] sm:$0xff]
    %v179 = vld [vmem:[#allocation5 + $0x260] sm:$0xff]
    %v180 = vld [vmem:[#allocation5 + $0x268] sm:$0xff]
    %v181 = vld [vmem:[#allocation5 + $0x270] sm:$0xff]
    %v182 = vld [vmem:[#allocation5 + $0x278] sm:$0xff]
    %v183 = vld [vmem:[#allocation5 + $0x280] sm:$0xff]
    %v184 = vld [vmem:[#allocation5 + $0x288] sm:$0xff]
    %v185 = vld [vmem:[#allocation5 + $0x290] sm:$0xff]
    %v186 = vld [vmem:[#allocation5 + $0x298] sm:$0xff]
    %v187 = vld [vmem:[#allocation5 + $0x2a0] sm:$0xff]
    %v188 = vld [vmem:[#allocation5 + $0x2a8] sm:$0xff]
    %v189 = vld [vmem:[#allocation5 + $0x2b0] sm:$0xff]
    %v190 = vld [vmem:[#allocation5 + $0x2b8] sm:$0xff]
    %v191 = vld [vmem:[#allocation5 + $0x2c0] sm:$0xff]
    %v192 = vld [vmem:[#allocation5 + $0x2c8] sm:$0xff]
    %v193 = vld [vmem:[#allocation5 + $0x2d0] sm:$0xff]
    %v194 = vld [vmem:[#allocation5 + $0x2d8] sm:$0xff]
    %v195 = vld [vmem:[#allocation5 + $0x2e0] sm:$0xff]
    %v196 = vld [vmem:[#allocation5 + $0x2e8] sm:$0xff]
    %v197 = vld [vmem:[#allocation5 + $0x2f0] sm:$0xff]
    %v198 = vld [vmem:[#allocation5 + $0x2f8] sm:$0xff]
    %v199 = vld [vmem:[#allocation5 + $0x300] sm:$0xff]
    %v200 = vld [vmem:[#allocation5 + $0x308] sm:$0xff]
    %v201 = vld [vmem:[#allocation5 + $0x310] sm:$0xff]
    %v202 = vld [vmem:[#allocation5 + $0x318] sm:$0xff]
    %v203 = vld [vmem:[#allocation5 + $0x320] sm:$0xff]
    %v204 = vld [vmem:[#allocation5 + $0x328] sm:$0xff]
    %v205 = vld [vmem:[#allocation5 + $0x330] sm:$0xff]
    %v206 = vld [vmem:[#allocation5 + $0x338] sm:$0xff]
    %v207 = vld [vmem:[#allocation5 + $0x340] sm:$0xff]
    %v208 = vld [vmem:[#allocation5 + $0x348] sm:$0xff]
    %v209 = vld [vmem:[#allocation5 + $0x350] sm:$0xff]
    %v210 = vld [vmem:[#allocation5 + $0x358] sm:$0xff]
    %v211 = vld [vmem:[#allocation5 + $0x360] sm:$0xff]
    %v212 = vld [vmem:[#allocation5 + $0x368] sm:$0xff]
    %v213 = vld [vmem:[#allocation5 + $0x370] sm:$0xff]
    %v214 = vld [vmem:[#allocation5 + $0x378] sm:$0xff]
    %v215 = vld [vmem:[#allocation5 + $0x380] sm:$0xff]
    %v216 = vld [vmem:[#allocation5 + $0x388] sm:$0xff]
    %v217 = vld [vmem:[#allocation5 + $0x390] sm:$0xff]
    %v218 = vld [vmem:[#allocation5 + $0x398] sm:$0xff]
    %v219 = vld [vmem:[#allocation5 + $0x3a0] sm:$0xff]
    %v220 = vld [vmem:[#allocation5 + $0x3a8] sm:$0xff]
    %v221 = vld [vmem:[#allocation5 + $0x3b0] sm:$0xff]
    %v222 = vld [vmem:[#allocation5 + $0x3b8] sm:$0xff]
    %v223 = vld [vmem:[#allocation5 + $0x3c0] sm:$0xff]
    %v224 = vld [vmem:[#allocation5 + $0x3c8] sm:$0xff]
    %v225 = vld [vmem:[#allocation5 + $0x3d0] sm:$0xff]
    %v226 = vld [vmem:[#allocation5 + $0x3d8] sm:$0xff]
    %v227 = vld [vmem:[#allocation5 + $0x3e0] sm:$0xff]
    %v228 = vld [vmem:[#allocation5 + $0x3e8] sm:$0xff]
    %v229 = vld [vmem:[#allocation5 + $0x3f0] sm:$0xff]
    %v230 = vld [vmem:[#allocation5 + $0x3f8] sm:$0xff]
    %v231 = vld [vmem:[#allocation5 + $0x400] sm:$0xff]
    %v232 = vld [vmem:[#allocation5 + $0x408] sm:$0xff]
    %v233 = vld [vmem:[#allocation5 + $0x410] sm:$0xff]
    %v234 = vld [vmem:[#allocation5 + $0x418] sm:$0xff]
    %v235 = vld [vmem:[#allocation5 + $0x420] sm:$0xff]
    %v236 = vld [vmem:[#allocation5 + $0x428] sm:$0xff]
    %v237 = vld [vmem:[#allocation5 + $0x430] sm:$0xff]
    %v238 = vld [vmem:[#allocation5 + $0x438] sm:$0xff]
    %v239 = vld [vmem:[#allocation5 + $0x440] sm:$0xff]
    %v240 = vld [vmem:[#allocation5 + $0x448] sm:$0xff]
    %v241 = vld [vmem:[#allocation5 + $0x450] sm:$0xff]
    %v242 = vld [vmem:[#allocation5 + $0x458] sm:$0xff]
    %v243 = vld [vmem:[#allocation5 + $0x460] sm:$0xff]
    %v244 = vld [vmem:[#allocation5 + $0x468] sm:$0xff]
    %v245 = vld [vmem:[#allocation5 + $0x470] sm:$0xff]
    %v246 = vld [vmem:[#allocation5 + $0x478] sm:$0xff]
    %v247 = vld [vmem:[#allocation5 + $0x480] sm:$0xff]
    %v248 = vld [vmem:[#allocation5 + $0x488] sm:$0xff]
    %v249 = vld [vmem:[#allocation5 + $0x490] sm:$0xff]
    %v250 = vld [vmem:[#allocation5 + $0x498] sm:$0xff]
    %v251 = vld [vmem:[#allocation5 + $0x4a0] sm:$0xff]
    %v252 = vld [vmem:[#allocation5 + $0x4a8] sm:$0xff]
    %v253 = vld [vmem:[#allocation5 + $0x4b0] sm:$0xff]
    %v254 = vld [vmem:[#allocation5 + $0x4b8] sm:$0xff]
    %v255 = vld [vmem:[#allocation5 + $0x4c0] sm:$0xff]
    %v256 = vld [vmem:[#allocation5 + $0x4c8] sm:$0xff]
    %v257 = vld [vmem:[#allocation5 + $0x4d0] sm:$0xff]
    %v258 = vld [vmem:[#allocation5 + $0x4d8] sm:$0xff]
    %v259 = vld [vmem:[#allocation5 + $0x4e0] sm:$0xff]
    %v260 = vld [vmem:[#allocation5 + $0x4e8] sm:$0xff]
    %v261 = vld [vmem:[#allocation5 + $0x4f0] sm:$0xff]
    %v262 = vld [vmem:[#allocation5 + $0x4f8] sm:$0xff]
    %v263 = vld [vmem:[#allocation5 + $0x500] sm:$0xff]
    %v264 = vld [vmem:[#allocation5 + $0x508] sm:$0xff]
    %v265 = vld [vmem:[#allocation5 + $0x510] sm:$0xff]
    %v266 = vld [vmem:[#allocation5 + $0x518] sm:$0xff]
    %v267 = vld [vmem:[#allocation5 + $0x520] sm:$0xff]
    %v268 = vld [vmem:[#allocation5 + $0x528] sm:$0xff]
    %v269 = vld [vmem:[#allocation5 + $0x530] sm:$0xff]
    %v270 = vld [vmem:[#allocation5 + $0x538] sm:$0xff]
    %v271 = vld [vmem:[#allocation5 + $0x540] sm:$0xff]
    %v272 = vld [vmem:[#allocation5 + $0x548] sm:$0xff]
    %v273 = vld [vmem:[#allocation5 + $0x550] sm:$0xff]
    %v274 = vld [vmem:[#allocation5 + $0x558] sm:$0xff]
    %v275 = vld [vmem:[#allocation5 + $0x560] sm:$0xff]
    %v276 = vld [vmem:[#allocation5 + $0x568] sm:$0xff]
    %v277 = vld [vmem:[#allocation5 + $0x570] sm:$0xff]
    %v278 = vld [vmem:[#allocation5 + $0x578] sm:$0xff]
    %v279 = vld [vmem:[#allocation5 + $0x580] sm:$0xff]
    %v280 = vld [vmem:[#allocation5 + $0x588] sm:$0xff]
    %v281 = vld [vmem:[#allocation5 + $0x590] sm:$0xff]
    %v282 = vld [vmem:[#allocation5 + $0x598] sm:$0xff]
    %v283 = vld [vmem:[#allocation5 + $0x5a0] sm:$0xff]
    %v284 = vld [vmem:[#allocation5 + $0x5a8] sm:$0xff]
    %v285 = vld [vmem:[#allocation5 + $0x5b0] sm:$0xff]
    %v286 = vld [vmem:[#allocation5 + $0x5b8] sm:$0xff]
    %v287 = vld [vmem:[#allocation5 + $0x5c0] sm:$0xff]
    %v288 = vld [vmem:[#allocation5 + $0x5c8] sm:$0xff]
    %v289 = vld [vmem:[#allocation5 + $0x5d0] sm:$0xff]
    %v290 = vld [vmem:[#allocation5 + $0x5d8] sm:$0xff]
    %v291 = vld [vmem:[#allocation5 + $0x5e0] sm:$0xff]
    %v292 = vld [vmem:[#allocation5 + $0x5e8] sm:$0xff]
    %v293 = vld [vmem:[#allocation5 + $0x5f0] sm:$0xff]
    %v294 = vld [vmem:[#allocation5 + $0x5f8] sm:$0xff]
    %v295 = vld [vmem:[#allocation5 + $0x600] sm:$0xff]
    %v296 = vld [vmem:[#allocation5 + $0x608] sm:$0xff]
    %v297 = vld [vmem:[#allocation5 + $0x610] sm:$0xff]
    %v298 = vld [vmem:[#allocation5 + $0x618] sm:$0xff]
    %v299 = vld [vmem:[#allocation5 + $0x620] sm:$0xff]
    %v300 = vld [vmem:[#allocation5 + $0x628] sm:$0xff]
    %v301 = vld [vmem:[#allocation5 + $0x630] sm:$0xff]
    %v302 = vld [vmem:[#allocation5 + $0x638] sm:$0xff]
    %v303 = vld [vmem:[#allocation5 + $0x640] sm:$0xff]
    %v304 = vld [vmem:[#allocation5 + $0x648] sm:$0xff]
    %v305 = vld [vmem:[#allocation5 + $0x650] sm:$0xff]
    %v306 = vld [vmem:[#allocation5 + $0x658] sm:$0xff]
    %v307 = vld [vmem:[#allocation5 + $0x660] sm:$0xff]
    %v308 = vld [vmem:[#allocation5 + $0x668] sm:$0xff]
    %v309 = vld [vmem:[#allocation5 + $0x670] sm:$0xff]
    %v310 = vld [vmem:[#allocation5 + $0x678] sm:$0xff]
    %v311 = vld [vmem:[#allocation5 + $0x680] sm:$0xff]
    %v312 = vld [vmem:[#allocation5 + $0x688] sm:$0xff]
    %v313 = vld [vmem:[#allocation5 + $0x690] sm:$0xff]
    %v314 = vld [vmem:[#allocation5 + $0x698] sm:$0xff]
    %v315 = vld [vmem:[#allocation5 + $0x6a0] sm:$0xff]
    %v316 = vld [vmem:[#allocation5 + $0x6a8] sm:$0xff]
    %v317 = vld [vmem:[#allocation5 + $0x6b0] sm:$0xff]
    %v318 = vld [vmem:[#allocation5 + $0x6b8] sm:$0xff]
    %v319 = vld [vmem:[#allocation5 + $0x6c0] sm:$0xff]
    %v320 = vld [vmem:[#allocation5 + $0x6c8] sm:$0xff]
    %v321 = vld [vmem:[#allocation5 + $0x6d0] sm:$0xff]
    %v322 = vld [vmem:[#allocation5 + $0x6d8] sm:$0xff]
    %v323 = vld [vmem:[#allocation5 + $0x6e0] sm:$0xff]
    %v324 = vld [vmem:[#allocation5 + $0x6e8] sm:$0xff]
    %v325 = vld [vmem:[#allocation5 + $0x6f0] sm:$0xff]
    %v326 = vld [vmem:[#allocation5 + $0x6f8] sm:$0xff]
    %v327 = vld [vmem:[#allocation5 + $0x700] sm:$0xff]
    %v328 = vld [vmem:[#allocation5 + $0x708] sm:$0xff]
    %v329 = vld [vmem:[#allocation5 + $0x710] sm:$0xff]
    %v330 = vld [vmem:[#allocation5 + $0x718] sm:$0xff]
    %v331 = vld [vmem:[#allocation5 + $0x720] sm:$0xff]
    %v332 = vld [vmem:[#allocation5 + $0x728] sm:$0xff]
    %v333 = vld [vmem:[#allocation5 + $0x730] sm:$0xff]
    %v334 = vld [vmem:[#allocation5 + $0x738] sm:$0xff]
    %v335 = vld [vmem:[#allocation5 + $0x740] sm:$0xff]
    %v336 = vld [vmem:[#allocation5 + $0x748] sm:$0xff]
    %v337 = vld [vmem:[#allocation5 + $0x750] sm:$0xff]
    %v338 = vld [vmem:[#allocation5 + $0x758] sm:$0xff]
    %v339 = vld [vmem:[#allocation5 + $0x760] sm:$0xff]
    %v340 = vld [vmem:[#allocation5 + $0x768] sm:$0xff]
    %v341 = vld [vmem:[#allocation5 + $0x770] sm:$0xff]
    %v342 = vld [vmem:[#allocation5 + $0x778] sm:$0xff]
    %v343 = vld [vmem:[#allocation5 + $0x780] sm:$0xff]
    %v344 = vld [vmem:[#allocation5 + $0x788] sm:$0xff]
    %v345 = vld [vmem:[#allocation5 + $0x790] sm:$0xff]
    %v346 = vld [vmem:[#allocation5 + $0x798] sm:$0xff]
    %v347 = vld [vmem:[#allocation5 + $0x7a0] sm:$0xff]
    %v348 = vld [vmem:[#allocation5 + $0x7a8] sm:$0xff]
    %v349 = vld [vmem:[#allocation5 + $0x7b0] sm:$0xff]
    %v350 = vld [vmem:[#allocation5 + $0x7b8] sm:$0xff]
    %v351 = vld [vmem:[#allocation5 + $0x7c0] sm:$0xff]
    %v352 = vld [vmem:[#allocation5 + $0x7c8] sm:$0xff]
    %v353 = vld [vmem:[#allocation5 + $0x7d0] sm:$0xff]
    %v354 = vld [vmem:[#allocation5 + $0x7d8] sm:$0xff]
    %v355 = vld [vmem:[#allocation5 + $0x7e0] sm:$0xff]
    %v356 = vld [vmem:[#allocation5 + $0x7e8] sm:$0xff]
    %v357 = vld [vmem:[#allocation5 + $0x7f0] sm:$0xff]
    %v358 = vld [vmem:[#allocation5 + $0x7f8] sm:$0xff]
    %v359 = vld [vmem:[#allocation5 + $0x800] sm:$0xff]
    %v360 = vld [vmem:[#allocation5 + $0x808] sm:$0xff]
    %v361 = vld [vmem:[#allocation5 + $0x810] sm:$0xff]
    %v362 = vld [vmem:[#allocation5 + $0x818] sm:$0xff]
    %v363 = vld [vmem:[#allocation5 + $0x820] sm:$0xff]
    %v364 = vld [vmem:[#allocation5 + $0x828] sm:$0xff]
    %v365 = vld [vmem:[#allocation5 + $0x830] sm:$0xff]
    %v366 = vld [vmem:[#allocation5 + $0x838] sm:$0xff]
    %v367 = vld [vmem:[#allocation5 + $0x840] sm:$0xff]
    %v368 = vld [vmem:[#allocation5 + $0x848] sm:$0xff]
    %v369 = vld [vmem:[#allocation5 + $0x850] sm:$0xff]
    %v370 = vld [vmem:[#allocation5 + $0x858] sm:$0xff]
    %v371 = vld [vmem:[#allocation5 + $0x860] sm:$0xff]
    %v372 = vld [vmem:[#allocation5 + $0x868] sm:$0xff]
    %v373 = vld [vmem:[#allocation5 + $0x870] sm:$0xff]
    %v374 = vld [vmem:[#allocation5 + $0x878] sm:$0xff]
    %v375 = vld [vmem:[#allocation5 + $0x880] sm:$0xff]
    %v376 = vld [vmem:[#allocation5 + $0x888] sm:$0xff]
    %v377 = vld [vmem:[#allocation5 + $0x890] sm:$0xff]
    %v378 = vld [vmem:[#allocation5 + $0x898] sm:$0xff]
    %v379 = vld [vmem:[#allocation5 + $0x8a0] sm:$0xff]
    %v380 = vld [vmem:[#allocation5 + $0x8a8] sm:$0xff]
    %v381 = vld [vmem:[#allocation5 + $0x8b0] sm:$0xff]
    %v382 = vld [vmem:[#allocation5 + $0x8b8] sm:$0xff]
    %v383 = vld [vmem:[#allocation5 + $0x8c0] sm:$0xff]
    %v384 = vld [vmem:[#allocation5 + $0x8c8] sm:$0xff]
    %v385 = vld [vmem:[#allocation5 + $0x8d0] sm:$0xff]
    %v386 = vld [vmem:[#allocation5 + $0x8d8] sm:$0xff]
    %v387 = vld [vmem:[#allocation5 + $0x8e0] sm:$0xff]
    %v388 = vld [vmem:[#allocation5 + $0x8e8] sm:$0xff]
    %v389 = vld [vmem:[#allocation5 + $0x8f0] sm:$0xff]
    %v390 = vld [vmem:[#allocation5 + $0x8f8] sm:$0xff]
    %v391 = vld [vmem:[#allocation5 + $0x900] sm:$0xff]
    %v392 = vld [vmem:[#allocation5 + $0x908] sm:$0xff]
    %v393 = vld [vmem:[#allocation5 + $0x910] sm:$0xff]
    %v394 = vld [vmem:[#allocation5 + $0x918] sm:$0xff]
    %v395 = vld [vmem:[#allocation5 + $0x920] sm:$0xff]
    %v396 = vld [vmem:[#allocation5 + $0x928] sm:$0xff]
    %v397 = vld [vmem:[#allocation5 + $0x930] sm:$0xff]
    %v398 = vld [vmem:[#allocation5 + $0x938] sm:$0xff]
    %v399 = vld [vmem:[#allocation5 + $0x940] sm:$0xff]
    %v400 = vld [vmem:[#allocation5 + $0x948] sm:$0xff]
    %v401 = vld [vmem:[#allocation5 + $0x950] sm:$0xff]
    %v402 = vld [vmem:[#allocation5 + $0x958] sm:$0xff]
    %v403 = vld [vmem:[#allocation5 + $0x960] sm:$0xff]
    %v404 = vld [vmem:[#allocation5 + $0x968] sm:$0xff]
    %v405 = vld [vmem:[#allocation5 + $0x970] sm:$0xff]
    %v406 = vld [vmem:[#allocation5 + $0x978] sm:$0xff]
    %v407 = vld [vmem:[#allocation5 + $0x980] sm:$0xff]
    %v408 = vld [vmem:[#allocation5 + $0x988] sm:$0xff]
    %v409 = vld [vmem:[#allocation5 + $0x990] sm:$0xff]
    %v410 = vld [vmem:[#allocation5 + $0x998] sm:$0xff]
    %v411 = vld [vmem:[#allocation5 + $0x9a0] sm:$0xff]
    %v412 = vld [vmem:[#allocation5 + $0x9a8] sm:$0xff]
    %v413 = vld [vmem:[#allocation5 + $0x9b0] sm:$0xff]
    %v414 = vld [vmem:[#allocation5 + $0x9b8] sm:$0xff]
    %v415 = vld [vmem:[#allocation5 + $0x9c0] sm:$0xff]
    %v416 = vld [vmem:[#allocation5 + $0x9c8] sm:$0xff]
    %v417 = vld [vmem:[#allocation5 + $0x9d0] sm:$0xff]
    %v418 = vld [vmem:[#allocation5 + $0x9d8] sm:$0xff]
    %v419 = vld [vmem:[#allocation5 + $0x9e0] sm:$0xff]
    %v420 = vld [vmem:[#allocation5 + $0x9e8] sm:$0xff]
    %v421 = vld [vmem:[#allocation5 + $0x9f0] sm:$0xff]
    %v422 = vld [vmem:[#allocation5 + $0x9f8] sm:$0xff]
    %v423 = vld [vmem:[#allocation5 + $0xa00] sm:$0xff]
    %v424 = vld [vmem:[#allocation5 + $0xa08] sm:$0xff]
    %v425 = vld [vmem:[#allocation5 + $0xa10] sm:$0xff]
    %v426 = vld [vmem:[#allocation5 + $0xa18] sm:$0xff]
    %v427 = vld [vmem:[#allocation5 + $0xa20] sm:$0xff]
    %v428 = vld [vmem:[#allocation5 + $0xa28] sm:$0xff]
    %v429 = vld [vmem:[#allocation5 + $0xa30] sm:$0xff]
    %v430 = vld [vmem:[#allocation5 + $0xa38] sm:$0xff]
    %v431 = vld [vmem:[#allocation5 + $0xa40] sm:$0xff]
    %v432 = vld [vmem:[#allocation5 + $0xa48] sm:$0xff]
    %v433 = vld [vmem:[#allocation5 + $0xa50] sm:$0xff]
    %v434 = vld [vmem:[#allocation5 + $0xa58] sm:$0xff]
    %v435 = vld [vmem:[#allocation5 + $0xa60] sm:$0xff]
    %v436 = vld [vmem:[#allocation5 + $0xa68] sm:$0xff]
    %v437 = vld [vmem:[#allocation5 + $0xa70] sm:$0xff]
    %v438 = vld [vmem:[#allocation5 + $0xa78] sm:$0xff]
    %v439 = vld [vmem:[#allocation5 + $0xa80] sm:$0xff]
    %v440 = vld [vmem:[#allocation5 + $0xa88] sm:$0xff]
    %v441 = vld [vmem:[#allocation5 + $0xa90] sm:$0xff]
    %v442 = vld [vmem:[#allocation5 + $0xa98] sm:$0xff]
    %v443 = vld [vmem:[#allocation5 + $0xaa0] sm:$0xff]
    %v444 = vld [vmem:[#allocation5 + $0xaa8] sm:$0xff]
    %v445 = vld [vmem:[#allocation5 + $0xab0] sm:$0xff]
    %v446 = vld [vmem:[#allocation5 + $0xab8] sm:$0xff]
    %v447 = vld [vmem:[#allocation5 + $0xac0] sm:$0xff]
    %v448 = vld [vmem:[#allocation5 + $0xac8] sm:$0xff]
    %v449 = vld [vmem:[#allocation5 + $0xad0] sm:$0xff]
    %v450 = vld [vmem:[#allocation5 + $0xad8] sm:$0xff]
    %v451 = vld [vmem:[#allocation5 + $0xae0] sm:$0xff]
    %v452 = vld [vmem:[#allocation5 + $0xae8] sm:$0xff]
    %v453 = vld [vmem:[#allocation5 + $0xaf0] sm:$0xff]
    %v454 = vld [vmem:[#allocation5 + $0xaf8] sm:$0xff]
    %v455 = vld [vmem:[#allocation5 + $0xb00] sm:$0xff]
    %v456 = vld [vmem:[#allocation5 + $0xb08] sm:$0xff]
    %v457 = vld [vmem:[#allocation5 + $0xb10] sm:$0xff]
    %v458 = vld [vmem:[#allocation5 + $0xb18] sm:$0xff]
    %v459 = vld [vmem:[#allocation5 + $0xb20] sm:$0xff]
    %v460 = vld [vmem:[#allocation5 + $0xb28] sm:$0xff]
    %v461 = vld [vmem:[#allocation5 + $0xb30] sm:$0xff]
    %v462 = vld [vmem:[#allocation5 + $0xb38] sm:$0xff]
    %v463 = vld [vmem:[#allocation5 + $0xb40] sm:$0xff]
    %v464 = vld [vmem:[#allocation5 + $0xb48] sm:$0xff]
    %v465 = vld [vmem:[#allocation5 + $0xb50] sm:$0xff]
    %v466 = vld [vmem:[#allocation5 + $0xb58] sm:$0xff]
    %v467 = vld [vmem:[#allocation5 + $0xb60] sm:$0xff]
    %v468 = vld [vmem:[#allocation5 + $0xb68] sm:$0xff]
    %v469 = vld [vmem:[#allocation5 + $0xb70] sm:$0xff]
    %v470 = vld [vmem:[#allocation5 + $0xb78] sm:$0xff]
    %v471 = vld [vmem:[#allocation5 + $0xb80] sm:$0xff]
    %v472 = vld [vmem:[#allocation5 + $0xb88] sm:$0xff]
    %v473 = vld [vmem:[#allocation5 + $0xb90] sm:$0xff]
    %v474 = vld [vmem:[#allocation5 + $0xb98] sm:$0xff]
    %v475 = vld [vmem:[#allocation5 + $0xba0] sm:$0xff]
    %v476 = vld [vmem:[#allocation5 + $0xba8] sm:$0xff]
    %v477 = vld [vmem:[#allocation5 + $0xbb0] sm:$0xff]
    %v478 = vld [vmem:[#allocation5 + $0xbb8] sm:$0xff]
    %v479 = vld [vmem:[#allocation5 + $0xbc0] sm:$0xff]
    %v480 = vld [vmem:[#allocation5 + $0xbc8] sm:$0xff]
    %v481 = vld [vmem:[#allocation5 + $0xbd0] sm:$0xff]
    %v482 = vld [vmem:[#allocation5 + $0xbd8] sm:$0xff]
    %v483 = vld [vmem:[#allocation5 + $0xbe0] sm:$0xff]
    %v484 = vld [vmem:[#allocation5 + $0xbe8] sm:$0xff]
    %v485 = vld [vmem:[#allocation5 + $0xbf0] sm:$0xff]
    %v486 = vld [vmem:[#allocation5 + $0xbf8] sm:$0xff]
    %v487 = vld [vmem:[#allocation5 + $0xc00] sm:$0xff]
    %v488 = vld [vmem:[#allocation5 + $0xc08] sm:$0xff]
    %v489 = vld [vmem:[#allocation5 + $0xc10] sm:$0xff]
    %v490 = vld [vmem:[#allocation5 + $0xc18] sm:$0xff]
    %v491 = vld [vmem:[#allocation5 + $0xc20] sm:$0xff]
    %v492 = vld [vmem:[#allocation5 + $0xc28] sm:$0xff]
    %v493 = vld [vmem:[#allocation5 + $0xc30] sm:$0xff]
    %v494 = vld [vmem:[#allocation5 + $0xc38] sm:$0xff]
    %v495 = vld [vmem:[#allocation5 + $0xc40] sm:$0xff]
    %v496 = vld [vmem:[#allocation5 + $0xc48] sm:$0xff]
    %v497 = vld [vmem:[#allocation5 + $0xc50] sm:$0xff]
    %v498 = vld [vmem:[#allocation5 + $0xc58] sm:$0xff]
    %v499 = vld [vmem:[#allocation5 + $0xc60] sm:$0xff]
    %v500 = vld [vmem:[#allocation5 + $0xc68] sm:$0xff]
    %v501 = vld [vmem:[#allocation5 + $0xc70] sm:$0xff]
    %v502 = vld [vmem:[#allocation5 + $0xc78] sm:$0xff]
    %v503 = vld [vmem:[#allocation5 + $0xc80] sm:$0xff]
    %v504 = vld [vmem:[#allocation5 + $0xc88] sm:$0xff]
    %v505 = vld [vmem:[#allocation5 + $0xc90] sm:$0xff]
    %v506 = vld [vmem:[#allocation5 + $0xc98] sm:$0xff]
    %v507 = vld [vmem:[#allocation5 + $0xca0] sm:$0xff]
    %v508 = vld [vmem:[#allocation5 + $0xca8] sm:$0xff]
    %v509 = vld [vmem:[#allocation5 + $0xcb0] sm:$0xff]
    %v510 = vld [vmem:[#allocation5 + $0xcb8] sm:$0xff]
    %v511 = vld [vmem:[#allocation5 + $0xcc0] sm:$0xff]
    %v512 = vld [vmem:[#allocation5 + $0xcc8] sm:$0xff]
    %v513 = vld [vmem:[#allocation5 + $0xcd0] sm:$0xff]
    %v514 = vld [vmem:[#allocation5 + $0xcd8] sm:$0xff]
    %v515 = vld [vmem:[#allocation5 + $0xce0] sm:$0xff]
    %v516 = vld [vmem:[#allocation5 + $0xce8] sm:$0xff]
    %v517 = vld [vmem:[#allocation5 + $0xcf0] sm:$0xff]
    %v518 = vld [vmem:[#allocation5 + $0xcf8] sm:$0xff]
    %v519 = vld [vmem:[#allocation5 + $0xd00] sm:$0xff]
    %v520 = vld [vmem:[#allocation5 + $0xd08] sm:$0xff]
    %v521 = vld [vmem:[#allocation5 + $0xd10] sm:$0xff]
    %v522 = vld [vmem:[#allocation5 + $0xd18] sm:$0xff]
    %v523 = vld [vmem:[#allocation5 + $0xd20] sm:$0xff]
    %v524 = vld [vmem:[#allocation5 + $0xd28] sm:$0xff]
    %v525 = vld [vmem:[#allocation5 + $0xd30] sm:$0xff]
    %v526 = vld [vmem:[#allocation5 + $0xd38] sm:$0xff]
    %v527 = vld [vmem:[#allocation5 + $0xd40] sm:$0xff]
    %v528 = vld [vmem:[#allocation5 + $0xd48] sm:$0xff]
    %v529 = vld [vmem:[#allocation5 + $0xd50] sm:$0xff]
    %v530 = vld [vmem:[#allocation5 + $0xd58] sm:$0xff]
    %v531 = vld [vmem:[#allocation5 + $0xd60] sm:$0xff]
    %v532 = vld [vmem:[#allocation5 + $0xd68] sm:$0xff]
    %v533 = vld [vmem:[#allocation5 + $0xd70] sm:$0xff]
    %v534 = vld [vmem:[#allocation5 + $0xd78] sm:$0xff]
    %v535 = vld [vmem:[#allocation5 + $0xd80] sm:$0xff]
    %v536 = vld [vmem:[#allocation5 + $0xd88] sm:$0xff]
    %v537 = vld [vmem:[#allocation5 + $0xd90] sm:$0xff]
    %v538 = vld [vmem:[#allocation5 + $0xd98] sm:$0xff]
    %v539 = vld [vmem:[#allocation5 + $0xda0] sm:$0xff]
    %v540 = vld [vmem:[#allocation5 + $0xda8] sm:$0xff]
    %v541 = vld [vmem:[#allocation5 + $0xdb0] sm:$0xff]
    %v542 = vld [vmem:[#allocation5 + $0xdb8] sm:$0xff]
    %v543 = vld [vmem:[#allocation5 + $0xdc0] sm:$0xff]
    %v544 = vld [vmem:[#allocation5 + $0xdc8] sm:$0xff]
    %v545 = vld [vmem:[#allocation5 + $0xdd0] sm:$0xff]
    %v546 = vld [vmem:[#allocation5 + $0xdd8] sm:$0xff]
    %v547 = vld [vmem:[#allocation5 + $0xde0] sm:$0xff]
    %v548 = vld [vmem:[#allocation5 + $0xde8] sm:$0xff]
    %v549 = vld [vmem:[#allocation5 + $0xdf0] sm:$0xff]
    %v550 = vld [vmem:[#allocation5 + $0xdf8] sm:$0xff]
    %v551 = vld [vmem:[#allocation5 + $0xe00] sm:$0xff]
    %v552 = vld [vmem:[#allocation5 + $0xe08] sm:$0xff]
    %v553 = vld [vmem:[#allocation5 + $0xe10] sm:$0xff]
    %v554 = vld [vmem:[#allocation5 + $0xe18] sm:$0xff]
    %v555 = vld [vmem:[#allocation5 + $0xe20] sm:$0xff]
    %v556 = vld [vmem:[#allocation5 + $0xe28] sm:$0xff]
    %v557 = vld [vmem:[#allocation5 + $0xe30] sm:$0xff]
    %v558 = vld [vmem:[#allocation5 + $0xe38] sm:$0xff]
    %v559 = vld [vmem:[#allocation5 + $0xe40] sm:$0xff]
    %v560 = vld [vmem:[#allocation5 + $0xe48] sm:$0xff]
    %v561 = vld [vmem:[#allocation5 + $0xe50] sm:$0xff]
    %v562 = vld [vmem:[#allocation5 + $0xe58] sm:$0xff]
    %v563 = vld [vmem:[#allocation5 + $0xe60] sm:$0xff]
    %v564 = vld [vmem:[#allocation5 + $0xe68] sm:$0xff]
    %v565 = vld [vmem:[#allocation5 + $0xe70] sm:$0xff]
    %v566 = vld [vmem:[#allocation5 + $0xe78] sm:$0xff]
    %v567 = vld [vmem:[#allocation5 + $0xe80] sm:$0xff]
    %v568 = vld [vmem:[#allocation5 + $0xe88] sm:$0xff]
    %v569 = vld [vmem:[#allocation5 + $0xe90] sm:$0xff]
    %v570 = vld [vmem:[#allocation5 + $0xe98] sm:$0xff]
    %v571 = vld [vmem:[#allocation5 + $0xea0] sm:$0xff]
    %v572 = vld [vmem:[#allocation5 + $0xea8] sm:$0xff]
    %v573 = vld [vmem:[#allocation5 + $0xeb0] sm:$0xff]
    %v574 = vld [vmem:[#allocation5 + $0xeb8] sm:$0xff]
    %v575 = vld [vmem:[#allocation5 + $0xec0] sm:$0xff]
    %v576 = vld [vmem:[#allocation5 + $0xec8] sm:$0xff]
    %v577 = vld [vmem:[#allocation5 + $0xed0] sm:$0xff]
    %v578 = vld [vmem:[#allocation5 + $0xed8] sm:$0xff]
    %v579 = vld [vmem:[#allocation5 + $0xee0] sm:$0xff]
    %v580 = vld [vmem:[#allocation5 + $0xee8] sm:$0xff]
    %v581 = vld [vmem:[#allocation5 + $0xef0] sm:$0xff]
    %v582 = vld [vmem:[#allocation5 + $0xef8] sm:$0xff]
    %v583 = vld [vmem:[#allocation5 + $0xf00] sm:$0xff]
    %v584 = vld [vmem:[#allocation5 + $0xf08] sm:$0xff]
    %v585 = vld [vmem:[#allocation5 + $0xf10] sm:$0xff]
    %v586 = vld [vmem:[#allocation5 + $0xf18] sm:$0xff]
    %v587 = vld [vmem:[#allocation5 + $0xf20] sm:$0xff]
    %v588 = vld [vmem:[#allocation5 + $0xf28] sm:$0xff]
    %v589 = vld [vmem:[#allocation5 + $0xf30] sm:$0xff]
    %v590 = vld [vmem:[#allocation5 + $0xf38] sm:$0xff]
    %v591 = vld [vmem:[#allocation5 + $0xf40] sm:$0xff]
    %v592 = vld [vmem:[#allocation5 + $0xf48] sm:$0xff]
    %v593 = vld [vmem:[#allocation5 + $0xf50] sm:$0xff]
    %v594 = vld [vmem:[#allocation5 + $0xf58] sm:$0xff]
    %v595 = vld [vmem:[#allocation5 + $0xf60] sm:$0xff]
    %v596 = vld [vmem:[#allocation5 + $0xf68] sm:$0xff]
    %v597 = vld [vmem:[#allocation5 + $0xf70] sm:$0xff]
    %v598 = vld [vmem:[#allocation5 + $0xf78] sm:$0xff]
    %v599 = vld [vmem:[#allocation5 + $0xf80] sm:$0xff]
    %v600 = vld [vmem:[#allocation5 + $0xf88] sm:$0xff]
    %v601 = vld [vmem:[#allocation5 + $0xf90] sm:$0xff]
    %v602 = vld [vmem:[#allocation5 + $0xf98] sm:$0xff]
    %v603 = vld [vmem:[#allocation5 + $0xfa0] sm:$0xff]
    %v604 = vld [vmem:[#allocation5 + $0xfa8] sm:$0xff]
    %v605 = vld [vmem:[#allocation5 + $0xfb0] sm:$0xff]
    %v606 = vld [vmem:[#allocation5 + $0xfb8] sm:$0xff]
    %v607 = vld [vmem:[#allocation5 + $0xfc0] sm:$0xff]
    %v608 = vld [vmem:[#allocation5 + $0xfc8] sm:$0xff]
    %v609 = vld [vmem:[#allocation5 + $0xfd0] sm:$0xff]
    %v610 = vld [vmem:[#allocation5 + $0xfd8] sm:$0xff]
    %v611 = vld [vmem:[#allocation5 + $0xfe0] sm:$0xff]
    %v612 = vld [vmem:[#allocation5 + $0xfe8] sm:$0xff]
    %v613 = vld [vmem:[#allocation5 + $0xff0] sm:$0xff]
    %v614 = vld [vmem:[#allocation5 + $0xff8] sm:$0xff]
    %v615 = vld [vmem:[#allocation5 + $0x1000] sm:$0xff]
    %v616 = vld [vmem:[#allocation5 + $0x1008] sm:$0xff]
    %v617 = vld [vmem:[#allocation5 + $0x1010] sm:$0xff]
    %v618 = vld [vmem:[#allocation5 + $0x1018] sm:$0xff]
    %v619 = vld [vmem:[#allocation5 + $0x1020] sm:$0xff]
    %v620 = vld [vmem:[#allocation5 + $0x1028] sm:$0xff]
    %v621 = vld [vmem:[#allocation5 + $0x1030] sm:$0xff]
    %v622 = vld [vmem:[#allocation5 + $0x1038] sm:$0xff]
    %v623 = vld [vmem:[#allocation5 + $0x1040] sm:$0xff]
    %v624 = vld [vmem:[#allocation5 + $0x1048] sm:$0xff]
    %v625 = vld [vmem:[#allocation5 + $0x1050] sm:$0xff]
    %v626 = vld [vmem:[#allocation5 + $0x1058] sm:$0xff]
    %v627 = vld [vmem:[#allocation5 + $0x1060] sm:$0xff]
    %v628 = vld [vmem:[#allocation5 + $0x1068] sm:$0xff]
    %v629 = vld [vmem:[#allocation5 + $0x1070] sm:$0xff]
    %v630 = vld [vmem:[#allocation5 + $0x1078] sm:$0xff]
    %v631 = vld [vmem:[#allocation5 + $0x1080] sm:$0xff]
    %v632 = vld [vmem:[#allocation5 + $0x1088] sm:$0xff]
    %v633 = vld [vmem:[#allocation5 + $0x1090] sm:$0xff]
    %v634 = vld [vmem:[#allocation5 + $0x1098] sm:$0xff]
    %v635 = vld [vmem:[#allocation5 + $0x10a0] sm:$0xff]
    %v636 = vld [vmem:[#allocation5 + $0x10a8] sm:$0xff]
    %v637 = vld [vmem:[#allocation5 + $0x10b0] sm:$0xff]
    %v638 = vld [vmem:[#allocation5 + $0x10b8] sm:$0xff]
    %v639 = vld [vmem:[#allocation5 + $0x10c0] sm:$0xff]
    %v640 = vld [vmem:[#allocation5 + $0x10c8] sm:$0xff]
    %v641 = vld [vmem:[#allocation5 + $0x10d0] sm:$0xff]
    %v642 = vld [vmem:[#allocation5 + $0x10d8] sm:$0xff]
    %v643 = vld [vmem:[#allocation5 + $0x10e0] sm:$0xff]
    %v644 = vld [vmem:[#allocation5 + $0x10e8] sm:$0xff]
    %v645 = vld [vmem:[#allocation5 + $0x10f0] sm:$0xff]
    %v646 = vld [vmem:[#allocation5 + $0x10f8] sm:$0xff]
    %v647 = vld [vmem:[#allocation5 + $0x1100] sm:$0xff]
    %v648 = vld [vmem:[#allocation5 + $0x1108] sm:$0xff]
    %v649 = vld [vmem:[#allocation5 + $0x1110] sm:$0xff]
    %v650 = vld [vmem:[#allocation5 + $0x1118] sm:$0xff]
    %v651 = vld [vmem:[#allocation5 + $0x1120] sm:$0xff]
    %v652 = vld [vmem:[#allocation5 + $0x1128] sm:$0xff]
    %v653 = vld [vmem:[#allocation5 + $0x1130] sm:$0xff]
    %v654 = vld [vmem:[#allocation5 + $0x1138] sm:$0xff]
    %v655 = vld [vmem:[#allocation5 + $0x1140] sm:$0xff]
    %v656 = vld [vmem:[#allocation5 + $0x1148] sm:$0xff]
    %v657 = vld [vmem:[#allocation5 + $0x1150] sm:$0xff]
    %v658 = vld [vmem:[#allocation5 + $0x1158] sm:$0xff]
    %v659 = vld [vmem:[#allocation5 + $0x1160] sm:$0xff]
    %v660 = vld [vmem:[#allocation5 + $0x1168] sm:$0xff]
    %v661 = vld [vmem:[#allocation5 + $0x1170] sm:$0xff]
    %v662 = vld [vmem:[#allocation5 + $0x1178] sm:$0xff]
    %v663 = vld [vmem:[#allocation5 + $0x1180] sm:$0xff]
    %v664 = vld [vmem:[#allocation5 + $0x1188] sm:$0xff]
    %v665 = vld [vmem:[#allocation5 + $0x1190] sm:$0xff]
    %v666 = vld [vmem:[#allocation5 + $0x1198] sm:$0xff]
    %v667 = vld [vmem:[#allocation5 + $0x11a0] sm:$0xff]
    %v668 = vld [vmem:[#allocation5 + $0x11a8] sm:$0xff]
    %v669 = vld [vmem:[#allocation5 + $0x11b0] sm:$0xff]
    %v670 = vld [vmem:[#allocation5 + $0x11b8] sm:$0xff]
    %v671 = vld [vmem:[#allocation5 + $0x11c0] sm:$0xff]
    %v672 = vld [vmem:[#allocation5 + $0x11c8] sm:$0xff]
    %v673 = vld [vmem:[#allocation5 + $0x11d0] sm:$0xff]
    %v674 = vld [vmem:[#allocation5 + $0x11d8] sm:$0xff]
    %v675 = vld [vmem:[#allocation5 + $0x11e0] sm:$0xff]
    %v676 = vld [vmem:[#allocation5 + $0x11e8] sm:$0xff]
    %v677 = vld [vmem:[#allocation5 + $0x11f0] sm:$0xff]
    %v678 = vld [vmem:[#allocation5 + $0x11f8] sm:$0xff]
    %v679 = vld [vmem:[#allocation5 + $0x1200] sm:$0xff]
    %v680 = vld [vmem:[#allocation5 + $0x1208] sm:$0xff]
    %v681 = vld [vmem:[#allocation5 + $0x1210] sm:$0xff]
    %v682 = vld [vmem:[#allocation5 + $0x1218] sm:$0xff]
    %v683 = vld [vmem:[#allocation5 + $0x1220] sm:$0xff]
    %v684 = vld [vmem:[#allocation5 + $0x1228] sm:$0xff]
    %v685 = vld [vmem:[#allocation5 + $0x1230] sm:$0xff]
    %v686 = vld [vmem:[#allocation5 + $0x1238] sm:$0xff]
    %v687 = vld [vmem:[#allocation5 + $0x1240] sm:$0xff]
    %v688 = vld [vmem:[#allocation5 + $0x1248] sm:$0xff]
    %v689 = vld [vmem:[#allocation5 + $0x1250] sm:$0xff]
    %v690 = vld [vmem:[#allocation5 + $0x1258] sm:$0xff]
    %v691 = vld [vmem:[#allocation5 + $0x1260] sm:$0xff]
    %v692 = vld [vmem:[#allocation5 + $0x1268] sm:$0xff]
    %v693 = vld [vmem:[#allocation5 + $0x1270] sm:$0xff]
    %v694 = vld [vmem:[#allocation5 + $0x1278] sm:$0xff]
    %v695 = vld [vmem:[#allocation5 + $0x1280] sm:$0xff]
    %v696 = vld [vmem:[#allocation5 + $0x1288] sm:$0xff]
    %v697 = vld [vmem:[#allocation5 + $0x1290] sm:$0xff]
    %v698 = vld [vmem:[#allocation5 + $0x1298] sm:$0xff]
    %v699 = vld [vmem:[#allocation5 + $0x12a0] sm:$0xff]
    %v700 = vld [vmem:[#allocation5 + $0x12a8] sm:$0xff]
    %v701 = vld [vmem:[#allocation5 + $0x12b0] sm:$0xff]
    %v702 = vld [vmem:[#allocation5 + $0x12b8] sm:$0xff]
    %v703 = vld [vmem:[#allocation5 + $0x12c0] sm:$0xff]
    %v704 = vld [vmem:[#allocation5 + $0x12c8] sm:$0xff]
    %v705 = vld [vmem:[#allocation5 + $0x12d0] sm:$0xff]
    %v706 = vld [vmem:[#allocation5 + $0x12d8] sm:$0xff]
    %v707 = vld [vmem:[#allocation5 + $0x12e0] sm:$0xff]
    %v708 = vld [vmem:[#allocation5 + $0x12e8] sm:$0xff]
    %v709 = vld [vmem:[#allocation5 + $0x12f0] sm:$0xff]
    %v710 = vld [vmem:[#allocation5 + $0x12f8] sm:$0xff]
    %v711 = vld [vmem:[#allocation5 + $0x1300] sm:$0xff]
    %v712 = vld [vmem:[#allocation5 + $0x1308] sm:$0xff]
    %v713 = vld [vmem:[#allocation5 + $0x1310] sm:$0xff]
    %v714 = vld [vmem:[#allocation5 + $0x1318] sm:$0xff]
    %v715 = vld [vmem:[#allocation5 + $0x1320] sm:$0xff]
    %v716 = vld [vmem:[#allocation5 + $0x1328] sm:$0xff]
    %v717 = vld [vmem:[#allocation5 + $0x1330] sm:$0xff]
    %v718 = vld [vmem:[#allocation5 + $0x1338] sm:$0xff]
    %v719 = vld [vmem:[#allocation5 + $0x1340] sm:$0xff]
    %v720 = vld [vmem:[#allocation5 + $0x1348] sm:$0xff]
    %v721 = vld [vmem:[#allocation5 + $0x1350] sm:$0xff]
    %v722 = vld [vmem:[#allocation5 + $0x1358] sm:$0xff]
    %v723 = vld [vmem:[#allocation5 + $0x1360] sm:$0xff]
    %v724 = vld [vmem:[#allocation5 + $0x1368] sm:$0xff]
    %v725 = vld [vmem:[#allocation5 + $0x1370] sm:$0xff]
    %v726 = vld [vmem:[#allocation5 + $0x1378] sm:$0xff]
    %v727 = vld [vmem:[#allocation5 + $0x1380] sm:$0xff]
    %v728 = vld [vmem:[#allocation5 + $0x1388] sm:$0xff]
    %v729 = vld [vmem:[#allocation5 + $0x1390] sm:$0xff]
    %v730 = vld [vmem:[#allocation5 + $0x1398] sm:$0xff]
    %v731 = vld [vmem:[#allocation5 + $0x13a0] sm:$0xff]
    %v732 = vld [vmem:[#allocation5 + $0x13a8] sm:$0xff]
    %v733 = vld [vmem:[#allocation5 + $0x13b0] sm:$0xff]
    %v734 = vld [vmem:[#allocation5 + $0x13b8] sm:$0xff]
    %v735 = vld [vmem:[#allocation5 + $0x13c0] sm:$0xff]
    %v736 = vld [vmem:[#allocation5 + $0x13c8] sm:$0xff]
    %v737 = vld [vmem:[#allocation5 + $0x13d0] sm:$0xff]
    %v738 = vld [vmem:[#allocation5 + $0x13d8] sm:$0xff]
    %v739 = vld [vmem:[#allocation5 + $0x13e0] sm:$0xff]
    %v740 = vld [vmem:[#allocation5 + $0x13e8] sm:$0xff]
    %v741 = vld [vmem:[#allocation5 + $0x13f0] sm:$0xff]
    %v742 = vld [vmem:[#allocation5 + $0x13f8] sm:$0xff]
    %v743 = vld [vmem:[#allocation5 + $0x1400] sm:$0xff]
    %v744 = vld [vmem:[#allocation5 + $0x1408] sm:$0xff]
    %v745 = vld [vmem:[#allocation5 + $0x1410] sm:$0xff]
    %v746 = vld [vmem:[#allocation5 + $0x1418] sm:$0xff]
    %v747 = vld [vmem:[#allocation5 + $0x1420] sm:$0xff]
    %v748 = vld [vmem:[#allocation5 + $0x1428] sm:$0xff]
    %v749 = vld [vmem:[#allocation5 + $0x1430] sm:$0xff]
    %v750 = vld [vmem:[#allocation5 + $0x1438] sm:$0xff]
    %v751 = vld [vmem:[#allocation5 + $0x1440] sm:$0xff]
    %v752 = vld [vmem:[#allocation5 + $0x1448] sm:$0xff]
    %v753 = vld [vmem:[#allocation5 + $0x1450] sm:$0xff]
    %v754 = vld [vmem:[#allocation5 + $0x1458] sm:$0xff]
    %v755 = vld [vmem:[#allocation5 + $0x1460] sm:$0xff]
    %v756 = vld [vmem:[#allocation5 + $0x1468] sm:$0xff]
    %v757 = vld [vmem:[#allocation5 + $0x1470] sm:$0xff]
    %v758 = vld [vmem:[#allocation5 + $0x1478] sm:$0xff]
    %v759 = vld [vmem:[#allocation5 + $0x1480] sm:$0xff]
    %v760 = vld [vmem:[#allocation5 + $0x1488] sm:$0xff]
    %v761 = vld [vmem:[#allocation5 + $0x1490] sm:$0xff]
    %v762 = vld [vmem:[#allocation5 + $0x1498] sm:$0xff]
    %v763 = vld [vmem:[#allocation5 + $0x14a0] sm:$0xff]
    %v764 = vld [vmem:[#allocation5 + $0x14a8] sm:$0xff]
    %v765 = vld [vmem:[#allocation5 + $0x14b0] sm:$0xff]
    %v766 = vld [vmem:[#allocation5 + $0x14b8] sm:$0xff]
    %v767 = vld [vmem:[#allocation5 + $0x14c0] sm:$0xff]
    %v768 = vld [vmem:[#allocation5 + $0x14c8] sm:$0xff]
    %v769 = vld [vmem:[#allocation5 + $0x14d0] sm:$0xff]
    %v770 = vld [vmem:[#allocation5 + $0x14d8] sm:$0xff]
    %v771 = vld [vmem:[#allocation5 + $0x14e0] sm:$0xff]
    %v772 = vld [vmem:[#allocation5 + $0x14e8] sm:$0xff]
    %v773 = vld [vmem:[#allocation5 + $0x14f0] sm:$0xff]
    %v774 = vld [vmem:[#allocation5 + $0x14f8] sm:$0xff]
    %v775 = vld [vmem:[#allocation5 + $0x1500] sm:$0xff]
    %v776 = vld [vmem:[#allocation5 + $0x1508] sm:$0xff]
    %v777 = vld [vmem:[#allocation5 + $0x1510] sm:$0xff]
    %v778 = vld [vmem:[#allocation5 + $0x1518] sm:$0xff]
    %v779 = vld [vmem:[#allocation5 + $0x1520] sm:$0xff]
    %v780 = vld [vmem:[#allocation5 + $0x1528] sm:$0xff]
    %v781 = vld [vmem:[#allocation5 + $0x1530] sm:$0xff]
    %v782 = vld [vmem:[#allocation5 + $0x1538] sm:$0xff]
    %v783 = vld [vmem:[#allocation5 + $0x1540] sm:$0xff]
    %v784 = vld [vmem:[#allocation5 + $0x1548] sm:$0xff]
    %v785 = vld [vmem:[#allocation5 + $0x1550] sm:$0xff]
    %v786 = vld [vmem:[#allocation5 + $0x1558] sm:$0xff]
    %v787 = vld [vmem:[#allocation5 + $0x1560] sm:$0xff]
    %v788 = vld [vmem:[#allocation5 + $0x1568] sm:$0xff]
    %v789 = vld [vmem:[#allocation5 + $0x1570] sm:$0xff]
    %v790 = vld [vmem:[#allocation5 + $0x1578] sm:$0xff]
    %v791 = vld [vmem:[#allocation5 + $0x1580] sm:$0xff]
    %v792 = vld [vmem:[#allocation5 + $0x1588] sm:$0xff]
    %v793 = vld [vmem:[#allocation5 + $0x1590] sm:$0xff]
    %v794 = vld [vmem:[#allocation5 + $0x1598] sm:$0xff]
    %v795 = vld [vmem:[#allocation5 + $0x15a0] sm:$0xff]
    %v796 = vld [vmem:[#allocation5 + $0x15a8] sm:$0xff]
    %v797 = vld [vmem:[#allocation5 + $0x15b0] sm:$0xff]
    %v798 = vld [vmem:[#allocation5 + $0x15b8] sm:$0xff]
    %v799 = vld [vmem:[#allocation5 + $0x15c0] sm:$0xff]
    %v800 = vld [vmem:[#allocation5 + $0x15c8] sm:$0xff]
    %v801 = vld [vmem:[#allocation5 + $0x15d0] sm:$0xff]
    %v802 = vld [vmem:[#allocation5 + $0x15d8] sm:$0xff]
    %v803 = vld [vmem:[#allocation5 + $0x15e0] sm:$0xff]
    %v804 = vld [vmem:[#allocation5 + $0x15e8] sm:$0xff]
    %v805 = vld [vmem:[#allocation5 + $0x15f0] sm:$0xff]
    %v806 = vld [vmem:[#allocation5 + $0x15f8] sm:$0xff]
    %v807 = vld [vmem:[#allocation5 + $0x1600] sm:$0xff]
    %v808 = vld [vmem:[#allocation5 + $0x1608] sm:$0xff]
    %v809 = vld [vmem:[#allocation5 + $0x1610] sm:$0xff]
    %v810 = vld [vmem:[#allocation5 + $0x1618] sm:$0xff]
    %v811 = vld [vmem:[#allocation5 + $0x1620] sm:$0xff]
    %v812 = vld [vmem:[#allocation5 + $0x1628] sm:$0xff]
    %v813 = vld [vmem:[#allocation5 + $0x1630] sm:$0xff]
    %v814 = vld [vmem:[#allocation5 + $0x1638] sm:$0xff]
    %v815 = vld [vmem:[#allocation5 + $0x1640] sm:$0xff]
    %v816 = vld [vmem:[#allocation5 + $0x1648] sm:$0xff]
    %v817 = vld [vmem:[#allocation5 + $0x1650] sm:$0xff]
    %v818 = vld [vmem:[#allocation5 + $0x1658] sm:$0xff]
    %v819 = vld [vmem:[#allocation5 + $0x1660] sm:$0xff]
    %v820 = vld [vmem:[#allocation5 + $0x1668] sm:$0xff]
    %v821 = vld [vmem:[#allocation5 + $0x1670] sm:$0xff]
    %v822 = vld [vmem:[#allocation5 + $0x1678] sm:$0xff]
    %v823 = vld [vmem:[#allocation5 + $0x1680] sm:$0xff]
    %v824 = vld [vmem:[#allocation5 + $0x1688] sm:$0xff]
    %v825 = vld [vmem:[#allocation5 + $0x1690] sm:$0xff]
    %v826 = vld [vmem:[#allocation5 + $0x1698] sm:$0xff]
    %v827 = vld [vmem:[#allocation5 + $0x16a0] sm:$0xff]
    %v828 = vld [vmem:[#allocation5 + $0x16a8] sm:$0xff]
    %v829 = vld [vmem:[#allocation5 + $0x16b0] sm:$0xff]
    %v830 = vld [vmem:[#allocation5 + $0x16b8] sm:$0xff]
    %v831 = vld [vmem:[#allocation5 + $0x16c0] sm:$0xff]
    %v832 = vld [vmem:[#allocation5 + $0x16c8] sm:$0xff]
    %v833 = vld [vmem:[#allocation5 + $0x16d0] sm:$0xff]
    %v834 = vld [vmem:[#allocation5 + $0x16d8] sm:$0xff]
    %v835 = vld [vmem:[#allocation5 + $0x16e0] sm:$0xff]
    %v836 = vld [vmem:[#allocation5 + $0x16e8] sm:$0xff]
    %v837 = vld [vmem:[#allocation5 + $0x16f0] sm:$0xff]
    %v838 = vld [vmem:[#allocation5 + $0x16f8] sm:$0xff]
    %v839 = vld [vmem:[#allocation5 + $0x1700] sm:$0xff]
    %v840 = vld [vmem:[#allocation5 + $0x1708] sm:$0xff]
    %v841 = vld [vmem:[#allocation5 + $0x1710] sm:$0xff]
    %v842 = vld [vmem:[#allocation5 + $0x1718] sm:$0xff]
    %v843 = vld [vmem:[#allocation5 + $0x1720] sm:$0xff]
    %v844 = vld [vmem:[#allocation5 + $0x1728] sm:$0xff]
    %v845 = vld [vmem:[#allocation5 + $0x1730] sm:$0xff]
    %v846 = vld [vmem:[#allocation5 + $0x1738] sm:$0xff]
    %v847 = vld [vmem:[#allocation5 + $0x1740] sm:$0xff]
    %v848 = vld [vmem:[#allocation5 + $0x1748] sm:$0xff]
    %v849 = vld [vmem:[#allocation5 + $0x1750] sm:$0xff]
    %v850 = vld [vmem:[#allocation5 + $0x1758] sm:$0xff]
    %v851 = vld [vmem:[#allocation5 + $0x1760] sm:$0xff]
    %v852 = vld [vmem:[#allocation5 + $0x1768] sm:$0xff]
    %v853 = vld [vmem:[#allocation5 + $0x1770] sm:$0xff]
    %v854 = vld [vmem:[#allocation5 + $0x1778] sm:$0xff]
    %v855 = vld [vmem:[#allocation5 + $0x1780] sm:$0xff]
    %v856 = vld [vmem:[#allocation5 + $0x1788] sm:$0xff]
    %v857 = vld [vmem:[#allocation5 + $0x1790] sm:$0xff]
    %v858 = vld [vmem:[#allocation5 + $0x1798] sm:$0xff]
    %v859 = vld [vmem:[#allocation5 + $0x17a0] sm:$0xff]
    %v860 = vld [vmem:[#allocation5 + $0x17a8] sm:$0xff]
    %v861 = vld [vmem:[#allocation5 + $0x17b0] sm:$0xff]
    %v862 = vld [vmem:[#allocation5 + $0x17b8] sm:$0xff]
    %v863 = vld [vmem:[#allocation5 + $0x17c0] sm:$0xff]
    %v864 = vld [vmem:[#allocation5 + $0x17c8] sm:$0xff]
    %v865 = vld [vmem:[#allocation5 + $0x17d0] sm:$0xff]
    %v866 = vld [vmem:[#allocation5 + $0x17d8] sm:$0xff]
    %v867 = vld [vmem:[#allocation5 + $0x17e0] sm:$0xff]
    %v868 = vld [vmem:[#allocation5 + $0x17e8] sm:$0xff]
    %v869 = vld [vmem:[#allocation5 + $0x17f0] sm:$0xff]
    %v870 = vld [vmem:[#allocation5 + $0x17f8] sm:$0xff]
    %v1639 = vunpack.c.l.b16 %v103
    %v1640 = vunpack.c.h.b16 %v103
    %v1641 = vunpack.c.l.b16 %v104
    %v1642 = vunpack.c.h.b16 %v104
    %v1643 = vunpack.c.l.b16 %v105
    %v1644 = vunpack.c.h.b16 %v105
    %v1645 = vunpack.c.l.b16 %v106
    %v1646 = vunpack.c.h.b16 %v106
    %v1647 = vunpack.c.l.b16 %v107
    %v1648 = vunpack.c.h.b16 %v107
    %v1649 = vunpack.c.l.b16 %v108
    %v1650 = vunpack.c.h.b16 %v108
    %v1651 = vunpack.c.l.b16 %v109
    %v1652 = vunpack.c.h.b16 %v109
    %v1653 = vunpack.c.l.b16 %v110
    %v1654 = vunpack.c.h.b16 %v110
    %v1655 = vunpack.c.l.b16 %v111
    %v1656 = vunpack.c.h.b16 %v111
    %v1657 = vunpack.c.l.b16 %v112
    %v1658 = vunpack.c.h.b16 %v112
    %v1659 = vunpack.c.l.b16 %v113
    %v1660 = vunpack.c.h.b16 %v113
    %v1661 = vunpack.c.l.b16 %v114
    %v1662 = vunpack.c.h.b16 %v114
    %v1663 = vunpack.c.l.b16 %v115
    %v1664 = vunpack.c.h.b16 %v115
    %v1665 = vunpack.c.l.b16 %v116
    %v1666 = vunpack.c.h.b16 %v116
    %v1667 = vunpack.c.l.b16 %v117
    %v1668 = vunpack.c.h.b16 %v117
    %v1669 = vunpack.c.l.b16 %v118
    %v1670 = vunpack.c.h.b16 %v118
    %v1671 = vunpack.c.l.b16 %v119
    %v1672 = vunpack.c.h.b16 %v119
    %v1673 = vunpack.c.l.b16 %v120
    %v1674 = vunpack.c.h.b16 %v120
    %v1675 = vunpack.c.l.b16 %v121
    %v1676 = vunpack.c.h.b16 %v121
    %v1677 = vunpack.c.l.b16 %v122
    %v1678 = vunpack.c.h.b16 %v122
    %v1679 = vunpack.c.l.b16 %v123
    %v1680 = vunpack.c.h.b16 %v123
    %v1681 = vunpack.c.l.b16 %v124
    %v1682 = vunpack.c.h.b16 %v124
    %v1683 = vunpack.c.l.b16 %v125
    %v1684 = vunpack.c.h.b16 %v125
    %v1685 = vunpack.c.l.b16 %v126
    %v1686 = vunpack.c.h.b16 %v126
    %v1687 = vunpack.c.l.b16 %v127
    %v1688 = vunpack.c.h.b16 %v127
    %v1689 = vunpack.c.l.b16 %v128
    %v1690 = vunpack.c.h.b16 %v128
    %v1691 = vunpack.c.l.b16 %v129
    %v1692 = vunpack.c.h.b16 %v129
    %v1693 = vunpack.c.l.b16 %v130
    %v1694 = vunpack.c.h.b16 %v130
    %v1695 = vunpack.c.l.b16 %v131
    %v1696 = vunpack.c.h.b16 %v131
    %v1697 = vunpack.c.l.b16 %v132
    %v1698 = vunpack.c.h.b16 %v132
    %v1699 = vunpack.c.l.b16 %v133
    %v1700 = vunpack.c.h.b16 %v133
    %v1701 = vunpack.c.l.b16 %v134
    %v1702 = vunpack.c.h.b16 %v134
    %v1703 = vunpack.c.l.b16 %v135
    %v1704 = vunpack.c.h.b16 %v135
    %v1705 = vunpack.c.l.b16 %v136
    %v1706 = vunpack.c.h.b16 %v136
    %v1707 = vunpack.c.l.b16 %v137
    %v1708 = vunpack.c.h.b16 %v137
    %v1709 = vunpack.c.l.b16 %v138
    %v1710 = vunpack.c.h.b16 %v138
    %v1711 = vunpack.c.l.b16 %v139
    %v1712 = vunpack.c.h.b16 %v139
    %v1713 = vunpack.c.l.b16 %v140
    %v1714 = vunpack.c.h.b16 %v140
    %v1715 = vunpack.c.l.b16 %v141
    %v1716 = vunpack.c.h.b16 %v141
    %v1717 = vunpack.c.l.b16 %v142
    %v1718 = vunpack.c.h.b16 %v142
    %v1719 = vunpack.c.l.b16 %v143
    %v1720 = vunpack.c.h.b16 %v143
    %v1721 = vunpack.c.l.b16 %v144
    %v1722 = vunpack.c.h.b16 %v144
    %v1723 = vunpack.c.l.b16 %v145
    %v1724 = vunpack.c.h.b16 %v145
    %v1725 = vunpack.c.l.b16 %v146
    %v1726 = vunpack.c.h.b16 %v146
    %v1727 = vunpack.c.l.b16 %v147
    %v1728 = vunpack.c.h.b16 %v147
    %v1729 = vunpack.c.l.b16 %v148
    %v1730 = vunpack.c.h.b16 %v148
    %v1731 = vunpack.c.l.b16 %v149
    %v1732 = vunpack.c.h.b16 %v149
    %v1733 = vunpack.c.l.b16 %v150
    %v1734 = vunpack.c.h.b16 %v150
    %v1735 = vunpack.c.l.b16 %v151
    %v1736 = vunpack.c.h.b16 %v151
    %v1737 = vunpack.c.l.b16 %v152
    %v1738 = vunpack.c.h.b16 %v152
    %v1739 = vunpack.c.l.b16 %v153
    %v1740 = vunpack.c.h.b16 %v153
    %v1741 = vunpack.c.l.b16 %v154
    %v1742 = vunpack.c.h.b16 %v154
    %v1743 = vunpack.c.l.b16 %v155
    %v1744 = vunpack.c.h.b16 %v155
    %v1745 = vunpack.c.l.b16 %v156
    %v1746 = vunpack.c.h.b16 %v156
    %v1747 = vunpack.c.l.b16 %v157
    %v1748 = vunpack.c.h.b16 %v157
    %v1749 = vunpack.c.l.b16 %v158
    %v1750 = vunpack.c.h.b16 %v158
    %v1751 = vunpack.c.l.b16 %v159
    %v1752 = vunpack.c.h.b16 %v159
    %v1753 = vunpack.c.l.b16 %v160
    %v1754 = vunpack.c.h.b16 %v160
    %v1755 = vunpack.c.l.b16 %v161
    %v1756 = vunpack.c.h.b16 %v161
    %v1757 = vunpack.c.l.b16 %v162
    %v1758 = vunpack.c.h.b16 %v162
    %v1759 = vunpack.c.l.b16 %v163
    %v1760 = vunpack.c.h.b16 %v163
    %v1761 = vunpack.c.l.b16 %v164
    %v1762 = vunpack.c.h.b16 %v164
    %v1763 = vunpack.c.l.b16 %v165
    %v1764 = vunpack.c.h.b16 %v165
    %v1765 = vunpack.c.l.b16 %v166
    %v1766 = vunpack.c.h.b16 %v166
    %v1767 = vunpack.c.l.b16 %v167
    %v1768 = vunpack.c.h.b16 %v167
    %v1769 = vunpack.c.l.b16 %v168
    %v1770 = vunpack.c.h.b16 %v168
    %v1771 = vunpack.c.l.b16 %v169
    %v1772 = vunpack.c.h.b16 %v169
    %v1773 = vunpack.c.l.b16 %v170
    %v1774 = vunpack.c.h.b16 %v170
    %v1775 = vunpack.c.l.b16 %v171
    %v1776 = vunpack.c.h.b16 %v171
    %v1777 = vunpack.c.l.b16 %v172
    %v1778 = vunpack.c.h.b16 %v172
    %v1779 = vunpack.c.l.b16 %v173
    %v1780 = vunpack.c.h.b16 %v173
    %v1781 = vunpack.c.l.b16 %v174
    %v1782 = vunpack.c.h.b16 %v174
    %v1783 = vunpack.c.l.b16 %v175
    %v1784 = vunpack.c.h.b16 %v175
    %v1785 = vunpack.c.l.b16 %v176
    %v1786 = vunpack.c.h.b16 %v176
    %v1787 = vunpack.c.l.b16 %v177
    %v1788 = vunpack.c.h.b16 %v177
    %v1789 = vunpack.c.l.b16 %v178
    %v1790 = vunpack.c.h.b16 %v178
    %v1791 = vunpack.c.l.b16 %v179
    %v1792 = vunpack.c.h.b16 %v179
    %v1793 = vunpack.c.l.b16 %v180
    %v1794 = vunpack.c.h.b16 %v180
    %v1795 = vunpack.c.l.b16 %v181
    %v1796 = vunpack.c.h.b16 %v181
    %v1797 = vunpack.c.l.b16 %v182
    %v1798 = vunpack.c.h.b16 %v182
    %v1799 = vunpack.c.l.b16 %v183
    %v1800 = vunpack.c.h.b16 %v183
    %v1801 = vunpack.c.l.b16 %v184
    %v1802 = vunpack.c.h.b16 %v184
    %v1803 = vunpack.c.l.b16 %v185
    %v1804 = vunpack.c.h.b16 %v185
    %v1805 = vunpack.c.l.b16 %v186
    %v1806 = vunpack.c.h.b16 %v186
    %v1807 = vunpack.c.l.b16 %v187
    %v1808 = vunpack.c.h.b16 %v187
    %v1809 = vunpack.c.l.b16 %v188
    %v1810 = vunpack.c.h.b16 %v188
    %v1811 = vunpack.c.l.b16 %v189
    %v1812 = vunpack.c.h.b16 %v189
    %v1813 = vunpack.c.l.b16 %v190
    %v1814 = vunpack.c.h.b16 %v190
    %v1815 = vunpack.c.l.b16 %v191
    %v1816 = vunpack.c.h.b16 %v191
    %v1817 = vunpack.c.l.b16 %v192
    %v1818 = vunpack.c.h.b16 %v192
    %v1819 = vunpack.c.l.b16 %v193
    %v1820 = vunpack.c.h.b16 %v193
    %v1821 = vunpack.c.l.b16 %v194
    %v1822 = vunpack.c.h.b16 %v194
    %v1823 = vunpack.c.l.b16 %v195
    %v1824 = vunpack.c.h.b16 %v195
    %v1825 = vunpack.c.l.b16 %v196
    %v1826 = vunpack.c.h.b16 %v196
    %v1827 = vunpack.c.l.b16 %v197
    %v1828 = vunpack.c.h.b16 %v197
    %v1829 = vunpack.c.l.b16 %v198
    %v1830 = vunpack.c.h.b16 %v198
    %v1831 = vunpack.c.l.b16 %v199
    %v1832 = vunpack.c.h.b16 %v199
    %v1833 = vunpack.c.l.b16 %v200
    %v1834 = vunpack.c.h.b16 %v200
    %v1835 = vunpack.c.l.b16 %v201
    %v1836 = vunpack.c.h.b16 %v201
    %v1837 = vunpack.c.l.b16 %v202
    %v1838 = vunpack.c.h.b16 %v202
    %v1839 = vunpack.c.l.b16 %v203
    %v1840 = vunpack.c.h.b16 %v203
    %v1841 = vunpack.c.l.b16 %v204
    %v1842 = vunpack.c.h.b16 %v204
    %v1843 = vunpack.c.l.b16 %v205
    %v1844 = vunpack.c.h.b16 %v205
    %v1845 = vunpack.c.l.b16 %v206
    %v1846 = vunpack.c.h.b16 %v206
    %v1847 = vunpack.c.l.b16 %v207
    %v1848 = vunpack.c.h.b16 %v207
    %v1849 = vunpack.c.l.b16 %v208
    %v1850 = vunpack.c.h.b16 %v208
    %v1851 = vunpack.c.l.b16 %v209
    %v1852 = vunpack.c.h.b16 %v209
    %v1853 = vunpack.c.l.b16 %v210
    %v1854 = vunpack.c.h.b16 %v210
    %v1855 = vunpack.c.l.b16 %v211
    %v1856 = vunpack.c.h.b16 %v211
    %v1857 = vunpack.c.l.b16 %v212
    %v1858 = vunpack.c.h.b16 %v212
    %v1859 = vunpack.c.l.b16 %v213
    %v1860 = vunpack.c.h.b16 %v213
    %v1861 = vunpack.c.l.b16 %v214
    %v1862 = vunpack.c.h.b16 %v214
    %v1863 = vunpack.c.l.b16 %v215
    %v1864 = vunpack.c.h.b16 %v215
    %v1865 = vunpack.c.l.b16 %v216
    %v1866 = vunpack.c.h.b16 %v216
    %v1867 = vunpack.c.l.b16 %v217
    %v1868 = vunpack.c.h.b16 %v217
    %v1869 = vunpack.c.l.b16 %v218
    %v1870 = vunpack.c.h.b16 %v218
    %v1871 = vunpack.c.l.b16 %v219
    %v1872 = vunpack.c.h.b16 %v219
    %v1873 = vunpack.c.l.b16 %v220
    %v1874 = vunpack.c.h.b16 %v220
    %v1875 = vunpack.c.l.b16 %v221
    %v1876 = vunpack.c.h.b16 %v221
    %v1877 = vunpack.c.l.b16 %v222
    %v1878 = vunpack.c.h.b16 %v222
    %v1879 = vunpack.c.l.b16 %v223
    %v1880 = vunpack.c.h.b16 %v223
    %v1881 = vunpack.c.l.b16 %v224
    %v1882 = vunpack.c.h.b16 %v224
    %v1883 = vunpack.c.l.b16 %v225
    %v1884 = vunpack.c.h.b16 %v225
    %v1885 = vunpack.c.l.b16 %v226
    %v1886 = vunpack.c.h.b16 %v226
    %v1887 = vunpack.c.l.b16 %v227
    %v1888 = vunpack.c.h.b16 %v227
    %v1889 = vunpack.c.l.b16 %v228
    %v1890 = vunpack.c.h.b16 %v228
    %v1891 = vunpack.c.l.b16 %v229
    %v1892 = vunpack.c.h.b16 %v229
    %v1893 = vunpack.c.l.b16 %v230
    %v1894 = vunpack.c.h.b16 %v230
    %v1895 = vunpack.c.l.b16 %v231
    %v1896 = vunpack.c.h.b16 %v231
    %v1897 = vunpack.c.l.b16 %v232
    %v1898 = vunpack.c.h.b16 %v232
    %v1899 = vunpack.c.l.b16 %v233
    %v1900 = vunpack.c.h.b16 %v233
    %v1901 = vunpack.c.l.b16 %v234
    %v1902 = vunpack.c.h.b16 %v234
    %v1903 = vunpack.c.l.b16 %v235
    %v1904 = vunpack.c.h.b16 %v235
    %v1905 = vunpack.c.l.b16 %v236
    %v1906 = vunpack.c.h.b16 %v236
    %v1907 = vunpack.c.l.b16 %v237
    %v1908 = vunpack.c.h.b16 %v237
    %v1909 = vunpack.c.l.b16 %v238
    %v1910 = vunpack.c.h.b16 %v238
    %v1911 = vunpack.c.l.b16 %v239
    %v1912 = vunpack.c.h.b16 %v239
    %v1913 = vunpack.c.l.b16 %v240
    %v1914 = vunpack.c.h.b16 %v240
    %v1915 = vunpack.c.l.b16 %v241
    %v1916 = vunpack.c.h.b16 %v241
    %v1917 = vunpack.c.l.b16 %v242
    %v1918 = vunpack.c.h.b16 %v242
    %v1919 = vunpack.c.l.b16 %v243
    %v1920 = vunpack.c.h.b16 %v243
    %v1921 = vunpack.c.l.b16 %v244
    %v1922 = vunpack.c.h.b16 %v244
    %v1923 = vunpack.c.l.b16 %v245
    %v1924 = vunpack.c.h.b16 %v245
    %v1925 = vunpack.c.l.b16 %v246
    %v1926 = vunpack.c.h.b16 %v246
    %v1927 = vunpack.c.l.b16 %v247
    %v1928 = vunpack.c.h.b16 %v247
    %v1929 = vunpack.c.l.b16 %v248
    %v1930 = vunpack.c.h.b16 %v248
    %v1931 = vunpack.c.l.b16 %v249
    %v1932 = vunpack.c.h.b16 %v249
    %v1933 = vunpack.c.l.b16 %v250
    %v1934 = vunpack.c.h.b16 %v250
    %v1935 = vunpack.c.l.b16 %v251
    %v1936 = vunpack.c.h.b16 %v251
    %v1937 = vunpack.c.l.b16 %v252
    %v1938 = vunpack.c.h.b16 %v252
    %v1939 = vunpack.c.l.b16 %v253
    %v1940 = vunpack.c.h.b16 %v253
    %v1941 = vunpack.c.l.b16 %v254
    %v1942 = vunpack.c.h.b16 %v254
    %v1943 = vunpack.c.l.b16 %v255
    %v1944 = vunpack.c.h.b16 %v255
    %v1945 = vunpack.c.l.b16 %v256
    %v1946 = vunpack.c.h.b16 %v256
    %v1947 = vunpack.c.l.b16 %v257
    %v1948 = vunpack.c.h.b16 %v257
    %v1949 = vunpack.c.l.b16 %v258
    %v1950 = vunpack.c.h.b16 %v258
    %v1951 = vunpack.c.l.b16 %v259
    %v1952 = vunpack.c.h.b16 %v259
    %v1953 = vunpack.c.l.b16 %v260
    %v1954 = vunpack.c.h.b16 %v260
    %v1955 = vunpack.c.l.b16 %v261
    %v1956 = vunpack.c.h.b16 %v261
    %v1957 = vunpack.c.l.b16 %v262
    %v1958 = vunpack.c.h.b16 %v262
    %v1959 = vunpack.c.l.b16 %v263
    %v1960 = vunpack.c.h.b16 %v263
    %v1961 = vunpack.c.l.b16 %v264
    %v1962 = vunpack.c.h.b16 %v264
    %v1963 = vunpack.c.l.b16 %v265
    %v1964 = vunpack.c.h.b16 %v265
    %v1965 = vunpack.c.l.b16 %v266
    %v1966 = vunpack.c.h.b16 %v266
    %v1967 = vunpack.c.l.b16 %v267
    %v1968 = vunpack.c.h.b16 %v267
    %v1969 = vunpack.c.l.b16 %v268
    %v1970 = vunpack.c.h.b16 %v268
    %v1971 = vunpack.c.l.b16 %v269
    %v1972 = vunpack.c.h.b16 %v269
    %v1973 = vunpack.c.l.b16 %v270
    %v1974 = vunpack.c.h.b16 %v270
    %v1975 = vunpack.c.l.b16 %v271
    %v1976 = vunpack.c.h.b16 %v271
    %v1977 = vunpack.c.l.b16 %v272
    %v1978 = vunpack.c.h.b16 %v272
    %v1979 = vunpack.c.l.b16 %v273
    %v1980 = vunpack.c.h.b16 %v273
    %v1981 = vunpack.c.l.b16 %v274
    %v1982 = vunpack.c.h.b16 %v274
    %v1983 = vunpack.c.l.b16 %v275
    %v1984 = vunpack.c.h.b16 %v275
    %v1985 = vunpack.c.l.b16 %v276
    %v1986 = vunpack.c.h.b16 %v276
    %v1987 = vunpack.c.l.b16 %v277
    %v1988 = vunpack.c.h.b16 %v277
    %v1989 = vunpack.c.l.b16 %v278
    %v1990 = vunpack.c.h.b16 %v278
    %v1991 = vunpack.c.l.b16 %v279
    %v1992 = vunpack.c.h.b16 %v279
    %v1993 = vunpack.c.l.b16 %v280
    %v1994 = vunpack.c.h.b16 %v280
    %v1995 = vunpack.c.l.b16 %v281
    %v1996 = vunpack.c.h.b16 %v281
    %v1997 = vunpack.c.l.b16 %v282
    %v1998 = vunpack.c.h.b16 %v282
    %v1999 = vunpack.c.l.b16 %v283
    %v2000 = vunpack.c.h.b16 %v283
    %v2001 = vunpack.c.l.b16 %v284
    %v2002 = vunpack.c.h.b16 %v284
    %v2003 = vunpack.c.l.b16 %v285
    %v2004 = vunpack.c.h.b16 %v285
    %v2005 = vunpack.c.l.b16 %v286
    %v2006 = vunpack.c.h.b16 %v286
    %v2007 = vunpack.c.l.b16 %v287
    %v2008 = vunpack.c.h.b16 %v287
    %v2009 = vunpack.c.l.b16 %v288
    %v2010 = vunpack.c.h.b16 %v288
    %v2011 = vunpack.c.l.b16 %v289
    %v2012 = vunpack.c.h.b16 %v289
    %v2013 = vunpack.c.l.b16 %v290
    %v2014 = vunpack.c.h.b16 %v290
    %v2015 = vunpack.c.l.b16 %v291
    %v2016 = vunpack.c.h.b16 %v291
    %v2017 = vunpack.c.l.b16 %v292
    %v2018 = vunpack.c.h.b16 %v292
    %v2019 = vunpack.c.l.b16 %v293
    %v2020 = vunpack.c.h.b16 %v293
    %v2021 = vunpack.c.l.b16 %v294
    %v2022 = vunpack.c.h.b16 %v294
    %v2023 = vunpack.c.l.b16 %v295
    %v2024 = vunpack.c.h.b16 %v295
    %v2025 = vunpack.c.l.b16 %v296
    %v2026 = vunpack.c.h.b16 %v296
    %v2027 = vunpack.c.l.b16 %v297
    %v2028 = vunpack.c.h.b16 %v297
    %v2029 = vunpack.c.l.b16 %v298
    %v2030 = vunpack.c.h.b16 %v298
    %v2031 = vunpack.c.l.b16 %v299
    %v2032 = vunpack.c.h.b16 %v299
    %v2033 = vunpack.c.l.b16 %v300
    %v2034 = vunpack.c.h.b16 %v300
    %v2035 = vunpack.c.l.b16 %v301
    %v2036 = vunpack.c.h.b16 %v301
    %v2037 = vunpack.c.l.b16 %v302
    %v2038 = vunpack.c.h.b16 %v302
    %v2039 = vunpack.c.l.b16 %v303
    %v2040 = vunpack.c.h.b16 %v303
    %v2041 = vunpack.c.l.b16 %v304
    %v2042 = vunpack.c.h.b16 %v304
    %v2043 = vunpack.c.l.b16 %v305
    %v2044 = vunpack.c.h.b16 %v305
    %v2045 = vunpack.c.l.b16 %v306
    %v2046 = vunpack.c.h.b16 %v306
    %v2047 = vunpack.c.l.b16 %v307
    %v2048 = vunpack.c.h.b16 %v307
    %v2049 = vunpack.c.l.b16 %v308
    %v2050 = vunpack.c.h.b16 %v308
    %v2051 = vunpack.c.l.b16 %v309
    %v2052 = vunpack.c.h.b16 %v309
    %v2053 = vunpack.c.l.b16 %v310
    %v2054 = vunpack.c.h.b16 %v310
    %v2055 = vunpack.c.l.b16 %v311
    %v2056 = vunpack.c.h.b16 %v311
    %v2057 = vunpack.c.l.b16 %v312
    %v2058 = vunpack.c.h.b16 %v312
    %v2059 = vunpack.c.l.b16 %v313
    %v2060 = vunpack.c.h.b16 %v313
    %v2061 = vunpack.c.l.b16 %v314
    %v2062 = vunpack.c.h.b16 %v314
    %v2063 = vunpack.c.l.b16 %v315
    %v2064 = vunpack.c.h.b16 %v315
    %v2065 = vunpack.c.l.b16 %v316
    %v2066 = vunpack.c.h.b16 %v316
    %v2067 = vunpack.c.l.b16 %v317
    %v2068 = vunpack.c.h.b16 %v317
    %v2069 = vunpack.c.l.b16 %v318
    %v2070 = vunpack.c.h.b16 %v318
    %v2071 = vunpack.c.l.b16 %v319
    %v2072 = vunpack.c.h.b16 %v319
    %v2073 = vunpack.c.l.b16 %v320
    %v2074 = vunpack.c.h.b16 %v320
    %v2075 = vunpack.c.l.b16 %v321
    %v2076 = vunpack.c.h.b16 %v321
    %v2077 = vunpack.c.l.b16 %v322
    %v2078 = vunpack.c.h.b16 %v322
    %v2079 = vunpack.c.l.b16 %v323
    %v2080 = vunpack.c.h.b16 %v323
    %v2081 = vunpack.c.l.b16 %v324
    %v2082 = vunpack.c.h.b16 %v324
    %v2083 = vunpack.c.l.b16 %v325
    %v2084 = vunpack.c.h.b16 %v325
    %v2085 = vunpack.c.l.b16 %v326
    %v2086 = vunpack.c.h.b16 %v326
    %v2087 = vunpack.c.l.b16 %v327
    %v2088 = vunpack.c.h.b16 %v327
    %v2089 = vunpack.c.l.b16 %v328
    %v2090 = vunpack.c.h.b16 %v328
    %v2091 = vunpack.c.l.b16 %v329
    %v2092 = vunpack.c.h.b16 %v329
    %v2093 = vunpack.c.l.b16 %v330
    %v2094 = vunpack.c.h.b16 %v330
    %v2095 = vunpack.c.l.b16 %v331
    %v2096 = vunpack.c.h.b16 %v331
    %v2097 = vunpack.c.l.b16 %v332
    %v2098 = vunpack.c.h.b16 %v332
    %v2099 = vunpack.c.l.b16 %v333
    %v2100 = vunpack.c.h.b16 %v333
    %v2101 = vunpack.c.l.b16 %v334
    %v2102 = vunpack.c.h.b16 %v334
    %v2103 = vunpack.c.l.b16 %v335
    %v2104 = vunpack.c.h.b16 %v335
    %v2105 = vunpack.c.l.b16 %v336
    %v2106 = vunpack.c.h.b16 %v336
    %v2107 = vunpack.c.l.b16 %v337
    %v2108 = vunpack.c.h.b16 %v337
    %v2109 = vunpack.c.l.b16 %v338
    %v2110 = vunpack.c.h.b16 %v338
    %v2111 = vunpack.c.l.b16 %v339
    %v2112 = vunpack.c.h.b16 %v339
    %v2113 = vunpack.c.l.b16 %v340
    %v2114 = vunpack.c.h.b16 %v340
    %v2115 = vunpack.c.l.b16 %v341
    %v2116 = vunpack.c.h.b16 %v341
    %v2117 = vunpack.c.l.b16 %v342
    %v2118 = vunpack.c.h.b16 %v342
    %v2119 = vunpack.c.l.b16 %v343
    %v2120 = vunpack.c.h.b16 %v343
    %v2121 = vunpack.c.l.b16 %v344
    %v2122 = vunpack.c.h.b16 %v344
    %v2123 = vunpack.c.l.b16 %v345
    %v2124 = vunpack.c.h.b16 %v345
    %v2125 = vunpack.c.l.b16 %v346
    %v2126 = vunpack.c.h.b16 %v346
    %v2127 = vunpack.c.l.b16 %v347
    %v2128 = vunpack.c.h.b16 %v347
    %v2129 = vunpack.c.l.b16 %v348
    %v2130 = vunpack.c.h.b16 %v348
    %v2131 = vunpack.c.l.b16 %v349
    %v2132 = vunpack.c.h.b16 %v349
    %v2133 = vunpack.c.l.b16 %v350
    %v2134 = vunpack.c.h.b16 %v350
    %v2135 = vunpack.c.l.b16 %v351
    %v2136 = vunpack.c.h.b16 %v351
    %v2137 = vunpack.c.l.b16 %v352
    %v2138 = vunpack.c.h.b16 %v352
    %v2139 = vunpack.c.l.b16 %v353
    %v2140 = vunpack.c.h.b16 %v353
    %v2141 = vunpack.c.l.b16 %v354
    %v2142 = vunpack.c.h.b16 %v354
    %v2143 = vunpack.c.l.b16 %v355
    %v2144 = vunpack.c.h.b16 %v355
    %v2145 = vunpack.c.l.b16 %v356
    %v2146 = vunpack.c.h.b16 %v356
    %v2147 = vunpack.c.l.b16 %v357
    %v2148 = vunpack.c.h.b16 %v357
    %v2149 = vunpack.c.l.b16 %v358
    %v2150 = vunpack.c.h.b16 %v358
    %v2151 = vunpack.c.l.b16 %v359
    %v2152 = vunpack.c.h.b16 %v359
    %v2153 = vunpack.c.l.b16 %v360
    %v2154 = vunpack.c.h.b16 %v360
    %v2155 = vunpack.c.l.b16 %v361
    %v2156 = vunpack.c.h.b16 %v361
    %v2157 = vunpack.c.l.b16 %v362
    %v2158 = vunpack.c.h.b16 %v362
    %v2159 = vunpack.c.l.b16 %v363
    %v2160 = vunpack.c.h.b16 %v363
    %v2161 = vunpack.c.l.b16 %v364
    %v2162 = vunpack.c.h.b16 %v364
    %v2163 = vunpack.c.l.b16 %v365
    %v2164 = vunpack.c.h.b16 %v365
    %v2165 = vunpack.c.l.b16 %v366
    %v2166 = vunpack.c.h.b16 %v366
    %v2167 = vunpack.c.l.b16 %v367
    %v2168 = vunpack.c.h.b16 %v367
    %v2169 = vunpack.c.l.b16 %v368
    %v2170 = vunpack.c.h.b16 %v368
    %v2171 = vunpack.c.l.b16 %v369
    %v2172 = vunpack.c.h.b16 %v369
    %v2173 = vunpack.c.l.b16 %v370
    %v2174 = vunpack.c.h.b16 %v370
    %v2175 = vunpack.c.l.b16 %v371
    %v2176 = vunpack.c.h.b16 %v371
    %v2177 = vunpack.c.l.b16 %v372
    %v2178 = vunpack.c.h.b16 %v372
    %v2179 = vunpack.c.l.b16 %v373
    %v2180 = vunpack.c.h.b16 %v373
    %v2181 = vunpack.c.l.b16 %v374
    %v2182 = vunpack.c.h.b16 %v374
    %v2183 = vunpack.c.l.b16 %v375
    %v2184 = vunpack.c.h.b16 %v375
    %v2185 = vunpack.c.l.b16 %v376
    %v2186 = vunpack.c.h.b16 %v376
    %v2187 = vunpack.c.l.b16 %v377
    %v2188 = vunpack.c.h.b16 %v377
    %v2189 = vunpack.c.l.b16 %v378
    %v2190 = vunpack.c.h.b16 %v378
    %v2191 = vunpack.c.l.b16 %v379
    %v2192 = vunpack.c.h.b16 %v379
    %v2193 = vunpack.c.l.b16 %v380
    %v2194 = vunpack.c.h.b16 %v380
    %v2195 = vunpack.c.l.b16 %v381
    %v2196 = vunpack.c.h.b16 %v381
    %v2197 = vunpack.c.l.b16 %v382
    %v2198 = vunpack.c.h.b16 %v382
    %v2199 = vunpack.c.l.b16 %v383
    %v2200 = vunpack.c.h.b16 %v383
    %v2201 = vunpack.c.l.b16 %v384
    %v2202 = vunpack.c.h.b16 %v384
    %v2203 = vunpack.c.l.b16 %v385
    %v2204 = vunpack.c.h.b16 %v385
    %v2205 = vunpack.c.l.b16 %v386
    %v2206 = vunpack.c.h.b16 %v386
    %v2207 = vunpack.c.l.b16 %v387
    %v2208 = vunpack.c.h.b16 %v387
    %v2209 = vunpack.c.l.b16 %v388
    %v2210 = vunpack.c.h.b16 %v388
    %v2211 = vunpack.c.l.b16 %v389
    %v2212 = vunpack.c.h.b16 %v389
    %v2213 = vunpack.c.l.b16 %v390
    %v2214 = vunpack.c.h.b16 %v390
    %v2215 = vunpack.c.l.b16 %v391
    %v2216 = vunpack.c.h.b16 %v391
    %v2217 = vunpack.c.l.b16 %v392
    %v2218 = vunpack.c.h.b16 %v392
    %v2219 = vunpack.c.l.b16 %v393
    %v2220 = vunpack.c.h.b16 %v393
    %v2221 = vunpack.c.l.b16 %v394
    %v2222 = vunpack.c.h.b16 %v394
    %v2223 = vunpack.c.l.b16 %v395
    %v2224 = vunpack.c.h.b16 %v395
    %v2225 = vunpack.c.l.b16 %v396
    %v2226 = vunpack.c.h.b16 %v396
    %v2227 = vunpack.c.l.b16 %v397
    %v2228 = vunpack.c.h.b16 %v397
    %v2229 = vunpack.c.l.b16 %v398
    %v2230 = vunpack.c.h.b16 %v398
    %v2231 = vunpack.c.l.b16 %v399
    %v2232 = vunpack.c.h.b16 %v399
    %v2233 = vunpack.c.l.b16 %v400
    %v2234 = vunpack.c.h.b16 %v400
    %v2235 = vunpack.c.l.b16 %v401
    %v2236 = vunpack.c.h.b16 %v401
    %v2237 = vunpack.c.l.b16 %v402
    %v2238 = vunpack.c.h.b16 %v402
    %v2239 = vunpack.c.l.b16 %v403
    %v2240 = vunpack.c.h.b16 %v403
    %v2241 = vunpack.c.l.b16 %v404
    %v2242 = vunpack.c.h.b16 %v404
    %v2243 = vunpack.c.l.b16 %v405
    %v2244 = vunpack.c.h.b16 %v405
    %v2245 = vunpack.c.l.b16 %v406
    %v2246 = vunpack.c.h.b16 %v406
    %v2247 = vunpack.c.l.b16 %v407
    %v2248 = vunpack.c.h.b16 %v407
    %v2249 = vunpack.c.l.b16 %v408
    %v2250 = vunpack.c.h.b16 %v408
    %v2251 = vunpack.c.l.b16 %v409
    %v2252 = vunpack.c.h.b16 %v409
    %v2253 = vunpack.c.l.b16 %v410
    %v2254 = vunpack.c.h.b16 %v410
    %v2255 = vunpack.c.l.b16 %v411
    %v2256 = vunpack.c.h.b16 %v411
    %v2257 = vunpack.c.l.b16 %v412
    %v2258 = vunpack.c.h.b16 %v412
    %v2259 = vunpack.c.l.b16 %v413
    %v2260 = vunpack.c.h.b16 %v413
    %v2261 = vunpack.c.l.b16 %v414
    %v2262 = vunpack.c.h.b16 %v414
    %v2263 = vunpack.c.l.b16 %v415
    %v2264 = vunpack.c.h.b16 %v415
    %v2265 = vunpack.c.l.b16 %v416
    %v2266 = vunpack.c.h.b16 %v416
    %v2267 = vunpack.c.l.b16 %v417
    %v2268 = vunpack.c.h.b16 %v417
    %v2269 = vunpack.c.l.b16 %v418
    %v2270 = vunpack.c.h.b16 %v418
    %v2271 = vunpack.c.l.b16 %v419
    %v2272 = vunpack.c.h.b16 %v419
    %v2273 = vunpack.c.l.b16 %v420
    %v2274 = vunpack.c.h.b16 %v420
    %v2275 = vunpack.c.l.b16 %v421
    %v2276 = vunpack.c.h.b16 %v421
    %v2277 = vunpack.c.l.b16 %v422
    %v2278 = vunpack.c.h.b16 %v422
    %v2279 = vunpack.c.l.b16 %v423
    %v2280 = vunpack.c.h.b16 %v423
    %v2281 = vunpack.c.l.b16 %v424
    %v2282 = vunpack.c.h.b16 %v424
    %v2283 = vunpack.c.l.b16 %v425
    %v2284 = vunpack.c.h.b16 %v425
    %v2285 = vunpack.c.l.b16 %v426
    %v2286 = vunpack.c.h.b16 %v426
    %v2287 = vunpack.c.l.b16 %v427
    %v2288 = vunpack.c.h.b16 %v427
    %v2289 = vunpack.c.l.b16 %v428
    %v2290 = vunpack.c.h.b16 %v428
    %v2291 = vunpack.c.l.b16 %v429
    %v2292 = vunpack.c.h.b16 %v429
    %v2293 = vunpack.c.l.b16 %v430
    %v2294 = vunpack.c.h.b16 %v430
    %v2295 = vunpack.c.l.b16 %v431
    %v2296 = vunpack.c.h.b16 %v431
    %v2297 = vunpack.c.l.b16 %v432
    %v2298 = vunpack.c.h.b16 %v432
    %v2299 = vunpack.c.l.b16 %v433
    %v2300 = vunpack.c.h.b16 %v433
    %v2301 = vunpack.c.l.b16 %v434
    %v2302 = vunpack.c.h.b16 %v434
    %v2303 = vunpack.c.l.b16 %v435
    %v2304 = vunpack.c.h.b16 %v435
    %v2305 = vunpack.c.l.b16 %v436
    %v2306 = vunpack.c.h.b16 %v436
    %v2307 = vunpack.c.l.b16 %v437
    %v2308 = vunpack.c.h.b16 %v437
    %v2309 = vunpack.c.l.b16 %v438
    %v2310 = vunpack.c.h.b16 %v438
    %v2311 = vunpack.c.l.b16 %v439
    %v2312 = vunpack.c.h.b16 %v439
    %v2313 = vunpack.c.l.b16 %v440
    %v2314 = vunpack.c.h.b16 %v440
    %v2315 = vunpack.c.l.b16 %v441
    %v2316 = vunpack.c.h.b16 %v441
    %v2317 = vunpack.c.l.b16 %v442
    %v2318 = vunpack.c.h.b16 %v442
    %v2319 = vunpack.c.l.b16 %v443
    %v2320 = vunpack.c.h.b16 %v443
    %v2321 = vunpack.c.l.b16 %v444
    %v2322 = vunpack.c.h.b16 %v444
    %v2323 = vunpack.c.l.b16 %v445
    %v2324 = vunpack.c.h.b16 %v445
    %v2325 = vunpack.c.l.b16 %v446
    %v2326 = vunpack.c.h.b16 %v446
    %v2327 = vunpack.c.l.b16 %v447
    %v2328 = vunpack.c.h.b16 %v447
    %v2329 = vunpack.c.l.b16 %v448
    %v2330 = vunpack.c.h.b16 %v448
    %v2331 = vunpack.c.l.b16 %v449
    %v2332 = vunpack.c.h.b16 %v449
    %v2333 = vunpack.c.l.b16 %v450
    %v2334 = vunpack.c.h.b16 %v450
    %v2335 = vunpack.c.l.b16 %v451
    %v2336 = vunpack.c.h.b16 %v451
    %v2337 = vunpack.c.l.b16 %v452
    %v2338 = vunpack.c.h.b16 %v452
    %v2339 = vunpack.c.l.b16 %v453
    %v2340 = vunpack.c.h.b16 %v453
    %v2341 = vunpack.c.l.b16 %v454
    %v2342 = vunpack.c.h.b16 %v454
    %v2343 = vunpack.c.l.b16 %v455
    %v2344 = vunpack.c.h.b16 %v455
    %v2345 = vunpack.c.l.b16 %v456
    %v2346 = vunpack.c.h.b16 %v456
    %v2347 = vunpack.c.l.b16 %v457
    %v2348 = vunpack.c.h.b16 %v457
    %v2349 = vunpack.c.l.b16 %v458
    %v2350 = vunpack.c.h.b16 %v458
    %v2351 = vunpack.c.l.b16 %v459
    %v2352 = vunpack.c.h.b16 %v459
    %v2353 = vunpack.c.l.b16 %v460
    %v2354 = vunpack.c.h.b16 %v460
    %v2355 = vunpack.c.l.b16 %v461
    %v2356 = vunpack.c.h.b16 %v461
    %v2357 = vunpack.c.l.b16 %v462
    %v2358 = vunpack.c.h.b16 %v462
    %v2359 = vunpack.c.l.b16 %v463
    %v2360 = vunpack.c.h.b16 %v463
    %v2361 = vunpack.c.l.b16 %v464
    %v2362 = vunpack.c.h.b16 %v464
    %v2363 = vunpack.c.l.b16 %v465
    %v2364 = vunpack.c.h.b16 %v465
    %v2365 = vunpack.c.l.b16 %v466
    %v2366 = vunpack.c.h.b16 %v466
    %v2367 = vunpack.c.l.b16 %v467
    %v2368 = vunpack.c.h.b16 %v467
    %v2369 = vunpack.c.l.b16 %v468
    %v2370 = vunpack.c.h.b16 %v468
    %v2371 = vunpack.c.l.b16 %v469
    %v2372 = vunpack.c.h.b16 %v469
    %v2373 = vunpack.c.l.b16 %v470
    %v2374 = vunpack.c.h.b16 %v470
    %v2375 = vunpack.c.l.b16 %v471
    %v2376 = vunpack.c.h.b16 %v471
    %v2377 = vunpack.c.l.b16 %v472
    %v2378 = vunpack.c.h.b16 %v472
    %v2379 = vunpack.c.l.b16 %v473
    %v2380 = vunpack.c.h.b16 %v473
    %v2381 = vunpack.c.l.b16 %v474
    %v2382 = vunpack.c.h.b16 %v474
    %v2383 = vunpack.c.l.b16 %v475
    %v2384 = vunpack.c.h.b16 %v475
    %v2385 = vunpack.c.l.b16 %v476
    %v2386 = vunpack.c.h.b16 %v476
    %v2387 = vunpack.c.l.b16 %v477
    %v2388 = vunpack.c.h.b16 %v477
    %v2389 = vunpack.c.l.b16 %v478
    %v2390 = vunpack.c.h.b16 %v478
    %v2391 = vunpack.c.l.b16 %v479
    %v2392 = vunpack.c.h.b16 %v479
    %v2393 = vunpack.c.l.b16 %v480
    %v2394 = vunpack.c.h.b16 %v480
    %v2395 = vunpack.c.l.b16 %v481
    %v2396 = vunpack.c.h.b16 %v481
    %v2397 = vunpack.c.l.b16 %v482
    %v2398 = vunpack.c.h.b16 %v482
    %v2399 = vunpack.c.l.b16 %v483
    %v2400 = vunpack.c.h.b16 %v483
    %v2401 = vunpack.c.l.b16 %v484
    %v2402 = vunpack.c.h.b16 %v484
    %v2403 = vunpack.c.l.b16 %v485
    %v2404 = vunpack.c.h.b16 %v485
    %v2405 = vunpack.c.l.b16 %v486
    %v2406 = vunpack.c.h.b16 %v486
    %v2407 = vunpack.c.l.b16 %v487
    %v2408 = vunpack.c.h.b16 %v487
    %v2409 = vunpack.c.l.b16 %v488
    %v2410 = vunpack.c.h.b16 %v488
    %v2411 = vunpack.c.l.b16 %v489
    %v2412 = vunpack.c.h.b16 %v489
    %v2413 = vunpack.c.l.b16 %v490
    %v2414 = vunpack.c.h.b16 %v490
    %v2415 = vunpack.c.l.b16 %v491
    %v2416 = vunpack.c.h.b16 %v491
    %v2417 = vunpack.c.l.b16 %v492
    %v2418 = vunpack.c.h.b16 %v492
    %v2419 = vunpack.c.l.b16 %v493
    %v2420 = vunpack.c.h.b16 %v493
    %v2421 = vunpack.c.l.b16 %v494
    %v2422 = vunpack.c.h.b16 %v494
    %v2423 = vunpack.c.l.b16 %v495
    %v2424 = vunpack.c.h.b16 %v495
    %v2425 = vunpack.c.l.b16 %v496
    %v2426 = vunpack.c.h.b16 %v496
    %v2427 = vunpack.c.l.b16 %v497
    %v2428 = vunpack.c.h.b16 %v497
    %v2429 = vunpack.c.l.b16 %v498
    %v2430 = vunpack.c.h.b16 %v498
    %v2431 = vunpack.c.l.b16 %v499
    %v2432 = vunpack.c.h.b16 %v499
    %v2433 = vunpack.c.l.b16 %v500
    %v2434 = vunpack.c.h.b16 %v500
    %v2435 = vunpack.c.l.b16 %v501
    %v2436 = vunpack.c.h.b16 %v501
    %v2437 = vunpack.c.l.b16 %v502
    %v2438 = vunpack.c.h.b16 %v502
    %v2439 = vunpack.c.l.b16 %v503
    %v2440 = vunpack.c.h.b16 %v503
    %v2441 = vunpack.c.l.b16 %v504
    %v2442 = vunpack.c.h.b16 %v504
    %v2443 = vunpack.c.l.b16 %v505
    %v2444 = vunpack.c.h.b16 %v505
    %v2445 = vunpack.c.l.b16 %v506
    %v2446 = vunpack.c.h.b16 %v506
    %v2447 = vunpack.c.l.b16 %v507
    %v2448 = vunpack.c.h.b16 %v507
    %v2449 = vunpack.c.l.b16 %v508
    %v2450 = vunpack.c.h.b16 %v508
    %v2451 = vunpack.c.l.b16 %v509
    %v2452 = vunpack.c.h.b16 %v509
    %v2453 = vunpack.c.l.b16 %v510
    %v2454 = vunpack.c.h.b16 %v510
    %v2455 = vunpack.c.l.b16 %v511
    %v2456 = vunpack.c.h.b16 %v511
    %v2457 = vunpack.c.l.b16 %v512
    %v2458 = vunpack.c.h.b16 %v512
    %v2459 = vunpack.c.l.b16 %v513
    %v2460 = vunpack.c.h.b16 %v513
    %v2461 = vunpack.c.l.b16 %v514
    %v2462 = vunpack.c.h.b16 %v514
    %v2463 = vunpack.c.l.b16 %v515
    %v2464 = vunpack.c.h.b16 %v515
    %v2465 = vunpack.c.l.b16 %v516
    %v2466 = vunpack.c.h.b16 %v516
    %v2467 = vunpack.c.l.b16 %v517
    %v2468 = vunpack.c.h.b16 %v517
    %v2469 = vunpack.c.l.b16 %v518
    %v2470 = vunpack.c.h.b16 %v518
    %v2471 = vunpack.c.l.b16 %v519
    %v2472 = vunpack.c.h.b16 %v519
    %v2473 = vunpack.c.l.b16 %v520
    %v2474 = vunpack.c.h.b16 %v520
    %v2475 = vunpack.c.l.b16 %v521
    %v2476 = vunpack.c.h.b16 %v521
    %v2477 = vunpack.c.l.b16 %v522
    %v2478 = vunpack.c.h.b16 %v522
    %v2479 = vunpack.c.l.b16 %v523
    %v2480 = vunpack.c.h.b16 %v523
    %v2481 = vunpack.c.l.b16 %v524
    %v2482 = vunpack.c.h.b16 %v524
    %v2483 = vunpack.c.l.b16 %v525
    %v2484 = vunpack.c.h.b16 %v525
    %v2485 = vunpack.c.l.b16 %v526
    %v2486 = vunpack.c.h.b16 %v526
    %v2487 = vunpack.c.l.b16 %v527
    %v2488 = vunpack.c.h.b16 %v527
    %v2489 = vunpack.c.l.b16 %v528
    %v2490 = vunpack.c.h.b16 %v528
    %v2491 = vunpack.c.l.b16 %v529
    %v2492 = vunpack.c.h.b16 %v529
    %v2493 = vunpack.c.l.b16 %v530
    %v2494 = vunpack.c.h.b16 %v530
    %v2495 = vunpack.c.l.b16 %v531
    %v2496 = vunpack.c.h.b16 %v531
    %v2497 = vunpack.c.l.b16 %v532
    %v2498 = vunpack.c.h.b16 %v532
    %v2499 = vunpack.c.l.b16 %v533
    %v2500 = vunpack.c.h.b16 %v533
    %v2501 = vunpack.c.l.b16 %v534
    %v2502 = vunpack.c.h.b16 %v534
    %v2503 = vunpack.c.l.b16 %v535
    %v2504 = vunpack.c.h.b16 %v535
    %v2505 = vunpack.c.l.b16 %v536
    %v2506 = vunpack.c.h.b16 %v536
    %v2507 = vunpack.c.l.b16 %v537
    %v2508 = vunpack.c.h.b16 %v537
    %v2509 = vunpack.c.l.b16 %v538
    %v2510 = vunpack.c.h.b16 %v538
    %v2511 = vunpack.c.l.b16 %v539
    %v2512 = vunpack.c.h.b16 %v539
    %v2513 = vunpack.c.l.b16 %v540
    %v2514 = vunpack.c.h.b16 %v540
    %v2515 = vunpack.c.l.b16 %v541
    %v2516 = vunpack.c.h.b16 %v541
    %v2517 = vunpack.c.l.b16 %v542
    %v2518 = vunpack.c.h.b16 %v542
    %v2519 = vunpack.c.l.b16 %v543
    %v2520 = vunpack.c.h.b16 %v543
    %v2521 = vunpack.c.l.b16 %v544
    %v2522 = vunpack.c.h.b16 %v544
    %v2523 = vunpack.c.l.b16 %v545
    %v2524 = vunpack.c.h.b16 %v545
    %v2525 = vunpack.c.l.b16 %v546
    %v2526 = vunpack.c.h.b16 %v546
    %v2527 = vunpack.c.l.b16 %v547
    %v2528 = vunpack.c.h.b16 %v547
    %v2529 = vunpack.c.l.b16 %v548
    %v2530 = vunpack.c.h.b16 %v548
    %v2531 = vunpack.c.l.b16 %v549
    %v2532 = vunpack.c.h.b16 %v549
    %v2533 = vunpack.c.l.b16 %v550
    %v2534 = vunpack.c.h.b16 %v550
    %v2535 = vunpack.c.l.b16 %v551
    %v2536 = vunpack.c.h.b16 %v551
    %v2537 = vunpack.c.l.b16 %v552
    %v2538 = vunpack.c.h.b16 %v552
    %v2539 = vunpack.c.l.b16 %v553
    %v2540 = vunpack.c.h.b16 %v553
    %v2541 = vunpack.c.l.b16 %v554
    %v2542 = vunpack.c.h.b16 %v554
    %v2543 = vunpack.c.l.b16 %v555
    %v2544 = vunpack.c.h.b16 %v555
    %v2545 = vunpack.c.l.b16 %v556
    %v2546 = vunpack.c.h.b16 %v556
    %v2547 = vunpack.c.l.b16 %v557
    %v2548 = vunpack.c.h.b16 %v557
    %v2549 = vunpack.c.l.b16 %v558
    %v2550 = vunpack.c.h.b16 %v558
    %v2551 = vunpack.c.l.b16 %v559
    %v2552 = vunpack.c.h.b16 %v559
    %v2553 = vunpack.c.l.b16 %v560
    %v2554 = vunpack.c.h.b16 %v560
    %v2555 = vunpack.c.l.b16 %v561
    %v2556 = vunpack.c.h.b16 %v561
    %v2557 = vunpack.c.l.b16 %v562
    %v2558 = vunpack.c.h.b16 %v562
    %v2559 = vunpack.c.l.b16 %v563
    %v2560 = vunpack.c.h.b16 %v563
    %v2561 = vunpack.c.l.b16 %v564
    %v2562 = vunpack.c.h.b16 %v564
    %v2563 = vunpack.c.l.b16 %v565
    %v2564 = vunpack.c.h.b16 %v565
    %v2565 = vunpack.c.l.b16 %v566
    %v2566 = vunpack.c.h.b16 %v566
    %v2567 = vunpack.c.l.b16 %v567
    %v2568 = vunpack.c.h.b16 %v567
    %v2569 = vunpack.c.l.b16 %v568
    %v2570 = vunpack.c.h.b16 %v568
    %v2571 = vunpack.c.l.b16 %v569
    %v2572 = vunpack.c.h.b16 %v569
    %v2573 = vunpack.c.l.b16 %v570
    %v2574 = vunpack.c.h.b16 %v570
    %v2575 = vunpack.c.l.b16 %v571
    %v2576 = vunpack.c.h.b16 %v571
    %v2577 = vunpack.c.l.b16 %v572
    %v2578 = vunpack.c.h.b16 %v572
    %v2579 = vunpack.c.l.b16 %v573
    %v2580 = vunpack.c.h.b16 %v573
    %v2581 = vunpack.c.l.b16 %v574
    %v2582 = vunpack.c.h.b16 %v574
    %v2583 = vunpack.c.l.b16 %v575
    %v2584 = vunpack.c.h.b16 %v575
    %v2585 = vunpack.c.l.b16 %v576
    %v2586 = vunpack.c.h.b16 %v576
    %v2587 = vunpack.c.l.b16 %v577
    %v2588 = vunpack.c.h.b16 %v577
    %v2589 = vunpack.c.l.b16 %v578
    %v2590 = vunpack.c.h.b16 %v578
    %v2591 = vunpack.c.l.b16 %v579
    %v2592 = vunpack.c.h.b16 %v579
    %v2593 = vunpack.c.l.b16 %v580
    %v2594 = vunpack.c.h.b16 %v580
    %v2595 = vunpack.c.l.b16 %v581
    %v2596 = vunpack.c.h.b16 %v581
    %v2597 = vunpack.c.l.b16 %v582
    %v2598 = vunpack.c.h.b16 %v582
    %v2599 = vunpack.c.l.b16 %v583
    %v2600 = vunpack.c.h.b16 %v583
    %v2601 = vunpack.c.l.b16 %v584
    %v2602 = vunpack.c.h.b16 %v584
    %v2603 = vunpack.c.l.b16 %v585
    %v2604 = vunpack.c.h.b16 %v585
    %v2605 = vunpack.c.l.b16 %v586
    %v2606 = vunpack.c.h.b16 %v586
    %v2607 = vunpack.c.l.b16 %v587
    %v2608 = vunpack.c.h.b16 %v587
    %v2609 = vunpack.c.l.b16 %v588
    %v2610 = vunpack.c.h.b16 %v588
    %v2611 = vunpack.c.l.b16 %v589
    %v2612 = vunpack.c.h.b16 %v589
    %v2613 = vunpack.c.l.b16 %v590
    %v2614 = vunpack.c.h.b16 %v590
    %v2615 = vunpack.c.l.b16 %v591
    %v2616 = vunpack.c.h.b16 %v591
    %v2617 = vunpack.c.l.b16 %v592
    %v2618 = vunpack.c.h.b16 %v592
    %v2619 = vunpack.c.l.b16 %v593
    %v2620 = vunpack.c.h.b16 %v593
    %v2621 = vunpack.c.l.b16 %v594
    %v2622 = vunpack.c.h.b16 %v594
    %v2623 = vunpack.c.l.b16 %v595
    %v2624 = vunpack.c.h.b16 %v595
    %v2625 = vunpack.c.l.b16 %v596
    %v2626 = vunpack.c.h.b16 %v596
    %v2627 = vunpack.c.l.b16 %v597
    %v2628 = vunpack.c.h.b16 %v597
    %v2629 = vunpack.c.l.b16 %v598
    %v2630 = vunpack.c.h.b16 %v598
    %v2631 = vunpack.c.l.b16 %v599
    %v2632 = vunpack.c.h.b16 %v599
    %v2633 = vunpack.c.l.b16 %v600
    %v2634 = vunpack.c.h.b16 %v600
    %v2635 = vunpack.c.l.b16 %v601
    %v2636 = vunpack.c.h.b16 %v601
    %v2637 = vunpack.c.l.b16 %v602
    %v2638 = vunpack.c.h.b16 %v602
    %v2639 = vunpack.c.l.b16 %v603
    %v2640 = vunpack.c.h.b16 %v603
    %v2641 = vunpack.c.l.b16 %v604
    %v2642 = vunpack.c.h.b16 %v604
    %v2643 = vunpack.c.l.b16 %v605
    %v2644 = vunpack.c.h.b16 %v605
    %v2645 = vunpack.c.l.b16 %v606
    %v2646 = vunpack.c.h.b16 %v606
    %v2647 = vunpack.c.l.b16 %v607
    %v2648 = vunpack.c.h.b16 %v607
    %v2649 = vunpack.c.l.b16 %v608
    %v2650 = vunpack.c.h.b16 %v608
    %v2651 = vunpack.c.l.b16 %v609
    %v2652 = vunpack.c.h.b16 %v609
    %v2653 = vunpack.c.l.b16 %v610
    %v2654 = vunpack.c.h.b16 %v610
    %v2655 = vunpack.c.l.b16 %v611
    %v2656 = vunpack.c.h.b16 %v611
    %v2657 = vunpack.c.l.b16 %v612
    %v2658 = vunpack.c.h.b16 %v612
    %v2659 = vunpack.c.l.b16 %v613
    %v2660 = vunpack.c.h.b16 %v613
    %v2661 = vunpack.c.l.b16 %v614
    %v2662 = vunpack.c.h.b16 %v614
    %v2663 = vunpack.c.l.b16 %v615
    %v2664 = vunpack.c.h.b16 %v615
    %v2665 = vunpack.c.l.b16 %v616
    %v2666 = vunpack.c.h.b16 %v616
    %v2667 = vunpack.c.l.b16 %v617
    %v2668 = vunpack.c.h.b16 %v617
    %v2669 = vunpack.c.l.b16 %v618
    %v2670 = vunpack.c.h.b16 %v618
    %v2671 = vunpack.c.l.b16 %v619
    %v2672 = vunpack.c.h.b16 %v619
    %v2673 = vunpack.c.l.b16 %v620
    %v2674 = vunpack.c.h.b16 %v620
    %v2675 = vunpack.c.l.b16 %v621
    %v2676 = vunpack.c.h.b16 %v621
    %v2677 = vunpack.c.l.b16 %v622
    %v2678 = vunpack.c.h.b16 %v622
    %v2679 = vunpack.c.l.b16 %v623
    %v2680 = vunpack.c.h.b16 %v623
    %v2681 = vunpack.c.l.b16 %v624
    %v2682 = vunpack.c.h.b16 %v624
    %v2683 = vunpack.c.l.b16 %v625
    %v2684 = vunpack.c.h.b16 %v625
    %v2685 = vunpack.c.l.b16 %v626
    %v2686 = vunpack.c.h.b16 %v626
    %v2687 = vunpack.c.l.b16 %v627
    %v2688 = vunpack.c.h.b16 %v627
    %v2689 = vunpack.c.l.b16 %v628
    %v2690 = vunpack.c.h.b16 %v628
    %v2691 = vunpack.c.l.b16 %v629
    %v2692 = vunpack.c.h.b16 %v629
    %v2693 = vunpack.c.l.b16 %v630
    %v2694 = vunpack.c.h.b16 %v630
    %v2695 = vunpack.c.l.b16 %v631
    %v2696 = vunpack.c.h.b16 %v631
    %v2697 = vunpack.c.l.b16 %v632
    %v2698 = vunpack.c.h.b16 %v632
    %v2699 = vunpack.c.l.b16 %v633
    %v2700 = vunpack.c.h.b16 %v633
    %v2701 = vunpack.c.l.b16 %v634
    %v2702 = vunpack.c.h.b16 %v634
    %v2703 = vunpack.c.l.b16 %v635
    %v2704 = vunpack.c.h.b16 %v635
    %v2705 = vunpack.c.l.b16 %v636
    %v2706 = vunpack.c.h.b16 %v636
    %v2707 = vunpack.c.l.b16 %v637
    %v2708 = vunpack.c.h.b16 %v637
    %v2709 = vunpack.c.l.b16 %v638
    %v2710 = vunpack.c.h.b16 %v638
    %v2711 = vunpack.c.l.b16 %v639
    %v2712 = vunpack.c.h.b16 %v639
    %v2713 = vunpack.c.l.b16 %v640
    %v2714 = vunpack.c.h.b16 %v640
    %v2715 = vunpack.c.l.b16 %v641
    %v2716 = vunpack.c.h.b16 %v641
    %v2717 = vunpack.c.l.b16 %v642
    %v2718 = vunpack.c.h.b16 %v642
    %v2719 = vunpack.c.l.b16 %v643
    %v2720 = vunpack.c.h.b16 %v643
    %v2721 = vunpack.c.l.b16 %v644
    %v2722 = vunpack.c.h.b16 %v644
    %v2723 = vunpack.c.l.b16 %v645
    %v2724 = vunpack.c.h.b16 %v645
    %v2725 = vunpack.c.l.b16 %v646
    %v2726 = vunpack.c.h.b16 %v646
    %v2727 = vunpack.c.l.b16 %v647
    %v2728 = vunpack.c.h.b16 %v647
    %v2729 = vunpack.c.l.b16 %v648
    %v2730 = vunpack.c.h.b16 %v648
    %v2731 = vunpack.c.l.b16 %v649
    %v2732 = vunpack.c.h.b16 %v649
    %v2733 = vunpack.c.l.b16 %v650
    %v2734 = vunpack.c.h.b16 %v650
    %v2735 = vunpack.c.l.b16 %v651
    %v2736 = vunpack.c.h.b16 %v651
    %v2737 = vunpack.c.l.b16 %v652
    %v2738 = vunpack.c.h.b16 %v652
    %v2739 = vunpack.c.l.b16 %v653
    %v2740 = vunpack.c.h.b16 %v653
    %v2741 = vunpack.c.l.b16 %v654
    %v2742 = vunpack.c.h.b16 %v654
    %v2743 = vunpack.c.l.b16 %v655
    %v2744 = vunpack.c.h.b16 %v655
    %v2745 = vunpack.c.l.b16 %v656
    %v2746 = vunpack.c.h.b16 %v656
    %v2747 = vunpack.c.l.b16 %v657
    %v2748 = vunpack.c.h.b16 %v657
    %v2749 = vunpack.c.l.b16 %v658
    %v2750 = vunpack.c.h.b16 %v658
    %v2751 = vunpack.c.l.b16 %v659
    %v2752 = vunpack.c.h.b16 %v659
    %v2753 = vunpack.c.l.b16 %v660
    %v2754 = vunpack.c.h.b16 %v660
    %v2755 = vunpack.c.l.b16 %v661
    %v2756 = vunpack.c.h.b16 %v661
    %v2757 = vunpack.c.l.b16 %v662
    %v2758 = vunpack.c.h.b16 %v662
    %v2759 = vunpack.c.l.b16 %v663
    %v2760 = vunpack.c.h.b16 %v663
    %v2761 = vunpack.c.l.b16 %v664
    %v2762 = vunpack.c.h.b16 %v664
    %v2763 = vunpack.c.l.b16 %v665
    %v2764 = vunpack.c.h.b16 %v665
    %v2765 = vunpack.c.l.b16 %v666
    %v2766 = vunpack.c.h.b16 %v666
    %v2767 = vunpack.c.l.b16 %v667
    %v2768 = vunpack.c.h.b16 %v667
    %v2769 = vunpack.c.l.b16 %v668
    %v2770 = vunpack.c.h.b16 %v668
    %v2771 = vunpack.c.l.b16 %v669
    %v2772 = vunpack.c.h.b16 %v669
    %v2773 = vunpack.c.l.b16 %v670
    %v2774 = vunpack.c.h.b16 %v670
    %v2775 = vunpack.c.l.b16 %v671
    %v2776 = vunpack.c.h.b16 %v671
    %v2777 = vunpack.c.l.b16 %v672
    %v2778 = vunpack.c.h.b16 %v672
    %v2779 = vunpack.c.l.b16 %v673
    %v2780 = vunpack.c.h.b16 %v673
    %v2781 = vunpack.c.l.b16 %v674
    %v2782 = vunpack.c.h.b16 %v674
    %v2783 = vunpack.c.l.b16 %v675
    %v2784 = vunpack.c.h.b16 %v675
    %v2785 = vunpack.c.l.b16 %v676
    %v2786 = vunpack.c.h.b16 %v676
    %v2787 = vunpack.c.l.b16 %v677
    %v2788 = vunpack.c.h.b16 %v677
    %v2789 = vunpack.c.l.b16 %v678
    %v2790 = vunpack.c.h.b16 %v678
    %v2791 = vunpack.c.l.b16 %v679
    %v2792 = vunpack.c.h.b16 %v679
    %v2793 = vunpack.c.l.b16 %v680
    %v2794 = vunpack.c.h.b16 %v680
    %v2795 = vunpack.c.l.b16 %v681
    %v2796 = vunpack.c.h.b16 %v681
    %v2797 = vunpack.c.l.b16 %v682
    %v2798 = vunpack.c.h.b16 %v682
    %v2799 = vunpack.c.l.b16 %v683
    %v2800 = vunpack.c.h.b16 %v683
    %v2801 = vunpack.c.l.b16 %v684
    %v2802 = vunpack.c.h.b16 %v684
    %v2803 = vunpack.c.l.b16 %v685
    %v2804 = vunpack.c.h.b16 %v685
    %v2805 = vunpack.c.l.b16 %v686
    %v2806 = vunpack.c.h.b16 %v686
    %v2807 = vunpack.c.l.b16 %v687
    %v2808 = vunpack.c.h.b16 %v687
    %v2809 = vunpack.c.l.b16 %v688
    %v2810 = vunpack.c.h.b16 %v688
    %v2811 = vunpack.c.l.b16 %v689
    %v2812 = vunpack.c.h.b16 %v689
    %v2813 = vunpack.c.l.b16 %v690
    %v2814 = vunpack.c.h.b16 %v690
    %v2815 = vunpack.c.l.b16 %v691
    %v2816 = vunpack.c.h.b16 %v691
    %v2817 = vunpack.c.l.b16 %v692
    %v2818 = vunpack.c.h.b16 %v692
    %v2819 = vunpack.c.l.b16 %v693
    %v2820 = vunpack.c.h.b16 %v693
    %v2821 = vunpack.c.l.b16 %v694
    %v2822 = vunpack.c.h.b16 %v694
    %v2823 = vunpack.c.l.b16 %v695
    %v2824 = vunpack.c.h.b16 %v695
    %v2825 = vunpack.c.l.b16 %v696
    %v2826 = vunpack.c.h.b16 %v696
    %v2827 = vunpack.c.l.b16 %v697
    %v2828 = vunpack.c.h.b16 %v697
    %v2829 = vunpack.c.l.b16 %v698
    %v2830 = vunpack.c.h.b16 %v698
    %v2831 = vunpack.c.l.b16 %v699
    %v2832 = vunpack.c.h.b16 %v699
    %v2833 = vunpack.c.l.b16 %v700
    %v2834 = vunpack.c.h.b16 %v700
    %v2835 = vunpack.c.l.b16 %v701
    %v2836 = vunpack.c.h.b16 %v701
    %v2837 = vunpack.c.l.b16 %v702
    %v2838 = vunpack.c.h.b16 %v702
    %v2839 = vunpack.c.l.b16 %v703
    %v2840 = vunpack.c.h.b16 %v703
    %v2841 = vunpack.c.l.b16 %v704
    %v2842 = vunpack.c.h.b16 %v704
    %v2843 = vunpack.c.l.b16 %v705
    %v2844 = vunpack.c.h.b16 %v705
    %v2845 = vunpack.c.l.b16 %v706
    %v2846 = vunpack.c.h.b16 %v706
    %v2847 = vunpack.c.l.b16 %v707
    %v2848 = vunpack.c.h.b16 %v707
    %v2849 = vunpack.c.l.b16 %v708
    %v2850 = vunpack.c.h.b16 %v708
    %v2851 = vunpack.c.l.b16 %v709
    %v2852 = vunpack.c.h.b16 %v709
    %v2853 = vunpack.c.l.b16 %v710
    %v2854 = vunpack.c.h.b16 %v710
    %v2855 = vunpack.c.l.b16 %v711
    %v2856 = vunpack.c.h.b16 %v711
    %v2857 = vunpack.c.l.b16 %v712
    %v2858 = vunpack.c.h.b16 %v712
    %v2859 = vunpack.c.l.b16 %v713
    %v2860 = vunpack.c.h.b16 %v713
    %v2861 = vunpack.c.l.b16 %v714
    %v2862 = vunpack.c.h.b16 %v714
    %v2863 = vunpack.c.l.b16 %v715
    %v2864 = vunpack.c.h.b16 %v715
    %v2865 = vunpack.c.l.b16 %v716
    %v2866 = vunpack.c.h.b16 %v716
    %v2867 = vunpack.c.l.b16 %v717
    %v2868 = vunpack.c.h.b16 %v717
    %v2869 = vunpack.c.l.b16 %v718
    %v2870 = vunpack.c.h.b16 %v718
    %v2871 = vunpack.c.l.b16 %v719
    %v2872 = vunpack.c.h.b16 %v719
    %v2873 = vunpack.c.l.b16 %v720
    %v2874 = vunpack.c.h.b16 %v720
    %v2875 = vunpack.c.l.b16 %v721
    %v2876 = vunpack.c.h.b16 %v721
    %v2877 = vunpack.c.l.b16 %v722
    %v2878 = vunpack.c.h.b16 %v722
    %v2879 = vunpack.c.l.b16 %v723
    %v2880 = vunpack.c.h.b16 %v723
    %v2881 = vunpack.c.l.b16 %v724
    %v2882 = vunpack.c.h.b16 %v724
    %v2883 = vunpack.c.l.b16 %v725
    %v2884 = vunpack.c.h.b16 %v725
    %v2885 = vunpack.c.l.b16 %v726
    %v2886 = vunpack.c.h.b16 %v726
    %v2887 = vunpack.c.l.b16 %v727
    %v2888 = vunpack.c.h.b16 %v727
    %v2889 = vunpack.c.l.b16 %v728
    %v2890 = vunpack.c.h.b16 %v728
    %v2891 = vunpack.c.l.b16 %v729
    %v2892 = vunpack.c.h.b16 %v729
    %v2893 = vunpack.c.l.b16 %v730
    %v2894 = vunpack.c.h.b16 %v730
    %v2895 = vunpack.c.l.b16 %v731
    %v2896 = vunpack.c.h.b16 %v731
    %v2897 = vunpack.c.l.b16 %v732
    %v2898 = vunpack.c.h.b16 %v732
    %v2899 = vunpack.c.l.b16 %v733
    %v2900 = vunpack.c.h.b16 %v733
    %v2901 = vunpack.c.l.b16 %v734
    %v2902 = vunpack.c.h.b16 %v734
    %v2903 = vunpack.c.l.b16 %v735
    %v2904 = vunpack.c.h.b16 %v735
    %v2905 = vunpack.c.l.b16 %v736
    %v2906 = vunpack.c.h.b16 %v736
    %v2907 = vunpack.c.l.b16 %v737
    %v2908 = vunpack.c.h.b16 %v737
    %v2909 = vunpack.c.l.b16 %v738
    %v2910 = vunpack.c.h.b16 %v738
    %v2911 = vunpack.c.l.b16 %v739
    %v2912 = vunpack.c.h.b16 %v739
    %v2913 = vunpack.c.l.b16 %v740
    %v2914 = vunpack.c.h.b16 %v740
    %v2915 = vunpack.c.l.b16 %v741
    %v2916 = vunpack.c.h.b16 %v741
    %v2917 = vunpack.c.l.b16 %v742
    %v2918 = vunpack.c.h.b16 %v742
    %v2919 = vunpack.c.l.b16 %v743
    %v2920 = vunpack.c.h.b16 %v743
    %v2921 = vunpack.c.l.b16 %v744
    %v2922 = vunpack.c.h.b16 %v744
    %v2923 = vunpack.c.l.b16 %v745
    %v2924 = vunpack.c.h.b16 %v745
    %v2925 = vunpack.c.l.b16 %v746
    %v2926 = vunpack.c.h.b16 %v746
    %v2927 = vunpack.c.l.b16 %v747
    %v2928 = vunpack.c.h.b16 %v747
    %v2929 = vunpack.c.l.b16 %v748
    %v2930 = vunpack.c.h.b16 %v748
    %v2931 = vunpack.c.l.b16 %v749
    %v2932 = vunpack.c.h.b16 %v749
    %v2933 = vunpack.c.l.b16 %v750
    %v2934 = vunpack.c.h.b16 %v750
    %v2935 = vunpack.c.l.b16 %v751
    %v2936 = vunpack.c.h.b16 %v751
    %v2937 = vunpack.c.l.b16 %v752
    %v2938 = vunpack.c.h.b16 %v752
    %v2939 = vunpack.c.l.b16 %v753
    %v2940 = vunpack.c.h.b16 %v753
    %v2941 = vunpack.c.l.b16 %v754
    %v2942 = vunpack.c.h.b16 %v754
    %v2943 = vunpack.c.l.b16 %v755
    %v2944 = vunpack.c.h.b16 %v755
    %v2945 = vunpack.c.l.b16 %v756
    %v2946 = vunpack.c.h.b16 %v756
    %v2947 = vunpack.c.l.b16 %v757
    %v2948 = vunpack.c.h.b16 %v757
    %v2949 = vunpack.c.l.b16 %v758
    %v2950 = vunpack.c.h.b16 %v758
    %v2951 = vunpack.c.l.b16 %v759
    %v2952 = vunpack.c.h.b16 %v759
    %v2953 = vunpack.c.l.b16 %v760
    %v2954 = vunpack.c.h.b16 %v760
    %v2955 = vunpack.c.l.b16 %v761
    %v2956 = vunpack.c.h.b16 %v761
    %v2957 = vunpack.c.l.b16 %v762
    %v2958 = vunpack.c.h.b16 %v762
    %v2959 = vunpack.c.l.b16 %v763
    %v2960 = vunpack.c.h.b16 %v763
    %v2961 = vunpack.c.l.b16 %v764
    %v2962 = vunpack.c.h.b16 %v764
    %v2963 = vunpack.c.l.b16 %v765
    %v2964 = vunpack.c.h.b16 %v765
    %v2965 = vunpack.c.l.b16 %v766
    %v2966 = vunpack.c.h.b16 %v766
    %v2967 = vunpack.c.l.b16 %v767
    %v2968 = vunpack.c.h.b16 %v767
    %v2969 = vunpack.c.l.b16 %v768
    %v2970 = vunpack.c.h.b16 %v768
    %v2971 = vunpack.c.l.b16 %v769
    %v2972 = vunpack.c.h.b16 %v769
    %v2973 = vunpack.c.l.b16 %v770
    %v2974 = vunpack.c.h.b16 %v770
    %v2975 = vunpack.c.l.b16 %v771
    %v2976 = vunpack.c.h.b16 %v771
    %v2977 = vunpack.c.l.b16 %v772
    %v2978 = vunpack.c.h.b16 %v772
    %v2979 = vunpack.c.l.b16 %v773
    %v2980 = vunpack.c.h.b16 %v773
    %v2981 = vunpack.c.l.b16 %v774
    %v2982 = vunpack.c.h.b16 %v774
    %v2983 = vunpack.c.l.b16 %v775
    %v2984 = vunpack.c.h.b16 %v775
    %v2985 = vunpack.c.l.b16 %v776
    %v2986 = vunpack.c.h.b16 %v776
    %v2987 = vunpack.c.l.b16 %v777
    %v2988 = vunpack.c.h.b16 %v777
    %v2989 = vunpack.c.l.b16 %v778
    %v2990 = vunpack.c.h.b16 %v778
    %v2991 = vunpack.c.l.b16 %v779
    %v2992 = vunpack.c.h.b16 %v779
    %v2993 = vunpack.c.l.b16 %v780
    %v2994 = vunpack.c.h.b16 %v780
    %v2995 = vunpack.c.l.b16 %v781
    %v2996 = vunpack.c.h.b16 %v781
    %v2997 = vunpack.c.l.b16 %v782
    %v2998 = vunpack.c.h.b16 %v782
    %v2999 = vunpack.c.l.b16 %v783
    %v3000 = vunpack.c.h.b16 %v783
    %v3001 = vunpack.c.l.b16 %v784
    %v3002 = vunpack.c.h.b16 %v784
    %v3003 = vunpack.c.l.b16 %v785
    %v3004 = vunpack.c.h.b16 %v785
    %v3005 = vunpack.c.l.b16 %v786
    %v3006 = vunpack.c.h.b16 %v786
    %v3007 = vunpack.c.l.b16 %v787
    %v3008 = vunpack.c.h.b16 %v787
    %v3009 = vunpack.c.l.b16 %v788
    %v3010 = vunpack.c.h.b16 %v788
    %v3011 = vunpack.c.l.b16 %v789
    %v3012 = vunpack.c.h.b16 %v789
    %v3013 = vunpack.c.l.b16 %v790
    %v3014 = vunpack.c.h.b16 %v790
    %v3015 = vunpack.c.l.b16 %v791
    %v3016 = vunpack.c.h.b16 %v791
    %v3017 = vunpack.c.l.b16 %v792
    %v3018 = vunpack.c.h.b16 %v792
    %v3019 = vunpack.c.l.b16 %v793
    %v3020 = vunpack.c.h.b16 %v793
    %v3021 = vunpack.c.l.b16 %v794
    %v3022 = vunpack.c.h.b16 %v794
    %v3023 = vunpack.c.l.b16 %v795
    %v3024 = vunpack.c.h.b16 %v795
    %v3025 = vunpack.c.l.b16 %v796
    %v3026 = vunpack.c.h.b16 %v796
    %v3027 = vunpack.c.l.b16 %v797
    %v3028 = vunpack.c.h.b16 %v797
    %v3029 = vunpack.c.l.b16 %v798
    %v3030 = vunpack.c.h.b16 %v798
    %v3031 = vunpack.c.l.b16 %v799
    %v3032 = vunpack.c.h.b16 %v799
    %v3033 = vunpack.c.l.b16 %v800
    %v3034 = vunpack.c.h.b16 %v800
    %v3035 = vunpack.c.l.b16 %v801
    %v3036 = vunpack.c.h.b16 %v801
    %v3037 = vunpack.c.l.b16 %v802
    %v3038 = vunpack.c.h.b16 %v802
    %v3039 = vunpack.c.l.b16 %v803
    %v3040 = vunpack.c.h.b16 %v803
    %v3041 = vunpack.c.l.b16 %v804
    %v3042 = vunpack.c.h.b16 %v804
    %v3043 = vunpack.c.l.b16 %v805
    %v3044 = vunpack.c.h.b16 %v805
    %v3045 = vunpack.c.l.b16 %v806
    %v3046 = vunpack.c.h.b16 %v806
    %v3047 = vunpack.c.l.b16 %v807
    %v3048 = vunpack.c.h.b16 %v807
    %v3049 = vunpack.c.l.b16 %v808
    %v3050 = vunpack.c.h.b16 %v808
    %v3051 = vunpack.c.l.b16 %v809
    %v3052 = vunpack.c.h.b16 %v809
    %v3053 = vunpack.c.l.b16 %v810
    %v3054 = vunpack.c.h.b16 %v810
    %v3055 = vunpack.c.l.b16 %v811
    %v3056 = vunpack.c.h.b16 %v811
    %v3057 = vunpack.c.l.b16 %v812
    %v3058 = vunpack.c.h.b16 %v812
    %v3059 = vunpack.c.l.b16 %v813
    %v3060 = vunpack.c.h.b16 %v813
    %v3061 = vunpack.c.l.b16 %v814
    %v3062 = vunpack.c.h.b16 %v814
    %v3063 = vunpack.c.l.b16 %v815
    %v3064 = vunpack.c.h.b16 %v815
    %v3065 = vunpack.c.l.b16 %v816
    %v3066 = vunpack.c.h.b16 %v816
    %v3067 = vunpack.c.l.b16 %v817
    %v3068 = vunpack.c.h.b16 %v817
    %v3069 = vunpack.c.l.b16 %v818
    %v3070 = vunpack.c.h.b16 %v818
    %v3071 = vunpack.c.l.b16 %v819
    %v3072 = vunpack.c.h.b16 %v819
    %v3073 = vunpack.c.l.b16 %v820
    %v3074 = vunpack.c.h.b16 %v820
    %v3075 = vunpack.c.l.b16 %v821
    %v3076 = vunpack.c.h.b16 %v821
    %v3077 = vunpack.c.l.b16 %v822
    %v3078 = vunpack.c.h.b16 %v822
    %v3079 = vunpack.c.l.b16 %v823
    %v3080 = vunpack.c.h.b16 %v823
    %v3081 = vunpack.c.l.b16 %v824
    %v3082 = vunpack.c.h.b16 %v824
    %v3083 = vunpack.c.l.b16 %v825
    %v3084 = vunpack.c.h.b16 %v825
    %v3085 = vunpack.c.l.b16 %v826
    %v3086 = vunpack.c.h.b16 %v826
    %v3087 = vunpack.c.l.b16 %v827
    %v3088 = vunpack.c.h.b16 %v827
    %v3089 = vunpack.c.l.b16 %v828
    %v3090 = vunpack.c.h.b16 %v828
    %v3091 = vunpack.c.l.b16 %v829
    %v3092 = vunpack.c.h.b16 %v829
    %v3093 = vunpack.c.l.b16 %v830
    %v3094 = vunpack.c.h.b16 %v830
    %v3095 = vunpack.c.l.b16 %v831
    %v3096 = vunpack.c.h.b16 %v831
    %v3097 = vunpack.c.l.b16 %v832
    %v3098 = vunpack.c.h.b16 %v832
    %v3099 = vunpack.c.l.b16 %v833
    %v3100 = vunpack.c.h.b16 %v833
    %v3101 = vunpack.c.l.b16 %v834
    %v3102 = vunpack.c.h.b16 %v834
    %v3103 = vunpack.c.l.b16 %v835
    %v3104 = vunpack.c.h.b16 %v835
    %v3105 = vunpack.c.l.b16 %v836
    %v3106 = vunpack.c.h.b16 %v836
    %v3107 = vunpack.c.l.b16 %v837
    %v3108 = vunpack.c.h.b16 %v837
    %v3109 = vunpack.c.l.b16 %v838
    %v3110 = vunpack.c.h.b16 %v838
    %v3111 = vunpack.c.l.b16 %v839
    %v3112 = vunpack.c.h.b16 %v839
    %v3113 = vunpack.c.l.b16 %v840
    %v3114 = vunpack.c.h.b16 %v840
    %v3115 = vunpack.c.l.b16 %v841
    %v3116 = vunpack.c.h.b16 %v841
    %v3117 = vunpack.c.l.b16 %v842
    %v3118 = vunpack.c.h.b16 %v842
    %v3119 = vunpack.c.l.b16 %v843
    %v3120 = vunpack.c.h.b16 %v843
    %v3121 = vunpack.c.l.b16 %v844
    %v3122 = vunpack.c.h.b16 %v844
    %v3123 = vunpack.c.l.b16 %v845
    %v3124 = vunpack.c.h.b16 %v845
    %v3125 = vunpack.c.l.b16 %v846
    %v3126 = vunpack.c.h.b16 %v846
    %v3127 = vunpack.c.l.b16 %v847
    %v3128 = vunpack.c.h.b16 %v847
    %v3129 = vunpack.c.l.b16 %v848
    %v3130 = vunpack.c.h.b16 %v848
    %v3131 = vunpack.c.l.b16 %v849
    %v3132 = vunpack.c.h.b16 %v849
    %v3133 = vunpack.c.l.b16 %v850
    %v3134 = vunpack.c.h.b16 %v850
    %v3135 = vunpack.c.l.b16 %v851
    %v3136 = vunpack.c.h.b16 %v851
    %v3137 = vunpack.c.l.b16 %v852
    %v3138 = vunpack.c.h.b16 %v852
    %v3139 = vunpack.c.l.b16 %v853
    %v3140 = vunpack.c.h.b16 %v853
    %v3141 = vunpack.c.l.b16 %v854
    %v3142 = vunpack.c.h.b16 %v854
    %v3143 = vunpack.c.l.b16 %v855
    %v3144 = vunpack.c.h.b16 %v855
    %v3145 = vunpack.c.l.b16 %v856
    %v3146 = vunpack.c.h.b16 %v856
    %v3147 = vunpack.c.l.b16 %v857
    %v3148 = vunpack.c.h.b16 %v857
    %v3149 = vunpack.c.l.b16 %v858
    %v3150 = vunpack.c.h.b16 %v858
    %v3151 = vunpack.c.l.b16 %v859
    %v3152 = vunpack.c.h.b16 %v859
    %v3153 = vunpack.c.l.b16 %v860
    %v3154 = vunpack.c.h.b16 %v860
    %v3155 = vunpack.c.l.b16 %v861
    %v3156 = vunpack.c.h.b16 %v861
    %v3157 = vunpack.c.l.b16 %v862
    %v3158 = vunpack.c.h.b16 %v862
    %v3159 = vunpack.c.l.b16 %v863
    %v3160 = vunpack.c.h.b16 %v863
    %v3161 = vunpack.c.l.b16 %v864
    %v3162 = vunpack.c.h.b16 %v864
    %v3163 = vunpack.c.l.b16 %v865
    %v3164 = vunpack.c.h.b16 %v865
    %v3165 = vunpack.c.l.b16 %v866
    %v3166 = vunpack.c.h.b16 %v866
    %v3167 = vunpack.c.l.b16 %v867
    %v3168 = vunpack.c.h.b16 %v867
    %v3169 = vunpack.c.l.b16 %v868
    %v3170 = vunpack.c.h.b16 %v868
    %v3171 = vunpack.c.l.b16 %v869
    %v3172 = vunpack.c.h.b16 %v869
    %v3173 = vunpack.c.l.b16 %v870
    %v3174 = vunpack.c.h.b16 %v870
    %v3175 = vpack.c.b16 %v1655, %v1639
    %v3176 = vpack.c.b16 %v1656, %v1640
    %v3177 = vpack.c.b16 %v1657, %v1641
    %v3178 = vpack.c.b16 %v1658, %v1642
    %v3179 = vpack.c.b16 %v1659, %v1643
    %v3180 = vpack.c.b16 %v1660, %v1644
    %v3181 = vpack.c.b16 %v1661, %v1645
    %v3182 = vpack.c.b16 %v1662, %v1646
    %v3183 = vpack.c.b16 %v1663, %v1647
    %v3184 = vpack.c.b16 %v1664, %v1648
    %v3185 = vpack.c.b16 %v1665, %v1649
    %v3186 = vpack.c.b16 %v1666, %v1650
    %v3187 = vpack.c.b16 %v1667, %v1651
    %v3188 = vpack.c.b16 %v1668, %v1652
    %v3189 = vpack.c.b16 %v1669, %v1653
    %v3190 = vpack.c.b16 %v1670, %v1654
    %v3191 = vpack.c.b16 %v1687, %v1671
    %v3192 = vpack.c.b16 %v1688, %v1672
    %v3193 = vpack.c.b16 %v1689, %v1673
    %v3194 = vpack.c.b16 %v1690, %v1674
    %v3195 = vpack.c.b16 %v1691, %v1675
    %v3196 = vpack.c.b16 %v1692, %v1676
    %v3197 = vpack.c.b16 %v1693, %v1677
    %v3198 = vpack.c.b16 %v1694, %v1678
    %v3199 = vpack.c.b16 %v1695, %v1679
    %v3200 = vpack.c.b16 %v1696, %v1680
    %v3201 = vpack.c.b16 %v1697, %v1681
    %v3202 = vpack.c.b16 %v1698, %v1682
    %v3203 = vpack.c.b16 %v1699, %v1683
    %v3204 = vpack.c.b16 %v1700, %v1684
    %v3205 = vpack.c.b16 %v1701, %v1685
    %v3206 = vpack.c.b16 %v1702, %v1686
    %v3207 = vpack.c.b16 %v1719, %v1703
    %v3208 = vpack.c.b16 %v1720, %v1704
    %v3209 = vpack.c.b16 %v1721, %v1705
    %v3210 = vpack.c.b16 %v1722, %v1706
    %v3211 = vpack.c.b16 %v1723, %v1707
    %v3212 = vpack.c.b16 %v1724, %v1708
    %v3213 = vpack.c.b16 %v1725, %v1709
    %v3214 = vpack.c.b16 %v1726, %v1710
    %v3215 = vpack.c.b16 %v1727, %v1711
    %v3216 = vpack.c.b16 %v1728, %v1712
    %v3217 = vpack.c.b16 %v1729, %v1713
    %v3218 = vpack.c.b16 %v1730, %v1714
    %v3219 = vpack.c.b16 %v1731, %v1715
    %v3220 = vpack.c.b16 %v1732, %v1716
    %v3221 = vpack.c.b16 %v1733, %v1717
    %v3222 = vpack.c.b16 %v1734, %v1718
    %v3223 = vpack.c.b16 %v1751, %v1735
    %v3224 = vpack.c.b16 %v1752, %v1736
    %v3225 = vpack.c.b16 %v1753, %v1737
    %v3226 = vpack.c.b16 %v1754, %v1738
    %v3227 = vpack.c.b16 %v1755, %v1739
    %v3228 = vpack.c.b16 %v1756, %v1740
    %v3229 = vpack.c.b16 %v1757, %v1741
    %v3230 = vpack.c.b16 %v1758, %v1742
    %v3231 = vpack.c.b16 %v1759, %v1743
    %v3232 = vpack.c.b16 %v1760, %v1744
    %v3233 = vpack.c.b16 %v1761, %v1745
    %v3234 = vpack.c.b16 %v1762, %v1746
    %v3235 = vpack.c.b16 %v1763, %v1747
    %v3236 = vpack.c.b16 %v1764, %v1748
    %v3237 = vpack.c.b16 %v1765, %v1749
    %v3238 = vpack.c.b16 %v1766, %v1750
    %v3239 = vpack.c.b16 %v1783, %v1767
    %v3240 = vpack.c.b16 %v1784, %v1768
    %v3241 = vpack.c.b16 %v1785, %v1769
    %v3242 = vpack.c.b16 %v1786, %v1770
    %v3243 = vpack.c.b16 %v1787, %v1771
    %v3244 = vpack.c.b16 %v1788, %v1772
    %v3245 = vpack.c.b16 %v1789, %v1773
    %v3246 = vpack.c.b16 %v1790, %v1774
    %v3247 = vpack.c.b16 %v1791, %v1775
    %v3248 = vpack.c.b16 %v1792, %v1776
    %v3249 = vpack.c.b16 %v1793, %v1777
    %v3250 = vpack.c.b16 %v1794, %v1778
    %v3251 = vpack.c.b16 %v1795, %v1779
    %v3252 = vpack.c.b16 %v1796, %v1780
    %v3253 = vpack.c.b16 %v1797, %v1781
    %v3254 = vpack.c.b16 %v1798, %v1782
    %v3255 = vpack.c.b16 %v1815, %v1799
    %v3256 = vpack.c.b16 %v1816, %v1800
    %v3257 = vpack.c.b16 %v1817, %v1801
    %v3258 = vpack.c.b16 %v1818, %v1802
    %v3259 = vpack.c.b16 %v1819, %v1803
    %v3260 = vpack.c.b16 %v1820, %v1804
    %v3261 = vpack.c.b16 %v1821, %v1805
    %v3262 = vpack.c.b16 %v1822, %v1806
    %v3263 = vpack.c.b16 %v1823, %v1807
    %v3264 = vpack.c.b16 %v1824, %v1808
    %v3265 = vpack.c.b16 %v1825, %v1809
    %v3266 = vpack.c.b16 %v1826, %v1810
    %v3267 = vpack.c.b16 %v1827, %v1811
    %v3268 = vpack.c.b16 %v1828, %v1812
    %v3269 = vpack.c.b16 %v1829, %v1813
    %v3270 = vpack.c.b16 %v1830, %v1814
    %v3271 = vpack.c.b16 %v1847, %v1831
    %v3272 = vpack.c.b16 %v1848, %v1832
    %v3273 = vpack.c.b16 %v1849, %v1833
    %v3274 = vpack.c.b16 %v1850, %v1834
    %v3275 = vpack.c.b16 %v1851, %v1835
    %v3276 = vpack.c.b16 %v1852, %v1836
    %v3277 = vpack.c.b16 %v1853, %v1837
    %v3278 = vpack.c.b16 %v1854, %v1838
    %v3279 = vpack.c.b16 %v1855, %v1839
    %v3280 = vpack.c.b16 %v1856, %v1840
    %v3281 = vpack.c.b16 %v1857, %v1841
    %v3282 = vpack.c.b16 %v1858, %v1842
    %v3283 = vpack.c.b16 %v1859, %v1843
    %v3284 = vpack.c.b16 %v1860, %v1844
    %v3285 = vpack.c.b16 %v1861, %v1845
    %v3286 = vpack.c.b16 %v1862, %v1846
    %v3287 = vpack.c.b16 %v1879, %v1863
    %v3288 = vpack.c.b16 %v1880, %v1864
    %v3289 = vpack.c.b16 %v1881, %v1865
    %v3290 = vpack.c.b16 %v1882, %v1866
    %v3291 = vpack.c.b16 %v1883, %v1867
    %v3292 = vpack.c.b16 %v1884, %v1868
    %v3293 = vpack.c.b16 %v1885, %v1869
    %v3294 = vpack.c.b16 %v1886, %v1870
    %v3295 = vpack.c.b16 %v1887, %v1871
    %v3296 = vpack.c.b16 %v1888, %v1872
    %v3297 = vpack.c.b16 %v1889, %v1873
    %v3298 = vpack.c.b16 %v1890, %v1874
    %v3299 = vpack.c.b16 %v1891, %v1875
    %v3300 = vpack.c.b16 %v1892, %v1876
    %v3301 = vpack.c.b16 %v1893, %v1877
    %v3302 = vpack.c.b16 %v1894, %v1878
    %v3303 = vpack.c.b16 %v1911, %v1895
    %v3304 = vpack.c.b16 %v1912, %v1896
    %v3305 = vpack.c.b16 %v1913, %v1897
    %v3306 = vpack.c.b16 %v1914, %v1898
    %v3307 = vpack.c.b16 %v1915, %v1899
    %v3308 = vpack.c.b16 %v1916, %v1900
    %v3309 = vpack.c.b16 %v1917, %v1901
    %v3310 = vpack.c.b16 %v1918, %v1902
    %v3311 = vpack.c.b16 %v1919, %v1903
    %v3312 = vpack.c.b16 %v1920, %v1904
    %v3313 = vpack.c.b16 %v1921, %v1905
    %v3314 = vpack.c.b16 %v1922, %v1906
    %v3315 = vpack.c.b16 %v1923, %v1907
    %v3316 = vpack.c.b16 %v1924, %v1908
    %v3317 = vpack.c.b16 %v1925, %v1909
    %v3318 = vpack.c.b16 %v1926, %v1910
    %v3319 = vpack.c.b16 %v1943, %v1927
    %v3320 = vpack.c.b16 %v1944, %v1928
    %v3321 = vpack.c.b16 %v1945, %v1929
    %v3322 = vpack.c.b16 %v1946, %v1930
    %v3323 = vpack.c.b16 %v1947, %v1931
    %v3324 = vpack.c.b16 %v1948, %v1932
    %v3325 = vpack.c.b16 %v1949, %v1933
    %v3326 = vpack.c.b16 %v1950, %v1934
    %v3327 = vpack.c.b16 %v1951, %v1935
    %v3328 = vpack.c.b16 %v1952, %v1936
    %v3329 = vpack.c.b16 %v1953, %v1937
    %v3330 = vpack.c.b16 %v1954, %v1938
    %v3331 = vpack.c.b16 %v1955, %v1939
    %v3332 = vpack.c.b16 %v1956, %v1940
    %v3333 = vpack.c.b16 %v1957, %v1941
    %v3334 = vpack.c.b16 %v1958, %v1942
    %v3335 = vpack.c.b16 %v1975, %v1959
    %v3336 = vpack.c.b16 %v1976, %v1960
    %v3337 = vpack.c.b16 %v1977, %v1961
    %v3338 = vpack.c.b16 %v1978, %v1962
    %v3339 = vpack.c.b16 %v1979, %v1963
    %v3340 = vpack.c.b16 %v1980, %v1964
    %v3341 = vpack.c.b16 %v1981, %v1965
    %v3342 = vpack.c.b16 %v1982, %v1966
    %v3343 = vpack.c.b16 %v1983, %v1967
    %v3344 = vpack.c.b16 %v1984, %v1968
    %v3345 = vpack.c.b16 %v1985, %v1969
    %v3346 = vpack.c.b16 %v1986, %v1970
    %v3347 = vpack.c.b16 %v1987, %v1971
    %v3348 = vpack.c.b16 %v1988, %v1972
    %v3349 = vpack.c.b16 %v1989, %v1973
    %v3350 = vpack.c.b16 %v1990, %v1974
    %v3351 = vpack.c.b16 %v2007, %v1991
    %v3352 = vpack.c.b16 %v2008, %v1992
    %v3353 = vpack.c.b16 %v2009, %v1993
    %v3354 = vpack.c.b16 %v2010, %v1994
    %v3355 = vpack.c.b16 %v2011, %v1995
    %v3356 = vpack.c.b16 %v2012, %v1996
    %v3357 = vpack.c.b16 %v2013, %v1997
    %v3358 = vpack.c.b16 %v2014, %v1998
    %v3359 = vpack.c.b16 %v2015, %v1999
    %v3360 = vpack.c.b16 %v2016, %v2000
    %v3361 = vpack.c.b16 %v2017, %v2001
    %v3362 = vpack.c.b16 %v2018, %v2002
    %v3363 = vpack.c.b16 %v2019, %v2003
    %v3364 = vpack.c.b16 %v2020, %v2004
    %v3365 = vpack.c.b16 %v2021, %v2005
    %v3366 = vpack.c.b16 %v2022, %v2006
    %v3367 = vpack.c.b16 %v2039, %v2023
    %v3368 = vpack.c.b16 %v2040, %v2024
    %v3369 = vpack.c.b16 %v2041, %v2025
    %v3370 = vpack.c.b16 %v2042, %v2026
    %v3371 = vpack.c.b16 %v2043, %v2027
    %v3372 = vpack.c.b16 %v2044, %v2028
    %v3373 = vpack.c.b16 %v2045, %v2029
    %v3374 = vpack.c.b16 %v2046, %v2030
    %v3375 = vpack.c.b16 %v2047, %v2031
    %v3376 = vpack.c.b16 %v2048, %v2032
    %v3377 = vpack.c.b16 %v2049, %v2033
    %v3378 = vpack.c.b16 %v2050, %v2034
    %v3379 = vpack.c.b16 %v2051, %v2035
    %v3380 = vpack.c.b16 %v2052, %v2036
    %v3381 = vpack.c.b16 %v2053, %v2037
    %v3382 = vpack.c.b16 %v2054, %v2038
    %v3383 = vpack.c.b16 %v2071, %v2055
    %v3384 = vpack.c.b16 %v2072, %v2056
    %v3385 = vpack.c.b16 %v2073, %v2057
    %v3386 = vpack.c.b16 %v2074, %v2058
    %v3387 = vpack.c.b16 %v2075, %v2059
    %v3388 = vpack.c.b16 %v2076, %v2060
    %v3389 = vpack.c.b16 %v2077, %v2061
    %v3390 = vpack.c.b16 %v2078, %v2062
    %v3391 = vpack.c.b16 %v2079, %v2063
    %v3392 = vpack.c.b16 %v2080, %v2064
    %v3393 = vpack.c.b16 %v2081, %v2065
    %v3394 = vpack.c.b16 %v2082, %v2066
    %v3395 = vpack.c.b16 %v2083, %v2067
    %v3396 = vpack.c.b16 %v2084, %v2068
    %v3397 = vpack.c.b16 %v2085, %v2069
    %v3398 = vpack.c.b16 %v2086, %v2070
    %v3399 = vpack.c.b16 %v2103, %v2087
    %v3400 = vpack.c.b16 %v2104, %v2088
    %v3401 = vpack.c.b16 %v2105, %v2089
    %v3402 = vpack.c.b16 %v2106, %v2090
    %v3403 = vpack.c.b16 %v2107, %v2091
    %v3404 = vpack.c.b16 %v2108, %v2092
    %v3405 = vpack.c.b16 %v2109, %v2093
    %v3406 = vpack.c.b16 %v2110, %v2094
    %v3407 = vpack.c.b16 %v2111, %v2095
    %v3408 = vpack.c.b16 %v2112, %v2096
    %v3409 = vpack.c.b16 %v2113, %v2097
    %v3410 = vpack.c.b16 %v2114, %v2098
    %v3411 = vpack.c.b16 %v2115, %v2099
    %v3412 = vpack.c.b16 %v2116, %v2100
    %v3413 = vpack.c.b16 %v2117, %v2101
    %v3414 = vpack.c.b16 %v2118, %v2102
    %v3415 = vpack.c.b16 %v2135, %v2119
    %v3416 = vpack.c.b16 %v2136, %v2120
    %v3417 = vpack.c.b16 %v2137, %v2121
    %v3418 = vpack.c.b16 %v2138, %v2122
    %v3419 = vpack.c.b16 %v2139, %v2123
    %v3420 = vpack.c.b16 %v2140, %v2124
    %v3421 = vpack.c.b16 %v2141, %v2125
    %v3422 = vpack.c.b16 %v2142, %v2126
    %v3423 = vpack.c.b16 %v2143, %v2127
    %v3424 = vpack.c.b16 %v2144, %v2128
    %v3425 = vpack.c.b16 %v2145, %v2129
    %v3426 = vpack.c.b16 %v2146, %v2130
    %v3427 = vpack.c.b16 %v2147, %v2131
    %v3428 = vpack.c.b16 %v2148, %v2132
    %v3429 = vpack.c.b16 %v2149, %v2133
    %v3430 = vpack.c.b16 %v2150, %v2134
    %v3431 = vpack.c.b16 %v2167, %v2151
    %v3432 = vpack.c.b16 %v2168, %v2152
    %v3433 = vpack.c.b16 %v2169, %v2153
    %v3434 = vpack.c.b16 %v2170, %v2154
    %v3435 = vpack.c.b16 %v2171, %v2155
    %v3436 = vpack.c.b16 %v2172, %v2156
    %v3437 = vpack.c.b16 %v2173, %v2157
    %v3438 = vpack.c.b16 %v2174, %v2158
    %v3439 = vpack.c.b16 %v2175, %v2159
    %v3440 = vpack.c.b16 %v2176, %v2160
    %v3441 = vpack.c.b16 %v2177, %v2161
    %v3442 = vpack.c.b16 %v2178, %v2162
    %v3443 = vpack.c.b16 %v2179, %v2163
    %v3444 = vpack.c.b16 %v2180, %v2164
    %v3445 = vpack.c.b16 %v2181, %v2165
    %v3446 = vpack.c.b16 %v2182, %v2166
    %v3447 = vpack.c.b16 %v2199, %v2183
    %v3448 = vpack.c.b16 %v2200, %v2184
    %v3449 = vpack.c.b16 %v2201, %v2185
    %v3450 = vpack.c.b16 %v2202, %v2186
    %v3451 = vpack.c.b16 %v2203, %v2187
    %v3452 = vpack.c.b16 %v2204, %v2188
    %v3453 = vpack.c.b16 %v2205, %v2189
    %v3454 = vpack.c.b16 %v2206, %v2190
    %v3455 = vpack.c.b16 %v2207, %v2191
    %v3456 = vpack.c.b16 %v2208, %v2192
    %v3457 = vpack.c.b16 %v2209, %v2193
    %v3458 = vpack.c.b16 %v2210, %v2194
    %v3459 = vpack.c.b16 %v2211, %v2195
    %v3460 = vpack.c.b16 %v2212, %v2196
    %v3461 = vpack.c.b16 %v2213, %v2197
    %v3462 = vpack.c.b16 %v2214, %v2198
    %v3463 = vpack.c.b16 %v2231, %v2215
    %v3464 = vpack.c.b16 %v2232, %v2216
    %v3465 = vpack.c.b16 %v2233, %v2217
    %v3466 = vpack.c.b16 %v2234, %v2218
    %v3467 = vpack.c.b16 %v2235, %v2219
    %v3468 = vpack.c.b16 %v2236, %v2220
    %v3469 = vpack.c.b16 %v2237, %v2221
    %v3470 = vpack.c.b16 %v2238, %v2222
    %v3471 = vpack.c.b16 %v2239, %v2223
    %v3472 = vpack.c.b16 %v2240, %v2224
    %v3473 = vpack.c.b16 %v2241, %v2225
    %v3474 = vpack.c.b16 %v2242, %v2226
    %v3475 = vpack.c.b16 %v2243, %v2227
    %v3476 = vpack.c.b16 %v2244, %v2228
    %v3477 = vpack.c.b16 %v2245, %v2229
    %v3478 = vpack.c.b16 %v2246, %v2230
    %v3479 = vpack.c.b16 %v2263, %v2247
    %v3480 = vpack.c.b16 %v2264, %v2248
    %v3481 = vpack.c.b16 %v2265, %v2249
    %v3482 = vpack.c.b16 %v2266, %v2250
    %v3483 = vpack.c.b16 %v2267, %v2251
    %v3484 = vpack.c.b16 %v2268, %v2252
    %v3485 = vpack.c.b16 %v2269, %v2253
    %v3486 = vpack.c.b16 %v2270, %v2254
    %v3487 = vpack.c.b16 %v2271, %v2255
    %v3488 = vpack.c.b16 %v2272, %v2256
    %v3489 = vpack.c.b16 %v2273, %v2257
    %v3490 = vpack.c.b16 %v2274, %v2258
    %v3491 = vpack.c.b16 %v2275, %v2259
    %v3492 = vpack.c.b16 %v2276, %v2260
    %v3493 = vpack.c.b16 %v2277, %v2261
    %v3494 = vpack.c.b16 %v2278, %v2262
    %v3495 = vpack.c.b16 %v2295, %v2279
    %v3496 = vpack.c.b16 %v2296, %v2280
    %v3497 = vpack.c.b16 %v2297, %v2281
    %v3498 = vpack.c.b16 %v2298, %v2282
    %v3499 = vpack.c.b16 %v2299, %v2283
    %v3500 = vpack.c.b16 %v2300, %v2284
    %v3501 = vpack.c.b16 %v2301, %v2285
    %v3502 = vpack.c.b16 %v2302, %v2286
    %v3503 = vpack.c.b16 %v2303, %v2287
    %v3504 = vpack.c.b16 %v2304, %v2288
    %v3505 = vpack.c.b16 %v2305, %v2289
    %v3506 = vpack.c.b16 %v2306, %v2290
    %v3507 = vpack.c.b16 %v2307, %v2291
    %v3508 = vpack.c.b16 %v2308, %v2292
    %v3509 = vpack.c.b16 %v2309, %v2293
    %v3510 = vpack.c.b16 %v2310, %v2294
    %v3511 = vpack.c.b16 %v2327, %v2311
    %v3512 = vpack.c.b16 %v2328, %v2312
    %v3513 = vpack.c.b16 %v2329, %v2313
    %v3514 = vpack.c.b16 %v2330, %v2314
    %v3515 = vpack.c.b16 %v2331, %v2315
    %v3516 = vpack.c.b16 %v2332, %v2316
    %v3517 = vpack.c.b16 %v2333, %v2317
    %v3518 = vpack.c.b16 %v2334, %v2318
    %v3519 = vpack.c.b16 %v2335, %v2319
    %v3520 = vpack.c.b16 %v2336, %v2320
    %v3521 = vpack.c.b16 %v2337, %v2321
    %v3522 = vpack.c.b16 %v2338, %v2322
    %v3523 = vpack.c.b16 %v2339, %v2323
    %v3524 = vpack.c.b16 %v2340, %v2324
    %v3525 = vpack.c.b16 %v2341, %v2325
    %v3526 = vpack.c.b16 %v2342, %v2326
    %v3527 = vpack.c.b16 %v2359, %v2343
    %v3528 = vpack.c.b16 %v2360, %v2344
    %v3529 = vpack.c.b16 %v2361, %v2345
    %v3530 = vpack.c.b16 %v2362, %v2346
    %v3531 = vpack.c.b16 %v2363, %v2347
    %v3532 = vpack.c.b16 %v2364, %v2348
    %v3533 = vpack.c.b16 %v2365, %v2349
    %v3534 = vpack.c.b16 %v2366, %v2350
    %v3535 = vpack.c.b16 %v2367, %v2351
    %v3536 = vpack.c.b16 %v2368, %v2352
    %v3537 = vpack.c.b16 %v2369, %v2353
    %v3538 = vpack.c.b16 %v2370, %v2354
    %v3539 = vpack.c.b16 %v2371, %v2355
    %v3540 = vpack.c.b16 %v2372, %v2356
    %v3541 = vpack.c.b16 %v2373, %v2357
    %v3542 = vpack.c.b16 %v2374, %v2358
    %v3543 = vpack.c.b16 %v2391, %v2375
    %v3544 = vpack.c.b16 %v2392, %v2376
    %v3545 = vpack.c.b16 %v2393, %v2377
    %v3546 = vpack.c.b16 %v2394, %v2378
    %v3547 = vpack.c.b16 %v2395, %v2379
    %v3548 = vpack.c.b16 %v2396, %v2380
    %v3549 = vpack.c.b16 %v2397, %v2381
    %v3550 = vpack.c.b16 %v2398, %v2382
    %v3551 = vpack.c.b16 %v2399, %v2383
    %v3552 = vpack.c.b16 %v2400, %v2384
    %v3553 = vpack.c.b16 %v2401, %v2385
    %v3554 = vpack.c.b16 %v2402, %v2386
    %v3555 = vpack.c.b16 %v2403, %v2387
    %v3556 = vpack.c.b16 %v2404, %v2388
    %v3557 = vpack.c.b16 %v2405, %v2389
    %v3558 = vpack.c.b16 %v2406, %v2390
    %v3559 = vpack.c.b16 %v2423, %v2407
    %v3560 = vpack.c.b16 %v2424, %v2408
    %v3561 = vpack.c.b16 %v2425, %v2409
    %v3562 = vpack.c.b16 %v2426, %v2410
    %v3563 = vpack.c.b16 %v2427, %v2411
    %v3564 = vpack.c.b16 %v2428, %v2412
    %v3565 = vpack.c.b16 %v2429, %v2413
    %v3566 = vpack.c.b16 %v2430, %v2414
    %v3567 = vpack.c.b16 %v2431, %v2415
    %v3568 = vpack.c.b16 %v2432, %v2416
    %v3569 = vpack.c.b16 %v2433, %v2417
    %v3570 = vpack.c.b16 %v2434, %v2418
    %v3571 = vpack.c.b16 %v2435, %v2419
    %v3572 = vpack.c.b16 %v2436, %v2420
    %v3573 = vpack.c.b16 %v2437, %v2421
    %v3574 = vpack.c.b16 %v2438, %v2422
    %v3575 = vpack.c.b16 %v2455, %v2439
    %v3576 = vpack.c.b16 %v2456, %v2440
    %v3577 = vpack.c.b16 %v2457, %v2441
    %v3578 = vpack.c.b16 %v2458, %v2442
    %v3579 = vpack.c.b16 %v2459, %v2443
    %v3580 = vpack.c.b16 %v2460, %v2444
    %v3581 = vpack.c.b16 %v2461, %v2445
    %v3582 = vpack.c.b16 %v2462, %v2446
    %v3583 = vpack.c.b16 %v2463, %v2447
    %v3584 = vpack.c.b16 %v2464, %v2448
    %v3585 = vpack.c.b16 %v2465, %v2449
    %v3586 = vpack.c.b16 %v2466, %v2450
    %v3587 = vpack.c.b16 %v2467, %v2451
    %v3588 = vpack.c.b16 %v2468, %v2452
    %v3589 = vpack.c.b16 %v2469, %v2453
    %v3590 = vpack.c.b16 %v2470, %v2454
    %v3591 = vpack.c.b16 %v2487, %v2471
    %v3592 = vpack.c.b16 %v2488, %v2472
    %v3593 = vpack.c.b16 %v2489, %v2473
    %v3594 = vpack.c.b16 %v2490, %v2474
    %v3595 = vpack.c.b16 %v2491, %v2475
    %v3596 = vpack.c.b16 %v2492, %v2476
    %v3597 = vpack.c.b16 %v2493, %v2477
    %v3598 = vpack.c.b16 %v2494, %v2478
    %v3599 = vpack.c.b16 %v2495, %v2479
    %v3600 = vpack.c.b16 %v2496, %v2480
    %v3601 = vpack.c.b16 %v2497, %v2481
    %v3602 = vpack.c.b16 %v2498, %v2482
    %v3603 = vpack.c.b16 %v2499, %v2483
    %v3604 = vpack.c.b16 %v2500, %v2484
    %v3605 = vpack.c.b16 %v2501, %v2485
    %v3606 = vpack.c.b16 %v2502, %v2486
    %v3607 = vpack.c.b16 %v2519, %v2503
    %v3608 = vpack.c.b16 %v2520, %v2504
    %v3609 = vpack.c.b16 %v2521, %v2505
    %v3610 = vpack.c.b16 %v2522, %v2506
    %v3611 = vpack.c.b16 %v2523, %v2507
    %v3612 = vpack.c.b16 %v2524, %v2508
    %v3613 = vpack.c.b16 %v2525, %v2509
    %v3614 = vpack.c.b16 %v2526, %v2510
    %v3615 = vpack.c.b16 %v2527, %v2511
    %v3616 = vpack.c.b16 %v2528, %v2512
    %v3617 = vpack.c.b16 %v2529, %v2513
    %v3618 = vpack.c.b16 %v2530, %v2514
    %v3619 = vpack.c.b16 %v2531, %v2515
    %v3620 = vpack.c.b16 %v2532, %v2516
    %v3621 = vpack.c.b16 %v2533, %v2517
    %v3622 = vpack.c.b16 %v2534, %v2518
    %v3623 = vpack.c.b16 %v2551, %v2535
    %v3624 = vpack.c.b16 %v2552, %v2536
    %v3625 = vpack.c.b16 %v2553, %v2537
    %v3626 = vpack.c.b16 %v2554, %v2538
    %v3627 = vpack.c.b16 %v2555, %v2539
    %v3628 = vpack.c.b16 %v2556, %v2540
    %v3629 = vpack.c.b16 %v2557, %v2541
    %v3630 = vpack.c.b16 %v2558, %v2542
    %v3631 = vpack.c.b16 %v2559, %v2543
    %v3632 = vpack.c.b16 %v2560, %v2544
    %v3633 = vpack.c.b16 %v2561, %v2545
    %v3634 = vpack.c.b16 %v2562, %v2546
    %v3635 = vpack.c.b16 %v2563, %v2547
    %v3636 = vpack.c.b16 %v2564, %v2548
    %v3637 = vpack.c.b16 %v2565, %v2549
    %v3638 = vpack.c.b16 %v2566, %v2550
    %v3639 = vpack.c.b16 %v2583, %v2567
    %v3640 = vpack.c.b16 %v2584, %v2568
    %v3641 = vpack.c.b16 %v2585, %v2569
    %v3642 = vpack.c.b16 %v2586, %v2570
    %v3643 = vpack.c.b16 %v2587, %v2571
    %v3644 = vpack.c.b16 %v2588, %v2572
    %v3645 = vpack.c.b16 %v2589, %v2573
    %v3646 = vpack.c.b16 %v2590, %v2574
    %v3647 = vpack.c.b16 %v2591, %v2575
    %v3648 = vpack.c.b16 %v2592, %v2576
    %v3649 = vpack.c.b16 %v2593, %v2577
    %v3650 = vpack.c.b16 %v2594, %v2578
    %v3651 = vpack.c.b16 %v2595, %v2579
    %v3652 = vpack.c.b16 %v2596, %v2580
    %v3653 = vpack.c.b16 %v2597, %v2581
    %v3654 = vpack.c.b16 %v2598, %v2582
    %v3655 = vpack.c.b16 %v2615, %v2599
    %v3656 = vpack.c.b16 %v2616, %v2600
    %v3657 = vpack.c.b16 %v2617, %v2601
    %v3658 = vpack.c.b16 %v2618, %v2602
    %v3659 = vpack.c.b16 %v2619, %v2603
    %v3660 = vpack.c.b16 %v2620, %v2604
    %v3661 = vpack.c.b16 %v2621, %v2605
    %v3662 = vpack.c.b16 %v2622, %v2606
    %v3663 = vpack.c.b16 %v2623, %v2607
    %v3664 = vpack.c.b16 %v2624, %v2608
    %v3665 = vpack.c.b16 %v2625, %v2609
    %v3666 = vpack.c.b16 %v2626, %v2610
    %v3667 = vpack.c.b16 %v2627, %v2611
    %v3668 = vpack.c.b16 %v2628, %v2612
    %v3669 = vpack.c.b16 %v2629, %v2613
    %v3670 = vpack.c.b16 %v2630, %v2614
    %v3671 = vpack.c.b16 %v2647, %v2631
    %v3672 = vpack.c.b16 %v2648, %v2632
    %v3673 = vpack.c.b16 %v2649, %v2633
    %v3674 = vpack.c.b16 %v2650, %v2634
    %v3675 = vpack.c.b16 %v2651, %v2635
    %v3676 = vpack.c.b16 %v2652, %v2636
    %v3677 = vpack.c.b16 %v2653, %v2637
    %v3678 = vpack.c.b16 %v2654, %v2638
    %v3679 = vpack.c.b16 %v2655, %v2639
    %v3680 = vpack.c.b16 %v2656, %v2640
    %v3681 = vpack.c.b16 %v2657, %v2641
    %v3682 = vpack.c.b16 %v2658, %v2642
    %v3683 = vpack.c.b16 %v2659, %v2643
    %v3684 = vpack.c.b16 %v2660, %v2644
    %v3685 = vpack.c.b16 %v2661, %v2645
    %v3686 = vpack.c.b16 %v2662, %v2646
    %v3687 = vpack.c.b16 %v2679, %v2663
    %v3688 = vpack.c.b16 %v2680, %v2664
    %v3689 = vpack.c.b16 %v2681, %v2665
    %v3690 = vpack.c.b16 %v2682, %v2666
    %v3691 = vpack.c.b16 %v2683, %v2667
    %v3692 = vpack.c.b16 %v2684, %v2668
    %v3693 = vpack.c.b16 %v2685, %v2669
    %v3694 = vpack.c.b16 %v2686, %v2670
    %v3695 = vpack.c.b16 %v2687, %v2671
    %v3696 = vpack.c.b16 %v2688, %v2672
    %v3697 = vpack.c.b16 %v2689, %v2673
    %v3698 = vpack.c.b16 %v2690, %v2674
    %v3699 = vpack.c.b16 %v2691, %v2675
    %v3700 = vpack.c.b16 %v2692, %v2676
    %v3701 = vpack.c.b16 %v2693, %v2677
    %v3702 = vpack.c.b16 %v2694, %v2678
    %v3703 = vpack.c.b16 %v2711, %v2695
    %v3704 = vpack.c.b16 %v2712, %v2696
    %v3705 = vpack.c.b16 %v2713, %v2697
    %v3706 = vpack.c.b16 %v2714, %v2698
    %v3707 = vpack.c.b16 %v2715, %v2699
    %v3708 = vpack.c.b16 %v2716, %v2700
    %v3709 = vpack.c.b16 %v2717, %v2701
    %v3710 = vpack.c.b16 %v2718, %v2702
    %v3711 = vpack.c.b16 %v2719, %v2703
    %v3712 = vpack.c.b16 %v2720, %v2704
    %v3713 = vpack.c.b16 %v2721, %v2705
    %v3714 = vpack.c.b16 %v2722, %v2706
    %v3715 = vpack.c.b16 %v2723, %v2707
    %v3716 = vpack.c.b16 %v2724, %v2708
    %v3717 = vpack.c.b16 %v2725, %v2709
    %v3718 = vpack.c.b16 %v2726, %v2710
    %v3719 = vpack.c.b16 %v2743, %v2727
    %v3720 = vpack.c.b16 %v2744, %v2728
    %v3721 = vpack.c.b16 %v2745, %v2729
    %v3722 = vpack.c.b16 %v2746, %v2730
    %v3723 = vpack.c.b16 %v2747, %v2731
    %v3724 = vpack.c.b16 %v2748, %v2732
    %v3725 = vpack.c.b16 %v2749, %v2733
    %v3726 = vpack.c.b16 %v2750, %v2734
    %v3727 = vpack.c.b16 %v2751, %v2735
    %v3728 = vpack.c.b16 %v2752, %v2736
    %v3729 = vpack.c.b16 %v2753, %v2737
    %v3730 = vpack.c.b16 %v2754, %v2738
    %v3731 = vpack.c.b16 %v2755, %v2739
    %v3732 = vpack.c.b16 %v2756, %v2740
    %v3733 = vpack.c.b16 %v2757, %v2741
    %v3734 = vpack.c.b16 %v2758, %v2742
    %v3735 = vpack.c.b16 %v2775, %v2759
    %v3736 = vpack.c.b16 %v2776, %v2760
    %v3737 = vpack.c.b16 %v2777, %v2761
    %v3738 = vpack.c.b16 %v2778, %v2762
    %v3739 = vpack.c.b16 %v2779, %v2763
    %v3740 = vpack.c.b16 %v2780, %v2764
    %v3741 = vpack.c.b16 %v2781, %v2765
    %v3742 = vpack.c.b16 %v2782, %v2766
    %v3743 = vpack.c.b16 %v2783, %v2767
    %v3744 = vpack.c.b16 %v2784, %v2768
    %v3745 = vpack.c.b16 %v2785, %v2769
    %v3746 = vpack.c.b16 %v2786, %v2770
    %v3747 = vpack.c.b16 %v2787, %v2771
    %v3748 = vpack.c.b16 %v2788, %v2772
    %v3749 = vpack.c.b16 %v2789, %v2773
    %v3750 = vpack.c.b16 %v2790, %v2774
    %v3751 = vpack.c.b16 %v2807, %v2791
    %v3752 = vpack.c.b16 %v2808, %v2792
    %v3753 = vpack.c.b16 %v2809, %v2793
    %v3754 = vpack.c.b16 %v2810, %v2794
    %v3755 = vpack.c.b16 %v2811, %v2795
    %v3756 = vpack.c.b16 %v2812, %v2796
    %v3757 = vpack.c.b16 %v2813, %v2797
    %v3758 = vpack.c.b16 %v2814, %v2798
    %v3759 = vpack.c.b16 %v2815, %v2799
    %v3760 = vpack.c.b16 %v2816, %v2800
    %v3761 = vpack.c.b16 %v2817, %v2801
    %v3762 = vpack.c.b16 %v2818, %v2802
    %v3763 = vpack.c.b16 %v2819, %v2803
    %v3764 = vpack.c.b16 %v2820, %v2804
    %v3765 = vpack.c.b16 %v2821, %v2805
    %v3766 = vpack.c.b16 %v2822, %v2806
    %v3767 = vpack.c.b16 %v2839, %v2823
    %v3768 = vpack.c.b16 %v2840, %v2824
    %v3769 = vpack.c.b16 %v2841, %v2825
    %v3770 = vpack.c.b16 %v2842, %v2826
    %v3771 = vpack.c.b16 %v2843, %v2827
    %v3772 = vpack.c.b16 %v2844, %v2828
    %v3773 = vpack.c.b16 %v2845, %v2829
    %v3774 = vpack.c.b16 %v2846, %v2830
    %v3775 = vpack.c.b16 %v2847, %v2831
    %v3776 = vpack.c.b16 %v2848, %v2832
    %v3777 = vpack.c.b16 %v2849, %v2833
    %v3778 = vpack.c.b16 %v2850, %v2834
    %v3779 = vpack.c.b16 %v2851, %v2835
    %v3780 = vpack.c.b16 %v2852, %v2836
    %v3781 = vpack.c.b16 %v2853, %v2837
    %v3782 = vpack.c.b16 %v2854, %v2838
    %v3783 = vpack.c.b16 %v2871, %v2855
    %v3784 = vpack.c.b16 %v2872, %v2856
    %v3785 = vpack.c.b16 %v2873, %v2857
    %v3786 = vpack.c.b16 %v2874, %v2858
    %v3787 = vpack.c.b16 %v2875, %v2859
    %v3788 = vpack.c.b16 %v2876, %v2860
    %v3789 = vpack.c.b16 %v2877, %v2861
    %v3790 = vpack.c.b16 %v2878, %v2862
    %v3791 = vpack.c.b16 %v2879, %v2863
    %v3792 = vpack.c.b16 %v2880, %v2864
    %v3793 = vpack.c.b16 %v2881, %v2865
    %v3794 = vpack.c.b16 %v2882, %v2866
    %v3795 = vpack.c.b16 %v2883, %v2867
    %v3796 = vpack.c.b16 %v2884, %v2868
    %v3797 = vpack.c.b16 %v2885, %v2869
    %v3798 = vpack.c.b16 %v2886, %v2870
    %v3799 = vpack.c.b16 %v2903, %v2887
    %v3800 = vpack.c.b16 %v2904, %v2888
    %v3801 = vpack.c.b16 %v2905, %v2889
    %v3802 = vpack.c.b16 %v2906, %v2890
    %v3803 = vpack.c.b16 %v2907, %v2891
    %v3804 = vpack.c.b16 %v2908, %v2892
    %v3805 = vpack.c.b16 %v2909, %v2893
    %v3806 = vpack.c.b16 %v2910, %v2894
    %v3807 = vpack.c.b16 %v2911, %v2895
    %v3808 = vpack.c.b16 %v2912, %v2896
    %v3809 = vpack.c.b16 %v2913, %v2897
    %v3810 = vpack.c.b16 %v2914, %v2898
    %v3811 = vpack.c.b16 %v2915, %v2899
    %v3812 = vpack.c.b16 %v2916, %v2900
    %v3813 = vpack.c.b16 %v2917, %v2901
    %v3814 = vpack.c.b16 %v2918, %v2902
    %v3815 = vpack.c.b16 %v2935, %v2919
    %v3816 = vpack.c.b16 %v2936, %v2920
    %v3817 = vpack.c.b16 %v2937, %v2921
    %v3818 = vpack.c.b16 %v2938, %v2922
    %v3819 = vpack.c.b16 %v2939, %v2923
    %v3820 = vpack.c.b16 %v2940, %v2924
    %v3821 = vpack.c.b16 %v2941, %v2925
    %v3822 = vpack.c.b16 %v2942, %v2926
    %v3823 = vpack.c.b16 %v2943, %v2927
    %v3824 = vpack.c.b16 %v2944, %v2928
    %v3825 = vpack.c.b16 %v2945, %v2929
    %v3826 = vpack.c.b16 %v2946, %v2930
    %v3827 = vpack.c.b16 %v2947, %v2931
    %v3828 = vpack.c.b16 %v2948, %v2932
    %v3829 = vpack.c.b16 %v2949, %v2933
    %v3830 = vpack.c.b16 %v2950, %v2934
    %v3831 = vpack.c.b16 %v2967, %v2951
    %v3832 = vpack.c.b16 %v2968, %v2952
    %v3833 = vpack.c.b16 %v2969, %v2953
    %v3834 = vpack.c.b16 %v2970, %v2954
    %v3835 = vpack.c.b16 %v2971, %v2955
    %v3836 = vpack.c.b16 %v2972, %v2956
    %v3837 = vpack.c.b16 %v2973, %v2957
    %v3838 = vpack.c.b16 %v2974, %v2958
    %v3839 = vpack.c.b16 %v2975, %v2959
    %v3840 = vpack.c.b16 %v2976, %v2960
    %v3841 = vpack.c.b16 %v2977, %v2961
    %v3842 = vpack.c.b16 %v2978, %v2962
    %v3843 = vpack.c.b16 %v2979, %v2963
    %v3844 = vpack.c.b16 %v2980, %v2964
    %v3845 = vpack.c.b16 %v2981, %v2965
    %v3846 = vpack.c.b16 %v2982, %v2966
    %v3847 = vpack.c.b16 %v2999, %v2983
    %v3848 = vpack.c.b16 %v3000, %v2984
    %v3849 = vpack.c.b16 %v3001, %v2985
    %v3850 = vpack.c.b16 %v3002, %v2986
    %v3851 = vpack.c.b16 %v3003, %v2987
    %v3852 = vpack.c.b16 %v3004, %v2988
    %v3853 = vpack.c.b16 %v3005, %v2989
    %v3854 = vpack.c.b16 %v3006, %v2990
    %v3855 = vpack.c.b16 %v3007, %v2991
    %v3856 = vpack.c.b16 %v3008, %v2992
    %v3857 = vpack.c.b16 %v3009, %v2993
    %v3858 = vpack.c.b16 %v3010, %v2994
    %v3859 = vpack.c.b16 %v3011, %v2995
    %v3860 = vpack.c.b16 %v3012, %v2996
    %v3861 = vpack.c.b16 %v3013, %v2997
    %v3862 = vpack.c.b16 %v3014, %v2998
    %v3863 = vpack.c.b16 %v3031, %v3015
    %v3864 = vpack.c.b16 %v3032, %v3016
    %v3865 = vpack.c.b16 %v3033, %v3017
    %v3866 = vpack.c.b16 %v3034, %v3018
    %v3867 = vpack.c.b16 %v3035, %v3019
    %v3868 = vpack.c.b16 %v3036, %v3020
    %v3869 = vpack.c.b16 %v3037, %v3021
    %v3870 = vpack.c.b16 %v3038, %v3022
    %v3871 = vpack.c.b16 %v3039, %v3023
    %v3872 = vpack.c.b16 %v3040, %v3024
    %v3873 = vpack.c.b16 %v3041, %v3025
    %v3874 = vpack.c.b16 %v3042, %v3026
    %v3875 = vpack.c.b16 %v3043, %v3027
    %v3876 = vpack.c.b16 %v3044, %v3028
    %v3877 = vpack.c.b16 %v3045, %v3029
    %v3878 = vpack.c.b16 %v3046, %v3030
    %v3879 = vpack.c.b16 %v3063, %v3047
    %v3880 = vpack.c.b16 %v3064, %v3048
    %v3881 = vpack.c.b16 %v3065, %v3049
    %v3882 = vpack.c.b16 %v3066, %v3050
    %v3883 = vpack.c.b16 %v3067, %v3051
    %v3884 = vpack.c.b16 %v3068, %v3052
    %v3885 = vpack.c.b16 %v3069, %v3053
    %v3886 = vpack.c.b16 %v3070, %v3054
    %v3887 = vpack.c.b16 %v3071, %v3055
    %v3888 = vpack.c.b16 %v3072, %v3056
    %v3889 = vpack.c.b16 %v3073, %v3057
    %v3890 = vpack.c.b16 %v3074, %v3058
    %v3891 = vpack.c.b16 %v3075, %v3059
    %v3892 = vpack.c.b16 %v3076, %v3060
    %v3893 = vpack.c.b16 %v3077, %v3061
    %v3894 = vpack.c.b16 %v3078, %v3062
    %v3895 = vpack.c.b16 %v3095, %v3079
    %v3896 = vpack.c.b16 %v3096, %v3080
    %v3897 = vpack.c.b16 %v3097, %v3081
    %v3898 = vpack.c.b16 %v3098, %v3082
    %v3899 = vpack.c.b16 %v3099, %v3083
    %v3900 = vpack.c.b16 %v3100, %v3084
    %v3901 = vpack.c.b16 %v3101, %v3085
    %v3902 = vpack.c.b16 %v3102, %v3086
    %v3903 = vpack.c.b16 %v3103, %v3087
    %v3904 = vpack.c.b16 %v3104, %v3088
    %v3905 = vpack.c.b16 %v3105, %v3089
    %v3906 = vpack.c.b16 %v3106, %v3090
    %v3907 = vpack.c.b16 %v3107, %v3091
    %v3908 = vpack.c.b16 %v3108, %v3092
    %v3909 = vpack.c.b16 %v3109, %v3093
    %v3910 = vpack.c.b16 %v3110, %v3094
    %v3911 = vpack.c.b16 %v3127, %v3111
    %v3912 = vpack.c.b16 %v3128, %v3112
    %v3913 = vpack.c.b16 %v3129, %v3113
    %v3914 = vpack.c.b16 %v3130, %v3114
    %v3915 = vpack.c.b16 %v3131, %v3115
    %v3916 = vpack.c.b16 %v3132, %v3116
    %v3917 = vpack.c.b16 %v3133, %v3117
    %v3918 = vpack.c.b16 %v3134, %v3118
    %v3919 = vpack.c.b16 %v3135, %v3119
    %v3920 = vpack.c.b16 %v3136, %v3120
    %v3921 = vpack.c.b16 %v3137, %v3121
    %v3922 = vpack.c.b16 %v3138, %v3122
    %v3923 = vpack.c.b16 %v3139, %v3123
    %v3924 = vpack.c.b16 %v3140, %v3124
    %v3925 = vpack.c.b16 %v3141, %v3125
    %v3926 = vpack.c.b16 %v3142, %v3126
    %v3927 = vpack.c.b16 %v3159, %v3143
    %v3928 = vpack.c.b16 %v3160, %v3144
    %v3929 = vpack.c.b16 %v3161, %v3145
    %v3930 = vpack.c.b16 %v3162, %v3146
    %v3931 = vpack.c.b16 %v3163, %v3147
    %v3932 = vpack.c.b16 %v3164, %v3148
    %v3933 = vpack.c.b16 %v3165, %v3149
    %v3934 = vpack.c.b16 %v3166, %v3150
    %v3935 = vpack.c.b16 %v3167, %v3151
    %v3936 = vpack.c.b16 %v3168, %v3152
    %v3937 = vpack.c.b16 %v3169, %v3153
    %v3938 = vpack.c.b16 %v3170, %v3154
    %v3939 = vpack.c.b16 %v3171, %v3155
    %v3940 = vpack.c.b16 %v3172, %v3156
    %v3941 = vpack.c.b16 %v3173, %v3157
    %v3942 = vpack.c.b16 %v3174, %v3158
    %4711 = vmatprep.subr.bf16.mxu0 %v3176
    %4712 = vmatpush1.bf16.msra.mxu0 %v3175
    %4713 = vmatprep.subr.bf16.mxu0 %v3192
    %4714 = vmatpush1.bf16.msra.mxu0 %v3191
    %4715 = vmatprep.subr.bf16.mxu0 %v3208
    %4716 = vmatpush1.bf16.msra.mxu0 %v3207
    %4717 = vmatprep.subr.bf16.mxu0 %v3224
    %4718 = vmatpush1.bf16.msra.mxu0 %v3223
    %4719 = vmatprep.subr.bf16.mxu0 %v3240
    %4720 = vmatpush1.bf16.msra.mxu0 %v3239
    %4721 = vmatprep.subr.bf16.mxu0 %v3256
    %4722 = vmatpush1.bf16.msra.mxu0 %v3255
    %4723 = vmatprep.subr.bf16.mxu0 %v3272
    %4724 = vmatpush1.bf16.msra.mxu0 %v3271
    %4725 = vmatprep.subr.bf16.mxu0 %v3288
    %4726 = vmatpush1.bf16.msra.mxu0 %v3287
    %4727 = vmatprep.subr.bf16.mxu0 %v3304
    %4728 = vmatpush1.bf16.msra.mxu0 %v3303
    %4729 = vmatprep.subr.bf16.mxu0 %v3320
    %4730 = vmatpush1.bf16.msra.mxu0 %v3319
    %4731 = vmatprep.subr.bf16.mxu0 %v3336
    %4732 = vmatpush1.bf16.msra.mxu0 %v3335
    %4733 = vmatprep.subr.bf16.mxu0 %v3352
    %4734 = vmatpush1.bf16.msra.mxu0 %v3351
    %4735 = vmatprep.subr.bf16.mxu0 %v3368
    %4736 = vmatpush1.bf16.msra.mxu0 %v3367
    %4737 = vmatprep.subr.bf16.mxu0 %v3384
    %4738 = vmatpush1.bf16.msra.mxu0 %v3383
    %4739 = vmatprep.subr.bf16.mxu0 %v3400
    %4740 = vmatpush1.bf16.msra.mxu0 %v3399
    %4741 = vmatprep.subr.bf16.mxu0 %v3416
    %4742 = vmatpush1.bf16.msra.mxu0 %v3415
    %4743 = vmatprep.mubr.bf16.mxu0 %v98
    %4744 = vmatmul.mubr.bf16.gmra.mrb[0].mxu0 %v97
    %v4745 = vpop.f32.mrb[0].mxu0
    %v4746 = vadd.f32 0.0, %v4745
    %v4747 = vpop.f32.mrb[0].mxu0
    %v4748 = vadd.f32 0.0, %v4747
    %v4749 = vpop.f32.mrb[0].mxu0
    %v4750 = vadd.f32 0.0, %v4749
    %v4751 = vpop.f32.mrb[0].mxu0
    %v4752 = vadd.f32 0.0, %v4751
    %4753 = vdwg.mxu0
    %4754 = vmatprep.subr.bf16.mxu0 %v3432
    %4755 = vmatpush1.bf16.msra.mxu0 %v3431
    %4756 = vmatprep.subr.bf16.mxu0 %v3448
    %4757 = vmatpush1.bf16.msra.mxu0 %v3447
    %4758 = vmatprep.subr.bf16.mxu0 %v3464
    %4759 = vmatpush1.bf16.msra.mxu0 %v3463
    %4760 = vmatprep.subr.bf16.mxu0 %v3480
    %4761 = vmatpush1.bf16.msra.mxu0 %v3479
    %4762 = vmatprep.subr.bf16.mxu0 %v3496
    %4763 = vmatpush1.bf16.msra.mxu0 %v3495
    %4764 = vmatprep.subr.bf16.mxu0 %v3512
    %4765 = vmatpush1.bf16.msra.mxu0 %v3511
    %4766 = vmatprep.subr.bf16.mxu0 %v3528
    %4767 = vmatpush1.bf16.msra.mxu0 %v3527
    %4768 = vmatprep.subr.bf16.mxu0 %v3544
    %4769 = vmatpush1.bf16.msra.mxu0 %v3543
    %4770 = vmatprep.subr.bf16.mxu0 %v3560
    %4771 = vmatpush1.bf16.msra.mxu0 %v3559
    %4772 = vmatprep.subr.bf16.mxu0 %v3576
    %4773 = vmatpush1.bf16.msra.mxu0 %v3575
    %4774 = vmatprep.subr.bf16.mxu0 %v3592
    %4775 = vmatpush1.bf16.msra.mxu0 %v3591
    %4776 = vmatprep.subr.bf16.mxu0 %v3608
    %4777 = vmatpush1.bf16.msra.mxu0 %v3607
    %4778 = vmatprep.subr.bf16.mxu0 %v3624
    %4779 = vmatpush1.bf16.msra.mxu0 %v3623
    %4780 = vmatprep.subr.bf16.mxu0 %v3640
    %4781 = vmatpush1.bf16.msra.mxu0 %v3639
    %4782 = vmatprep.subr.bf16.mxu0 %v3656
    %4783 = vmatpush1.bf16.msra.mxu0 %v3655
    %4784 = vmatprep.subr.bf16.mxu0 %v3672
    %4785 = vmatpush1.bf16.msra.mxu0 %v3671
    %4786 = vmatprep.mubr.bf16.mxu0 %v100
    %4787 = vmatmul.mubr.bf16.gmra.mrb[0].mxu0 %v99
    %v4788 = vpop.f32.mrb[0].mxu0
    %v4789 = vadd.f32 %v4746, %v4788
    %v4790 = vpop.f32.mrb[0].mxu0
    %v4791 = vadd.f32 %v4748, %v4790
    %v4792 = vpop.f32.mrb[0].mxu0
    %v4793 = vadd.f32 %v4750, %v4792
    %v4794 = vpop.f32.mrb[0].mxu0
    %v4795 = vadd.f32 %v4752, %v4794
    %4796 = vdwg.mxu0
    %4797 = vmatprep.subr.bf16.mxu0 %v3688
    %4798 = vmatpush1.bf16.msra.mxu0 %v3687
    %4799 = vmatprep.subr.bf16.mxu0 %v3704
    %4800 = vmatpush1.bf16.msra.mxu0 %v3703
    %4801 = vmatprep.subr.bf16.mxu0 %v3720
    %4802 = vmatpush1.bf16.msra.mxu0 %v3719
    %4803 = vmatprep.subr.bf16.mxu0 %v3736
    %4804 = vmatpush1.bf16.msra.mxu0 %v3735
    %4805 = vmatprep.subr.bf16.mxu0 %v3752
    %4806 = vmatpush1.bf16.msra.mxu0 %v3751
    %4807 = vmatprep.subr.bf16.mxu0 %v3768
    %4808 = vmatpush1.bf16.msra.mxu0 %v3767
    %4809 = vmatprep.subr.bf16.mxu0 %v3784
    %4810 = vmatpush1.bf16.msra.mxu0 %v3783
    %4811 = vmatprep.subr.bf16.mxu0 %v3800
    %4812 = vmatpush1.bf16.msra.mxu0 %v3799
    %4813 = vmatprep.subr.bf16.mxu0 %v3816
    %4814 = vmatpush1.bf16.msra.mxu0 %v3815
    %4815 = vmatprep.subr.bf16.mxu0 %v3832
    %4816 = vmatpush1.bf16.msra.mxu0 %v3831
    %4817 = vmatprep.subr.bf16.mxu0 %v3848
    %4818 = vmatpush1.bf16.msra.mxu0 %v3847
    %4819 = vmatprep.subr.bf16.mxu0 %v3864
    %4820 = vmatpush1.bf16.msra.mxu0 %v3863
    %4821 = vmatprep.subr.bf16.mxu0 %v3880
    %4822 = vmatpush1.bf16.msra.mxu0 %v3879
    %4823 = vmatprep.subr.bf16.mxu0 %v3896
    %4824 = vmatpush1.bf16.msra.mxu0 %v3895
    %4825 = vmatprep.subr.bf16.mxu0 %v3912
    %4826 = vmatpush1.bf16.msra.mxu0 %v3911
    %4827 = vmatprep.subr.bf16.mxu0 %v3928
    %4828 = vmatpush1.bf16.msra.mxu0 %v3927
    %4829 = vmatprep.mubr.bf16.mxu0 %v102
    %4830 = vmatmul.mubr.bf16.gmra.mrb[0].mxu0 %v101
    %v4831 = vpop.f32.mrb[0].mxu0
    %v4832 = vadd.f32 %v4789, %v4831
    %v4833 = vpop.f32.mrb[0].mxu0
    %v4834 = vadd.f32 %v4791, %v4833
    %v4835 = vpop.f32.mrb[0].mxu0
    %v4836 = vadd.f32 %v4793, %v4835
    %v4837 = vpop.f32.mrb[0].mxu0
    %v4838 = vadd.f32 %v4795, %v4837
    %4839 = vdwg.mxu0
    %4840 = vmatprep.subr.bf16.mxu0 %v3178
    %4841 = vmatpush1.bf16.msra.mxu0 %v3177
    %4842 = vmatprep.subr.bf16.mxu0 %v3194
    %4843 = vmatpush1.bf16.msra.mxu0 %v3193
    %4844 = vmatprep.subr.bf16.mxu0 %v3210
    %4845 = vmatpush1.bf16.msra.mxu0 %v3209
    %4846 = vmatprep.subr.bf16.mxu0 %v3226
    %4847 = vmatpush1.bf16.msra.mxu0 %v3225
    %4848 = vmatprep.subr.bf16.mxu0 %v3242
    %4849 = vmatpush1.bf16.msra.mxu0 %v3241
    %4850 = vmatprep.subr.bf16.mxu0 %v3258
    %4851 = vmatpush1.bf16.msra.mxu0 %v3257
    %4852 = vmatprep.subr.bf16.mxu0 %v3274
    %4853 = vmatpush1.bf16.msra.mxu0 %v3273
    %4854 = vmatprep.subr.bf16.mxu0 %v3290
    %4855 = vmatpush1.bf16.msra.mxu0 %v3289
    %4856 = vmatprep.subr.bf16.mxu0 %v3306
    %4857 = vmatpush1.bf16.msra.mxu0 %v3305
    %4858 = vmatprep.subr.bf16.mxu0 %v3322
    %4859 = vmatpush1.bf16.msra.mxu0 %v3321
    %4860 = vmatprep.subr.bf16.mxu0 %v3338
    %4861 = vmatpush1.bf16.msra.mxu0 %v3337
    %4862 = vmatprep.subr.bf16.mxu0 %v3354
    %4863 = vmatpush1.bf16.msra.mxu0 %v3353
    %4864 = vmatprep.subr.bf16.mxu0 %v3370
    %4865 = vmatpush1.bf16.msra.mxu0 %v3369
    %4866 = vmatprep.subr.bf16.mxu0 %v3386
    %4867 = vmatpush1.bf16.msra.mxu0 %v3385
    %4868 = vmatprep.subr.bf16.mxu0 %v3402
    %4869 = vmatpush1.bf16.msra.mxu0 %v3401
    %4870 = vmatprep.subr.bf16.mxu0 %v3418
    %4871 = vmatpush1.bf16.msra.mxu0 %v3417
    %4872 = vmatprep.mubr.bf16.mxu0 %v98
    %4873 = vmatmul.mubr.bf16.gmra.mrb[0].mxu0 %v97
    %v4874 = vpop.f32.mrb[0].mxu0
    %v4875 = vadd.f32 0.0, %v4874
    %v4876 = vpop.f32.mrb[0].mxu0
    %v4877 = vadd.f32 0.0, %v4876
    %v4878 = vpop.f32.mrb[0].mxu0
    %v4879 = vadd.f32 0.0, %v4878
    %v4880 = vpop.f32.mrb[0].mxu0
    %v4881 = vadd.f32 0.0, %v4880
    %4882 = vdwg.mxu0
    %4883 = vmatprep.subr.bf16.mxu0 %v3434
    %4884 = vmatpush1.bf16.msra.mxu0 %v3433
    %4885 = vmatprep.subr.bf16.mxu0 %v3450
    %4886 = vmatpush1.bf16.msra.mxu0 %v3449
    %4887 = vmatprep.subr.bf16.mxu0 %v3466
    %4888 = vmatpush1.bf16.msra.mxu0 %v3465
    %4889 = vmatprep.subr.bf16.mxu0 %v3482
    %4890 = vmatpush1.bf16.msra.mxu0 %v3481
    %4891 = vmatprep.subr.bf16.mxu0 %v3498
    %4892 = vmatpush1.bf16.msra.mxu0 %v3497
    %4893 = vmatprep.subr.bf16.mxu0 %v3514
    %4894 = vmatpush1.bf16.msra.mxu0 %v3513
    %4895 = vmatprep.subr.bf16.mxu0 %v3530
    %4896 = vmatpush1.bf16.msra.mxu0 %v3529
    %4897 = vmatprep.subr.bf16.mxu0 %v3546
    %4898 = vmatpush1.bf16.msra.mxu0 %v3545
    %4899 = vmatprep.subr.bf16.mxu0 %v3562
    %4900 = vmatpush1.bf16.msra.mxu0 %v3561
    %4901 = vmatprep.subr.bf16.mxu0 %v3578
    %4902 = vmatpush1.bf16.msra.mxu0 %v3577
    %4903 = vmatprep.subr.bf16.mxu0 %v3594
    %4904 = vmatpush1.bf16.msra.mxu0 %v3593
    %4905 = vmatprep.subr.bf16.mxu0 %v3610
    %4906 = vmatpush1.bf16.msra.mxu0 %v3609
    %4907 = vmatprep.subr.bf16.mxu0 %v3626
    %4908 = vmatpush1.bf16.msra.mxu0 %v3625
    %4909 = vmatprep.subr.bf16.mxu0 %v3642
    %4910 = vmatpush1.bf16.msra.mxu0 %v3641
    %4911 = vmatprep.subr.bf16.mxu0 %v3658
    %4912 = vmatpush1.bf16.msra.mxu0 %v3657
    %4913 = vmatprep.subr.bf16.mxu0 %v3674
    %4914 = vmatpush1.bf16.msra.mxu0 %v3673
    %4915 = vmatprep.mubr.bf16.mxu0 %v100
    %4916 = vmatmul.mubr.bf16.gmra.mrb[0].mxu0 %v99
    %v4917 = vpop.f32.mrb[0].mxu0
    %v4918 = vadd.f32 %v4875, %v4917
    %v4919 = vpop.f32.mrb[0].mxu0
    %v4920 = vadd.f32 %v4877, %v4919
    %v4921 = vpop.f32.mrb[0].mxu0
    %v4922 = vadd.f32 %v4879, %v4921
    %v4923 = vpop.f32.mrb[0].mxu0
    %v4924 = vadd.f32 %v4881, %v4923
    %4925 = vdwg.mxu0
    %4926 = vmatprep.subr.bf16.mxu0 %v3690
    %4927 = vmatpush1.bf16.msra.mxu0 %v3689
    %4928 = vmatprep.subr.bf16.mxu0 %v3706
    %4929 = vmatpush1.bf16.msra.mxu0 %v3705
    %4930 = vmatprep.subr.bf16.mxu0 %v3722
    %4931 = vmatpush1.bf16.msra.mxu0 %v3721
    %4932 = vmatprep.subr.bf16.mxu0 %v3738
    %4933 = vmatpush1.bf16.msra.mxu0 %v3737
    %4934 = vmatprep.subr.bf16.mxu0 %v3754
    %4935 = vmatpush1.bf16.msra.mxu0 %v3753
    %4936 = vmatprep.subr.bf16.mxu0 %v3770
    %4937 = vmatpush1.bf16.msra.mxu0 %v3769
    %4938 = vmatprep.subr.bf16.mxu0 %v3786
    %4939 = vmatpush1.bf16.msra.mxu0 %v3785
    %4940 = vmatprep.subr.bf16.mxu0 %v3802
    %4941 = vmatpush1.bf16.msra.mxu0 %v3801
    %4942 = vmatprep.subr.bf16.mxu0 %v3818
    %4943 = vmatpush1.bf16.msra.mxu0 %v3817
    %4944 = vmatprep.subr.bf16.mxu0 %v3834
    %4945 = vmatpush1.bf16.msra.mxu0 %v3833
    %4946 = vmatprep.subr.bf16.mxu0 %v3850
    %4947 = vmatpush1.bf16.msra.mxu0 %v3849
    %4948 = vmatprep.subr.bf16.mxu0 %v3866
    %4949 = vmatpush1.bf16.msra.mxu0 %v3865
    %4950 = vmatprep.subr.bf16.mxu0 %v3882
    %4951 = vmatpush1.bf16.msra.mxu0 %v3881
    %4952 = vmatprep.subr.bf16.mxu0 %v3898
    %4953 = vmatpush1.bf16.msra.mxu0 %v3897
    %4954 = vmatprep.subr.bf16.mxu0 %v3914
    %4955 = vmatpush1.bf16.msra.mxu0 %v3913
    %4956 = vmatprep.subr.bf16.mxu0 %v3930
    %4957 = vmatpush1.bf16.msra.mxu0 %v3929
    %4958 = vmatprep.mubr.bf16.mxu0 %v102
    %4959 = vmatmul.mubr.bf16.gmra.mrb[0].mxu0 %v101
    %v4960 = vpop.f32.mrb[0].mxu0
    %v4961 = vadd.f32 %v4918, %v4960
    %v4962 = vpop.f32.mrb[0].mxu0
    %v4963 = vadd.f32 %v4920, %v4962
    %v4964 = vpop.f32.mrb[0].mxu0
    %v4965 = vadd.f32 %v4922, %v4964
    %v4966 = vpop.f32.mrb[0].mxu0
    %v4967 = vadd.f32 %v4924, %v4966
    %4968 = vdwg.mxu0
    %4969 = vmatprep.subr.bf16.mxu0 %v3180
    %4970 = vmatpush1.bf16.msra.mxu0 %v3179
    %4971 = vmatprep.subr.bf16.mxu0 %v3196
    %4972 = vmatpush1.bf16.msra.mxu0 %v3195
    %4973 = vmatprep.subr.bf16.mxu0 %v3212
    %4974 = vmatpush1.bf16.msra.mxu0 %v3211
    %4975 = vmatprep.subr.bf16.mxu0 %v3228
    %4976 = vmatpush1.bf16.msra.mxu0 %v3227
    %4977 = vmatprep.subr.bf16.mxu0 %v3244
    %4978 = vmatpush1.bf16.msra.mxu0 %v3243
    %4979 = vmatprep.subr.bf16.mxu0 %v3260
    %4980 = vmatpush1.bf16.msra.mxu0 %v3259
    %4981 = vmatprep.subr.bf16.mxu0 %v3276
    %4982 = vmatpush1.bf16.msra.mxu0 %v3275
    %4983 = vmatprep.subr.bf16.mxu0 %v3292
    %4984 = vmatpush1.bf16.msra.mxu0 %v3291
    %4985 = vmatprep.subr.bf16.mxu0 %v3308
    %4986 = vmatpush1.bf16.msra.mxu0 %v3307
    %4987 = vmatprep.subr.bf16.mxu0 %v3324
    %4988 = vmatpush1.bf16.msra.mxu0 %v3323
    %4989 = vmatprep.subr.bf16.mxu0 %v3340
    %4990 = vmatpush1.bf16.msra.mxu0 %v3339
    %4991 = vmatprep.subr.bf16.mxu0 %v3356
    %4992 = vmatpush1.bf16.msra.mxu0 %v3355
    %4993 = vmatprep.subr.bf16.mxu0 %v3372
    %4994 = vmatpush1.bf16.msra.mxu0 %v3371
    %4995 = vmatprep.subr.bf16.mxu0 %v3388
    %4996 = vmatpush1.bf16.msra.mxu0 %v3387
    %4997 = vmatprep.subr.bf16.mxu0 %v3404
    %4998 = vmatpush1.bf16.msra.mxu0 %v3403
    %4999 = vmatprep.subr.bf16.mxu0 %v3420
    %5000 = vmatpush1.bf16.msra.mxu0 %v3419
    %5001 = vmatprep.mubr.bf16.mxu0 %v98
    %5002 = vmatmul.mubr.bf16.gmra.mrb[0].mxu0 %v97
    %v5003 = vpop.f32.mrb[0].mxu0
    %v5004 = vadd.f32 0.0, %v5003
    %v5005 = vpop.f32.mrb[0].mxu0
    %v5006 = vadd.f32 0.0, %v5005
    %v5007 = vpop.f32.mrb[0].mxu0
    %v5008 = vadd.f32 0.0, %v5007
    %v5009 = vpop.f32.mrb[0].mxu0
    %v5010 = vadd.f32 0.0, %v5009
    %5011 = vdwg.mxu0
    %5012 = vmatprep.subr.bf16.mxu0 %v3436
    %5013 = vmatpush1.bf16.msra.mxu0 %v3435
    %5014 = vmatprep.subr.bf16.mxu0 %v3452
    %5015 = vmatpush1.bf16.msra.mxu0 %v3451
    %5016 = vmatprep.subr.bf16.mxu0 %v3468
    %5017 = vmatpush1.bf16.msra.mxu0 %v3467
    %5018 = vmatprep.subr.bf16.mxu0 %v3484
    %5019 = vmatpush1.bf16.msra.mxu0 %v3483
    %5020 = vmatprep.subr.bf16.mxu0 %v3500
    %5021 = vmatpush1.bf16.msra.mxu0 %v3499
    %5022 = vmatprep.subr.bf16.mxu0 %v3516
    %5023 = vmatpush1.bf16.msra.mxu0 %v3515
    %5024 = vmatprep.subr.bf16.mxu0 %v3532
    %5025 = vmatpush1.bf16.msra.mxu0 %v3531
    %5026 = vmatprep.subr.bf16.mxu0 %v3548
    %5027 = vmatpush1.bf16.msra.mxu0 %v3547
    %5028 = vmatprep.subr.bf16.mxu0 %v3564
    %5029 = vmatpush1.bf16.msra.mxu0 %v3563
    %5030 = vmatprep.subr.bf16.mxu0 %v3580
    %5031 = vmatpush1.bf16.msra.mxu0 %v3579
    %5032 = vmatprep.subr.bf16.mxu0 %v3596
    %5033 = vmatpush1.bf16.msra.mxu0 %v3595
    %5034 = vmatprep.subr.bf16.mxu0 %v3612
    %5035 = vmatpush1.bf16.msra.mxu0 %v3611
    %5036 = vmatprep.subr.bf16.mxu0 %v3628
    %5037 = vmatpush1.bf16.msra.mxu0 %v3627
    %5038 = vmatprep.subr.bf16.mxu0 %v3644
    %5039 = vmatpush1.bf16.msra.mxu0 %v3643
    %5040 = vmatprep.subr.bf16.mxu0 %v3660
    %5041 = vmatpush1.bf16.msra.mxu0 %v3659
    %5042 = vmatprep.subr.bf16.mxu0 %v3676
    %5043 = vmatpush1.bf16.msra.mxu0 %v3675
    %5044 = vmatprep.mubr.bf16.mxu0 %v100
    %5045 = vmatmul.mubr.bf16.gmra.mrb[0].mxu0 %v99
    %v5046 = vpop.f32.mrb[0].mxu0
    %v5047 = vadd.f32 %v5004, %v5046
    %v5048 = vpop.f32.mrb[0].mxu0
    %v5049 = vadd.f32 %v5006, %v5048
    %v5050 = vpop.f32.mrb[0].mxu0
    %v5051 = vadd.f32 %v5008, %v5050
    %v5052 = vpop.f32.mrb[0].mxu0
    %v5053 = vadd.f32 %v5010, %v5052
    %5054 = vdwg.mxu0
    %5055 = vmatprep.subr.bf16.mxu0 %v3692
    %5056 = vmatpush1.bf16.msra.mxu0 %v3691
    %5057 = vmatprep.subr.bf16.mxu0 %v3708
    %5058 = vmatpush1.bf16.msra.mxu0 %v3707
    %5059 = vmatprep.subr.bf16.mxu0 %v3724
    %5060 = vmatpush1.bf16.msra.mxu0 %v3723
    %5061 = vmatprep.subr.bf16.mxu0 %v3740
    %5062 = vmatpush1.bf16.msra.mxu0 %v3739
    %5063 = vmatprep.subr.bf16.mxu0 %v3756
    %5064 = vmatpush1.bf16.msra.mxu0 %v3755
    %5065 = vmatprep.subr.bf16.mxu0 %v3772
    %5066 = vmatpush1.bf16.msra.mxu0 %v3771
    %5067 = vmatprep.subr.bf16.mxu0 %v3788
    %5068 = vmatpush1.bf16.msra.mxu0 %v3787
    %5069 = vmatprep.subr.bf16.mxu0 %v3804
    %5070 = vmatpush1.bf16.msra.mxu0 %v3803
    %5071 = vmatprep.subr.bf16.mxu0 %v3820
    %5072 = vmatpush1.bf16.msra.mxu0 %v3819
    %5073 = vmatprep.subr.bf16.mxu0 %v3836
    %5074 = vmatpush1.bf16.msra.mxu0 %v3835
    %5075 = vmatprep.subr.bf16.mxu0 %v3852
    %5076 = vmatpush1.bf16.msra.mxu0 %v3851
    %5077 = vmatprep.subr.bf16.mxu0 %v3868
    %5078 = vmatpush1.bf16.msra.mxu0 %v3867
    %5079 = vmatprep.subr.bf16.mxu0 %v3884
    %5080 = vmatpush1.bf16.msra.mxu0 %v3883
    %5081 = vmatprep.subr.bf16.mxu0 %v3900
    %5082 = vmatpush1.bf16.msra.mxu0 %v3899
    %5083 = vmatprep.subr.bf16.mxu0 %v3916
    %5084 = vmatpush1.bf16.msra.mxu0 %v3915
    %5085 = vmatprep.subr.bf16.mxu0 %v3932
    %5086 = vmatpush1.bf16.msra.mxu0 %v3931
    %5087 = vmatprep.mubr.bf16.mxu0 %v102
    %5088 = vmatmul.mubr.bf16.gmra.mrb[0].mxu0 %v101
    %v5089 = vpop.f32.mrb[0].mxu0
    %v5090 = vadd.f32 %v5047, %v5089
    %v5091 = vpop.f32.mrb[0].mxu0
    %v5092 = vadd.f32 %v5049, %v5091
    %v5093 = vpop.f32.mrb[0].mxu0
    %v5094 = vadd.f32 %v5051, %v5093
    %v5095 = vpop.f32.mrb[0].mxu0
    %v5096 = vadd.f32 %v5053, %v5095
    %5097 = vdwg.mxu0
    %5098 = vmatprep.subr.bf16.mxu0 %v3182
    %5099 = vmatpush1.bf16.msra.mxu0 %v3181
    %5100 = vmatprep.subr.bf16.mxu0 %v3198
    %5101 = vmatpush1.bf16.msra.mxu0 %v3197
    %5102 = vmatprep.subr.bf16.mxu0 %v3214
    %5103 = vmatpush1.bf16.msra.mxu0 %v3213
    %5104 = vmatprep.subr.bf16.mxu0 %v3230
    %5105 = vmatpush1.bf16.msra.mxu0 %v3229
    %5106 = vmatprep.subr.bf16.mxu0 %v3246
    %5107 = vmatpush1.bf16.msra.mxu0 %v3245
    %5108 = vmatprep.subr.bf16.mxu0 %v3262
    %5109 = vmatpush1.bf16.msra.mxu0 %v3261
    %5110 = vmatprep.subr.bf16.mxu0 %v3278
    %5111 = vmatpush1.bf16.msra.mxu0 %v3277
    %5112 = vmatprep.subr.bf16.mxu0 %v3294
    %5113 = vmatpush1.bf16.msra.mxu0 %v3293
    %5114 = vmatprep.subr.bf16.mxu0 %v3310
    %5115 = vmatpush1.bf16.msra.mxu0 %v3309
    %5116 = vmatprep.subr.bf16.mxu0 %v3326
    %5117 = vmatpush1.bf16.msra.mxu0 %v3325
    %5118 = vmatprep.subr.bf16.mxu0 %v3342
    %5119 = vmatpush1.bf16.msra.mxu0 %v3341
    %5120 = vmatprep.subr.bf16.mxu0 %v3358
    %5121 = vmatpush1.bf16.msra.mxu0 %v3357
    %5122 = vmatprep.subr.bf16.mxu0 %v3374
    %5123 = vmatpush1.bf16.msra.mxu0 %v3373
    %5124 = vmatprep.subr.bf16.mxu0 %v3390
    %5125 = vmatpush1.bf16.msra.mxu0 %v3389
    %5126 = vmatprep.subr.bf16.mxu0 %v3406
    %5127 = vmatpush1.bf16.msra.mxu0 %v3405
    %5128 = vmatprep.subr.bf16.mxu0 %v3422
    %5129 = vmatpush1.bf16.msra.mxu0 %v3421
    %5130 = vmatprep.mubr.bf16.mxu0 %v98
    %5131 = vmatmul.mubr.bf16.gmra.mrb[0].mxu0 %v97
    %v5132 = vpop.f32.mrb[0].mxu0
    %v5133 = vadd.f32 0.0, %v5132
    %v5134 = vpop.f32.mrb[0].mxu0
    %v5135 = vadd.f32 0.0, %v5134
    %v5136 = vpop.f32.mrb[0].mxu0
    %v5137 = vadd.f32 0.0, %v5136
    %v5138 = vpop.f32.mrb[0].mxu0
    %v5139 = vadd.f32 0.0, %v5138
    %5140 = vdwg.mxu0
    %5141 = vmatprep.subr.bf16.mxu0 %v3438
    %5142 = vmatpush1.bf16.msra.mxu0 %v3437
    %5143 = vmatprep.subr.bf16.mxu0 %v3454
    %5144 = vmatpush1.bf16.msra.mxu0 %v3453
    %5145 = vmatprep.subr.bf16.mxu0 %v3470
    %5146 = vmatpush1.bf16.msra.mxu0 %v3469
    %5147 = vmatprep.subr.bf16.mxu0 %v3486
    %5148 = vmatpush1.bf16.msra.mxu0 %v3485
    %5149 = vmatprep.subr.bf16.mxu0 %v3502
    %5150 = vmatpush1.bf16.msra.mxu0 %v3501
    %5151 = vmatprep.subr.bf16.mxu0 %v3518
    %5152 = vmatpush1.bf16.msra.mxu0 %v3517
    %5153 = vmatprep.subr.bf16.mxu0 %v3534
    %5154 = vmatpush1.bf16.msra.mxu0 %v3533
    %5155 = vmatprep.subr.bf16.mxu0 %v3550
    %5156 = vmatpush1.bf16.msra.mxu0 %v3549
    %5157 = vmatprep.subr.bf16.mxu0 %v3566
    %5158 = vmatpush1.bf16.msra.mxu0 %v3565
    %5159 = vmatprep.subr.bf16.mxu0 %v3582
    %5160 = vmatpush1.bf16.msra.mxu0 %v3581
    %5161 = vmatprep.subr.bf16.mxu0 %v3598
    %5162 = vmatpush1.bf16.msra.mxu0 %v3597
    %5163 = vmatprep.subr.bf16.mxu0 %v3614
    %5164 = vmatpush1.bf16.msra.mxu0 %v3613
    %5165 = vmatprep.subr.bf16.mxu0 %v3630
    %5166 = vmatpush1.bf16.msra.mxu0 %v3629
    %5167 = vmatprep.subr.bf16.mxu0 %v3646
    %5168 = vmatpush1.bf16.msra.mxu0 %v3645
    %5169 = vmatprep.subr.bf16.mxu0 %v3662
    %5170 = vmatpush1.bf16.msra.mxu0 %v3661
    %5171 = vmatprep.subr.bf16.mxu0 %v3678
    %5172 = vmatpush1.bf16.msra.mxu0 %v3677
    %5173 = vmatprep.mubr.bf16.mxu0 %v100
    %5174 = vmatmul.mubr.bf16.gmra.mrb[0].mxu0 %v99
    %v5175 = vpop.f32.mrb[0].mxu0
    %v5176 = vadd.f32 %v5133, %v5175
    %v5177 = vpop.f32.mrb[0].mxu0
    %v5178 = vadd.f32 %v5135, %v5177
    %v5179 = vpop.f32.mrb[0].mxu0
    %v5180 = vadd.f32 %v5137, %v5179
    %v5181 = vpop.f32.mrb[0].mxu0
    %v5182 = vadd.f32 %v5139, %v5181
    %5183 = vdwg.mxu0
    %5184 = vmatprep.subr.bf16.mxu0 %v3694
    %5185 = vmatpush1.bf16.msra.mxu0 %v3693
    %5186 = vmatprep.subr.bf16.mxu0 %v3710
    %5187 = vmatpush1.bf16.msra.mxu0 %v3709
    %5188 = vmatprep.subr.bf16.mxu0 %v3726
    %5189 = vmatpush1.bf16.msra.mxu0 %v3725
    %5190 = vmatprep.subr.bf16.mxu0 %v3742
    %5191 = vmatpush1.bf16.msra.mxu0 %v3741
    %5192 = vmatprep.subr.bf16.mxu0 %v3758
    %5193 = vmatpush1.bf16.msra.mxu0 %v3757
    %5194 = vmatprep.subr.bf16.mxu0 %v3774
    %5195 = vmatpush1.bf16.msra.mxu0 %v3773
    %5196 = vmatprep.subr.bf16.mxu0 %v3790
    %5197 = vmatpush1.bf16.msra.mxu0 %v3789
    %5198 = vmatprep.subr.bf16.mxu0 %v3806
    %5199 = vmatpush1.bf16.msra.mxu0 %v3805
    %5200 = vmatprep.subr.bf16.mxu0 %v3822
    %5201 = vmatpush1.bf16.msra.mxu0 %v3821
    %5202 = vmatprep.subr.bf16.mxu0 %v3838
    %5203 = vmatpush1.bf16.msra.mxu0 %v3837
    %5204 = vmatprep.subr.bf16.mxu0 %v3854
    %5205 = vmatpush1.bf16.msra.mxu0 %v3853
    %5206 = vmatprep.subr.bf16.mxu0 %v3870
    %5207 = vmatpush1.bf16.msra.mxu0 %v3869
    %5208 = vmatprep.subr.bf16.mxu0 %v3886
    %5209 = vmatpush1.bf16.msra.mxu0 %v3885
    %5210 = vmatprep.subr.bf16.mxu0 %v3902
    %5211 = vmatpush1.bf16.msra.mxu0 %v3901
    %5212 = vmatprep.subr.bf16.mxu0 %v3918
    %5213 = vmatpush1.bf16.msra.mxu0 %v3917
    %5214 = vmatprep.subr.bf16.mxu0 %v3934
    %5215 = vmatpush1.bf16.msra.mxu0 %v3933
    %5216 = vmatprep.mubr.bf16.mxu0 %v102
    %5217 = vmatmul.mubr.bf16.gmra.mrb[0].mxu0 %v101
    %v5218 = vpop.f32.mrb[0].mxu0
    %v5219 = vadd.f32 %v5176, %v5218
    %v5220 = vpop.f32.mrb[0].mxu0
    %v5221 = vadd.f32 %v5178, %v5220
    %v5222 = vpop.f32.mrb[0].mxu0
    %v5223 = vadd.f32 %v5180, %v5222
    %v5224 = vpop.f32.mrb[0].mxu0
    %v5225 = vadd.f32 %v5182, %v5224
    %5226 = vdwg.mxu0
    %5227 = vmatprep.subr.bf16.mxu0 %v3184
    %5228 = vmatpush1.bf16.msra.mxu0 %v3183
    %5229 = vmatprep.subr.bf16.mxu0 %v3200
    %5230 = vmatpush1.bf16.msra.mxu0 %v3199
    %5231 = vmatprep.subr.bf16.mxu0 %v3216
    %5232 = vmatpush1.bf16.msra.mxu0 %v3215
    %5233 = vmatprep.subr.bf16.mxu0 %v3232
    %5234 = vmatpush1.bf16.msra.mxu0 %v3231
    %5235 = vmatprep.subr.bf16.mxu0 %v3248
    %5236 = vmatpush1.bf16.msra.mxu0 %v3247
    %5237 = vmatprep.subr.bf16.mxu0 %v3264
    %5238 = vmatpush1.bf16.msra.mxu0 %v3263
    %5239 = vmatprep.subr.bf16.mxu0 %v3280
    %5240 = vmatpush1.bf16.msra.mxu0 %v3279
    %5241 = vmatprep.subr.bf16.mxu0 %v3296
    %5242 = vmatpush1.bf16.msra.mxu0 %v3295
    %5243 = vmatprep.subr.bf16.mxu0 %v3312
    %5244 = vmatpush1.bf16.msra.mxu0 %v3311
    %5245 = vmatprep.subr.bf16.mxu0 %v3328
    %5246 = vmatpush1.bf16.msra.mxu0 %v3327
    %5247 = vmatprep.subr.bf16.mxu0 %v3344
    %5248 = vmatpush1.bf16.msra.mxu0 %v3343
    %5249 = vmatprep.subr.bf16.mxu0 %v3360
    %5250 = vmatpush1.bf16.msra.mxu0 %v3359
    %5251 = vmatprep.subr.bf16.mxu0 %v3376
    %5252 = vmatpush1.bf16.msra.mxu0 %v3375
    %5253 = vmatprep.subr.bf16.mxu0 %v3392
    %5254 = vmatpush1.bf16.msra.mxu0 %v3391
    %5255 = vmatprep.subr.bf16.mxu0 %v3408
    %5256 = vmatpush1.bf16.msra.mxu0 %v3407
    %5257 = vmatprep.subr.bf16.mxu0 %v3424
    %5258 = vmatpush1.bf16.msra.mxu0 %v3423
    %5259 = vmatprep.mubr.bf16.mxu0 %v98
    %5260 = vmatmul.mubr.bf16.gmra.mrb[0].mxu0 %v97
    %v5261 = vpop.f32.mrb[0].mxu0
    %v5262 = vadd.f32 0.0, %v5261
    %v5263 = vpop.f32.mrb[0].mxu0
    %v5264 = vadd.f32 0.0, %v5263
    %v5265 = vpop.f32.mrb[0].mxu0
    %v5266 = vadd.f32 0.0, %v5265
    %v5267 = vpop.f32.mrb[0].mxu0
    %v5268 = vadd.f32 0.0, %v5267
    %5269 = vdwg.mxu0
    %5270 = vmatprep.subr.bf16.mxu0 %v3440
    %5271 = vmatpush1.bf16.msra.mxu0 %v3439
    %5272 = vmatprep.subr.bf16.mxu0 %v3456
    %5273 = vmatpush1.bf16.msra.mxu0 %v3455
    %5274 = vmatprep.subr.bf16.mxu0 %v3472
    %5275 = vmatpush1.bf16.msra.mxu0 %v3471
    %5276 = vmatprep.subr.bf16.mxu0 %v3488
    %5277 = vmatpush1.bf16.msra.mxu0 %v3487
    %5278 = vmatprep.subr.bf16.mxu0 %v3504
    %5279 = vmatpush1.bf16.msra.mxu0 %v3503
    %5280 = vmatprep.subr.bf16.mxu0 %v3520
    %5281 = vmatpush1.bf16.msra.mxu0 %v3519
    %5282 = vmatprep.subr.bf16.mxu0 %v3536
    %5283 = vmatpush1.bf16.msra.mxu0 %v3535
    %5284 = vmatprep.subr.bf16.mxu0 %v3552
    %5285 = vmatpush1.bf16.msra.mxu0 %v3551
    %5286 = vmatprep.subr.bf16.mxu0 %v3568
    %5287 = vmatpush1.bf16.msra.mxu0 %v3567
    %5288 = vmatprep.subr.bf16.mxu0 %v3584
    %5289 = vmatpush1.bf16.msra.mxu0 %v3583
    %5290 = vmatprep.subr.bf16.mxu0 %v3600
    %5291 = vmatpush1.bf16.msra.mxu0 %v3599
    %5292 = vmatprep.subr.bf16.mxu0 %v3616
    %5293 = vmatpush1.bf16.msra.mxu0 %v3615
    %5294 = vmatprep.subr.bf16.mxu0 %v3632
    %5295 = vmatpush1.bf16.msra.mxu0 %v3631
    %5296 = vmatprep.subr.bf16.mxu0 %v3648
    %5297 = vmatpush1.bf16.msra.mxu0 %v3647
    %5298 = vmatprep.subr.bf16.mxu0 %v3664
    %5299 = vmatpush1.bf16.msra.mxu0 %v3663
    %5300 = vmatprep.subr.bf16.mxu0 %v3680
    %5301 = vmatpush1.bf16.msra.mxu0 %v3679
    %5302 = vmatprep.mubr.bf16.mxu0 %v100
    %5303 = vmatmul.mubr.bf16.gmra.mrb[0].mxu0 %v99
    %v5304 = vpop.f32.mrb[0].mxu0
    %v5305 = vadd.f32 %v5262, %v5304
    %v5306 = vpop.f32.mrb[0].mxu0
    %v5307 = vadd.f32 %v5264, %v5306
    %v5308 = vpop.f32.mrb[0].mxu0
    %v5309 = vadd.f32 %v5266, %v5308
    %v5310 = vpop.f32.mrb[0].mxu0
    %v5311 = vadd.f32 %v5268, %v5310
    %5312 = vdwg.mxu0
    %5313 = vmatprep.subr.bf16.mxu0 %v3696
    %5314 = vmatpush1.bf16.msra.mxu0 %v3695
    %5315 = vmatprep.subr.bf16.mxu0 %v3712
    %5316 = vmatpush1.bf16.msra.mxu0 %v3711
    %5317 = vmatprep.subr.bf16.mxu0 %v3728
    %5318 = vmatpush1.bf16.msra.mxu0 %v3727
    %5319 = vmatprep.subr.bf16.mxu0 %v3744
    %5320 = vmatpush1.bf16.msra.mxu0 %v3743
    %5321 = vmatprep.subr.bf16.mxu0 %v3760
    %5322 = vmatpush1.bf16.msra.mxu0 %v3759
    %5323 = vmatprep.subr.bf16.mxu0 %v3776
    %5324 = vmatpush1.bf16.msra.mxu0 %v3775
    %5325 = vmatprep.subr.bf16.mxu0 %v3792
    %5326 = vmatpush1.bf16.msra.mxu0 %v3791
    %5327 = vmatprep.subr.bf16.mxu0 %v3808
    %5328 = vmatpush1.bf16.msra.mxu0 %v3807
    %5329 = vmatprep.subr.bf16.mxu0 %v3824
    %5330 = vmatpush1.bf16.msra.mxu0 %v3823
    %5331 = vmatprep.subr.bf16.mxu0 %v3840
    %5332 = vmatpush1.bf16.msra.mxu0 %v3839
    %5333 = vmatprep.subr.bf16.mxu0 %v3856
    %5334 = vmatpush1.bf16.msra.mxu0 %v3855
    %5335 = vmatprep.subr.bf16.mxu0 %v3872
    %5336 = vmatpush1.bf16.msra.mxu0 %v3871
    %5337 = vmatprep.subr.bf16.mxu0 %v3888
    %5338 = vmatpush1.bf16.msra.mxu0 %v3887
    %5339 = vmatprep.subr.bf16.mxu0 %v3904
    %5340 = vmatpush1.bf16.msra.mxu0 %v3903
    %5341 = vmatprep.subr.bf16.mxu0 %v3920
    %5342 = vmatpush1.bf16.msra.mxu0 %v3919
    %5343 = vmatprep.subr.bf16.mxu0 %v3936
    %5344 = vmatpush1.bf16.msra.mxu0 %v3935
    %5345 = vmatprep.mubr.bf16.mxu0 %v102
    %5346 = vmatmul.mubr.bf16.gmra.mrb[0].mxu0 %v101
    %v5347 = vpop.f32.mrb[0].mxu0
    %v5348 = vadd.f32 %v5305, %v5347
    %v5349 = vpop.f32.mrb[0].mxu0
    %v5350 = vadd.f32 %v5307, %v5349
    %v5351 = vpop.f32.mrb[0].mxu0
    %v5352 = vadd.f32 %v5309, %v5351
    %v5353 = vpop.f32.mrb[0].mxu0
    %v5354 = vadd.f32 %v5311, %v5353
    %5355 = vdwg.mxu0
    %5356 = vmatprep.subr.bf16.mxu0 %v3186
    %5357 = vmatpush1.bf16.msra.mxu0 %v3185
    %5358 = vmatprep.subr.bf16.mxu0 %v3202
    %5359 = vmatpush1.bf16.msra.mxu0 %v3201
    %5360 = vmatprep.subr.bf16.mxu0 %v3218
    %5361 = vmatpush1.bf16.msra.mxu0 %v3217
    %5362 = vmatprep.subr.bf16.mxu0 %v3234
    %5363 = vmatpush1.bf16.msra.mxu0 %v3233
    %5364 = vmatprep.subr.bf16.mxu0 %v3250
    %5365 = vmatpush1.bf16.msra.mxu0 %v3249
    %5366 = vmatprep.subr.bf16.mxu0 %v3266
    %5367 = vmatpush1.bf16.msra.mxu0 %v3265
    %5368 = vmatprep.subr.bf16.mxu0 %v3282
    %5369 = vmatpush1.bf16.msra.mxu0 %v3281
    %5370 = vmatprep.subr.bf16.mxu0 %v3298
    %5371 = vmatpush1.bf16.msra.mxu0 %v3297
    %5372 = vmatprep.subr.bf16.mxu0 %v3314
    %5373 = vmatpush1.bf16.msra.mxu0 %v3313
    %5374 = vmatprep.subr.bf16.mxu0 %v3330
    %5375 = vmatpush1.bf16.msra.mxu0 %v3329
    %5376 = vmatprep.subr.bf16.mxu0 %v3346
    %5377 = vmatpush1.bf16.msra.mxu0 %v3345
    %5378 = vmatprep.subr.bf16.mxu0 %v3362
    %5379 = vmatpush1.bf16.msra.mxu0 %v3361
    %5380 = vmatprep.subr.bf16.mxu0 %v3378
    %5381 = vmatpush1.bf16.msra.mxu0 %v3377
    %5382 = vmatprep.subr.bf16.mxu0 %v3394
    %5383 = vmatpush1.bf16.msra.mxu0 %v3393
    %5384 = vmatprep.subr.bf16.mxu0 %v3410
    %5385 = vmatpush1.bf16.msra.mxu0 %v3409
    %5386 = vmatprep.subr.bf16.mxu0 %v3426
    %5387 = vmatpush1.bf16.msra.mxu0 %v3425
    %5388 = vmatprep.mubr.bf16.mxu0 %v98
    %5389 = vmatmul.mubr.bf16.gmra.mrb[0].mxu0 %v97
    %v5390 = vpop.f32.mrb[0].mxu0
    %v5391 = vadd.f32 0.0, %v5390
    %v5392 = vpop.f32.mrb[0].mxu0
    %v5393 = vadd.f32 0.0, %v5392
    %v5394 = vpop.f32.mrb[0].mxu0
    %v5395 = vadd.f32 0.0, %v5394
    %v5396 = vpop.f32.mrb[0].mxu0
    %v5397 = vadd.f32 0.0, %v5396
    %5398 = vdwg.mxu0
    %5399 = vmatprep.subr.bf16.mxu0 %v3442
    %5400 = vmatpush1.bf16.msra.mxu0 %v3441
    %5401 = vmatprep.subr.bf16.mxu0 %v3458
    %5402 = vmatpush1.bf16.msra.mxu0 %v3457
    %5403 = vmatprep.subr.bf16.mxu0 %v3474
    %5404 = vmatpush1.bf16.msra.mxu0 %v3473
    %5405 = vmatprep.subr.bf16.mxu0 %v3490
    %5406 = vmatpush1.bf16.msra.mxu0 %v3489
    %5407 = vmatprep.subr.bf16.mxu0 %v3506
    %5408 = vmatpush1.bf16.msra.mxu0 %v3505
    %5409 = vmatprep.subr.bf16.mxu0 %v3522
    %5410 = vmatpush1.bf16.msra.mxu0 %v3521
    %5411 = vmatprep.subr.bf16.mxu0 %v3538
    %5412 = vmatpush1.bf16.msra.mxu0 %v3537
    %5413 = vmatprep.subr.bf16.mxu0 %v3554
    %5414 = vmatpush1.bf16.msra.mxu0 %v3553
    %5415 = vmatprep.subr.bf16.mxu0 %v3570
    %5416 = vmatpush1.bf16.msra.mxu0 %v3569
    %5417 = vmatprep.subr.bf16.mxu0 %v3586
    %5418 = vmatpush1.bf16.msra.mxu0 %v3585
    %5419 = vmatprep.subr.bf16.mxu0 %v3602
    %5420 = vmatpush1.bf16.msra.mxu0 %v3601
    %5421 = vmatprep.subr.bf16.mxu0 %v3618
    %5422 = vmatpush1.bf16.msra.mxu0 %v3617
    %5423 = vmatprep.subr.bf16.mxu0 %v3634
    %5424 = vmatpush1.bf16.msra.mxu0 %v3633
    %5425 = vmatprep.subr.bf16.mxu0 %v3650
    %5426 = vmatpush1.bf16.msra.mxu0 %v3649
    %5427 = vmatprep.subr.bf16.mxu0 %v3666
    %5428 = vmatpush1.bf16.msra.mxu0 %v3665
    %5429 = vmatprep.subr.bf16.mxu0 %v3682
    %5430 = vmatpush1.bf16.msra.mxu0 %v3681
    %5431 = vmatprep.mubr.bf16.mxu0 %v100
    %5432 = vmatmul.mubr.bf16.gmra.mrb[0].mxu0 %v99
    %v5433 = vpop.f32.mrb[0].mxu0
    %v5434 = vadd.f32 %v5391, %v5433
    %v5435 = vpop.f32.mrb[0].mxu0
    %v5436 = vadd.f32 %v5393, %v5435
    %v5437 = vpop.f32.mrb[0].mxu0
    %v5438 = vadd.f32 %v5395, %v5437
    %v5439 = vpop.f32.mrb[0].mxu0
    %v5440 = vadd.f32 %v5397, %v5439
    %5441 = vdwg.mxu0
    %5442 = vmatprep.subr.bf16.mxu0 %v3698
    %5443 = vmatpush1.bf16.msra.mxu0 %v3697
    %5444 = vmatprep.subr.bf16.mxu0 %v3714
    %5445 = vmatpush1.bf16.msra.mxu0 %v3713
    %5446 = vmatprep.subr.bf16.mxu0 %v3730
    %5447 = vmatpush1.bf16.msra.mxu0 %v3729
    %5448 = vmatprep.subr.bf16.mxu0 %v3746
    %5449 = vmatpush1.bf16.msra.mxu0 %v3745
    %5450 = vmatprep.subr.bf16.mxu0 %v3762
    %5451 = vmatpush1.bf16.msra.mxu0 %v3761
    %5452 = vmatprep.subr.bf16.mxu0 %v3778
    %5453 = vmatpush1.bf16.msra.mxu0 %v3777
    %5454 = vmatprep.subr.bf16.mxu0 %v3794
    %5455 = vmatpush1.bf16.msra.mxu0 %v3793
    %5456 = vmatprep.subr.bf16.mxu0 %v3810
    %5457 = vmatpush1.bf16.msra.mxu0 %v3809
    %5458 = vmatprep.subr.bf16.mxu0 %v3826
    %5459 = vmatpush1.bf16.msra.mxu0 %v3825
    %5460 = vmatprep.subr.bf16.mxu0 %v3842
    %5461 = vmatpush1.bf16.msra.mxu0 %v3841
    %5462 = vmatprep.subr.bf16.mxu0 %v3858
    %5463 = vmatpush1.bf16.msra.mxu0 %v3857
    %5464 = vmatprep.subr.bf16.mxu0 %v3874
    %5465 = vmatpush1.bf16.msra.mxu0 %v3873
    %5466 = vmatprep.subr.bf16.mxu0 %v3890
    %5467 = vmatpush1.bf16.msra.mxu0 %v3889
    %5468 = vmatprep.subr.bf16.mxu0 %v3906
    %5469 = vmatpush1.bf16.msra.mxu0 %v3905
    %5470 = vmatprep.subr.bf16.mxu0 %v3922
    %5471 = vmatpush1.bf16.msra.mxu0 %v3921
    %5472 = vmatprep.subr.bf16.mxu0 %v3938
    %5473 = vmatpush1.bf16.msra.mxu0 %v3937
    %5474 = vmatprep.mubr.bf16.mxu0 %v102
    %5475 = vmatmul.mubr.bf16.gmra.mrb[0].mxu0 %v101
    %v5476 = vpop.f32.mrb[0].mxu0
    %v5477 = vadd.f32 %v5434, %v5476
    %v5478 = vpop.f32.mrb[0].mxu0
    %v5479 = vadd.f32 %v5436, %v5478
    %v5480 = vpop.f32.mrb[0].mxu0
    %v5481 = vadd.f32 %v5438, %v5480
    %v5482 = vpop.f32.mrb[0].mxu0
    %v5483 = vadd.f32 %v5440, %v5482
    %5484 = vdwg.mxu0
    %5485 = vmatprep.subr.bf16.mxu0 %v3188
    %5486 = vmatpush1.bf16.msra.mxu0 %v3187
    %5487 = vmatprep.subr.bf16.mxu0 %v3204
    %5488 = vmatpush1.bf16.msra.mxu0 %v3203
    %5489 = vmatprep.subr.bf16.mxu0 %v3220
    %5490 = vmatpush1.bf16.msra.mxu0 %v3219
    %5491 = vmatprep.subr.bf16.mxu0 %v3236
    %5492 = vmatpush1.bf16.msra.mxu0 %v3235
    %5493 = vmatprep.subr.bf16.mxu0 %v3252
    %5494 = vmatpush1.bf16.msra.mxu0 %v3251
    %5495 = vmatprep.subr.bf16.mxu0 %v3268
    %5496 = vmatpush1.bf16.msra.mxu0 %v3267
    %5497 = vmatprep.subr.bf16.mxu0 %v3284
    %5498 = vmatpush1.bf16.msra.mxu0 %v3283
    %5499 = vmatprep.subr.bf16.mxu0 %v3300
    %5500 = vmatpush1.bf16.msra.mxu0 %v3299
    %5501 = vmatprep.subr.bf16.mxu0 %v3316
    %5502 = vmatpush1.bf16.msra.mxu0 %v3315
    %5503 = vmatprep.subr.bf16.mxu0 %v3332
    %5504 = vmatpush1.bf16.msra.mxu0 %v3331
    %5505 = vmatprep.subr.bf16.mxu0 %v3348
    %5506 = vmatpush1.bf16.msra.mxu0 %v3347
    %5507 = vmatprep.subr.bf16.mxu0 %v3364
    %5508 = vmatpush1.bf16.msra.mxu0 %v3363
    %5509 = vmatprep.subr.bf16.mxu0 %v3380
    %5510 = vmatpush1.bf16.msra.mxu0 %v3379
    %5511 = vmatprep.subr.bf16.mxu0 %v3396
    %5512 = vmatpush1.bf16.msra.mxu0 %v3395
    %5513 = vmatprep.subr.bf16.mxu0 %v3412
    %5514 = vmatpush1.bf16.msra.mxu0 %v3411
    %5515 = vmatprep.subr.bf16.mxu0 %v3428
    %5516 = vmatpush1.bf16.msra.mxu0 %v3427
    %5517 = vmatprep.mubr.bf16.mxu0 %v98
    %5518 = vmatmul.mubr.bf16.gmra.mrb[0].mxu0 %v97
    %v5519 = vpop.f32.mrb[0].mxu0
    %v5520 = vadd.f32 0.0, %v5519
    %v5521 = vpop.f32.mrb[0].mxu0
    %v5522 = vadd.f32 0.0, %v5521
    %v5523 = vpop.f32.mrb[0].mxu0
    %v5524 = vadd.f32 0.0, %v5523
    %v5525 = vpop.f32.mrb[0].mxu0
    %v5526 = vadd.f32 0.0, %v5525
    %5527 = vdwg.mxu0
    %5528 = vmatprep.subr.bf16.mxu0 %v3444
    %5529 = vmatpush1.bf16.msra.mxu0 %v3443
    %5530 = vmatprep.subr.bf16.mxu0 %v3460
    %5531 = vmatpush1.bf16.msra.mxu0 %v3459
    %5532 = vmatprep.subr.bf16.mxu0 %v3476
    %5533 = vmatpush1.bf16.msra.mxu0 %v3475
    %5534 = vmatprep.subr.bf16.mxu0 %v3492
    %5535 = vmatpush1.bf16.msra.mxu0 %v3491
    %5536 = vmatprep.subr.bf16.mxu0 %v3508
    %5537 = vmatpush1.bf16.msra.mxu0 %v3507
    %5538 = vmatprep.subr.bf16.mxu0 %v3524
    %5539 = vmatpush1.bf16.msra.mxu0 %v3523
    %5540 = vmatprep.subr.bf16.mxu0 %v3540
    %5541 = vmatpush1.bf16.msra.mxu0 %v3539
    %5542 = vmatprep.subr.bf16.mxu0 %v3556
    %5543 = vmatpush1.bf16.msra.mxu0 %v3555
    %5544 = vmatprep.subr.bf16.mxu0 %v3572
    %5545 = vmatpush1.bf16.msra.mxu0 %v3571
    %5546 = vmatprep.subr.bf16.mxu0 %v3588
    %5547 = vmatpush1.bf16.msra.mxu0 %v3587
    %5548 = vmatprep.subr.bf16.mxu0 %v3604
    %5549 = vmatpush1.bf16.msra.mxu0 %v3603
    %5550 = vmatprep.subr.bf16.mxu0 %v3620
    %5551 = vmatpush1.bf16.msra.mxu0 %v3619
    %5552 = vmatprep.subr.bf16.mxu0 %v3636
    %5553 = vmatpush1.bf16.msra.mxu0 %v3635
    %5554 = vmatprep.subr.bf16.mxu0 %v3652
    %5555 = vmatpush1.bf16.msra.mxu0 %v3651
    %5556 = vmatprep.subr.bf16.mxu0 %v3668
    %5557 = vmatpush1.bf16.msra.mxu0 %v3667
    %5558 = vmatprep.subr.bf16.mxu0 %v3684
    %5559 = vmatpush1.bf16.msra.mxu0 %v3683
    %5560 = vmatprep.mubr.bf16.mxu0 %v100
    %5561 = vmatmul.mubr.bf16.gmra.mrb[0].mxu0 %v99
    %v5562 = vpop.f32.mrb[0].mxu0
    %v5563 = vadd.f32 %v5520, %v5562
    %v5564 = vpop.f32.mrb[0].mxu0
    %v5565 = vadd.f32 %v5522, %v5564
    %v5566 = vpop.f32.mrb[0].mxu0
    %v5567 = vadd.f32 %v5524, %v5566
    %v5568 = vpop.f32.mrb[0].mxu0
    %v5569 = vadd.f32 %v5526, %v5568
    %5570 = vdwg.mxu0
    %5571 = vmatprep.subr.bf16.mxu0 %v3700
    %5572 = vmatpush1.bf16.msra.mxu0 %v3699
    %5573 = vmatprep.subr.bf16.mxu0 %v3716
    %5574 = vmatpush1.bf16.msra.mxu0 %v3715
    %5575 = vmatprep.subr.bf16.mxu0 %v3732
    %5576 = vmatpush1.bf16.msra.mxu0 %v3731
    %5577 = vmatprep.subr.bf16.mxu0 %v3748
    %5578 = vmatpush1.bf16.msra.mxu0 %v3747
    %5579 = vmatprep.subr.bf16.mxu0 %v3764
    %5580 = vmatpush1.bf16.msra.mxu0 %v3763
    %5581 = vmatprep.subr.bf16.mxu0 %v3780
    %5582 = vmatpush1.bf16.msra.mxu0 %v3779
    %5583 = vmatprep.subr.bf16.mxu0 %v3796
    %5584 = vmatpush1.bf16.msra.mxu0 %v3795
    %5585 = vmatprep.subr.bf16.mxu0 %v3812
    %5586 = vmatpush1.bf16.msra.mxu0 %v3811
    %5587 = vmatprep.subr.bf16.mxu0 %v3828
    %5588 = vmatpush1.bf16.msra.mxu0 %v3827
    %5589 = vmatprep.subr.bf16.mxu0 %v3844
    %5590 = vmatpush1.bf16.msra.mxu0 %v3843
    %5591 = vmatprep.subr.bf16.mxu0 %v3860
    %5592 = vmatpush1.bf16.msra.mxu0 %v3859
    %5593 = vmatprep.subr.bf16.mxu0 %v3876
    %5594 = vmatpush1.bf16.msra.mxu0 %v3875
    %5595 = vmatprep.subr.bf16.mxu0 %v3892
    %5596 = vmatpush1.bf16.msra.mxu0 %v3891
    %5597 = vmatprep.subr.bf16.mxu0 %v3908
    %5598 = vmatpush1.bf16.msra.mxu0 %v3907
    %5599 = vmatprep.subr.bf16.mxu0 %v3924
    %5600 = vmatpush1.bf16.msra.mxu0 %v3923
    %5601 = vmatprep.subr.bf16.mxu0 %v3940
    %5602 = vmatpush1.bf16.msra.mxu0 %v3939
    %5603 = vmatprep.mubr.bf16.mxu0 %v102
    %5604 = vmatmul.mubr.bf16.gmra.mrb[0].mxu0 %v101
    %v5605 = vpop.f32.mrb[0].mxu0
    %v5606 = vadd.f32 %v5563, %v5605
    %v5607 = vpop.f32.mrb[0].mxu0
    %v5608 = vadd.f32 %v5565, %v5607
    %v5609 = vpop.f32.mrb[0].mxu0
    %v5610 = vadd.f32 %v5567, %v5609
    %v5611 = vpop.f32.mrb[0].mxu0
    %v5612 = vadd.f32 %v5569, %v5611
    %5613 = vdwg.mxu0
    %5614 = vmatprep.subr.bf16.mxu0 %v3190
    %5615 = vmatpush1.bf16.msra.mxu0 %v3189
    %5616 = vmatprep.subr.bf16.mxu0 %v3206
    %5617 = vmatpush1.bf16.msra.mxu0 %v3205
    %5618 = vmatprep.subr.bf16.mxu0 %v3222
    %5619 = vmatpush1.bf16.msra.mxu0 %v3221
    %5620 = vmatprep.subr.bf16.mxu0 %v3238
    %5621 = vmatpush1.bf16.msra.mxu0 %v3237
    %5622 = vmatprep.subr.bf16.mxu0 %v3254
    %5623 = vmatpush1.bf16.msra.mxu0 %v3253
    %5624 = vmatprep.subr.bf16.mxu0 %v3270
    %5625 = vmatpush1.bf16.msra.mxu0 %v3269
    %5626 = vmatprep.subr.bf16.mxu0 %v3286
    %5627 = vmatpush1.bf16.msra.mxu0 %v3285
    %5628 = vmatprep.subr.bf16.mxu0 %v3302
    %5629 = vmatpush1.bf16.msra.mxu0 %v3301
    %5630 = vmatprep.subr.bf16.mxu0 %v3318
    %5631 = vmatpush1.bf16.msra.mxu0 %v3317
    %5632 = vmatprep.subr.bf16.mxu0 %v3334
    %5633 = vmatpush1.bf16.msra.mxu0 %v3333
    %5634 = vmatprep.subr.bf16.mxu0 %v3350
    %5635 = vmatpush1.bf16.msra.mxu0 %v3349
    %5636 = vmatprep.subr.bf16.mxu0 %v3366
    %5637 = vmatpush1.bf16.msra.mxu0 %v3365
    %5638 = vmatprep.subr.bf16.mxu0 %v3382
    %5639 = vmatpush1.bf16.msra.mxu0 %v3381
    %5640 = vmatprep.subr.bf16.mxu0 %v3398
    %5641 = vmatpush1.bf16.msra.mxu0 %v3397
    %5642 = vmatprep.subr.bf16.mxu0 %v3414
    %5643 = vmatpush1.bf16.msra.mxu0 %v3413
    %5644 = vmatprep.subr.bf16.mxu0 %v3430
    %5645 = vmatpush1.bf16.msra.mxu0 %v3429
    %5646 = vmatprep.mubr.bf16.mxu0 %v98
    %5647 = vmatmul.mubr.bf16.gmra.mrb[0].mxu0 %v97
    %v5648 = vpop.f32.mrb[0].mxu0
    %v5649 = vadd.f32 0.0, %v5648
    %v5650 = vpop.f32.mrb[0].mxu0
    %v5651 = vadd.f32 0.0, %v5650
    %v5652 = vpop.f32.mrb[0].mxu0
    %v5653 = vadd.f32 0.0, %v5652
    %v5654 = vpop.f32.mrb[0].mxu0
    %v5655 = vadd.f32 0.0, %v5654
    %5656 = vdwg.mxu0
    %5657 = vmatprep.subr.bf16.mxu0 %v3446
    %5658 = vmatpush1.bf16.msra.mxu0 %v3445
    %5659 = vmatprep.subr.bf16.mxu0 %v3462
    %5660 = vmatpush1.bf16.msra.mxu0 %v3461
    %5661 = vmatprep.subr.bf16.mxu0 %v3478
    %5662 = vmatpush1.bf16.msra.mxu0 %v3477
    %5663 = vmatprep.subr.bf16.mxu0 %v3494
    %5664 = vmatpush1.bf16.msra.mxu0 %v3493
    %5665 = vmatprep.subr.bf16.mxu0 %v3510
    %5666 = vmatpush1.bf16.msra.mxu0 %v3509
    %5667 = vmatprep.subr.bf16.mxu0 %v3526
    %5668 = vmatpush1.bf16.msra.mxu0 %v3525
    %5669 = vmatprep.subr.bf16.mxu0 %v3542
    %5670 = vmatpush1.bf16.msra.mxu0 %v3541
    %5671 = vmatprep.subr.bf16.mxu0 %v3558
    %5672 = vmatpush1.bf16.msra.mxu0 %v3557
    %5673 = vmatprep.subr.bf16.mxu0 %v3574
    %5674 = vmatpush1.bf16.msra.mxu0 %v3573
    %5675 = vmatprep.subr.bf16.mxu0 %v3590
    %5676 = vmatpush1.bf16.msra.mxu0 %v3589
    %5677 = vmatprep.subr.bf16.mxu0 %v3606
    %5678 = vmatpush1.bf16.msra.mxu0 %v3605
    %5679 = vmatprep.subr.bf16.mxu0 %v3622
    %5680 = vmatpush1.bf16.msra.mxu0 %v3621
    %5681 = vmatprep.subr.bf16.mxu0 %v3638
    %5682 = vmatpush1.bf16.msra.mxu0 %v3637
    %5683 = vmatprep.subr.bf16.mxu0 %v3654
    %5684 = vmatpush1.bf16.msra.mxu0 %v3653
    %5685 = vmatprep.subr.bf16.mxu0 %v3670
    %5686 = vmatpush1.bf16.msra.mxu0 %v3669
    %5687 = vmatprep.subr.bf16.mxu0 %v3686
    %5688 = vmatpush1.bf16.msra.mxu0 %v3685
    %5689 = vmatprep.mubr.bf16.mxu0 %v100
    %5690 = vmatmul.mubr.bf16.gmra.mrb[0].mxu0 %v99
    %v5691 = vpop.f32.mrb[0].mxu0
    %v5692 = vadd.f32 %v5649, %v5691
    %v5693 = vpop.f32.mrb[0].mxu0
    %v5694 = vadd.f32 %v5651, %v5693
    %v5695 = vpop.f32.mrb[0].mxu0
    %v5696 = vadd.f32 %v5653, %v5695
    %v5697 = vpop.f32.mrb[0].mxu0
    %v5698 = vadd.f32 %v5655, %v5697
    %5699 = vdwg.mxu0
    %5700 = vmatprep.subr.bf16.mxu0 %v3702
    %5701 = vmatpush1.bf16.msra.mxu0 %v3701
    %5702 = vmatprep.subr.bf16.mxu0 %v3718
    %5703 = vmatpush1.bf16.msra.mxu0 %v3717
    %5704 = vmatprep.subr.bf16.mxu0 %v3734
    %5705 = vmatpush1.bf16.msra.mxu0 %v3733
    %5706 = vmatprep.subr.bf16.mxu0 %v3750
    %5707 = vmatpush1.bf16.msra.mxu0 %v3749
    %5708 = vmatprep.subr.bf16.mxu0 %v3766
    %5709 = vmatpush1.bf16.msra.mxu0 %v3765
    %5710 = vmatprep.subr.bf16.mxu0 %v3782
    %5711 = vmatpush1.bf16.msra.mxu0 %v3781
    %5712 = vmatprep.subr.bf16.mxu0 %v3798
    %5713 = vmatpush1.bf16.msra.mxu0 %v3797
    %5714 = vmatprep.subr.bf16.mxu0 %v3814
    %5715 = vmatpush1.bf16.msra.mxu0 %v3813
    %5716 = vmatprep.subr.bf16.mxu0 %v3830
    %5717 = vmatpush1.bf16.msra.mxu0 %v3829
    %5718 = vmatprep.subr.bf16.mxu0 %v3846
    %5719 = vmatpush1.bf16.msra.mxu0 %v3845
    %5720 = vmatprep.subr.bf16.mxu0 %v3862
    %5721 = vmatpush1.bf16.msra.mxu0 %v3861
    %5722 = vmatprep.subr.bf16.mxu0 %v3878
    %5723 = vmatpush1.bf16.msra.mxu0 %v3877
    %5724 = vmatprep.subr.bf16.mxu0 %v3894
    %5725 = vmatpush1.bf16.msra.mxu0 %v3893
    %5726 = vmatprep.subr.bf16.mxu0 %v3910
    %5727 = vmatpush1.bf16.msra.mxu0 %v3909
    %5728 = vmatprep.subr.bf16.mxu0 %v3926
    %5729 = vmatpush1.bf16.msra.mxu0 %v3925
    %5730 = vmatprep.subr.bf16.mxu0 %v3942
    %5731 = vmatpush1.bf16.msra.mxu0 %v3941
    %5732 = vmatprep.mubr.bf16.mxu0 %v102
    %5733 = vmatmul.mubr.bf16.gmra.mrb[0].mxu0 %v101
    %v5734 = vpop.f32.mrb[0].mxu0
    %v5735 = vadd.f32 %v5692, %v5734
    %v5736 = vpop.f32.mrb[0].mxu0
    %v5737 = vadd.f32 %v5694, %v5736
    %v5738 = vpop.f32.mrb[0].mxu0
    %v5739 = vadd.f32 %v5696, %v5738
    %v5740 = vpop.f32.mrb[0].mxu0
    %v5741 = vadd.f32 %v5698, %v5740
    %5742 = vdwg.mxu0
    %v5743 = vmax.f32 %v4832, 0.0
    %v5744 = vmax.f32 %v4834, 0.0
    %v5745 = vmax.f32 %v4961, 0.0
    %v5746 = vmax.f32 %v4963, 0.0
    %v5747 = vmax.f32 %v5090, 0.0
    %v5748 = vmax.f32 %v5092, 0.0
    %v5749 = vmax.f32 %v5219, 0.0
    %v5750 = vmax.f32 %v5221, 0.0
    %v5751 = vmax.f32 %v5348, 0.0
    %v5752 = vmax.f32 %v5350, 0.0
    %v5753 = vmax.f32 %v5477, 0.0
    %v5754 = vmax.f32 %v5479, 0.0
    %v5755 = vmax.f32 %v5606, 0.0
    %v5756 = vmax.f32 %v5608, 0.0
    %v5757 = vmax.f32 %v5735, 0.0
    %v5758 = vmax.f32 %v5737, 0.0
    %v5759 = vmax.f32 %v4836, 0.0
    %v5760 = vmax.f32 %v4838, 0.0
    %v5761 = vmax.f32 %v4965, 0.0
    %v5762 = vmax.f32 %v4967, 0.0
    %v5763 = vmax.f32 %v5094, 0.0
    %v5764 = vmax.f32 %v5096, 0.0
    %v5765 = vmax.f32 %v5223, 0.0
    %v5766 = vmax.f32 %v5225, 0.0
    %v5767 = vmax.f32 %v5352, 0.0
    %v5768 = vmax.f32 %v5354, 0.0
    %v5769 = vmax.f32 %v5481, 0.0
    %v5770 = vmax.f32 %v5483, 0.0
    %v5771 = vmax.f32 %v5610, 0.0
    %v5772 = vmax.f32 %v5612, 0.0
    %v5773 = vmax.f32 %v5739, 0.0
    %v5774 = vmax.f32 %v5741, 0.0
    %v5775 = vpack.c.bf16 %v5759, %v5743
    %v5776 = vpack.c.bf16 %v5760, %v5744
    %v5777 = vpack.c.bf16 %v5761, %v5745
    %v5778 = vpack.c.bf16 %v5762, %v5746
    %v5779 = vpack.c.bf16 %v5763, %v5747
    %v5780 = vpack.c.bf16 %v5764, %v5748
    %v5781 = vpack.c.bf16 %v5765, %v5749
    %v5782 = vpack.c.bf16 %v5766, %v5750
    %v5783 = vpack.c.bf16 %v5767, %v5751
    %v5784 = vpack.c.bf16 %v5768, %v5752
    %v5785 = vpack.c.bf16 %v5769, %v5753
    %v5786 = vpack.c.bf16 %v5770, %v5754
    %v5787 = vpack.c.bf16 %v5771, %v5755
    %v5788 = vpack.c.bf16 %v5772, %v5756
    %v5789 = vpack.c.bf16 %v5773, %v5757
    %v5790 = vpack.c.bf16 %v5774, %v5758
    %v5791 = vld [vmem:[#allocation7] sm:$0xff]
    %v5792 = vld [vmem:[#allocation7 + $0x8] sm:$0xff]
    %v5793 = vld [vmem:[#allocation7 + $0x10] sm:$0xff]
    %v5794 = vld [vmem:[#allocation7 + $0x18] sm:$0xff]
    %v5795 = vld [vmem:[#allocation7 + $0x20] sm:$0xff]
    %v5796 = vld [vmem:[#allocation7 + $0x28] sm:$0xff]
    %v5797 = vld [vmem:[#allocation7 + $0x30] sm:$0xff]
    %v5798 = vld [vmem:[#allocation7 + $0x38] sm:$0xff]
    %v5799 = vld [vmem:[#allocation7 + $0x40] sm:$0xff]
    %v5800 = vld [vmem:[#allocation7 + $0x48] sm:$0xff]
    %v5801 = vld [vmem:[#allocation7 + $0x50] sm:$0xff]
    %v5802 = vld [vmem:[#allocation7 + $0x58] sm:$0xff]
    %v5803 = vld [vmem:[#allocation7 + $0x60] sm:$0xff]
    %v5804 = vld [vmem:[#allocation7 + $0x68] sm:$0xff]
    %v5805 = vld [vmem:[#allocation7 + $0x70] sm:$0xff]
    %v5806 = vld [vmem:[#allocation7 + $0x78] sm:$0xff]
    %v5807 = vld [vmem:[#allocation7 + $0x80] sm:$0xff]
    %v5808 = vld [vmem:[#allocation7 + $0x88] sm:$0xff]
    %v5809 = vld [vmem:[#allocation7 + $0x90] sm:$0xff]
    %v5810 = vld [vmem:[#allocation7 + $0x98] sm:$0xff]
    %v5811 = vld [vmem:[#allocation7 + $0xa0] sm:$0xff]
    %v5812 = vld [vmem:[#allocation7 + $0xa8] sm:$0xff]
    %v5813 = vld [vmem:[#allocation7 + $0xb0] sm:$0xff]
    %v5814 = vld [vmem:[#allocation7 + $0xb8] sm:$0xff]
    %v5815 = vld [vmem:[#allocation7 + $0xc0] sm:$0xff]
    %v5816 = vld [vmem:[#allocation7 + $0xc8] sm:$0xff]
    %v5817 = vld [vmem:[#allocation7 + $0xd0] sm:$0xff]
    %v5818 = vld [vmem:[#allocation7 + $0xd8] sm:$0xff]
    %v5819 = vld [vmem:[#allocation7 + $0xe0] sm:$0xff]
    %v5820 = vld [vmem:[#allocation7 + $0xe8] sm:$0xff]
    %v5821 = vld [vmem:[#allocation7 + $0xf0] sm:$0xff]
    %v5822 = vld [vmem:[#allocation7 + $0xf8] sm:$0xff]
    %v5823 = vld [vmem:[#allocation7 + $0x100] sm:$0xff]
    %v5824 = vld [vmem:[#allocation7 + $0x108] sm:$0xff]
    %v5825 = vld [vmem:[#allocation7 + $0x110] sm:$0xff]
    %v5826 = vld [vmem:[#allocation7 + $0x118] sm:$0xff]
    %v5827 = vld [vmem:[#allocation7 + $0x120] sm:$0xff]
    %v5828 = vld [vmem:[#allocation7 + $0x128] sm:$0xff]
    %v5829 = vld [vmem:[#allocation7 + $0x130] sm:$0xff]
    %v5830 = vld [vmem:[#allocation7 + $0x138] sm:$0xff]
    %v5831 = vld [vmem:[#allocation7 + $0x140] sm:$0xff]
    %v5832 = vld [vmem:[#allocation7 + $0x148] sm:$0xff]
    %v5833 = vld [vmem:[#allocation7 + $0x150] sm:$0xff]
    %v5834 = vld [vmem:[#allocation7 + $0x158] sm:$0xff]
    %v5835 = vld [vmem:[#allocation7 + $0x160] sm:$0xff]
    %v5836 = vld [vmem:[#allocation7 + $0x168] sm:$0xff]
    %v5837 = vld [vmem:[#allocation7 + $0x170] sm:$0xff]
    %v5838 = vld [vmem:[#allocation7 + $0x178] sm:$0xff]
    %v5839 = vld [vmem:[#allocation7 + $0x180] sm:$0xff]
    %v5840 = vld [vmem:[#allocation7 + $0x188] sm:$0xff]
    %v5841 = vld [vmem:[#allocation7 + $0x190] sm:$0xff]
    %v5842 = vld [vmem:[#allocation7 + $0x198] sm:$0xff]
    %v5843 = vld [vmem:[#allocation7 + $0x1a0] sm:$0xff]
    %v5844 = vld [vmem:[#allocation7 + $0x1a8] sm:$0xff]
    %v5845 = vld [vmem:[#allocation7 + $0x1b0] sm:$0xff]
    %v5846 = vld [vmem:[#allocation7 + $0x1b8] sm:$0xff]
    %v5847 = vld [vmem:[#allocation7 + $0x1c0] sm:$0xff]
    %v5848 = vld [vmem:[#allocation7 + $0x1c8] sm:$0xff]
    %v5849 = vld [vmem:[#allocation7 + $0x1d0] sm:$0xff]
    %v5850 = vld [vmem:[#allocation7 + $0x1d8] sm:$0xff]
    %v5851 = vld [vmem:[#allocation7 + $0x1e0] sm:$0xff]
    %v5852 = vld [vmem:[#allocation7 + $0x1e8] sm:$0xff]
    %v5853 = vld [vmem:[#allocation7 + $0x1f0] sm:$0xff]
    %v5854 = vld [vmem:[#allocation7 + $0x1f8] sm:$0xff]
    %v5855 = vld [vmem:[#allocation7 + $0x200] sm:$0xff]
    %v5856 = vld [vmem:[#allocation7 + $0x208] sm:$0xff]
    %v5857 = vld [vmem:[#allocation7 + $0x210] sm:$0xff]
    %v5858 = vld [vmem:[#allocation7 + $0x218] sm:$0xff]
    %v5859 = vld [vmem:[#allocation7 + $0x220] sm:$0xff]
    %v5860 = vld [vmem:[#allocation7 + $0x228] sm:$0xff]
    %v5861 = vld [vmem:[#allocation7 + $0x230] sm:$0xff]
    %v5862 = vld [vmem:[#allocation7 + $0x238] sm:$0xff]
    %v5863 = vld [vmem:[#allocation7 + $0x240] sm:$0xff]
    %v5864 = vld [vmem:[#allocation7 + $0x248] sm:$0xff]
    %v5865 = vld [vmem:[#allocation7 + $0x250] sm:$0xff]
    %v5866 = vld [vmem:[#allocation7 + $0x258] sm:$0xff]
    %v5867 = vld [vmem:[#allocation7 + $0x260] sm:$0xff]
    %v5868 = vld [vmem:[#allocation7 + $0x268] sm:$0xff]
    %v5869 = vld [vmem:[#allocation7 + $0x270] sm:$0xff]
    %v5870 = vld [vmem:[#allocation7 + $0x278] sm:$0xff]
    %v5871 = vld [vmem:[#allocation7 + $0x280] sm:$0xff]
    %v5872 = vld [vmem:[#allocation7 + $0x288] sm:$0xff]
    %v5873 = vld [vmem:[#allocation7 + $0x290] sm:$0xff]
    %v5874 = vld [vmem:[#allocation7 + $0x298] sm:$0xff]
    %v5875 = vld [vmem:[#allocation7 + $0x2a0] sm:$0xff]
    %v5876 = vld [vmem:[#allocation7 + $0x2a8] sm:$0xff]
    %v5877 = vld [vmem:[#allocation7 + $0x2b0] sm:$0xff]
    %v5878 = vld [vmem:[#allocation7 + $0x2b8] sm:$0xff]
    %v5879 = vld [vmem:[#allocation7 + $0x2c0] sm:$0xff]
    %v5880 = vld [vmem:[#allocation7 + $0x2c8] sm:$0xff]
    %v5881 = vld [vmem:[#allocation7 + $0x2d0] sm:$0xff]
    %v5882 = vld [vmem:[#allocation7 + $0x2d8] sm:$0xff]
    %v5883 = vld [vmem:[#allocation7 + $0x2e0] sm:$0xff]
    %v5884 = vld [vmem:[#allocation7 + $0x2e8] sm:$0xff]
    %v5885 = vld [vmem:[#allocation7 + $0x2f0] sm:$0xff]
    %v5886 = vld [vmem:[#allocation7 + $0x2f8] sm:$0xff]
    %v5887 = vld [vmem:[#allocation7 + $0x300] sm:$0xff]
    %v5888 = vld [vmem:[#allocation7 + $0x308] sm:$0xff]
    %v5889 = vld [vmem:[#allocation7 + $0x310] sm:$0xff]
    %v5890 = vld [vmem:[#allocation7 + $0x318] sm:$0xff]
    %v5891 = vld [vmem:[#allocation7 + $0x320] sm:$0xff]
    %v5892 = vld [vmem:[#allocation7 + $0x328] sm:$0xff]
    %v5893 = vld [vmem:[#allocation7 + $0x330] sm:$0xff]
    %v5894 = vld [vmem:[#allocation7 + $0x338] sm:$0xff]
    %v5895 = vld [vmem:[#allocation7 + $0x340] sm:$0xff]
    %v5896 = vld [vmem:[#allocation7 + $0x348] sm:$0xff]
    %v5897 = vld [vmem:[#allocation7 + $0x350] sm:$0xff]
    %v5898 = vld [vmem:[#allocation7 + $0x358] sm:$0xff]
    %v5899 = vld [vmem:[#allocation7 + $0x360] sm:$0xff]
    %v5900 = vld [vmem:[#allocation7 + $0x368] sm:$0xff]
    %v5901 = vld [vmem:[#allocation7 + $0x370] sm:$0xff]
    %v5902 = vld [vmem:[#allocation7 + $0x378] sm:$0xff]
    %v5903 = vld [vmem:[#allocation7 + $0x380] sm:$0xff]
    %v5904 = vld [vmem:[#allocation7 + $0x388] sm:$0xff]
    %v5905 = vld [vmem:[#allocation7 + $0x390] sm:$0xff]
    %v5906 = vld [vmem:[#allocation7 + $0x398] sm:$0xff]
    %v5907 = vld [vmem:[#allocation7 + $0x3a0] sm:$0xff]
    %v5908 = vld [vmem:[#allocation7 + $0x3a8] sm:$0xff]
    %v5909 = vld [vmem:[#allocation7 + $0x3b0] sm:$0xff]
    %v5910 = vld [vmem:[#allocation7 + $0x3b8] sm:$0xff]
    %v5911 = vld [vmem:[#allocation7 + $0x3c0] sm:$0xff]
    %v5912 = vld [vmem:[#allocation7 + $0x3c8] sm:$0xff]
    %v5913 = vld [vmem:[#allocation7 + $0x3d0] sm:$0xff]
    %v5914 = vld [vmem:[#allocation7 + $0x3d8] sm:$0xff]
    %v5915 = vld [vmem:[#allocation7 + $0x3e0] sm:$0xff]
    %v5916 = vld [vmem:[#allocation7 + $0x3e8] sm:$0xff]
    %v5917 = vld [vmem:[#allocation7 + $0x3f0] sm:$0xff]
    %v5918 = vld [vmem:[#allocation7 + $0x3f8] sm:$0xff]
    %v5919 = vld [vmem:[#allocation7 + $0x400] sm:$0xff]
    %v5920 = vld [vmem:[#allocation7 + $0x408] sm:$0xff]
    %v5921 = vld [vmem:[#allocation7 + $0x410] sm:$0xff]
    %v5922 = vld [vmem:[#allocation7 + $0x418] sm:$0xff]
    %v5923 = vld [vmem:[#allocation7 + $0x420] sm:$0xff]
    %v5924 = vld [vmem:[#allocation7 + $0x428] sm:$0xff]
    %v5925 = vld [vmem:[#allocation7 + $0x430] sm:$0xff]
    %v5926 = vld [vmem:[#allocation7 + $0x438] sm:$0xff]
    %v5927 = vld [vmem:[#allocation7 + $0x440] sm:$0xff]
    %v5928 = vld [vmem:[#allocation7 + $0x448] sm:$0xff]
    %v5929 = vld [vmem:[#allocation7 + $0x450] sm:$0xff]
    %v5930 = vld [vmem:[#allocation7 + $0x458] sm:$0xff]
    %v5931 = vld [vmem:[#allocation7 + $0x460] sm:$0xff]
    %v5932 = vld [vmem:[#allocation7 + $0x468] sm:$0xff]
    %v5933 = vld [vmem:[#allocation7 + $0x470] sm:$0xff]
    %v5934 = vld [vmem:[#allocation7 + $0x478] sm:$0xff]
    %v5935 = vld [vmem:[#allocation7 + $0x480] sm:$0xff]
    %v5936 = vld [vmem:[#allocation7 + $0x488] sm:$0xff]
    %v5937 = vld [vmem:[#allocation7 + $0x490] sm:$0xff]
    %v5938 = vld [vmem:[#allocation7 + $0x498] sm:$0xff]
    %v5939 = vld [vmem:[#allocation7 + $0x4a0] sm:$0xff]
    %v5940 = vld [vmem:[#allocation7 + $0x4a8] sm:$0xff]
    %v5941 = vld [vmem:[#allocation7 + $0x4b0] sm:$0xff]
    %v5942 = vld [vmem:[#allocation7 + $0x4b8] sm:$0xff]
    %v5943 = vld [vmem:[#allocation7 + $0x4c0] sm:$0xff]
    %v5944 = vld [vmem:[#allocation7 + $0x4c8] sm:$0xff]
    %v5945 = vld [vmem:[#allocation7 + $0x4d0] sm:$0xff]
    %v5946 = vld [vmem:[#allocation7 + $0x4d8] sm:$0xff]
    %v5947 = vld [vmem:[#allocation7 + $0x4e0] sm:$0xff]
    %v5948 = vld [vmem:[#allocation7 + $0x4e8] sm:$0xff]
    %v5949 = vld [vmem:[#allocation7 + $0x4f0] sm:$0xff]
    %v5950 = vld [vmem:[#allocation7 + $0x4f8] sm:$0xff]
    %v5951 = vld [vmem:[#allocation7 + $0x500] sm:$0xff]
    %v5952 = vld [vmem:[#allocation7 + $0x508] sm:$0xff]
    %v5953 = vld [vmem:[#allocation7 + $0x510] sm:$0xff]
    %v5954 = vld [vmem:[#allocation7 + $0x518] sm:$0xff]
    %v5955 = vld [vmem:[#allocation7 + $0x520] sm:$0xff]
    %v5956 = vld [vmem:[#allocation7 + $0x528] sm:$0xff]
    %v5957 = vld [vmem:[#allocation7 + $0x530] sm:$0xff]
    %v5958 = vld [vmem:[#allocation7 + $0x538] sm:$0xff]
    %v5959 = vld [vmem:[#allocation7 + $0x540] sm:$0xff]
    %v5960 = vld [vmem:[#allocation7 + $0x548] sm:$0xff]
    %v5961 = vld [vmem:[#allocation7 + $0x550] sm:$0xff]
    %v5962 = vld [vmem:[#allocation7 + $0x558] sm:$0xff]
    %v5963 = vld [vmem:[#allocation7 + $0x560] sm:$0xff]
    %v5964 = vld [vmem:[#allocation7 + $0x568] sm:$0xff]
    %v5965 = vld [vmem:[#allocation7 + $0x570] sm:$0xff]
    %v5966 = vld [vmem:[#allocation7 + $0x578] sm:$0xff]
    %v5967 = vld [vmem:[#allocation7 + $0x580] sm:$0xff]
    %v5968 = vld [vmem:[#allocation7 + $0x588] sm:$0xff]
    %v5969 = vld [vmem:[#allocation7 + $0x590] sm:$0xff]
    %v5970 = vld [vmem:[#allocation7 + $0x598] sm:$0xff]
    %v5971 = vld [vmem:[#allocation7 + $0x5a0] sm:$0xff]
    %v5972 = vld [vmem:[#allocation7 + $0x5a8] sm:$0xff]
    %v5973 = vld [vmem:[#allocation7 + $0x5b0] sm:$0xff]
    %v5974 = vld [vmem:[#allocation7 + $0x5b8] sm:$0xff]
    %v5975 = vld [vmem:[#allocation7 + $0x5c0] sm:$0xff]
    %v5976 = vld [vmem:[#allocation7 + $0x5c8] sm:$0xff]
    %v5977 = vld [vmem:[#allocation7 + $0x5d0] sm:$0xff]
    %v5978 = vld [vmem:[#allocation7 + $0x5d8] sm:$0xff]
    %v5979 = vld [vmem:[#allocation7 + $0x5e0] sm:$0xff]
    %v5980 = vld [vmem:[#allocation7 + $0x5e8] sm:$0xff]
    %v5981 = vld [vmem:[#allocation7 + $0x5f0] sm:$0xff]
    %v5982 = vld [vmem:[#allocation7 + $0x5f8] sm:$0xff]
    %v5983 = vld [vmem:[#allocation7 + $0x600] sm:$0xff]
    %v5984 = vld [vmem:[#allocation7 + $0x608] sm:$0xff]
    %v5985 = vld [vmem:[#allocation7 + $0x610] sm:$0xff]
    %v5986 = vld [vmem:[#allocation7 + $0x618] sm:$0xff]
    %v5987 = vld [vmem:[#allocation7 + $0x620] sm:$0xff]
    %v5988 = vld [vmem:[#allocation7 + $0x628] sm:$0xff]
    %v5989 = vld [vmem:[#allocation7 + $0x630] sm:$0xff]
    %v5990 = vld [vmem:[#allocation7 + $0x638] sm:$0xff]
    %v5991 = vld [vmem:[#allocation7 + $0x640] sm:$0xff]
    %v5992 = vld [vmem:[#allocation7 + $0x648] sm:$0xff]
    %v5993 = vld [vmem:[#allocation7 + $0x650] sm:$0xff]
    %v5994 = vld [vmem:[#allocation7 + $0x658] sm:$0xff]
    %v5995 = vld [vmem:[#allocation7 + $0x660] sm:$0xff]
    %v5996 = vld [vmem:[#allocation7 + $0x668] sm:$0xff]
    %v5997 = vld [vmem:[#allocation7 + $0x670] sm:$0xff]
    %v5998 = vld [vmem:[#allocation7 + $0x678] sm:$0xff]
    %v5999 = vld [vmem:[#allocation7 + $0x680] sm:$0xff]
    %v6000 = vld [vmem:[#allocation7 + $0x688] sm:$0xff]
    %v6001 = vld [vmem:[#allocation7 + $0x690] sm:$0xff]
    %v6002 = vld [vmem:[#allocation7 + $0x698] sm:$0xff]
    %v6003 = vld [vmem:[#allocation7 + $0x6a0] sm:$0xff]
    %v6004 = vld [vmem:[#allocation7 + $0x6a8] sm:$0xff]
    %v6005 = vld [vmem:[#allocation7 + $0x6b0] sm:$0xff]
    %v6006 = vld [vmem:[#allocation7 + $0x6b8] sm:$0xff]
    %v6007 = vld [vmem:[#allocation7 + $0x6c0] sm:$0xff]
    %v6008 = vld [vmem:[#allocation7 + $0x6c8] sm:$0xff]
    %v6009 = vld [vmem:[#allocation7 + $0x6d0] sm:$0xff]
    %v6010 = vld [vmem:[#allocation7 + $0x6d8] sm:$0xff]
    %v6011 = vld [vmem:[#allocation7 + $0x6e0] sm:$0xff]
    %v6012 = vld [vmem:[#allocation7 + $0x6e8] sm:$0xff]
    %v6013 = vld [vmem:[#allocation7 + $0x6f0] sm:$0xff]
    %v6014 = vld [vmem:[#allocation7 + $0x6f8] sm:$0xff]
    %v6015 = vld [vmem:[#allocation7 + $0x700] sm:$0xff]
    %v6016 = vld [vmem:[#allocation7 + $0x708] sm:$0xff]
    %v6017 = vld [vmem:[#allocation7 + $0x710] sm:$0xff]
    %v6018 = vld [vmem:[#allocation7 + $0x718] sm:$0xff]
    %v6019 = vld [vmem:[#allocation7 + $0x720] sm:$0xff]
    %v6020 = vld [vmem:[#allocation7 + $0x728] sm:$0xff]
    %v6021 = vld [vmem:[#allocation7 + $0x730] sm:$0xff]
    %v6022 = vld [vmem:[#allocation7 + $0x738] sm:$0xff]
    %v6023 = vld [vmem:[#allocation7 + $0x740] sm:$0xff]
    %v6024 = vld [vmem:[#allocation7 + $0x748] sm:$0xff]
    %v6025 = vld [vmem:[#allocation7 + $0x750] sm:$0xff]
    %v6026 = vld [vmem:[#allocation7 + $0x758] sm:$0xff]
    %v6027 = vld [vmem:[#allocation7 + $0x760] sm:$0xff]
    %v6028 = vld [vmem:[#allocation7 + $0x768] sm:$0xff]
    %v6029 = vld [vmem:[#allocation7 + $0x770] sm:$0xff]
    %v6030 = vld [vmem:[#allocation7 + $0x778] sm:$0xff]
    %v6031 = vld [vmem:[#allocation7 + $0x780] sm:$0xff]
    %v6032 = vld [vmem:[#allocation7 + $0x788] sm:$0xff]
    %v6033 = vld [vmem:[#allocation7 + $0x790] sm:$0xff]
    %v6034 = vld [vmem:[#allocation7 + $0x798] sm:$0xff]
    %v6035 = vld [vmem:[#allocation7 + $0x7a0] sm:$0xff]
    %v6036 = vld [vmem:[#allocation7 + $0x7a8] sm:$0xff]
    %v6037 = vld [vmem:[#allocation7 + $0x7b0] sm:$0xff]
    %v6038 = vld [vmem:[#allocation7 + $0x7b8] sm:$0xff]
    %v6039 = vld [vmem:[#allocation7 + $0x7c0] sm:$0xff]
    %v6040 = vld [vmem:[#allocation7 + $0x7c8] sm:$0xff]
    %v6041 = vld [vmem:[#allocation7 + $0x7d0] sm:$0xff]
    %v6042 = vld [vmem:[#allocation7 + $0x7d8] sm:$0xff]
    %v6043 = vld [vmem:[#allocation7 + $0x7e0] sm:$0xff]
    %v6044 = vld [vmem:[#allocation7 + $0x7e8] sm:$0xff]
    %v6045 = vld [vmem:[#allocation7 + $0x7f0] sm:$0xff]
    %v6046 = vld [vmem:[#allocation7 + $0x7f8] sm:$0xff]
    %v6047 = vld [vmem:[#allocation7 + $0x800] sm:$0xff]
    %v6048 = vld [vmem:[#allocation7 + $0x808] sm:$0xff]
    %v6049 = vld [vmem:[#allocation7 + $0x810] sm:$0xff]
    %v6050 = vld [vmem:[#allocation7 + $0x818] sm:$0xff]
    %v6051 = vld [vmem:[#allocation7 + $0x820] sm:$0xff]
    %v6052 = vld [vmem:[#allocation7 + $0x828] sm:$0xff]
    %v6053 = vld [vmem:[#allocation7 + $0x830] sm:$0xff]
    %v6054 = vld [vmem:[#allocation7 + $0x838] sm:$0xff]
    %v6055 = vld [vmem:[#allocation7 + $0x840] sm:$0xff]
    %v6056 = vld [vmem:[#allocation7 + $0x848] sm:$0xff]
    %v6057 = vld [vmem:[#allocation7 + $0x850] sm:$0xff]
    %v6058 = vld [vmem:[#allocation7 + $0x858] sm:$0xff]
    %v6059 = vld [vmem:[#allocation7 + $0x860] sm:$0xff]
    %v6060 = vld [vmem:[#allocation7 + $0x868] sm:$0xff]
    %v6061 = vld [vmem:[#allocation7 + $0x870] sm:$0xff]
    %v6062 = vld [vmem:[#allocation7 + $0x878] sm:$0xff]
    %v6063 = vld [vmem:[#allocation7 + $0x880] sm:$0xff]
    %v6064 = vld [vmem:[#allocation7 + $0x888] sm:$0xff]
    %v6065 = vld [vmem:[#allocation7 + $0x890] sm:$0xff]
    %v6066 = vld [vmem:[#allocation7 + $0x898] sm:$0xff]
    %v6067 = vld [vmem:[#allocation7 + $0x8a0] sm:$0xff]
    %v6068 = vld [vmem:[#allocation7 + $0x8a8] sm:$0xff]
    %v6069 = vld [vmem:[#allocation7 + $0x8b0] sm:$0xff]
    %v6070 = vld [vmem:[#allocation7 + $0x8b8] sm:$0xff]
    %v6071 = vld [vmem:[#allocation7 + $0x8c0] sm:$0xff]
    %v6072 = vld [vmem:[#allocation7 + $0x8c8] sm:$0xff]
    %v6073 = vld [vmem:[#allocation7 + $0x8d0] sm:$0xff]
    %v6074 = vld [vmem:[#allocation7 + $0x8d8] sm:$0xff]
    %v6075 = vld [vmem:[#allocation7 + $0x8e0] sm:$0xff]
    %v6076 = vld [vmem:[#allocation7 + $0x8e8] sm:$0xff]
    %v6077 = vld [vmem:[#allocation7 + $0x8f0] sm:$0xff]
    %v6078 = vld [vmem:[#allocation7 + $0x8f8] sm:$0xff]
    %v6079 = vld [vmem:[#allocation7 + $0x900] sm:$0xff]
    %v6080 = vld [vmem:[#allocation7 + $0x908] sm:$0xff]
    %v6081 = vld [vmem:[#allocation7 + $0x910] sm:$0xff]
    %v6082 = vld [vmem:[#allocation7 + $0x918] sm:$0xff]
    %v6083 = vld [vmem:[#allocation7 + $0x920] sm:$0xff]
    %v6084 = vld [vmem:[#allocation7 + $0x928] sm:$0xff]
    %v6085 = vld [vmem:[#allocation7 + $0x930] sm:$0xff]
    %v6086 = vld [vmem:[#allocation7 + $0x938] sm:$0xff]
    %v6087 = vld [vmem:[#allocation7 + $0x940] sm:$0xff]
    %v6088 = vld [vmem:[#allocation7 + $0x948] sm:$0xff]
    %v6089 = vld [vmem:[#allocation7 + $0x950] sm:$0xff]
    %v6090 = vld [vmem:[#allocation7 + $0x958] sm:$0xff]
    %v6091 = vld [vmem:[#allocation7 + $0x960] sm:$0xff]
    %v6092 = vld [vmem:[#allocation7 + $0x968] sm:$0xff]
    %v6093 = vld [vmem:[#allocation7 + $0x970] sm:$0xff]
    %v6094 = vld [vmem:[#allocation7 + $0x978] sm:$0xff]
    %v6095 = vld [vmem:[#allocation7 + $0x980] sm:$0xff]
    %v6096 = vld [vmem:[#allocation7 + $0x988] sm:$0xff]
    %v6097 = vld [vmem:[#allocation7 + $0x990] sm:$0xff]
    %v6098 = vld [vmem:[#allocation7 + $0x998] sm:$0xff]
    %v6099 = vld [vmem:[#allocation7 + $0x9a0] sm:$0xff]
    %v6100 = vld [vmem:[#allocation7 + $0x9a8] sm:$0xff]
    %v6101 = vld [vmem:[#allocation7 + $0x9b0] sm:$0xff]
    %v6102 = vld [vmem:[#allocation7 + $0x9b8] sm:$0xff]
    %v6103 = vld [vmem:[#allocation7 + $0x9c0] sm:$0xff]
    %v6104 = vld [vmem:[#allocation7 + $0x9c8] sm:$0xff]
    %v6105 = vld [vmem:[#allocation7 + $0x9d0] sm:$0xff]
    %v6106 = vld [vmem:[#allocation7 + $0x9d8] sm:$0xff]
    %v6107 = vld [vmem:[#allocation7 + $0x9e0] sm:$0xff]
    %v6108 = vld [vmem:[#allocation7 + $0x9e8] sm:$0xff]
    %v6109 = vld [vmem:[#allocation7 + $0x9f0] sm:$0xff]
    %v6110 = vld [vmem:[#allocation7 + $0x9f8] sm:$0xff]
    %v6111 = vld [vmem:[#allocation7 + $0xa00] sm:$0xff]
    %v6112 = vld [vmem:[#allocation7 + $0xa08] sm:$0xff]
    %v6113 = vld [vmem:[#allocation7 + $0xa10] sm:$0xff]
    %v6114 = vld [vmem:[#allocation7 + $0xa18] sm:$0xff]
    %v6115 = vld [vmem:[#allocation7 + $0xa20] sm:$0xff]
    %v6116 = vld [vmem:[#allocation7 + $0xa28] sm:$0xff]
    %v6117 = vld [vmem:[#allocation7 + $0xa30] sm:$0xff]
    %v6118 = vld [vmem:[#allocation7 + $0xa38] sm:$0xff]
    %v6119 = vld [vmem:[#allocation7 + $0xa40] sm:$0xff]
    %v6120 = vld [vmem:[#allocation7 + $0xa48] sm:$0xff]
    %v6121 = vld [vmem:[#allocation7 + $0xa50] sm:$0xff]
    %v6122 = vld [vmem:[#allocation7 + $0xa58] sm:$0xff]
    %v6123 = vld [vmem:[#allocation7 + $0xa60] sm:$0xff]
    %v6124 = vld [vmem:[#allocation7 + $0xa68] sm:$0xff]
    %v6125 = vld [vmem:[#allocation7 + $0xa70] sm:$0xff]
    %v6126 = vld [vmem:[#allocation7 + $0xa78] sm:$0xff]
    %v6127 = vld [vmem:[#allocation7 + $0xa80] sm:$0xff]
    %v6128 = vld [vmem:[#allocation7 + $0xa88] sm:$0xff]
    %v6129 = vld [vmem:[#allocation7 + $0xa90] sm:$0xff]
    %v6130 = vld [vmem:[#allocation7 + $0xa98] sm:$0xff]
    %v6131 = vld [vmem:[#allocation7 + $0xaa0] sm:$0xff]
    %v6132 = vld [vmem:[#allocation7 + $0xaa8] sm:$0xff]
    %v6133 = vld [vmem:[#allocation7 + $0xab0] sm:$0xff]
    %v6134 = vld [vmem:[#allocation7 + $0xab8] sm:$0xff]
    %v6135 = vld [vmem:[#allocation7 + $0xac0] sm:$0xff]
    %v6136 = vld [vmem:[#allocation7 + $0xac8] sm:$0xff]
    %v6137 = vld [vmem:[#allocation7 + $0xad0] sm:$0xff]
    %v6138 = vld [vmem:[#allocation7 + $0xad8] sm:$0xff]
    %v6139 = vld [vmem:[#allocation7 + $0xae0] sm:$0xff]
    %v6140 = vld [vmem:[#allocation7 + $0xae8] sm:$0xff]
    %v6141 = vld [vmem:[#allocation7 + $0xaf0] sm:$0xff]
    %v6142 = vld [vmem:[#allocation7 + $0xaf8] sm:$0xff]
    %v6143 = vld [vmem:[#allocation7 + $0xb00] sm:$0xff]
    %v6144 = vld [vmem:[#allocation7 + $0xb08] sm:$0xff]
    %v6145 = vld [vmem:[#allocation7 + $0xb10] sm:$0xff]
    %v6146 = vld [vmem:[#allocation7 + $0xb18] sm:$0xff]
    %v6147 = vld [vmem:[#allocation7 + $0xb20] sm:$0xff]
    %v6148 = vld [vmem:[#allocation7 + $0xb28] sm:$0xff]
    %v6149 = vld [vmem:[#allocation7 + $0xb30] sm:$0xff]
    %v6150 = vld [vmem:[#allocation7 + $0xb38] sm:$0xff]
    %v6151 = vld [vmem:[#allocation7 + $0xb40] sm:$0xff]
    %v6152 = vld [vmem:[#allocation7 + $0xb48] sm:$0xff]
    %v6153 = vld [vmem:[#allocation7 + $0xb50] sm:$0xff]
    %v6154 = vld [vmem:[#allocation7 + $0xb58] sm:$0xff]
    %v6155 = vld [vmem:[#allocation7 + $0xb60] sm:$0xff]
    %v6156 = vld [vmem:[#allocation7 + $0xb68] sm:$0xff]
    %v6157 = vld [vmem:[#allocation7 + $0xb70] sm:$0xff]
    %v6158 = vld [vmem:[#allocation7 + $0xb78] sm:$0xff]
    %v6159 = vld [vmem:[#allocation7 + $0xb80] sm:$0xff]
    %v6160 = vld [vmem:[#allocation7 + $0xb88] sm:$0xff]
    %v6161 = vld [vmem:[#allocation7 + $0xb90] sm:$0xff]
    %v6162 = vld [vmem:[#allocation7 + $0xb98] sm:$0xff]
    %v6163 = vld [vmem:[#allocation7 + $0xba0] sm:$0xff]
    %v6164 = vld [vmem:[#allocation7 + $0xba8] sm:$0xff]
    %v6165 = vld [vmem:[#allocation7 + $0xbb0] sm:$0xff]
    %v6166 = vld [vmem:[#allocation7 + $0xbb8] sm:$0xff]
    %v6167 = vld [vmem:[#allocation7 + $0xbc0] sm:$0xff]
    %v6168 = vld [vmem:[#allocation7 + $0xbc8] sm:$0xff]
    %v6169 = vld [vmem:[#allocation7 + $0xbd0] sm:$0xff]
    %v6170 = vld [vmem:[#allocation7 + $0xbd8] sm:$0xff]
    %v6171 = vld [vmem:[#allocation7 + $0xbe0] sm:$0xff]
    %v6172 = vld [vmem:[#allocation7 + $0xbe8] sm:$0xff]
    %v6173 = vld [vmem:[#allocation7 + $0xbf0] sm:$0xff]
    %v6174 = vld [vmem:[#allocation7 + $0xbf8] sm:$0xff]
    %v6175 = vld [vmem:[#allocation7 + $0xc00] sm:$0xff]
    %v6176 = vld [vmem:[#allocation7 + $0xc08] sm:$0xff]
    %v6177 = vld [vmem:[#allocation7 + $0xc10] sm:$0xff]
    %v6178 = vld [vmem:[#allocation7 + $0xc18] sm:$0xff]
    %v6179 = vld [vmem:[#allocation7 + $0xc20] sm:$0xff]
    %v6180 = vld [vmem:[#allocation7 + $0xc28] sm:$0xff]
    %v6181 = vld [vmem:[#allocation7 + $0xc30] sm:$0xff]
    %v6182 = vld [vmem:[#allocation7 + $0xc38] sm:$0xff]
    %v6183 = vld [vmem:[#allocation7 + $0xc40] sm:$0xff]
    %v6184 = vld [vmem:[#allocation7 + $0xc48] sm:$0xff]
    %v6185 = vld [vmem:[#allocation7 + $0xc50] sm:$0xff]
    %v6186 = vld [vmem:[#allocation7 + $0xc58] sm:$0xff]
    %v6187 = vld [vmem:[#allocation7 + $0xc60] sm:$0xff]
    %v6188 = vld [vmem:[#allocation7 + $0xc68] sm:$0xff]
    %v6189 = vld [vmem:[#allocation7 + $0xc70] sm:$0xff]
    %v6190 = vld [vmem:[#allocation7 + $0xc78] sm:$0xff]
    %v6191 = vld [vmem:[#allocation7 + $0xc80] sm:$0xff]
    %v6192 = vld [vmem:[#allocation7 + $0xc88] sm:$0xff]
    %v6193 = vld [vmem:[#allocation7 + $0xc90] sm:$0xff]
    %v6194 = vld [vmem:[#allocation7 + $0xc98] sm:$0xff]
    %v6195 = vld [vmem:[#allocation7 + $0xca0] sm:$0xff]
    %v6196 = vld [vmem:[#allocation7 + $0xca8] sm:$0xff]
    %v6197 = vld [vmem:[#allocation7 + $0xcb0] sm:$0xff]
    %v6198 = vld [vmem:[#allocation7 + $0xcb8] sm:$0xff]
    %v6199 = vld [vmem:[#allocation7 + $0xcc0] sm:$0xff]
    %v6200 = vld [vmem:[#allocation7 + $0xcc8] sm:$0xff]
    %v6201 = vld [vmem:[#allocation7 + $0xcd0] sm:$0xff]
    %v6202 = vld [vmem:[#allocation7 + $0xcd8] sm:$0xff]
    %v6203 = vld [vmem:[#allocation7 + $0xce0] sm:$0xff]
    %v6204 = vld [vmem:[#allocation7 + $0xce8] sm:$0xff]
    %v6205 = vld [vmem:[#allocation7 + $0xcf0] sm:$0xff]
    %v6206 = vld [vmem:[#allocation7 + $0xcf8] sm:$0xff]
    %v6207 = vld [vmem:[#allocation7 + $0xd00] sm:$0xff]
    %v6208 = vld [vmem:[#allocation7 + $0xd08] sm:$0xff]
    %v6209 = vld [vmem:[#allocation7 + $0xd10] sm:$0xff]
    %v6210 = vld [vmem:[#allocation7 + $0xd18] sm:$0xff]
    %v6211 = vld [vmem:[#allocation7 + $0xd20] sm:$0xff]
    %v6212 = vld [vmem:[#allocation7 + $0xd28] sm:$0xff]
    %v6213 = vld [vmem:[#allocation7 + $0xd30] sm:$0xff]
    %v6214 = vld [vmem:[#allocation7 + $0xd38] sm:$0xff]
    %v6215 = vld [vmem:[#allocation7 + $0xd40] sm:$0xff]
    %v6216 = vld [vmem:[#allocation7 + $0xd48] sm:$0xff]
    %v6217 = vld [vmem:[#allocation7 + $0xd50] sm:$0xff]
    %v6218 = vld [vmem:[#allocation7 + $0xd58] sm:$0xff]
    %v6219 = vld [vmem:[#allocation7 + $0xd60] sm:$0xff]
    %v6220 = vld [vmem:[#allocation7 + $0xd68] sm:$0xff]
    %v6221 = vld [vmem:[#allocation7 + $0xd70] sm:$0xff]
    %v6222 = vld [vmem:[#allocation7 + $0xd78] sm:$0xff]
    %v6223 = vld [vmem:[#allocation7 + $0xd80] sm:$0xff]
    %v6224 = vld [vmem:[#allocation7 + $0xd88] sm:$0xff]
    %v6225 = vld [vmem:[#allocation7 + $0xd90] sm:$0xff]
    %v6226 = vld [vmem:[#allocation7 + $0xd98] sm:$0xff]
    %v6227 = vld [vmem:[#allocation7 + $0xda0] sm:$0xff]
    %v6228 = vld [vmem:[#allocation7 + $0xda8] sm:$0xff]
    %v6229 = vld [vmem:[#allocation7 + $0xdb0] sm:$0xff]
    %v6230 = vld [vmem:[#allocation7 + $0xdb8] sm:$0xff]
    %v6231 = vld [vmem:[#allocation7 + $0xdc0] sm:$0xff]
    %v6232 = vld [vmem:[#allocation7 + $0xdc8] sm:$0xff]
    %v6233 = vld [vmem:[#allocation7 + $0xdd0] sm:$0xff]
    %v6234 = vld [vmem:[#allocation7 + $0xdd8] sm:$0xff]
    %v6235 = vld [vmem:[#allocation7 + $0xde0] sm:$0xff]
    %v6236 = vld [vmem:[#allocation7 + $0xde8] sm:$0xff]
    %v6237 = vld [vmem:[#allocation7 + $0xdf0] sm:$0xff]
    %v6238 = vld [vmem:[#allocation7 + $0xdf8] sm:$0xff]
    %v6239 = vld [vmem:[#allocation7 + $0xe00] sm:$0xff]
    %v6240 = vld [vmem:[#allocation7 + $0xe08] sm:$0xff]
    %v6241 = vld [vmem:[#allocation7 + $0xe10] sm:$0xff]
    %v6242 = vld [vmem:[#allocation7 + $0xe18] sm:$0xff]
    %v6243 = vld [vmem:[#allocation7 + $0xe20] sm:$0xff]
    %v6244 = vld [vmem:[#allocation7 + $0xe28] sm:$0xff]
    %v6245 = vld [vmem:[#allocation7 + $0xe30] sm:$0xff]
    %v6246 = vld [vmem:[#allocation7 + $0xe38] sm:$0xff]
    %v6247 = vld [vmem:[#allocation7 + $0xe40] sm:$0xff]
    %v6248 = vld [vmem:[#allocation7 + $0xe48] sm:$0xff]
    %v6249 = vld [vmem:[#allocation7 + $0xe50] sm:$0xff]
    %v6250 = vld [vmem:[#allocation7 + $0xe58] sm:$0xff]
    %v6251 = vld [vmem:[#allocation7 + $0xe60] sm:$0xff]
    %v6252 = vld [vmem:[#allocation7 + $0xe68] sm:$0xff]
    %v6253 = vld [vmem:[#allocation7 + $0xe70] sm:$0xff]
    %v6254 = vld [vmem:[#allocation7 + $0xe78] sm:$0xff]
    %v6255 = vld [vmem:[#allocation7 + $0xe80] sm:$0xff]
    %v6256 = vld [vmem:[#allocation7 + $0xe88] sm:$0xff]
    %v6257 = vld [vmem:[#allocation7 + $0xe90] sm:$0xff]
    %v6258 = vld [vmem:[#allocation7 + $0xe98] sm:$0xff]
    %v6259 = vld [vmem:[#allocation7 + $0xea0] sm:$0xff]
    %v6260 = vld [vmem:[#allocation7 + $0xea8] sm:$0xff]
    %v6261 = vld [vmem:[#allocation7 + $0xeb0] sm:$0xff]
    %v6262 = vld [vmem:[#allocation7 + $0xeb8] sm:$0xff]
    %v6263 = vld [vmem:[#allocation7 + $0xec0] sm:$0xff]
    %v6264 = vld [vmem:[#allocation7 + $0xec8] sm:$0xff]
    %v6265 = vld [vmem:[#allocation7 + $0xed0] sm:$0xff]
    %v6266 = vld [vmem:[#allocation7 + $0xed8] sm:$0xff]
    %v6267 = vld [vmem:[#allocation7 + $0xee0] sm:$0xff]
    %v6268 = vld [vmem:[#allocation7 + $0xee8] sm:$0xff]
    %v6269 = vld [vmem:[#allocation7 + $0xef0] sm:$0xff]
    %v6270 = vld [vmem:[#allocation7 + $0xef8] sm:$0xff]
    %v6271 = vld [vmem:[#allocation7 + $0xf00] sm:$0xff]
    %v6272 = vld [vmem:[#allocation7 + $0xf08] sm:$0xff]
    %v6273 = vld [vmem:[#allocation7 + $0xf10] sm:$0xff]
    %v6274 = vld [vmem:[#allocation7 + $0xf18] sm:$0xff]
    %v6275 = vld [vmem:[#allocation7 + $0xf20] sm:$0xff]
    %v6276 = vld [vmem:[#allocation7 + $0xf28] sm:$0xff]
    %v6277 = vld [vmem:[#allocation7 + $0xf30] sm:$0xff]
    %v6278 = vld [vmem:[#allocation7 + $0xf38] sm:$0xff]
    %v6279 = vld [vmem:[#allocation7 + $0xf40] sm:$0xff]
    %v6280 = vld [vmem:[#allocation7 + $0xf48] sm:$0xff]
    %v6281 = vld [vmem:[#allocation7 + $0xf50] sm:$0xff]
    %v6282 = vld [vmem:[#allocation7 + $0xf58] sm:$0xff]
    %v6283 = vld [vmem:[#allocation7 + $0xf60] sm:$0xff]
    %v6284 = vld [vmem:[#allocation7 + $0xf68] sm:$0xff]
    %v6285 = vld [vmem:[#allocation7 + $0xf70] sm:$0xff]
    %v6286 = vld [vmem:[#allocation7 + $0xf78] sm:$0xff]
    %v6287 = vld [vmem:[#allocation7 + $0xf80] sm:$0xff]
    %v6288 = vld [vmem:[#allocation7 + $0xf88] sm:$0xff]
    %v6289 = vld [vmem:[#allocation7 + $0xf90] sm:$0xff]
    %v6290 = vld [vmem:[#allocation7 + $0xf98] sm:$0xff]
    %v6291 = vld [vmem:[#allocation7 + $0xfa0] sm:$0xff]
    %v6292 = vld [vmem:[#allocation7 + $0xfa8] sm:$0xff]
    %v6293 = vld [vmem:[#allocation7 + $0xfb0] sm:$0xff]
    %v6294 = vld [vmem:[#allocation7 + $0xfb8] sm:$0xff]
    %v6295 = vld [vmem:[#allocation7 + $0xfc0] sm:$0xff]
    %v6296 = vld [vmem:[#allocation7 + $0xfc8] sm:$0xff]
    %v6297 = vld [vmem:[#allocation7 + $0xfd0] sm:$0xff]
    %v6298 = vld [vmem:[#allocation7 + $0xfd8] sm:$0xff]
    %v6299 = vld [vmem:[#allocation7 + $0xfe0] sm:$0xff]
    %v6300 = vld [vmem:[#allocation7 + $0xfe8] sm:$0xff]
    %v6301 = vld [vmem:[#allocation7 + $0xff0] sm:$0xff]
    %v6302 = vld [vmem:[#allocation7 + $0xff8] sm:$0xff]
    %v6303 = vld [vmem:[#allocation7 + $0x1000] sm:$0xff]
    %v6304 = vld [vmem:[#allocation7 + $0x1008] sm:$0xff]
    %v6305 = vld [vmem:[#allocation7 + $0x1010] sm:$0xff]
    %v6306 = vld [vmem:[#allocation7 + $0x1018] sm:$0xff]
    %v6307 = vld [vmem:[#allocation7 + $0x1020] sm:$0xff]
    %v6308 = vld [vmem:[#allocation7 + $0x1028] sm:$0xff]
    %v6309 = vld [vmem:[#allocation7 + $0x1030] sm:$0xff]
    %v6310 = vld [vmem:[#allocation7 + $0x1038] sm:$0xff]
    %v6311 = vld [vmem:[#allocation7 + $0x1040] sm:$0xff]
    %v6312 = vld [vmem:[#allocation7 + $0x1048] sm:$0xff]
    %v6313 = vld [vmem:[#allocation7 + $0x1050] sm:$0xff]
    %v6314 = vld [vmem:[#allocation7 + $0x1058] sm:$0xff]
    %v6315 = vld [vmem:[#allocation7 + $0x1060] sm:$0xff]
    %v6316 = vld [vmem:[#allocation7 + $0x1068] sm:$0xff]
    %v6317 = vld [vmem:[#allocation7 + $0x1070] sm:$0xff]
    %v6318 = vld [vmem:[#allocation7 + $0x1078] sm:$0xff]
    %v6319 = vld [vmem:[#allocation7 + $0x1080] sm:$0xff]
    %v6320 = vld [vmem:[#allocation7 + $0x1088] sm:$0xff]
    %v6321 = vld [vmem:[#allocation7 + $0x1090] sm:$0xff]
    %v6322 = vld [vmem:[#allocation7 + $0x1098] sm:$0xff]
    %v6323 = vld [vmem:[#allocation7 + $0x10a0] sm:$0xff]
    %v6324 = vld [vmem:[#allocation7 + $0x10a8] sm:$0xff]
    %v6325 = vld [vmem:[#allocation7 + $0x10b0] sm:$0xff]
    %v6326 = vld [vmem:[#allocation7 + $0x10b8] sm:$0xff]
    %v6327 = vld [vmem:[#allocation7 + $0x10c0] sm:$0xff]
    %v6328 = vld [vmem:[#allocation7 + $0x10c8] sm:$0xff]
    %v6329 = vld [vmem:[#allocation7 + $0x10d0] sm:$0xff]
    %v6330 = vld [vmem:[#allocation7 + $0x10d8] sm:$0xff]
    %v6331 = vld [vmem:[#allocation7 + $0x10e0] sm:$0xff]
    %v6332 = vld [vmem:[#allocation7 + $0x10e8] sm:$0xff]
    %v6333 = vld [vmem:[#allocation7 + $0x10f0] sm:$0xff]
    %v6334 = vld [vmem:[#allocation7 + $0x10f8] sm:$0xff]
    %v6335 = vld [vmem:[#allocation7 + $0x1100] sm:$0xff]
    %v6336 = vld [vmem:[#allocation7 + $0x1108] sm:$0xff]
    %v6337 = vld [vmem:[#allocation7 + $0x1110] sm:$0xff]
    %v6338 = vld [vmem:[#allocation7 + $0x1118] sm:$0xff]
    %v6339 = vld [vmem:[#allocation7 + $0x1120] sm:$0xff]
    %v6340 = vld [vmem:[#allocation7 + $0x1128] sm:$0xff]
    %v6341 = vld [vmem:[#allocation7 + $0x1130] sm:$0xff]
    %v6342 = vld [vmem:[#allocation7 + $0x1138] sm:$0xff]
    %v6343 = vld [vmem:[#allocation7 + $0x1140] sm:$0xff]
    %v6344 = vld [vmem:[#allocation7 + $0x1148] sm:$0xff]
    %v6345 = vld [vmem:[#allocation7 + $0x1150] sm:$0xff]
    %v6346 = vld [vmem:[#allocation7 + $0x1158] sm:$0xff]
    %v6347 = vld [vmem:[#allocation7 + $0x1160] sm:$0xff]
    %v6348 = vld [vmem:[#allocation7 + $0x1168] sm:$0xff]
    %v6349 = vld [vmem:[#allocation7 + $0x1170] sm:$0xff]
    %v6350 = vld [vmem:[#allocation7 + $0x1178] sm:$0xff]
    %v6351 = vld [vmem:[#allocation7 + $0x1180] sm:$0xff]
    %v6352 = vld [vmem:[#allocation7 + $0x1188] sm:$0xff]
    %v6353 = vld [vmem:[#allocation7 + $0x1190] sm:$0xff]
    %v6354 = vld [vmem:[#allocation7 + $0x1198] sm:$0xff]
    %v6355 = vld [vmem:[#allocation7 + $0x11a0] sm:$0xff]
    %v6356 = vld [vmem:[#allocation7 + $0x11a8] sm:$0xff]
    %v6357 = vld [vmem:[#allocation7 + $0x11b0] sm:$0xff]
    %v6358 = vld [vmem:[#allocation7 + $0x11b8] sm:$0xff]
    %v6359 = vld [vmem:[#allocation7 + $0x11c0] sm:$0xff]
    %v6360 = vld [vmem:[#allocation7 + $0x11c8] sm:$0xff]
    %v6361 = vld [vmem:[#allocation7 + $0x11d0] sm:$0xff]
    %v6362 = vld [vmem:[#allocation7 + $0x11d8] sm:$0xff]
    %v6363 = vld [vmem:[#allocation7 + $0x11e0] sm:$0xff]
    %v6364 = vld [vmem:[#allocation7 + $0x11e8] sm:$0xff]
    %v6365 = vld [vmem:[#allocation7 + $0x11f0] sm:$0xff]
    %v6366 = vld [vmem:[#allocation7 + $0x11f8] sm:$0xff]
    %v6367 = vld [vmem:[#allocation7 + $0x1200] sm:$0xff]
    %v6368 = vld [vmem:[#allocation7 + $0x1208] sm:$0xff]
    %v6369 = vld [vmem:[#allocation7 + $0x1210] sm:$0xff]
    %v6370 = vld [vmem:[#allocation7 + $0x1218] sm:$0xff]
    %v6371 = vld [vmem:[#allocation7 + $0x1220] sm:$0xff]
    %v6372 = vld [vmem:[#allocation7 + $0x1228] sm:$0xff]
    %v6373 = vld [vmem:[#allocation7 + $0x1230] sm:$0xff]
    %v6374 = vld [vmem:[#allocation7 + $0x1238] sm:$0xff]
    %v6375 = vld [vmem:[#allocation7 + $0x1240] sm:$0xff]
    %v6376 = vld [vmem:[#allocation7 + $0x1248] sm:$0xff]
    %v6377 = vld [vmem:[#allocation7 + $0x1250] sm:$0xff]
    %v6378 = vld [vmem:[#allocation7 + $0x1258] sm:$0xff]
    %v6379 = vld [vmem:[#allocation7 + $0x1260] sm:$0xff]
    %v6380 = vld [vmem:[#allocation7 + $0x1268] sm:$0xff]
    %v6381 = vld [vmem:[#allocation7 + $0x1270] sm:$0xff]
    %v6382 = vld [vmem:[#allocation7 + $0x1278] sm:$0xff]
    %v6383 = vld [vmem:[#allocation7 + $0x1280] sm:$0xff]
    %v6384 = vld [vmem:[#allocation7 + $0x1288] sm:$0xff]
    %v6385 = vld [vmem:[#allocation7 + $0x1290] sm:$0xff]
    %v6386 = vld [vmem:[#allocation7 + $0x1298] sm:$0xff]
    %v6387 = vld [vmem:[#allocation7 + $0x12a0] sm:$0xff]
    %v6388 = vld [vmem:[#allocation7 + $0x12a8] sm:$0xff]
    %v6389 = vld [vmem:[#allocation7 + $0x12b0] sm:$0xff]
    %v6390 = vld [vmem:[#allocation7 + $0x12b8] sm:$0xff]
    %v6391 = vld [vmem:[#allocation7 + $0x12c0] sm:$0xff]
    %v6392 = vld [vmem:[#allocation7 + $0x12c8] sm:$0xff]
    %v6393 = vld [vmem:[#allocation7 + $0x12d0] sm:$0xff]
    %v6394 = vld [vmem:[#allocation7 + $0x12d8] sm:$0xff]
    %v6395 = vld [vmem:[#allocation7 + $0x12e0] sm:$0xff]
    %v6396 = vld [vmem:[#allocation7 + $0x12e8] sm:$0xff]
    %v6397 = vld [vmem:[#allocation7 + $0x12f0] sm:$0xff]
    %v6398 = vld [vmem:[#allocation7 + $0x12f8] sm:$0xff]
    %v6399 = vld [vmem:[#allocation7 + $0x1300] sm:$0xff]
    %v6400 = vld [vmem:[#allocation7 + $0x1308] sm:$0xff]
    %v6401 = vld [vmem:[#allocation7 + $0x1310] sm:$0xff]
    %v6402 = vld [vmem:[#allocation7 + $0x1318] sm:$0xff]
    %v6403 = vld [vmem:[#allocation7 + $0x1320] sm:$0xff]
    %v6404 = vld [vmem:[#allocation7 + $0x1328] sm:$0xff]
    %v6405 = vld [vmem:[#allocation7 + $0x1330] sm:$0xff]
    %v6406 = vld [vmem:[#allocation7 + $0x1338] sm:$0xff]
    %v6407 = vld [vmem:[#allocation7 + $0x1340] sm:$0xff]
    %v6408 = vld [vmem:[#allocation7 + $0x1348] sm:$0xff]
    %v6409 = vld [vmem:[#allocation7 + $0x1350] sm:$0xff]
    %v6410 = vld [vmem:[#allocation7 + $0x1358] sm:$0xff]
    %v6411 = vld [vmem:[#allocation7 + $0x1360] sm:$0xff]
    %v6412 = vld [vmem:[#allocation7 + $0x1368] sm:$0xff]
    %v6413 = vld [vmem:[#allocation7 + $0x1370] sm:$0xff]
    %v6414 = vld [vmem:[#allocation7 + $0x1378] sm:$0xff]
    %v6415 = vld [vmem:[#allocation7 + $0x1380] sm:$0xff]
    %v6416 = vld [vmem:[#allocation7 + $0x1388] sm:$0xff]
    %v6417 = vld [vmem:[#allocation7 + $0x1390] sm:$0xff]
    %v6418 = vld [vmem:[#allocation7 + $0x1398] sm:$0xff]
    %v6419 = vld [vmem:[#allocation7 + $0x13a0] sm:$0xff]
    %v6420 = vld [vmem:[#allocation7 + $0x13a8] sm:$0xff]
    %v6421 = vld [vmem:[#allocation7 + $0x13b0] sm:$0xff]
    %v6422 = vld [vmem:[#allocation7 + $0x13b8] sm:$0xff]
    %v6423 = vld [vmem:[#allocation7 + $0x13c0] sm:$0xff]
    %v6424 = vld [vmem:[#allocation7 + $0x13c8] sm:$0xff]
    %v6425 = vld [vmem:[#allocation7 + $0x13d0] sm:$0xff]
    %v6426 = vld [vmem:[#allocation7 + $0x13d8] sm:$0xff]
    %v6427 = vld [vmem:[#allocation7 + $0x13e0] sm:$0xff]
    %v6428 = vld [vmem:[#allocation7 + $0x13e8] sm:$0xff]
    %v6429 = vld [vmem:[#allocation7 + $0x13f0] sm:$0xff]
    %v6430 = vld [vmem:[#allocation7 + $0x13f8] sm:$0xff]
    %v6431 = vld [vmem:[#allocation7 + $0x1400] sm:$0xff]
    %v6432 = vld [vmem:[#allocation7 + $0x1408] sm:$0xff]
    %v6433 = vld [vmem:[#allocation7 + $0x1410] sm:$0xff]
    %v6434 = vld [vmem:[#allocation7 + $0x1418] sm:$0xff]
    %v6435 = vld [vmem:[#allocation7 + $0x1420] sm:$0xff]
    %v6436 = vld [vmem:[#allocation7 + $0x1428] sm:$0xff]
    %v6437 = vld [vmem:[#allocation7 + $0x1430] sm:$0xff]
    %v6438 = vld [vmem:[#allocation7 + $0x1438] sm:$0xff]
    %v6439 = vld [vmem:[#allocation7 + $0x1440] sm:$0xff]
    %v6440 = vld [vmem:[#allocation7 + $0x1448] sm:$0xff]
    %v6441 = vld [vmem:[#allocation7 + $0x1450] sm:$0xff]
    %v6442 = vld [vmem:[#allocation7 + $0x1458] sm:$0xff]
    %v6443 = vld [vmem:[#allocation7 + $0x1460] sm:$0xff]
    %v6444 = vld [vmem:[#allocation7 + $0x1468] sm:$0xff]
    %v6445 = vld [vmem:[#allocation7 + $0x1470] sm:$0xff]
    %v6446 = vld [vmem:[#allocation7 + $0x1478] sm:$0xff]
    %v6447 = vld [vmem:[#allocation7 + $0x1480] sm:$0xff]
    %v6448 = vld [vmem:[#allocation7 + $0x1488] sm:$0xff]
    %v6449 = vld [vmem:[#allocation7 + $0x1490] sm:$0xff]
    %v6450 = vld [vmem:[#allocation7 + $0x1498] sm:$0xff]
    %v6451 = vld [vmem:[#allocation7 + $0x14a0] sm:$0xff]
    %v6452 = vld [vmem:[#allocation7 + $0x14a8] sm:$0xff]
    %v6453 = vld [vmem:[#allocation7 + $0x14b0] sm:$0xff]
    %v6454 = vld [vmem:[#allocation7 + $0x14b8] sm:$0xff]
    %v6455 = vld [vmem:[#allocation7 + $0x14c0] sm:$0xff]
    %v6456 = vld [vmem:[#allocation7 + $0x14c8] sm:$0xff]
    %v6457 = vld [vmem:[#allocation7 + $0x14d0] sm:$0xff]
    %v6458 = vld [vmem:[#allocation7 + $0x14d8] sm:$0xff]
    %v6459 = vld [vmem:[#allocation7 + $0x14e0] sm:$0xff]
    %v6460 = vld [vmem:[#allocation7 + $0x14e8] sm:$0xff]
    %v6461 = vld [vmem:[#allocation7 + $0x14f0] sm:$0xff]
    %v6462 = vld [vmem:[#allocation7 + $0x14f8] sm:$0xff]
    %v6463 = vld [vmem:[#allocation7 + $0x1500] sm:$0xff]
    %v6464 = vld [vmem:[#allocation7 + $0x1508] sm:$0xff]
    %v6465 = vld [vmem:[#allocation7 + $0x1510] sm:$0xff]
    %v6466 = vld [vmem:[#allocation7 + $0x1518] sm:$0xff]
    %v6467 = vld [vmem:[#allocation7 + $0x1520] sm:$0xff]
    %v6468 = vld [vmem:[#allocation7 + $0x1528] sm:$0xff]
    %v6469 = vld [vmem:[#allocation7 + $0x1530] sm:$0xff]
    %v6470 = vld [vmem:[#allocation7 + $0x1538] sm:$0xff]
    %v6471 = vld [vmem:[#allocation7 + $0x1540] sm:$0xff]
    %v6472 = vld [vmem:[#allocation7 + $0x1548] sm:$0xff]
    %v6473 = vld [vmem:[#allocation7 + $0x1550] sm:$0xff]
    %v6474 = vld [vmem:[#allocation7 + $0x1558] sm:$0xff]
    %v6475 = vld [vmem:[#allocation7 + $0x1560] sm:$0xff]
    %v6476 = vld [vmem:[#allocation7 + $0x1568] sm:$0xff]
    %v6477 = vld [vmem:[#allocation7 + $0x1570] sm:$0xff]
    %v6478 = vld [vmem:[#allocation7 + $0x1578] sm:$0xff]
    %v6479 = vld [vmem:[#allocation7 + $0x1580] sm:$0xff]
    %v6480 = vld [vmem:[#allocation7 + $0x1588] sm:$0xff]
    %v6481 = vld [vmem:[#allocation7 + $0x1590] sm:$0xff]
    %v6482 = vld [vmem:[#allocation7 + $0x1598] sm:$0xff]
    %v6483 = vld [vmem:[#allocation7 + $0x15a0] sm:$0xff]
    %v6484 = vld [vmem:[#allocation7 + $0x15a8] sm:$0xff]
    %v6485 = vld [vmem:[#allocation7 + $0x15b0] sm:$0xff]
    %v6486 = vld [vmem:[#allocation7 + $0x15b8] sm:$0xff]
    %v6487 = vld [vmem:[#allocation7 + $0x15c0] sm:$0xff]
    %v6488 = vld [vmem:[#allocation7 + $0x15c8] sm:$0xff]
    %v6489 = vld [vmem:[#allocation7 + $0x15d0] sm:$0xff]
    %v6490 = vld [vmem:[#allocation7 + $0x15d8] sm:$0xff]
    %v6491 = vld [vmem:[#allocation7 + $0x15e0] sm:$0xff]
    %v6492 = vld [vmem:[#allocation7 + $0x15e8] sm:$0xff]
    %v6493 = vld [vmem:[#allocation7 + $0x15f0] sm:$0xff]
    %v6494 = vld [vmem:[#allocation7 + $0x15f8] sm:$0xff]
    %v6495 = vld [vmem:[#allocation7 + $0x1600] sm:$0xff]
    %v6496 = vld [vmem:[#allocation7 + $0x1608] sm:$0xff]
    %v6497 = vld [vmem:[#allocation7 + $0x1610] sm:$0xff]
    %v6498 = vld [vmem:[#allocation7 + $0x1618] sm:$0xff]
    %v6499 = vld [vmem:[#allocation7 + $0x1620] sm:$0xff]
    %v6500 = vld [vmem:[#allocation7 + $0x1628] sm:$0xff]
    %v6501 = vld [vmem:[#allocation7 + $0x1630] sm:$0xff]
    %v6502 = vld [vmem:[#allocation7 + $0x1638] sm:$0xff]
    %v6503 = vld [vmem:[#allocation7 + $0x1640] sm:$0xff]
    %v6504 = vld [vmem:[#allocation7 + $0x1648] sm:$0xff]
    %v6505 = vld [vmem:[#allocation7 + $0x1650] sm:$0xff]
    %v6506 = vld [vmem:[#allocation7 + $0x1658] sm:$0xff]
    %v6507 = vld [vmem:[#allocation7 + $0x1660] sm:$0xff]
    %v6508 = vld [vmem:[#allocation7 + $0x1668] sm:$0xff]
    %v6509 = vld [vmem:[#allocation7 + $0x1670] sm:$0xff]
    %v6510 = vld [vmem:[#allocation7 + $0x1678] sm:$0xff]
    %v6511 = vld [vmem:[#allocation7 + $0x1680] sm:$0xff]
    %v6512 = vld [vmem:[#allocation7 + $0x1688] sm:$0xff]
    %v6513 = vld [vmem:[#allocation7 + $0x1690] sm:$0xff]
    %v6514 = vld [vmem:[#allocation7 + $0x1698] sm:$0xff]
    %v6515 = vld [vmem:[#allocation7 + $0x16a0] sm:$0xff]
    %v6516 = vld [vmem:[#allocation7 + $0x16a8] sm:$0xff]
    %v6517 = vld [vmem:[#allocation7 + $0x16b0] sm:$0xff]
    %v6518 = vld [vmem:[#allocation7 + $0x16b8] sm:$0xff]
    %v6519 = vld [vmem:[#allocation7 + $0x16c0] sm:$0xff]
    %v6520 = vld [vmem:[#allocation7 + $0x16c8] sm:$0xff]
    %v6521 = vld [vmem:[#allocation7 + $0x16d0] sm:$0xff]
    %v6522 = vld [vmem:[#allocation7 + $0x16d8] sm:$0xff]
    %v6523 = vld [vmem:[#allocation7 + $0x16e0] sm:$0xff]
    %v6524 = vld [vmem:[#allocation7 + $0x16e8] sm:$0xff]
    %v6525 = vld [vmem:[#allocation7 + $0x16f0] sm:$0xff]
    %v6526 = vld [vmem:[#allocation7 + $0x16f8] sm:$0xff]
    %v6527 = vld [vmem:[#allocation7 + $0x1700] sm:$0xff]
    %v6528 = vld [vmem:[#allocation7 + $0x1708] sm:$0xff]
    %v6529 = vld [vmem:[#allocation7 + $0x1710] sm:$0xff]
    %v6530 = vld [vmem:[#allocation7 + $0x1718] sm:$0xff]
    %v6531 = vld [vmem:[#allocation7 + $0x1720] sm:$0xff]
    %v6532 = vld [vmem:[#allocation7 + $0x1728] sm:$0xff]
    %v6533 = vld [vmem:[#allocation7 + $0x1730] sm:$0xff]
    %v6534 = vld [vmem:[#allocation7 + $0x1738] sm:$0xff]
    %v6535 = vld [vmem:[#allocation7 + $0x1740] sm:$0xff]
    %v6536 = vld [vmem:[#allocation7 + $0x1748] sm:$0xff]
    %v6537 = vld [vmem:[#allocation7 + $0x1750] sm:$0xff]
    %v6538 = vld [vmem:[#allocation7 + $0x1758] sm:$0xff]
    %v6539 = vld [vmem:[#allocation7 + $0x1760] sm:$0xff]
    %v6540 = vld [vmem:[#allocation7 + $0x1768] sm:$0xff]
    %v6541 = vld [vmem:[#allocation7 + $0x1770] sm:$0xff]
    %v6542 = vld [vmem:[#allocation7 + $0x1778] sm:$0xff]
    %v6543 = vld [vmem:[#allocation7 + $0x1780] sm:$0xff]
    %v6544 = vld [vmem:[#allocation7 + $0x1788] sm:$0xff]
    %v6545 = vld [vmem:[#allocation7 + $0x1790] sm:$0xff]
    %v6546 = vld [vmem:[#allocation7 + $0x1798] sm:$0xff]
    %v6547 = vld [vmem:[#allocation7 + $0x17a0] sm:$0xff]
    %v6548 = vld [vmem:[#allocation7 + $0x17a8] sm:$0xff]
    %v6549 = vld [vmem:[#allocation7 + $0x17b0] sm:$0xff]
    %v6550 = vld [vmem:[#allocation7 + $0x17b8] sm:$0xff]
    %v6551 = vld [vmem:[#allocation7 + $0x17c0] sm:$0xff]
    %v6552 = vld [vmem:[#allocation7 + $0x17c8] sm:$0xff]
    %v6553 = vld [vmem:[#allocation7 + $0x17d0] sm:$0xff]
    %v6554 = vld [vmem:[#allocation7 + $0x17d8] sm:$0xff]
    %v6555 = vld [vmem:[#allocation7 + $0x17e0] sm:$0xff]
    %v6556 = vld [vmem:[#allocation7 + $0x17e8] sm:$0xff]
    %v6557 = vld [vmem:[#allocation7 + $0x17f0] sm:$0xff]
    %v6558 = vld [vmem:[#allocation7 + $0x17f8] sm:$0xff]
    %v7327 = vunpack.c.l.b16 %v5791
    %v7328 = vunpack.c.h.b16 %v5791
    %v7329 = vunpack.c.l.b16 %v5792
    %v7330 = vunpack.c.h.b16 %v5792
    %v7331 = vunpack.c.l.b16 %v5793
    %v7332 = vunpack.c.h.b16 %v5793
    %v7333 = vunpack.c.l.b16 %v5794
    %v7334 = vunpack.c.h.b16 %v5794
    %v7335 = vunpack.c.l.b16 %v5795
    %v7336 = vunpack.c.h.b16 %v5795
    %v7337 = vunpack.c.l.b16 %v5796
    %v7338 = vunpack.c.h.b16 %v5796
    %v7339 = vunpack.c.l.b16 %v5797
    %v7340 = vunpack.c.h.b16 %v5797
    %v7341 = vunpack.c.l.b16 %v5798
    %v7342 = vunpack.c.h.b16 %v5798
    %v7343 = vunpack.c.l.b16 %v5799
    %v7344 = vunpack.c.h.b16 %v5799
    %v7345 = vunpack.c.l.b16 %v5800
    %v7346 = vunpack.c.h.b16 %v5800
    %v7347 = vunpack.c.l.b16 %v5801
    %v7348 = vunpack.c.h.b16 %v5801
    %v7349 = vunpack.c.l.b16 %v5802
    %v7350 = vunpack.c.h.b16 %v5802
    %v7351 = vunpack.c.l.b16 %v5803
    %v7352 = vunpack.c.h.b16 %v5803
    %v7353 = vunpack.c.l.b16 %v5804
    %v7354 = vunpack.c.h.b16 %v5804
    %v7355 = vunpack.c.l.b16 %v5805
    %v7356 = vunpack.c.h.b16 %v5805
    %v7357 = vunpack.c.l.b16 %v5806
    %v7358 = vunpack.c.h.b16 %v5806
    %v7359 = vunpack.c.l.b16 %v5807
    %v7360 = vunpack.c.h.b16 %v5807
    %v7361 = vunpack.c.l.b16 %v5808
    %v7362 = vunpack.c.h.b16 %v5808
    %v7363 = vunpack.c.l.b16 %v5809
    %v7364 = vunpack.c.h.b16 %v5809
    %v7365 = vunpack.c.l.b16 %v5810
    %v7366 = vunpack.c.h.b16 %v5810
    %v7367 = vunpack.c.l.b16 %v5811
    %v7368 = vunpack.c.h.b16 %v5811
    %v7369 = vunpack.c.l.b16 %v5812
    %v7370 = vunpack.c.h.b16 %v5812
    %v7371 = vunpack.c.l.b16 %v5813
    %v7372 = vunpack.c.h.b16 %v5813
    %v7373 = vunpack.c.l.b16 %v5814
    %v7374 = vunpack.c.h.b16 %v5814
    %v7375 = vunpack.c.l.b16 %v5815
    %v7376 = vunpack.c.h.b16 %v5815
    %v7377 = vunpack.c.l.b16 %v5816
    %v7378 = vunpack.c.h.b16 %v5816
    %v7379 = vunpack.c.l.b16 %v5817
    %v7380 = vunpack.c.h.b16 %v5817
    %v7381 = vunpack.c.l.b16 %v5818
    %v7382 = vunpack.c.h.b16 %v5818
    %v7383 = vunpack.c.l.b16 %v5819
    %v7384 = vunpack.c.h.b16 %v5819
    %v7385 = vunpack.c.l.b16 %v5820
    %v7386 = vunpack.c.h.b16 %v5820
    %v7387 = vunpack.c.l.b16 %v5821
    %v7388 = vunpack.c.h.b16 %v5821
    %v7389 = vunpack.c.l.b16 %v5822
    %v7390 = vunpack.c.h.b16 %v5822
    %v7391 = vunpack.c.l.b16 %v5823
    %v7392 = vunpack.c.h.b16 %v5823
    %v7393 = vunpack.c.l.b16 %v5824
    %v7394 = vunpack.c.h.b16 %v5824
    %v7395 = vunpack.c.l.b16 %v5825
    %v7396 = vunpack.c.h.b16 %v5825
    %v7397 = vunpack.c.l.b16 %v5826
    %v7398 = vunpack.c.h.b16 %v5826
    %v7399 = vunpack.c.l.b16 %v5827
    %v7400 = vunpack.c.h.b16 %v5827
    %v7401 = vunpack.c.l.b16 %v5828
    %v7402 = vunpack.c.h.b16 %v5828
    %v7403 = vunpack.c.l.b16 %v5829
    %v7404 = vunpack.c.h.b16 %v5829
    %v7405 = vunpack.c.l.b16 %v5830
    %v7406 = vunpack.c.h.b16 %v5830
    %v7407 = vunpack.c.l.b16 %v5831
    %v7408 = vunpack.c.h.b16 %v5831
    %v7409 = vunpack.c.l.b16 %v5832
    %v7410 = vunpack.c.h.b16 %v5832
    %v7411 = vunpack.c.l.b16 %v5833
    %v7412 = vunpack.c.h.b16 %v5833
    %v7413 = vunpack.c.l.b16 %v5834
    %v7414 = vunpack.c.h.b16 %v5834
    %v7415 = vunpack.c.l.b16 %v5835
    %v7416 = vunpack.c.h.b16 %v5835
    %v7417 = vunpack.c.l.b16 %v5836
    %v7418 = vunpack.c.h.b16 %v5836
    %v7419 = vunpack.c.l.b16 %v5837
    %v7420 = vunpack.c.h.b16 %v5837
    %v7421 = vunpack.c.l.b16 %v5838
    %v7422 = vunpack.c.h.b16 %v5838
    %v7423 = vunpack.c.l.b16 %v5839
    %v7424 = vunpack.c.h.b16 %v5839
    %v7425 = vunpack.c.l.b16 %v5840
    %v7426 = vunpack.c.h.b16 %v5840
    %v7427 = vunpack.c.l.b16 %v5841
    %v7428 = vunpack.c.h.b16 %v5841
    %v7429 = vunpack.c.l.b16 %v5842
    %v7430 = vunpack.c.h.b16 %v5842
    %v7431 = vunpack.c.l.b16 %v5843
    %v7432 = vunpack.c.h.b16 %v5843
    %v7433 = vunpack.c.l.b16 %v5844
    %v7434 = vunpack.c.h.b16 %v5844
    %v7435 = vunpack.c.l.b16 %v5845
    %v7436 = vunpack.c.h.b16 %v5845
    %v7437 = vunpack.c.l.b16 %v5846
    %v7438 = vunpack.c.h.b16 %v5846
    %v7439 = vunpack.c.l.b16 %v5847
    %v7440 = vunpack.c.h.b16 %v5847
    %v7441 = vunpack.c.l.b16 %v5848
    %v7442 = vunpack.c.h.b16 %v5848
    %v7443 = vunpack.c.l.b16 %v5849
    %v7444 = vunpack.c.h.b16 %v5849
    %v7445 = vunpack.c.l.b16 %v5850
    %v7446 = vunpack.c.h.b16 %v5850
    %v7447 = vunpack.c.l.b16 %v5851
    %v7448 = vunpack.c.h.b16 %v5851
    %v7449 = vunpack.c.l.b16 %v5852
    %v7450 = vunpack.c.h.b16 %v5852
    %v7451 = vunpack.c.l.b16 %v5853
    %v7452 = vunpack.c.h.b16 %v5853
    %v7453 = vunpack.c.l.b16 %v5854
    %v7454 = vunpack.c.h.b16 %v5854
    %v7455 = vunpack.c.l.b16 %v5855
    %v7456 = vunpack.c.h.b16 %v5855
    %v7457 = vunpack.c.l.b16 %v5856
    %v7458 = vunpack.c.h.b16 %v5856
    %v7459 = vunpack.c.l.b16 %v5857
    %v7460 = vunpack.c.h.b16 %v5857
    %v7461 = vunpack.c.l.b16 %v5858
    %v7462 = vunpack.c.h.b16 %v5858
    %v7463 = vunpack.c.l.b16 %v5859
    %v7464 = vunpack.c.h.b16 %v5859
    %v7465 = vunpack.c.l.b16 %v5860
    %v7466 = vunpack.c.h.b16 %v5860
    %v7467 = vunpack.c.l.b16 %v5861
    %v7468 = vunpack.c.h.b16 %v5861
    %v7469 = vunpack.c.l.b16 %v5862
    %v7470 = vunpack.c.h.b16 %v5862
    %v7471 = vunpack.c.l.b16 %v5863
    %v7472 = vunpack.c.h.b16 %v5863
    %v7473 = vunpack.c.l.b16 %v5864
    %v7474 = vunpack.c.h.b16 %v5864
    %v7475 = vunpack.c.l.b16 %v5865
    %v7476 = vunpack.c.h.b16 %v5865
    %v7477 = vunpack.c.l.b16 %v5866
    %v7478 = vunpack.c.h.b16 %v5866
    %v7479 = vunpack.c.l.b16 %v5867
    %v7480 = vunpack.c.h.b16 %v5867
    %v7481 = vunpack.c.l.b16 %v5868
    %v7482 = vunpack.c.h.b16 %v5868
    %v7483 = vunpack.c.l.b16 %v5869
    %v7484 = vunpack.c.h.b16 %v5869
    %v7485 = vunpack.c.l.b16 %v5870
    %v7486 = vunpack.c.h.b16 %v5870
    %v7487 = vunpack.c.l.b16 %v5871
    %v7488 = vunpack.c.h.b16 %v5871
    %v7489 = vunpack.c.l.b16 %v5872
    %v7490 = vunpack.c.h.b16 %v5872
    %v7491 = vunpack.c.l.b16 %v5873
    %v7492 = vunpack.c.h.b16 %v5873
    %v7493 = vunpack.c.l.b16 %v5874
    %v7494 = vunpack.c.h.b16 %v5874
    %v7495 = vunpack.c.l.b16 %v5875
    %v7496 = vunpack.c.h.b16 %v5875
    %v7497 = vunpack.c.l.b16 %v5876
    %v7498 = vunpack.c.h.b16 %v5876
    %v7499 = vunpack.c.l.b16 %v5877
    %v7500 = vunpack.c.h.b16 %v5877
    %v7501 = vunpack.c.l.b16 %v5878
    %v7502 = vunpack.c.h.b16 %v5878
    %v7503 = vunpack.c.l.b16 %v5879
    %v7504 = vunpack.c.h.b16 %v5879
    %v7505 = vunpack.c.l.b16 %v5880
    %v7506 = vunpack.c.h.b16 %v5880
    %v7507 = vunpack.c.l.b16 %v5881
    %v7508 = vunpack.c.h.b16 %v5881
    %v7509 = vunpack.c.l.b16 %v5882
    %v7510 = vunpack.c.h.b16 %v5882
    %v7511 = vunpack.c.l.b16 %v5883
    %v7512 = vunpack.c.h.b16 %v5883
    %v7513 = vunpack.c.l.b16 %v5884
    %v7514 = vunpack.c.h.b16 %v5884
    %v7515 = vunpack.c.l.b16 %v5885
    %v7516 = vunpack.c.h.b16 %v5885
    %v7517 = vunpack.c.l.b16 %v5886
    %v7518 = vunpack.c.h.b16 %v5886
    %v7519 = vunpack.c.l.b16 %v5887
    %v7520 = vunpack.c.h.b16 %v5887
    %v7521 = vunpack.c.l.b16 %v5888
    %v7522 = vunpack.c.h.b16 %v5888
    %v7523 = vunpack.c.l.b16 %v5889
    %v7524 = vunpack.c.h.b16 %v5889
    %v7525 = vunpack.c.l.b16 %v5890
    %v7526 = vunpack.c.h.b16 %v5890
    %v7527 = vunpack.c.l.b16 %v5891
    %v7528 = vunpack.c.h.b16 %v5891
    %v7529 = vunpack.c.l.b16 %v5892
    %v7530 = vunpack.c.h.b16 %v5892
    %v7531 = vunpack.c.l.b16 %v5893
    %v7532 = vunpack.c.h.b16 %v5893
    %v7533 = vunpack.c.l.b16 %v5894
    %v7534 = vunpack.c.h.b16 %v5894
    %v7535 = vunpack.c.l.b16 %v5895
    %v7536 = vunpack.c.h.b16 %v5895
    %v7537 = vunpack.c.l.b16 %v5896
    %v7538 = vunpack.c.h.b16 %v5896
    %v7539 = vunpack.c.l.b16 %v5897
    %v7540 = vunpack.c.h.b16 %v5897
    %v7541 = vunpack.c.l.b16 %v5898
    %v7542 = vunpack.c.h.b16 %v5898
    %v7543 = vunpack.c.l.b16 %v5899
    %v7544 = vunpack.c.h.b16 %v5899
    %v7545 = vunpack.c.l.b16 %v5900
    %v7546 = vunpack.c.h.b16 %v5900
    %v7547 = vunpack.c.l.b16 %v5901
    %v7548 = vunpack.c.h.b16 %v5901
    %v7549 = vunpack.c.l.b16 %v5902
    %v7550 = vunpack.c.h.b16 %v5902
    %v7551 = vunpack.c.l.b16 %v5903
    %v7552 = vunpack.c.h.b16 %v5903
    %v7553 = vunpack.c.l.b16 %v5904
    %v7554 = vunpack.c.h.b16 %v5904
    %v7555 = vunpack.c.l.b16 %v5905
    %v7556 = vunpack.c.h.b16 %v5905
    %v7557 = vunpack.c.l.b16 %v5906
    %v7558 = vunpack.c.h.b16 %v5906
    %v7559 = vunpack.c.l.b16 %v5907
    %v7560 = vunpack.c.h.b16 %v5907
    %v7561 = vunpack.c.l.b16 %v5908
    %v7562 = vunpack.c.h.b16 %v5908
    %v7563 = vunpack.c.l.b16 %v5909
    %v7564 = vunpack.c.h.b16 %v5909
    %v7565 = vunpack.c.l.b16 %v5910
    %v7566 = vunpack.c.h.b16 %v5910
    %v7567 = vunpack.c.l.b16 %v5911
    %v7568 = vunpack.c.h.b16 %v5911
    %v7569 = vunpack.c.l.b16 %v5912
    %v7570 = vunpack.c.h.b16 %v5912
    %v7571 = vunpack.c.l.b16 %v5913
    %v7572 = vunpack.c.h.b16 %v5913
    %v7573 = vunpack.c.l.b16 %v5914
    %v7574 = vunpack.c.h.b16 %v5914
    %v7575 = vunpack.c.l.b16 %v5915
    %v7576 = vunpack.c.h.b16 %v5915
    %v7577 = vunpack.c.l.b16 %v5916
    %v7578 = vunpack.c.h.b16 %v5916
    %v7579 = vunpack.c.l.b16 %v5917
    %v7580 = vunpack.c.h.b16 %v5917
    %v7581 = vunpack.c.l.b16 %v5918
    %v7582 = vunpack.c.h.b16 %v5918
    %v7583 = vunpack.c.l.b16 %v5919
    %v7584 = vunpack.c.h.b16 %v5919
    %v7585 = vunpack.c.l.b16 %v5920
    %v7586 = vunpack.c.h.b16 %v5920
    %v7587 = vunpack.c.l.b16 %v5921
    %v7588 = vunpack.c.h.b16 %v5921
    %v7589 = vunpack.c.l.b16 %v5922
    %v7590 = vunpack.c.h.b16 %v5922
    %v7591 = vunpack.c.l.b16 %v5923
    %v7592 = vunpack.c.h.b16 %v5923
    %v7593 = vunpack.c.l.b16 %v5924
    %v7594 = vunpack.c.h.b16 %v5924
    %v7595 = vunpack.c.l.b16 %v5925
    %v7596 = vunpack.c.h.b16 %v5925
    %v7597 = vunpack.c.l.b16 %v5926
    %v7598 = vunpack.c.h.b16 %v5926
    %v7599 = vunpack.c.l.b16 %v5927
    %v7600 = vunpack.c.h.b16 %v5927
    %v7601 = vunpack.c.l.b16 %v5928
    %v7602 = vunpack.c.h.b16 %v5928
    %v7603 = vunpack.c.l.b16 %v5929
    %v7604 = vunpack.c.h.b16 %v5929
    %v7605 = vunpack.c.l.b16 %v5930
    %v7606 = vunpack.c.h.b16 %v5930
    %v7607 = vunpack.c.l.b16 %v5931
    %v7608 = vunpack.c.h.b16 %v5931
    %v7609 = vunpack.c.l.b16 %v5932
    %v7610 = vunpack.c.h.b16 %v5932
    %v7611 = vunpack.c.l.b16 %v5933
    %v7612 = vunpack.c.h.b16 %v5933
    %v7613 = vunpack.c.l.b16 %v5934
    %v7614 = vunpack.c.h.b16 %v5934
    %v7615 = vunpack.c.l.b16 %v5935
    %v7616 = vunpack.c.h.b16 %v5935
    %v7617 = vunpack.c.l.b16 %v5936
    %v7618 = vunpack.c.h.b16 %v5936
    %v7619 = vunpack.c.l.b16 %v5937
    %v7620 = vunpack.c.h.b16 %v5937
    %v7621 = vunpack.c.l.b16 %v5938
    %v7622 = vunpack.c.h.b16 %v5938
    %v7623 = vunpack.c.l.b16 %v5939
    %v7624 = vunpack.c.h.b16 %v5939
    %v7625 = vunpack.c.l.b16 %v5940
    %v7626 = vunpack.c.h.b16 %v5940
    %v7627 = vunpack.c.l.b16 %v5941
    %v7628 = vunpack.c.h.b16 %v5941
    %v7629 = vunpack.c.l.b16 %v5942
    %v7630 = vunpack.c.h.b16 %v5942
    %v7631 = vunpack.c.l.b16 %v5943
    %v7632 = vunpack.c.h.b16 %v5943
    %v7633 = vunpack.c.l.b16 %v5944
    %v7634 = vunpack.c.h.b16 %v5944
    %v7635 = vunpack.c.l.b16 %v5945
    %v7636 = vunpack.c.h.b16 %v5945
    %v7637 = vunpack.c.l.b16 %v5946
    %v7638 = vunpack.c.h.b16 %v5946
    %v7639 = vunpack.c.l.b16 %v5947
    %v7640 = vunpack.c.h.b16 %v5947
    %v7641 = vunpack.c.l.b16 %v5948
    %v7642 = vunpack.c.h.b16 %v5948
    %v7643 = vunpack.c.l.b16 %v5949
    %v7644 = vunpack.c.h.b16 %v5949
    %v7645 = vunpack.c.l.b16 %v5950
    %v7646 = vunpack.c.h.b16 %v5950
    %v7647 = vunpack.c.l.b16 %v5951
    %v7648 = vunpack.c.h.b16 %v5951
    %v7649 = vunpack.c.l.b16 %v5952
    %v7650 = vunpack.c.h.b16 %v5952
    %v7651 = vunpack.c.l.b16 %v5953
    %v7652 = vunpack.c.h.b16 %v5953
    %v7653 = vunpack.c.l.b16 %v5954
    %v7654 = vunpack.c.h.b16 %v5954
    %v7655 = vunpack.c.l.b16 %v5955
    %v7656 = vunpack.c.h.b16 %v5955
    %v7657 = vunpack.c.l.b16 %v5956
    %v7658 = vunpack.c.h.b16 %v5956
    %v7659 = vunpack.c.l.b16 %v5957
    %v7660 = vunpack.c.h.b16 %v5957
    %v7661 = vunpack.c.l.b16 %v5958
    %v7662 = vunpack.c.h.b16 %v5958
    %v7663 = vunpack.c.l.b16 %v5959
    %v7664 = vunpack.c.h.b16 %v5959
    %v7665 = vunpack.c.l.b16 %v5960
    %v7666 = vunpack.c.h.b16 %v5960
    %v7667 = vunpack.c.l.b16 %v5961
    %v7668 = vunpack.c.h.b16 %v5961
    %v7669 = vunpack.c.l.b16 %v5962
    %v7670 = vunpack.c.h.b16 %v5962
    %v7671 = vunpack.c.l.b16 %v5963
    %v7672 = vunpack.c.h.b16 %v5963
    %v7673 = vunpack.c.l.b16 %v5964
    %v7674 = vunpack.c.h.b16 %v5964
    %v7675 = vunpack.c.l.b16 %v5965
    %v7676 = vunpack.c.h.b16 %v5965
    %v7677 = vunpack.c.l.b16 %v5966
    %v7678 = vunpack.c.h.b16 %v5966
    %v7679 = vunpack.c.l.b16 %v5967
    %v7680 = vunpack.c.h.b16 %v5967
    %v7681 = vunpack.c.l.b16 %v5968
    %v7682 = vunpack.c.h.b16 %v5968
    %v7683 = vunpack.c.l.b16 %v5969
    %v7684 = vunpack.c.h.b16 %v5969
    %v7685 = vunpack.c.l.b16 %v5970
    %v7686 = vunpack.c.h.b16 %v5970
    %v7687 = vunpack.c.l.b16 %v5971
    %v7688 = vunpack.c.h.b16 %v5971
    %v7689 = vunpack.c.l.b16 %v5972
    %v7690 = vunpack.c.h.b16 %v5972
    %v7691 = vunpack.c.l.b16 %v5973
    %v7692 = vunpack.c.h.b16 %v5973
    %v7693 = vunpack.c.l.b16 %v5974
    %v7694 = vunpack.c.h.b16 %v5974
    %v7695 = vunpack.c.l.b16 %v5975
    %v7696 = vunpack.c.h.b16 %v5975
    %v7697 = vunpack.c.l.b16 %v5976
    %v7698 = vunpack.c.h.b16 %v5976
    %v7699 = vunpack.c.l.b16 %v5977
    %v7700 = vunpack.c.h.b16 %v5977
    %v7701 = vunpack.c.l.b16 %v5978
    %v7702 = vunpack.c.h.b16 %v5978
    %v7703 = vunpack.c.l.b16 %v5979
    %v7704 = vunpack.c.h.b16 %v5979
    %v7705 = vunpack.c.l.b16 %v5980
    %v7706 = vunpack.c.h.b16 %v5980
    %v7707 = vunpack.c.l.b16 %v5981
    %v7708 = vunpack.c.h.b16 %v5981
    %v7709 = vunpack.c.l.b16 %v5982
    %v7710 = vunpack.c.h.b16 %v5982
    %v7711 = vunpack.c.l.b16 %v5983
    %v7712 = vunpack.c.h.b16 %v5983
    %v7713 = vunpack.c.l.b16 %v5984
    %v7714 = vunpack.c.h.b16 %v5984
    %v7715 = vunpack.c.l.b16 %v5985
    %v7716 = vunpack.c.h.b16 %v5985
    %v7717 = vunpack.c.l.b16 %v5986
    %v7718 = vunpack.c.h.b16 %v5986
    %v7719 = vunpack.c.l.b16 %v5987
    %v7720 = vunpack.c.h.b16 %v5987
    %v7721 = vunpack.c.l.b16 %v5988
    %v7722 = vunpack.c.h.b16 %v5988
    %v7723 = vunpack.c.l.b16 %v5989
    %v7724 = vunpack.c.h.b16 %v5989
    %v7725 = vunpack.c.l.b16 %v5990
    %v7726 = vunpack.c.h.b16 %v5990
    %v7727 = vunpack.c.l.b16 %v5991
    %v7728 = vunpack.c.h.b16 %v5991
    %v7729 = vunpack.c.l.b16 %v5992
    %v7730 = vunpack.c.h.b16 %v5992
    %v7731 = vunpack.c.l.b16 %v5993
    %v7732 = vunpack.c.h.b16 %v5993
    %v7733 = vunpack.c.l.b16 %v5994
    %v7734 = vunpack.c.h.b16 %v5994
    %v7735 = vunpack.c.l.b16 %v5995
    %v7736 = vunpack.c.h.b16 %v5995
    %v7737 = vunpack.c.l.b16 %v5996
    %v7738 = vunpack.c.h.b16 %v5996
    %v7739 = vunpack.c.l.b16 %v5997
    %v7740 = vunpack.c.h.b16 %v5997
    %v7741 = vunpack.c.l.b16 %v5998
    %v7742 = vunpack.c.h.b16 %v5998
    %v7743 = vunpack.c.l.b16 %v5999
    %v7744 = vunpack.c.h.b16 %v5999
    %v7745 = vunpack.c.l.b16 %v6000
    %v7746 = vunpack.c.h.b16 %v6000
    %v7747 = vunpack.c.l.b16 %v6001
    %v7748 = vunpack.c.h.b16 %v6001
    %v7749 = vunpack.c.l.b16 %v6002
    %v7750 = vunpack.c.h.b16 %v6002
    %v7751 = vunpack.c.l.b16 %v6003
    %v7752 = vunpack.c.h.b16 %v6003
    %v7753 = vunpack.c.l.b16 %v6004
    %v7754 = vunpack.c.h.b16 %v6004
    %v7755 = vunpack.c.l.b16 %v6005
    %v7756 = vunpack.c.h.b16 %v6005
    %v7757 = vunpack.c.l.b16 %v6006
    %v7758 = vunpack.c.h.b16 %v6006
    %v7759 = vunpack.c.l.b16 %v6007
    %v7760 = vunpack.c.h.b16 %v6007
    %v7761 = vunpack.c.l.b16 %v6008
    %v7762 = vunpack.c.h.b16 %v6008
    %v7763 = vunpack.c.l.b16 %v6009
    %v7764 = vunpack.c.h.b16 %v6009
    %v7765 = vunpack.c.l.b16 %v6010
    %v7766 = vunpack.c.h.b16 %v6010
    %v7767 = vunpack.c.l.b16 %v6011
    %v7768 = vunpack.c.h.b16 %v6011
    %v7769 = vunpack.c.l.b16 %v6012
    %v7770 = vunpack.c.h.b16 %v6012
    %v7771 = vunpack.c.l.b16 %v6013
    %v7772 = vunpack.c.h.b16 %v6013
    %v7773 = vunpack.c.l.b16 %v6014
    %v7774 = vunpack.c.h.b16 %v6014
    %v7775 = vunpack.c.l.b16 %v6015
    %v7776 = vunpack.c.h.b16 %v6015
    %v7777 = vunpack.c.l.b16 %v6016
    %v7778 = vunpack.c.h.b16 %v6016
    %v7779 = vunpack.c.l.b16 %v6017
    %v7780 = vunpack.c.h.b16 %v6017
    %v7781 = vunpack.c.l.b16 %v6018
    %v7782 = vunpack.c.h.b16 %v6018
    %v7783 = vunpack.c.l.b16 %v6019
    %v7784 = vunpack.c.h.b16 %v6019
    %v7785 = vunpack.c.l.b16 %v6020
    %v7786 = vunpack.c.h.b16 %v6020
    %v7787 = vunpack.c.l.b16 %v6021
    %v7788 = vunpack.c.h.b16 %v6021
    %v7789 = vunpack.c.l.b16 %v6022
    %v7790 = vunpack.c.h.b16 %v6022
    %v7791 = vunpack.c.l.b16 %v6023
    %v7792 = vunpack.c.h.b16 %v6023
    %v7793 = vunpack.c.l.b16 %v6024
    %v7794 = vunpack.c.h.b16 %v6024
    %v7795 = vunpack.c.l.b16 %v6025
    %v7796 = vunpack.c.h.b16 %v6025
    %v7797 = vunpack.c.l.b16 %v6026
    %v7798 = vunpack.c.h.b16 %v6026
    %v7799 = vunpack.c.l.b16 %v6027
    %v7800 = vunpack.c.h.b16 %v6027
    %v7801 = vunpack.c.l.b16 %v6028
    %v7802 = vunpack.c.h.b16 %v6028
    %v7803 = vunpack.c.l.b16 %v6029
    %v7804 = vunpack.c.h.b16 %v6029
    %v7805 = vunpack.c.l.b16 %v6030
    %v7806 = vunpack.c.h.b16 %v6030
    %v7807 = vunpack.c.l.b16 %v6031
    %v7808 = vunpack.c.h.b16 %v6031
    %v7809 = vunpack.c.l.b16 %v6032
    %v7810 = vunpack.c.h.b16 %v6032
    %v7811 = vunpack.c.l.b16 %v6033
    %v7812 = vunpack.c.h.b16 %v6033
    %v7813 = vunpack.c.l.b16 %v6034
    %v7814 = vunpack.c.h.b16 %v6034
    %v7815 = vunpack.c.l.b16 %v6035
    %v7816 = vunpack.c.h.b16 %v6035
    %v7817 = vunpack.c.l.b16 %v6036
    %v7818 = vunpack.c.h.b16 %v6036
    %v7819 = vunpack.c.l.b16 %v6037
    %v7820 = vunpack.c.h.b16 %v6037
    %v7821 = vunpack.c.l.b16 %v6038
    %v7822 = vunpack.c.h.b16 %v6038
    %v7823 = vunpack.c.l.b16 %v6039
    %v7824 = vunpack.c.h.b16 %v6039
    %v7825 = vunpack.c.l.b16 %v6040
    %v7826 = vunpack.c.h.b16 %v6040
    %v7827 = vunpack.c.l.b16 %v6041
    %v7828 = vunpack.c.h.b16 %v6041
    %v7829 = vunpack.c.l.b16 %v6042
    %v7830 = vunpack.c.h.b16 %v6042
    %v7831 = vunpack.c.l.b16 %v6043
    %v7832 = vunpack.c.h.b16 %v6043
    %v7833 = vunpack.c.l.b16 %v6044
    %v7834 = vunpack.c.h.b16 %v6044
    %v7835 = vunpack.c.l.b16 %v6045
    %v7836 = vunpack.c.h.b16 %v6045
    %v7837 = vunpack.c.l.b16 %v6046
    %v7838 = vunpack.c.h.b16 %v6046
    %v7839 = vunpack.c.l.b16 %v6047
    %v7840 = vunpack.c.h.b16 %v6047
    %v7841 = vunpack.c.l.b16 %v6048
    %v7842 = vunpack.c.h.b16 %v6048
    %v7843 = vunpack.c.l.b16 %v6049
    %v7844 = vunpack.c.h.b16 %v6049
    %v7845 = vunpack.c.l.b16 %v6050
    %v7846 = vunpack.c.h.b16 %v6050
    %v7847 = vunpack.c.l.b16 %v6051
    %v7848 = vunpack.c.h.b16 %v6051
    %v7849 = vunpack.c.l.b16 %v6052
    %v7850 = vunpack.c.h.b16 %v6052
    %v7851 = vunpack.c.l.b16 %v6053
    %v7852 = vunpack.c.h.b16 %v6053
    %v7853 = vunpack.c.l.b16 %v6054
    %v7854 = vunpack.c.h.b16 %v6054
    %v7855 = vunpack.c.l.b16 %v6055
    %v7856 = vunpack.c.h.b16 %v6055
    %v7857 = vunpack.c.l.b16 %v6056
    %v7858 = vunpack.c.h.b16 %v6056
    %v7859 = vunpack.c.l.b16 %v6057
    %v7860 = vunpack.c.h.b16 %v6057
    %v7861 = vunpack.c.l.b16 %v6058
    %v7862 = vunpack.c.h.b16 %v6058
    %v7863 = vunpack.c.l.b16 %v6059
    %v7864 = vunpack.c.h.b16 %v6059
    %v7865 = vunpack.c.l.b16 %v6060
    %v7866 = vunpack.c.h.b16 %v6060
    %v7867 = vunpack.c.l.b16 %v6061
    %v7868 = vunpack.c.h.b16 %v6061
    %v7869 = vunpack.c.l.b16 %v6062
    %v7870 = vunpack.c.h.b16 %v6062
    %v7871 = vunpack.c.l.b16 %v6063
    %v7872 = vunpack.c.h.b16 %v6063
    %v7873 = vunpack.c.l.b16 %v6064
    %v7874 = vunpack.c.h.b16 %v6064
    %v7875 = vunpack.c.l.b16 %v6065
    %v7876 = vunpack.c.h.b16 %v6065
    %v7877 = vunpack.c.l.b16 %v6066
    %v7878 = vunpack.c.h.b16 %v6066
    %v7879 = vunpack.c.l.b16 %v6067
    %v7880 = vunpack.c.h.b16 %v6067
    %v7881 = vunpack.c.l.b16 %v6068
    %v7882 = vunpack.c.h.b16 %v6068
    %v7883 = vunpack.c.l.b16 %v6069
    %v7884 = vunpack.c.h.b16 %v6069
    %v7885 = vunpack.c.l.b16 %v6070
    %v7886 = vunpack.c.h.b16 %v6070
    %v7887 = vunpack.c.l.b16 %v6071
    %v7888 = vunpack.c.h.b16 %v6071
    %v7889 = vunpack.c.l.b16 %v6072
    %v7890 = vunpack.c.h.b16 %v6072
    %v7891 = vunpack.c.l.b16 %v6073
    %v7892 = vunpack.c.h.b16 %v6073
    %v7893 = vunpack.c.l.b16 %v6074
    %v7894 = vunpack.c.h.b16 %v6074
    %v7895 = vunpack.c.l.b16 %v6075
    %v7896 = vunpack.c.h.b16 %v6075
    %v7897 = vunpack.c.l.b16 %v6076
    %v7898 = vunpack.c.h.b16 %v6076
    %v7899 = vunpack.c.l.b16 %v6077
    %v7900 = vunpack.c.h.b16 %v6077
    %v7901 = vunpack.c.l.b16 %v6078
    %v7902 = vunpack.c.h.b16 %v6078
    %v7903 = vunpack.c.l.b16 %v6079
    %v7904 = vunpack.c.h.b16 %v6079
    %v7905 = vunpack.c.l.b16 %v6080
    %v7906 = vunpack.c.h.b16 %v6080
    %v7907 = vunpack.c.l.b16 %v6081
    %v7908 = vunpack.c.h.b16 %v6081
    %v7909 = vunpack.c.l.b16 %v6082
    %v7910 = vunpack.c.h.b16 %v6082
    %v7911 = vunpack.c.l.b16 %v6083
    %v7912 = vunpack.c.h.b16 %v6083
    %v7913 = vunpack.c.l.b16 %v6084
    %v7914 = vunpack.c.h.b16 %v6084
    %v7915 = vunpack.c.l.b16 %v6085
    %v7916 = vunpack.c.h.b16 %v6085
    %v7917 = vunpack.c.l.b16 %v6086
    %v7918 = vunpack.c.h.b16 %v6086
    %v7919 = vunpack.c.l.b16 %v6087
    %v7920 = vunpack.c.h.b16 %v6087
    %v7921 = vunpack.c.l.b16 %v6088
    %v7922 = vunpack.c.h.b16 %v6088
    %v7923 = vunpack.c.l.b16 %v6089
    %v7924 = vunpack.c.h.b16 %v6089
    %v7925 = vunpack.c.l.b16 %v6090
    %v7926 = vunpack.c.h.b16 %v6090
    %v7927 = vunpack.c.l.b16 %v6091
    %v7928 = vunpack.c.h.b16 %v6091
    %v7929 = vunpack.c.l.b16 %v6092
    %v7930 = vunpack.c.h.b16 %v6092
    %v7931 = vunpack.c.l.b16 %v6093
    %v7932 = vunpack.c.h.b16 %v6093
    %v7933 = vunpack.c.l.b16 %v6094
    %v7934 = vunpack.c.h.b16 %v6094
    %v7935 = vunpack.c.l.b16 %v6095
    %v7936 = vunpack.c.h.b16 %v6095
    %v7937 = vunpack.c.l.b16 %v6096
    %v7938 = vunpack.c.h.b16 %v6096
    %v7939 = vunpack.c.l.b16 %v6097
    %v7940 = vunpack.c.h.b16 %v6097
    %v7941 = vunpack.c.l.b16 %v6098
    %v7942 = vunpack.c.h.b16 %v6098
    %v7943 = vunpack.c.l.b16 %v6099
    %v7944 = vunpack.c.h.b16 %v6099
    %v7945 = vunpack.c.l.b16 %v6100
    %v7946 = vunpack.c.h.b16 %v6100
    %v7947 = vunpack.c.l.b16 %v6101
    %v7948 = vunpack.c.h.b16 %v6101
    %v7949 = vunpack.c.l.b16 %v6102
    %v7950 = vunpack.c.h.b16 %v6102
    %v7951 = vunpack.c.l.b16 %v6103
    %v7952 = vunpack.c.h.b16 %v6103
    %v7953 = vunpack.c.l.b16 %v6104
    %v7954 = vunpack.c.h.b16 %v6104
    %v7955 = vunpack.c.l.b16 %v6105
    %v7956 = vunpack.c.h.b16 %v6105
    %v7957 = vunpack.c.l.b16 %v6106
    %v7958 = vunpack.c.h.b16 %v6106
    %v7959 = vunpack.c.l.b16 %v6107
    %v7960 = vunpack.c.h.b16 %v6107
    %v7961 = vunpack.c.l.b16 %v6108
    %v7962 = vunpack.c.h.b16 %v6108
    %v7963 = vunpack.c.l.b16 %v6109
    %v7964 = vunpack.c.h.b16 %v6109
    %v7965 = vunpack.c.l.b16 %v6110
    %v7966 = vunpack.c.h.b16 %v6110
    %v7967 = vunpack.c.l.b16 %v6111
    %v7968 = vunpack.c.h.b16 %v6111
    %v7969 = vunpack.c.l.b16 %v6112
    %v7970 = vunpack.c.h.b16 %v6112
    %v7971 = vunpack.c.l.b16 %v6113
    %v7972 = vunpack.c.h.b16 %v6113
    %v7973 = vunpack.c.l.b16 %v6114
    %v7974 = vunpack.c.h.b16 %v6114
    %v7975 = vunpack.c.l.b16 %v6115
    %v7976 = vunpack.c.h.b16 %v6115
    %v7977 = vunpack.c.l.b16 %v6116
    %v7978 = vunpack.c.h.b16 %v6116
    %v7979 = vunpack.c.l.b16 %v6117
    %v7980 = vunpack.c.h.b16 %v6117
    %v7981 = vunpack.c.l.b16 %v6118
    %v7982 = vunpack.c.h.b16 %v6118
    %v7983 = vunpack.c.l.b16 %v6119
    %v7984 = vunpack.c.h.b16 %v6119
    %v7985 = vunpack.c.l.b16 %v6120
    %v7986 = vunpack.c.h.b16 %v6120
    %v7987 = vunpack.c.l.b16 %v6121
    %v7988 = vunpack.c.h.b16 %v6121
    %v7989 = vunpack.c.l.b16 %v6122
    %v7990 = vunpack.c.h.b16 %v6122
    %v7991 = vunpack.c.l.b16 %v6123
    %v7992 = vunpack.c.h.b16 %v6123
    %v7993 = vunpack.c.l.b16 %v6124
    %v7994 = vunpack.c.h.b16 %v6124
    %v7995 = vunpack.c.l.b16 %v6125
    %v7996 = vunpack.c.h.b16 %v6125
    %v7997 = vunpack.c.l.b16 %v6126
    %v7998 = vunpack.c.h.b16 %v6126
    %v7999 = vunpack.c.l.b16 %v6127
    %v8000 = vunpack.c.h.b16 %v6127
    %v8001 = vunpack.c.l.b16 %v6128
    %v8002 = vunpack.c.h.b16 %v6128
    %v8003 = vunpack.c.l.b16 %v6129
    %v8004 = vunpack.c.h.b16 %v6129
    %v8005 = vunpack.c.l.b16 %v6130
    %v8006 = vunpack.c.h.b16 %v6130
    %v8007 = vunpack.c.l.b16 %v6131
    %v8008 = vunpack.c.h.b16 %v6131
    %v8009 = vunpack.c.l.b16 %v6132
    %v8010 = vunpack.c.h.b16 %v6132
    %v8011 = vunpack.c.l.b16 %v6133
    %v8012 = vunpack.c.h.b16 %v6133
    %v8013 = vunpack.c.l.b16 %v6134
    %v8014 = vunpack.c.h.b16 %v6134
    %v8015 = vunpack.c.l.b16 %v6135
    %v8016 = vunpack.c.h.b16 %v6135
    %v8017 = vunpack.c.l.b16 %v6136
    %v8018 = vunpack.c.h.b16 %v6136
    %v8019 = vunpack.c.l.b16 %v6137
    %v8020 = vunpack.c.h.b16 %v6137
    %v8021 = vunpack.c.l.b16 %v6138
    %v8022 = vunpack.c.h.b16 %v6138
    %v8023 = vunpack.c.l.b16 %v6139
    %v8024 = vunpack.c.h.b16 %v6139
    %v8025 = vunpack.c.l.b16 %v6140
    %v8026 = vunpack.c.h.b16 %v6140
    %v8027 = vunpack.c.l.b16 %v6141
    %v8028 = vunpack.c.h.b16 %v6141
    %v8029 = vunpack.c.l.b16 %v6142
    %v8030 = vunpack.c.h.b16 %v6142
    %v8031 = vunpack.c.l.b16 %v6143
    %v8032 = vunpack.c.h.b16 %v6143
    %v8033 = vunpack.c.l.b16 %v6144
    %v8034 = vunpack.c.h.b16 %v6144
    %v8035 = vunpack.c.l.b16 %v6145
    %v8036 = vunpack.c.h.b16 %v6145
    %v8037 = vunpack.c.l.b16 %v6146
    %v8038 = vunpack.c.h.b16 %v6146
    %v8039 = vunpack.c.l.b16 %v6147
    %v8040 = vunpack.c.h.b16 %v6147
    %v8041 = vunpack.c.l.b16 %v6148
    %v8042 = vunpack.c.h.b16 %v6148
    %v8043 = vunpack.c.l.b16 %v6149
    %v8044 = vunpack.c.h.b16 %v6149
    %v8045 = vunpack.c.l.b16 %v6150
    %v8046 = vunpack.c.h.b16 %v6150
    %v8047 = vunpack.c.l.b16 %v6151
    %v8048 = vunpack.c.h.b16 %v6151
    %v8049 = vunpack.c.l.b16 %v6152
    %v8050 = vunpack.c.h.b16 %v6152
    %v8051 = vunpack.c.l.b16 %v6153
    %v8052 = vunpack.c.h.b16 %v6153
    %v8053 = vunpack.c.l.b16 %v6154
    %v8054 = vunpack.c.h.b16 %v6154
    %v8055 = vunpack.c.l.b16 %v6155
    %v8056 = vunpack.c.h.b16 %v6155
    %v8057 = vunpack.c.l.b16 %v6156
    %v8058 = vunpack.c.h.b16 %v6156
    %v8059 = vunpack.c.l.b16 %v6157
    %v8060 = vunpack.c.h.b16 %v6157
    %v8061 = vunpack.c.l.b16 %v6158
    %v8062 = vunpack.c.h.b16 %v6158
    %v8063 = vunpack.c.l.b16 %v6159
    %v8064 = vunpack.c.h.b16 %v6159
    %v8065 = vunpack.c.l.b16 %v6160
    %v8066 = vunpack.c.h.b16 %v6160
    %v8067 = vunpack.c.l.b16 %v6161
    %v8068 = vunpack.c.h.b16 %v6161
    %v8069 = vunpack.c.l.b16 %v6162
    %v8070 = vunpack.c.h.b16 %v6162
    %v8071 = vunpack.c.l.b16 %v6163
    %v8072 = vunpack.c.h.b16 %v6163
    %v8073 = vunpack.c.l.b16 %v6164
    %v8074 = vunpack.c.h.b16 %v6164
    %v8075 = vunpack.c.l.b16 %v6165
    %v8076 = vunpack.c.h.b16 %v6165
    %v8077 = vunpack.c.l.b16 %v6166
    %v8078 = vunpack.c.h.b16 %v6166
    %v8079 = vunpack.c.l.b16 %v6167
    %v8080 = vunpack.c.h.b16 %v6167
    %v8081 = vunpack.c.l.b16 %v6168
    %v8082 = vunpack.c.h.b16 %v6168
    %v8083 = vunpack.c.l.b16 %v6169
    %v8084 = vunpack.c.h.b16 %v6169
    %v8085 = vunpack.c.l.b16 %v6170
    %v8086 = vunpack.c.h.b16 %v6170
    %v8087 = vunpack.c.l.b16 %v6171
    %v8088 = vunpack.c.h.b16 %v6171
    %v8089 = vunpack.c.l.b16 %v6172
    %v8090 = vunpack.c.h.b16 %v6172
    %v8091 = vunpack.c.l.b16 %v6173
    %v8092 = vunpack.c.h.b16 %v6173
    %v8093 = vunpack.c.l.b16 %v6174
    %v8094 = vunpack.c.h.b16 %v6174
    %v8095 = vunpack.c.l.b16 %v6175
    %v8096 = vunpack.c.h.b16 %v6175
    %v8097 = vunpack.c.l.b16 %v6176
    %v8098 = vunpack.c.h.b16 %v6176
    %v8099 = vunpack.c.l.b16 %v6177
    %v8100 = vunpack.c.h.b16 %v6177
    %v8101 = vunpack.c.l.b16 %v6178
    %v8102 = vunpack.c.h.b16 %v6178
    %v8103 = vunpack.c.l.b16 %v6179
    %v8104 = vunpack.c.h.b16 %v6179
    %v8105 = vunpack.c.l.b16 %v6180
    %v8106 = vunpack.c.h.b16 %v6180
    %v8107 = vunpack.c.l.b16 %v6181
    %v8108 = vunpack.c.h.b16 %v6181
    %v8109 = vunpack.c.l.b16 %v6182
    %v8110 = vunpack.c.h.b16 %v6182
    %v8111 = vunpack.c.l.b16 %v6183
    %v8112 = vunpack.c.h.b16 %v6183
    %v8113 = vunpack.c.l.b16 %v6184
    %v8114 = vunpack.c.h.b16 %v6184
    %v8115 = vunpack.c.l.b16 %v6185
    %v8116 = vunpack.c.h.b16 %v6185
    %v8117 = vunpack.c.l.b16 %v6186
    %v8118 = vunpack.c.h.b16 %v6186
    %v8119 = vunpack.c.l.b16 %v6187
    %v8120 = vunpack.c.h.b16 %v6187
    %v8121 = vunpack.c.l.b16 %v6188
    %v8122 = vunpack.c.h.b16 %v6188
    %v8123 = vunpack.c.l.b16 %v6189
    %v8124 = vunpack.c.h.b16 %v6189
    %v8125 = vunpack.c.l.b16 %v6190
    %v8126 = vunpack.c.h.b16 %v6190
    %v8127 = vunpack.c.l.b16 %v6191
    %v8128 = vunpack.c.h.b16 %v6191
    %v8129 = vunpack.c.l.b16 %v6192
    %v8130 = vunpack.c.h.b16 %v6192
    %v8131 = vunpack.c.l.b16 %v6193
    %v8132 = vunpack.c.h.b16 %v6193
    %v8133 = vunpack.c.l.b16 %v6194
    %v8134 = vunpack.c.h.b16 %v6194
    %v8135 = vunpack.c.l.b16 %v6195
    %v8136 = vunpack.c.h.b16 %v6195
    %v8137 = vunpack.c.l.b16 %v6196
    %v8138 = vunpack.c.h.b16 %v6196
    %v8139 = vunpack.c.l.b16 %v6197
    %v8140 = vunpack.c.h.b16 %v6197
    %v8141 = vunpack.c.l.b16 %v6198
    %v8142 = vunpack.c.h.b16 %v6198
    %v8143 = vunpack.c.l.b16 %v6199
    %v8144 = vunpack.c.h.b16 %v6199
    %v8145 = vunpack.c.l.b16 %v6200
    %v8146 = vunpack.c.h.b16 %v6200
    %v8147 = vunpack.c.l.b16 %v6201
    %v8148 = vunpack.c.h.b16 %v6201
    %v8149 = vunpack.c.l.b16 %v6202
    %v8150 = vunpack.c.h.b16 %v6202
    %v8151 = vunpack.c.l.b16 %v6203
    %v8152 = vunpack.c.h.b16 %v6203
    %v8153 = vunpack.c.l.b16 %v6204
    %v8154 = vunpack.c.h.b16 %v6204
    %v8155 = vunpack.c.l.b16 %v6205
    %v8156 = vunpack.c.h.b16 %v6205
    %v8157 = vunpack.c.l.b16 %v6206
    %v8158 = vunpack.c.h.b16 %v6206
    %v8159 = vunpack.c.l.b16 %v6207
    %v8160 = vunpack.c.h.b16 %v6207
    %v8161 = vunpack.c.l.b16 %v6208
    %v8162 = vunpack.c.h.b16 %v6208
    %v8163 = vunpack.c.l.b16 %v6209
    %v8164 = vunpack.c.h.b16 %v6209
    %v8165 = vunpack.c.l.b16 %v6210
    %v8166 = vunpack.c.h.b16 %v6210
    %v8167 = vunpack.c.l.b16 %v6211
    %v8168 = vunpack.c.h.b16 %v6211
    %v8169 = vunpack.c.l.b16 %v6212
    %v8170 = vunpack.c.h.b16 %v6212
    %v8171 = vunpack.c.l.b16 %v6213
    %v8172 = vunpack.c.h.b16 %v6213
    %v8173 = vunpack.c.l.b16 %v6214
    %v8174 = vunpack.c.h.b16 %v6214
    %v8175 = vunpack.c.l.b16 %v6215
    %v8176 = vunpack.c.h.b16 %v6215
    %v8177 = vunpack.c.l.b16 %v6216
    %v8178 = vunpack.c.h.b16 %v6216
    %v8179 = vunpack.c.l.b16 %v6217
    %v8180 = vunpack.c.h.b16 %v6217
    %v8181 = vunpack.c.l.b16 %v6218
    %v8182 = vunpack.c.h.b16 %v6218
    %v8183 = vunpack.c.l.b16 %v6219
    %v8184 = vunpack.c.h.b16 %v6219
    %v8185 = vunpack.c.l.b16 %v6220
    %v8186 = vunpack.c.h.b16 %v6220
    %v8187 = vunpack.c.l.b16 %v6221
    %v8188 = vunpack.c.h.b16 %v6221
    %v8189 = vunpack.c.l.b16 %v6222
    %v8190 = vunpack.c.h.b16 %v6222
    %v8191 = vunpack.c.l.b16 %v6223
    %v8192 = vunpack.c.h.b16 %v6223
    %v8193 = vunpack.c.l.b16 %v6224
    %v8194 = vunpack.c.h.b16 %v6224
    %v8195 = vunpack.c.l.b16 %v6225
    %v8196 = vunpack.c.h.b16 %v6225
    %v8197 = vunpack.c.l.b16 %v6226
    %v8198 = vunpack.c.h.b16 %v6226
    %v8199 = vunpack.c.l.b16 %v6227
    %v8200 = vunpack.c.h.b16 %v6227
    %v8201 = vunpack.c.l.b16 %v6228
    %v8202 = vunpack.c.h.b16 %v6228
    %v8203 = vunpack.c.l.b16 %v6229
    %v8204 = vunpack.c.h.b16 %v6229
    %v8205 = vunpack.c.l.b16 %v6230
    %v8206 = vunpack.c.h.b16 %v6230
    %v8207 = vunpack.c.l.b16 %v6231
    %v8208 = vunpack.c.h.b16 %v6231
    %v8209 = vunpack.c.l.b16 %v6232
    %v8210 = vunpack.c.h.b16 %v6232
    %v8211 = vunpack.c.l.b16 %v6233
    %v8212 = vunpack.c.h.b16 %v6233
    %v8213 = vunpack.c.l.b16 %v6234
    %v8214 = vunpack.c.h.b16 %v6234
    %v8215 = vunpack.c.l.b16 %v6235
    %v8216 = vunpack.c.h.b16 %v6235
    %v8217 = vunpack.c.l.b16 %v6236
    %v8218 = vunpack.c.h.b16 %v6236
    %v8219 = vunpack.c.l.b16 %v6237
    %v8220 = vunpack.c.h.b16 %v6237
    %v8221 = vunpack.c.l.b16 %v6238
    %v8222 = vunpack.c.h.b16 %v6238
    %v8223 = vunpack.c.l.b16 %v6239
    %v8224 = vunpack.c.h.b16 %v6239
    %v8225 = vunpack.c.l.b16 %v6240
    %v8226 = vunpack.c.h.b16 %v6240
    %v8227 = vunpack.c.l.b16 %v6241
    %v8228 = vunpack.c.h.b16 %v6241
    %v8229 = vunpack.c.l.b16 %v6242
    %v8230 = vunpack.c.h.b16 %v6242
    %v8231 = vunpack.c.l.b16 %v6243
    %v8232 = vunpack.c.h.b16 %v6243
    %v8233 = vunpack.c.l.b16 %v6244
    %v8234 = vunpack.c.h.b16 %v6244
    %v8235 = vunpack.c.l.b16 %v6245
    %v8236 = vunpack.c.h.b16 %v6245
    %v8237 = vunpack.c.l.b16 %v6246
    %v8238 = vunpack.c.h.b16 %v6246
    %v8239 = vunpack.c.l.b16 %v6247
    %v8240 = vunpack.c.h.b16 %v6247
    %v8241 = vunpack.c.l.b16 %v6248
    %v8242 = vunpack.c.h.b16 %v6248
    %v8243 = vunpack.c.l.b16 %v6249
    %v8244 = vunpack.c.h.b16 %v6249
    %v8245 = vunpack.c.l.b16 %v6250
    %v8246 = vunpack.c.h.b16 %v6250
    %v8247 = vunpack.c.l.b16 %v6251
    %v8248 = vunpack.c.h.b16 %v6251
    %v8249 = vunpack.c.l.b16 %v6252
    %v8250 = vunpack.c.h.b16 %v6252
    %v8251 = vunpack.c.l.b16 %v6253
    %v8252 = vunpack.c.h.b16 %v6253
    %v8253 = vunpack.c.l.b16 %v6254
    %v8254 = vunpack.c.h.b16 %v6254
    %v8255 = vunpack.c.l.b16 %v6255
    %v8256 = vunpack.c.h.b16 %v6255
    %v8257 = vunpack.c.l.b16 %v6256
    %v8258 = vunpack.c.h.b16 %v6256
    %v8259 = vunpack.c.l.b16 %v6257
    %v8260 = vunpack.c.h.b16 %v6257
    %v8261 = vunpack.c.l.b16 %v6258
    %v8262 = vunpack.c.h.b16 %v6258
    %v8263 = vunpack.c.l.b16 %v6259
    %v8264 = vunpack.c.h.b16 %v6259
    %v8265 = vunpack.c.l.b16 %v6260
    %v8266 = vunpack.c.h.b16 %v6260
    %v8267 = vunpack.c.l.b16 %v6261
    %v8268 = vunpack.c.h.b16 %v6261
    %v8269 = vunpack.c.l.b16 %v6262
    %v8270 = vunpack.c.h.b16 %v6262
    %v8271 = vunpack.c.l.b16 %v6263
    %v8272 = vunpack.c.h.b16 %v6263
    %v8273 = vunpack.c.l.b16 %v6264
    %v8274 = vunpack.c.h.b16 %v6264
    %v8275 = vunpack.c.l.b16 %v6265
    %v8276 = vunpack.c.h.b16 %v6265
    %v8277 = vunpack.c.l.b16 %v6266
    %v8278 = vunpack.c.h.b16 %v6266
    %v8279 = vunpack.c.l.b16 %v6267
    %v8280 = vunpack.c.h.b16 %v6267
    %v8281 = vunpack.c.l.b16 %v6268
    %v8282 = vunpack.c.h.b16 %v6268
    %v8283 = vunpack.c.l.b16 %v6269
    %v8284 = vunpack.c.h.b16 %v6269
    %v8285 = vunpack.c.l.b16 %v6270
    %v8286 = vunpack.c.h.b16 %v6270
    %v8287 = vunpack.c.l.b16 %v6271
    %v8288 = vunpack.c.h.b16 %v6271
    %v8289 = vunpack.c.l.b16 %v6272
    %v8290 = vunpack.c.h.b16 %v6272
    %v8291 = vunpack.c.l.b16 %v6273
    %v8292 = vunpack.c.h.b16 %v6273
    %v8293 = vunpack.c.l.b16 %v6274
    %v8294 = vunpack.c.h.b16 %v6274
    %v8295 = vunpack.c.l.b16 %v6275
    %v8296 = vunpack.c.h.b16 %v6275
    %v8297 = vunpack.c.l.b16 %v6276
    %v8298 = vunpack.c.h.b16 %v6276
    %v8299 = vunpack.c.l.b16 %v6277
    %v8300 = vunpack.c.h.b16 %v6277
    %v8301 = vunpack.c.l.b16 %v6278
    %v8302 = vunpack.c.h.b16 %v6278
    %v8303 = vunpack.c.l.b16 %v6279
    %v8304 = vunpack.c.h.b16 %v6279
    %v8305 = vunpack.c.l.b16 %v6280
    %v8306 = vunpack.c.h.b16 %v6280
    %v8307 = vunpack.c.l.b16 %v6281
    %v8308 = vunpack.c.h.b16 %v6281
    %v8309 = vunpack.c.l.b16 %v6282
    %v8310 = vunpack.c.h.b16 %v6282
    %v8311 = vunpack.c.l.b16 %v6283
    %v8312 = vunpack.c.h.b16 %v6283
    %v8313 = vunpack.c.l.b16 %v6284
    %v8314 = vunpack.c.h.b16 %v6284
    %v8315 = vunpack.c.l.b16 %v6285
    %v8316 = vunpack.c.h.b16 %v6285
    %v8317 = vunpack.c.l.b16 %v6286
    %v8318 = vunpack.c.h.b16 %v6286
    %v8319 = vunpack.c.l.b16 %v6287
    %v8320 = vunpack.c.h.b16 %v6287
    %v8321 = vunpack.c.l.b16 %v6288
    %v8322 = vunpack.c.h.b16 %v6288
    %v8323 = vunpack.c.l.b16 %v6289
    %v8324 = vunpack.c.h.b16 %v6289
    %v8325 = vunpack.c.l.b16 %v6290
    %v8326 = vunpack.c.h.b16 %v6290
    %v8327 = vunpack.c.l.b16 %v6291
    %v8328 = vunpack.c.h.b16 %v6291
    %v8329 = vunpack.c.l.b16 %v6292
    %v8330 = vunpack.c.h.b16 %v6292
    %v8331 = vunpack.c.l.b16 %v6293
    %v8332 = vunpack.c.h.b16 %v6293
    %v8333 = vunpack.c.l.b16 %v6294
    %v8334 = vunpack.c.h.b16 %v6294
    %v8335 = vunpack.c.l.b16 %v6295
    %v8336 = vunpack.c.h.b16 %v6295
    %v8337 = vunpack.c.l.b16 %v6296
    %v8338 = vunpack.c.h.b16 %v6296
    %v8339 = vunpack.c.l.b16 %v6297
    %v8340 = vunpack.c.h.b16 %v6297
    %v8341 = vunpack.c.l.b16 %v6298
    %v8342 = vunpack.c.h.b16 %v6298
    %v8343 = vunpack.c.l.b16 %v6299
    %v8344 = vunpack.c.h.b16 %v6299
    %v8345 = vunpack.c.l.b16 %v6300
    %v8346 = vunpack.c.h.b16 %v6300
    %v8347 = vunpack.c.l.b16 %v6301
    %v8348 = vunpack.c.h.b16 %v6301
    %v8349 = vunpack.c.l.b16 %v6302
    %v8350 = vunpack.c.h.b16 %v6302
    %v8351 = vunpack.c.l.b16 %v6303
    %v8352 = vunpack.c.h.b16 %v6303
    %v8353 = vunpack.c.l.b16 %v6304
    %v8354 = vunpack.c.h.b16 %v6304
    %v8355 = vunpack.c.l.b16 %v6305
    %v8356 = vunpack.c.h.b16 %v6305
    %v8357 = vunpack.c.l.b16 %v6306
    %v8358 = vunpack.c.h.b16 %v6306
    %v8359 = vunpack.c.l.b16 %v6307
    %v8360 = vunpack.c.h.b16 %v6307
    %v8361 = vunpack.c.l.b16 %v6308
    %v8362 = vunpack.c.h.b16 %v6308
    %v8363 = vunpack.c.l.b16 %v6309
    %v8364 = vunpack.c.h.b16 %v6309
    %v8365 = vunpack.c.l.b16 %v6310
    %v8366 = vunpack.c.h.b16 %v6310
    %v8367 = vunpack.c.l.b16 %v6311
    %v8368 = vunpack.c.h.b16 %v6311
    %v8369 = vunpack.c.l.b16 %v6312
    %v8370 = vunpack.c.h.b16 %v6312
    %v8371 = vunpack.c.l.b16 %v6313
    %v8372 = vunpack.c.h.b16 %v6313
    %v8373 = vunpack.c.l.b16 %v6314
    %v8374 = vunpack.c.h.b16 %v6314
    %v8375 = vunpack.c.l.b16 %v6315
    %v8376 = vunpack.c.h.b16 %v6315
    %v8377 = vunpack.c.l.b16 %v6316
    %v8378 = vunpack.c.h.b16 %v6316
    %v8379 = vunpack.c.l.b16 %v6317
    %v8380 = vunpack.c.h.b16 %v6317
    %v8381 = vunpack.c.l.b16 %v6318
    %v8382 = vunpack.c.h.b16 %v6318
    %v8383 = vunpack.c.l.b16 %v6319
    %v8384 = vunpack.c.h.b16 %v6319
    %v8385 = vunpack.c.l.b16 %v6320
    %v8386 = vunpack.c.h.b16 %v6320
    %v8387 = vunpack.c.l.b16 %v6321
    %v8388 = vunpack.c.h.b16 %v6321
    %v8389 = vunpack.c.l.b16 %v6322
    %v8390 = vunpack.c.h.b16 %v6322
    %v8391 = vunpack.c.l.b16 %v6323
    %v8392 = vunpack.c.h.b16 %v6323
    %v8393 = vunpack.c.l.b16 %v6324
    %v8394 = vunpack.c.h.b16 %v6324
    %v8395 = vunpack.c.l.b16 %v6325
    %v8396 = vunpack.c.h.b16 %v6325
    %v8397 = vunpack.c.l.b16 %v6326
    %v8398 = vunpack.c.h.b16 %v6326
    %v8399 = vunpack.c.l.b16 %v6327
    %v8400 = vunpack.c.h.b16 %v6327
    %v8401 = vunpack.c.l.b16 %v6328
    %v8402 = vunpack.c.h.b16 %v6328
    %v8403 = vunpack.c.l.b16 %v6329
    %v8404 = vunpack.c.h.b16 %v6329
    %v8405 = vunpack.c.l.b16 %v6330
    %v8406 = vunpack.c.h.b16 %v6330
    %v8407 = vunpack.c.l.b16 %v6331
    %v8408 = vunpack.c.h.b16 %v6331
    %v8409 = vunpack.c.l.b16 %v6332
    %v8410 = vunpack.c.h.b16 %v6332
    %v8411 = vunpack.c.l.b16 %v6333
    %v8412 = vunpack.c.h.b16 %v6333
    %v8413 = vunpack.c.l.b16 %v6334
    %v8414 = vunpack.c.h.b16 %v6334
    %v8415 = vunpack.c.l.b16 %v6335
    %v8416 = vunpack.c.h.b16 %v6335
    %v8417 = vunpack.c.l.b16 %v6336
    %v8418 = vunpack.c.h.b16 %v6336
    %v8419 = vunpack.c.l.b16 %v6337
    %v8420 = vunpack.c.h.b16 %v6337
    %v8421 = vunpack.c.l.b16 %v6338
    %v8422 = vunpack.c.h.b16 %v6338
    %v8423 = vunpack.c.l.b16 %v6339
    %v8424 = vunpack.c.h.b16 %v6339
    %v8425 = vunpack.c.l.b16 %v6340
    %v8426 = vunpack.c.h.b16 %v6340
    %v8427 = vunpack.c.l.b16 %v6341
    %v8428 = vunpack.c.h.b16 %v6341
    %v8429 = vunpack.c.l.b16 %v6342
    %v8430 = vunpack.c.h.b16 %v6342
    %v8431 = vunpack.c.l.b16 %v6343
    %v8432 = vunpack.c.h.b16 %v6343
    %v8433 = vunpack.c.l.b16 %v6344
    %v8434 = vunpack.c.h.b16 %v6344
    %v8435 = vunpack.c.l.b16 %v6345
    %v8436 = vunpack.c.h.b16 %v6345
    %v8437 = vunpack.c.l.b16 %v6346
    %v8438 = vunpack.c.h.b16 %v6346
    %v8439 = vunpack.c.l.b16 %v6347
    %v8440 = vunpack.c.h.b16 %v6347
    %v8441 = vunpack.c.l.b16 %v6348
    %v8442 = vunpack.c.h.b16 %v6348
    %v8443 = vunpack.c.l.b16 %v6349
    %v8444 = vunpack.c.h.b16 %v6349
    %v8445 = vunpack.c.l.b16 %v6350
    %v8446 = vunpack.c.h.b16 %v6350
    %v8447 = vunpack.c.l.b16 %v6351
    %v8448 = vunpack.c.h.b16 %v6351
    %v8449 = vunpack.c.l.b16 %v6352
    %v8450 = vunpack.c.h.b16 %v6352
    %v8451 = vunpack.c.l.b16 %v6353
    %v8452 = vunpack.c.h.b16 %v6353
    %v8453 = vunpack.c.l.b16 %v6354
    %v8454 = vunpack.c.h.b16 %v6354
    %v8455 = vunpack.c.l.b16 %v6355
    %v8456 = vunpack.c.h.b16 %v6355
    %v8457 = vunpack.c.l.b16 %v6356
    %v8458 = vunpack.c.h.b16 %v6356
    %v8459 = vunpack.c.l.b16 %v6357
    %v8460 = vunpack.c.h.b16 %v6357
    %v8461 = vunpack.c.l.b16 %v6358
    %v8462 = vunpack.c.h.b16 %v6358
    %v8463 = vunpack.c.l.b16 %v6359
    %v8464 = vunpack.c.h.b16 %v6359
    %v8465 = vunpack.c.l.b16 %v6360
    %v8466 = vunpack.c.h.b16 %v6360
    %v8467 = vunpack.c.l.b16 %v6361
    %v8468 = vunpack.c.h.b16 %v6361
    %v8469 = vunpack.c.l.b16 %v6362
    %v8470 = vunpack.c.h.b16 %v6362
    %v8471 = vunpack.c.l.b16 %v6363
    %v8472 = vunpack.c.h.b16 %v6363
    %v8473 = vunpack.c.l.b16 %v6364
    %v8474 = vunpack.c.h.b16 %v6364
    %v8475 = vunpack.c.l.b16 %v6365
    %v8476 = vunpack.c.h.b16 %v6365
    %v8477 = vunpack.c.l.b16 %v6366
    %v8478 = vunpack.c.h.b16 %v6366
    %v8479 = vunpack.c.l.b16 %v6367
    %v8480 = vunpack.c.h.b16 %v6367
    %v8481 = vunpack.c.l.b16 %v6368
    %v8482 = vunpack.c.h.b16 %v6368
    %v8483 = vunpack.c.l.b16 %v6369
    %v8484 = vunpack.c.h.b16 %v6369
    %v8485 = vunpack.c.l.b16 %v6370
    %v8486 = vunpack.c.h.b16 %v6370
    %v8487 = vunpack.c.l.b16 %v6371
    %v8488 = vunpack.c.h.b16 %v6371
    %v8489 = vunpack.c.l.b16 %v6372
    %v8490 = vunpack.c.h.b16 %v6372
    %v8491 = vunpack.c.l.b16 %v6373
    %v8492 = vunpack.c.h.b16 %v6373
    %v8493 = vunpack.c.l.b16 %v6374
    %v8494 = vunpack.c.h.b16 %v6374
    %v8495 = vunpack.c.l.b16 %v6375
    %v8496 = vunpack.c.h.b16 %v6375
    %v8497 = vunpack.c.l.b16 %v6376
    %v8498 = vunpack.c.h.b16 %v6376
    %v8499 = vunpack.c.l.b16 %v6377
    %v8500 = vunpack.c.h.b16 %v6377
    %v8501 = vunpack.c.l.b16 %v6378
    %v8502 = vunpack.c.h.b16 %v6378
    %v8503 = vunpack.c.l.b16 %v6379
    %v8504 = vunpack.c.h.b16 %v6379
    %v8505 = vunpack.c.l.b16 %v6380
    %v8506 = vunpack.c.h.b16 %v6380
    %v8507 = vunpack.c.l.b16 %v6381
    %v8508 = vunpack.c.h.b16 %v6381
    %v8509 = vunpack.c.l.b16 %v6382
    %v8510 = vunpack.c.h.b16 %v6382
    %v8511 = vunpack.c.l.b16 %v6383
    %v8512 = vunpack.c.h.b16 %v6383
    %v8513 = vunpack.c.l.b16 %v6384
    %v8514 = vunpack.c.h.b16 %v6384
    %v8515 = vunpack.c.l.b16 %v6385
    %v8516 = vunpack.c.h.b16 %v6385
    %v8517 = vunpack.c.l.b16 %v6386
    %v8518 = vunpack.c.h.b16 %v6386
    %v8519 = vunpack.c.l.b16 %v6387
    %v8520 = vunpack.c.h.b16 %v6387
    %v8521 = vunpack.c.l.b16 %v6388
    %v8522 = vunpack.c.h.b16 %v6388
    %v8523 = vunpack.c.l.b16 %v6389
    %v8524 = vunpack.c.h.b16 %v6389
    %v8525 = vunpack.c.l.b16 %v6390
    %v8526 = vunpack.c.h.b16 %v6390
    %v8527 = vunpack.c.l.b16 %v6391
    %v8528 = vunpack.c.h.b16 %v6391
    %v8529 = vunpack.c.l.b16 %v6392
    %v8530 = vunpack.c.h.b16 %v6392
    %v8531 = vunpack.c.l.b16 %v6393
    %v8532 = vunpack.c.h.b16 %v6393
    %v8533 = vunpack.c.l.b16 %v6394
    %v8534 = vunpack.c.h.b16 %v6394
    %v8535 = vunpack.c.l.b16 %v6395
    %v8536 = vunpack.c.h.b16 %v6395
    %v8537 = vunpack.c.l.b16 %v6396
    %v8538 = vunpack.c.h.b16 %v6396
    %v8539 = vunpack.c.l.b16 %v6397
    %v8540 = vunpack.c.h.b16 %v6397
    %v8541 = vunpack.c.l.b16 %v6398
    %v8542 = vunpack.c.h.b16 %v6398
    %v8543 = vunpack.c.l.b16 %v6399
    %v8544 = vunpack.c.h.b16 %v6399
    %v8545 = vunpack.c.l.b16 %v6400
    %v8546 = vunpack.c.h.b16 %v6400
    %v8547 = vunpack.c.l.b16 %v6401
    %v8548 = vunpack.c.h.b16 %v6401
    %v8549 = vunpack.c.l.b16 %v6402
    %v8550 = vunpack.c.h.b16 %v6402
    %v8551 = vunpack.c.l.b16 %v6403
    %v8552 = vunpack.c.h.b16 %v6403
    %v8553 = vunpack.c.l.b16 %v6404
    %v8554 = vunpack.c.h.b16 %v6404
    %v8555 = vunpack.c.l.b16 %v6405
    %v8556 = vunpack.c.h.b16 %v6405
    %v8557 = vunpack.c.l.b16 %v6406
    %v8558 = vunpack.c.h.b16 %v6406
    %v8559 = vunpack.c.l.b16 %v6407
    %v8560 = vunpack.c.h.b16 %v6407
    %v8561 = vunpack.c.l.b16 %v6408
    %v8562 = vunpack.c.h.b16 %v6408
    %v8563 = vunpack.c.l.b16 %v6409
    %v8564 = vunpack.c.h.b16 %v6409
    %v8565 = vunpack.c.l.b16 %v6410
    %v8566 = vunpack.c.h.b16 %v6410
    %v8567 = vunpack.c.l.b16 %v6411
    %v8568 = vunpack.c.h.b16 %v6411
    %v8569 = vunpack.c.l.b16 %v6412
    %v8570 = vunpack.c.h.b16 %v6412
    %v8571 = vunpack.c.l.b16 %v6413
    %v8572 = vunpack.c.h.b16 %v6413
    %v8573 = vunpack.c.l.b16 %v6414
    %v8574 = vunpack.c.h.b16 %v6414
    %v8575 = vunpack.c.l.b16 %v6415
    %v8576 = vunpack.c.h.b16 %v6415
    %v8577 = vunpack.c.l.b16 %v6416
    %v8578 = vunpack.c.h.b16 %v6416
    %v8579 = vunpack.c.l.b16 %v6417
    %v8580 = vunpack.c.h.b16 %v6417
    %v8581 = vunpack.c.l.b16 %v6418
    %v8582 = vunpack.c.h.b16 %v6418
    %v8583 = vunpack.c.l.b16 %v6419
    %v8584 = vunpack.c.h.b16 %v6419
    %v8585 = vunpack.c.l.b16 %v6420
    %v8586 = vunpack.c.h.b16 %v6420
    %v8587 = vunpack.c.l.b16 %v6421
    %v8588 = vunpack.c.h.b16 %v6421
    %v8589 = vunpack.c.l.b16 %v6422
    %v8590 = vunpack.c.h.b16 %v6422
    %v8591 = vunpack.c.l.b16 %v6423
    %v8592 = vunpack.c.h.b16 %v6423
    %v8593 = vunpack.c.l.b16 %v6424
    %v8594 = vunpack.c.h.b16 %v6424
    %v8595 = vunpack.c.l.b16 %v6425
    %v8596 = vunpack.c.h.b16 %v6425
    %v8597 = vunpack.c.l.b16 %v6426
    %v8598 = vunpack.c.h.b16 %v6426
    %v8599 = vunpack.c.l.b16 %v6427
    %v8600 = vunpack.c.h.b16 %v6427
    %v8601 = vunpack.c.l.b16 %v6428
    %v8602 = vunpack.c.h.b16 %v6428
    %v8603 = vunpack.c.l.b16 %v6429
    %v8604 = vunpack.c.h.b16 %v6429
    %v8605 = vunpack.c.l.b16 %v6430
    %v8606 = vunpack.c.h.b16 %v6430
    %v8607 = vunpack.c.l.b16 %v6431
    %v8608 = vunpack.c.h.b16 %v6431
    %v8609 = vunpack.c.l.b16 %v6432
    %v8610 = vunpack.c.h.b16 %v6432
    %v8611 = vunpack.c.l.b16 %v6433
    %v8612 = vunpack.c.h.b16 %v6433
    %v8613 = vunpack.c.l.b16 %v6434
    %v8614 = vunpack.c.h.b16 %v6434
    %v8615 = vunpack.c.l.b16 %v6435
    %v8616 = vunpack.c.h.b16 %v6435
    %v8617 = vunpack.c.l.b16 %v6436
    %v8618 = vunpack.c.h.b16 %v6436
    %v8619 = vunpack.c.l.b16 %v6437
    %v8620 = vunpack.c.h.b16 %v6437
    %v8621 = vunpack.c.l.b16 %v6438
    %v8622 = vunpack.c.h.b16 %v6438
    %v8623 = vunpack.c.l.b16 %v6439
    %v8624 = vunpack.c.h.b16 %v6439
    %v8625 = vunpack.c.l.b16 %v6440
    %v8626 = vunpack.c.h.b16 %v6440
    %v8627 = vunpack.c.l.b16 %v6441
    %v8628 = vunpack.c.h.b16 %v6441
    %v8629 = vunpack.c.l.b16 %v6442
    %v8630 = vunpack.c.h.b16 %v6442
    %v8631 = vunpack.c.l.b16 %v6443
    %v8632 = vunpack.c.h.b16 %v6443
    %v8633 = vunpack.c.l.b16 %v6444
    %v8634 = vunpack.c.h.b16 %v6444
    %v8635 = vunpack.c.l.b16 %v6445
    %v8636 = vunpack.c.h.b16 %v6445
    %v8637 = vunpack.c.l.b16 %v6446
    %v8638 = vunpack.c.h.b16 %v6446
    %v8639 = vunpack.c.l.b16 %v6447
    %v8640 = vunpack.c.h.b16 %v6447
    %v8641 = vunpack.c.l.b16 %v6448
    %v8642 = vunpack.c.h.b16 %v6448
    %v8643 = vunpack.c.l.b16 %v6449
    %v8644 = vunpack.c.h.b16 %v6449
    %v8645 = vunpack.c.l.b16 %v6450
    %v8646 = vunpack.c.h.b16 %v6450
    %v8647 = vunpack.c.l.b16 %v6451
    %v8648 = vunpack.c.h.b16 %v6451
    %v8649 = vunpack.c.l.b16 %v6452
    %v8650 = vunpack.c.h.b16 %v6452
    %v8651 = vunpack.c.l.b16 %v6453
    %v8652 = vunpack.c.h.b16 %v6453
    %v8653 = vunpack.c.l.b16 %v6454
    %v8654 = vunpack.c.h.b16 %v6454
    %v8655 = vunpack.c.l.b16 %v6455
    %v8656 = vunpack.c.h.b16 %v6455
    %v8657 = vunpack.c.l.b16 %v6456
    %v8658 = vunpack.c.h.b16 %v6456
    %v8659 = vunpack.c.l.b16 %v6457
    %v8660 = vunpack.c.h.b16 %v6457
    %v8661 = vunpack.c.l.b16 %v6458
    %v8662 = vunpack.c.h.b16 %v6458
    %v8663 = vunpack.c.l.b16 %v6459
    %v8664 = vunpack.c.h.b16 %v6459
    %v8665 = vunpack.c.l.b16 %v6460
    %v8666 = vunpack.c.h.b16 %v6460
    %v8667 = vunpack.c.l.b16 %v6461
    %v8668 = vunpack.c.h.b16 %v6461
    %v8669 = vunpack.c.l.b16 %v6462
    %v8670 = vunpack.c.h.b16 %v6462
    %v8671 = vunpack.c.l.b16 %v6463
    %v8672 = vunpack.c.h.b16 %v6463
    %v8673 = vunpack.c.l.b16 %v6464
    %v8674 = vunpack.c.h.b16 %v6464
    %v8675 = vunpack.c.l.b16 %v6465
    %v8676 = vunpack.c.h.b16 %v6465
    %v8677 = vunpack.c.l.b16 %v6466
    %v8678 = vunpack.c.h.b16 %v6466
    %v8679 = vunpack.c.l.b16 %v6467
    %v8680 = vunpack.c.h.b16 %v6467
    %v8681 = vunpack.c.l.b16 %v6468
    %v8682 = vunpack.c.h.b16 %v6468
    %v8683 = vunpack.c.l.b16 %v6469
    %v8684 = vunpack.c.h.b16 %v6469
    %v8685 = vunpack.c.l.b16 %v6470
    %v8686 = vunpack.c.h.b16 %v6470
    %v8687 = vunpack.c.l.b16 %v6471
    %v8688 = vunpack.c.h.b16 %v6471
    %v8689 = vunpack.c.l.b16 %v6472
    %v8690 = vunpack.c.h.b16 %v6472
    %v8691 = vunpack.c.l.b16 %v6473
    %v8692 = vunpack.c.h.b16 %v6473
    %v8693 = vunpack.c.l.b16 %v6474
    %v8694 = vunpack.c.h.b16 %v6474
    %v8695 = vunpack.c.l.b16 %v6475
    %v8696 = vunpack.c.h.b16 %v6475
    %v8697 = vunpack.c.l.b16 %v6476
    %v8698 = vunpack.c.h.b16 %v6476
    %v8699 = vunpack.c.l.b16 %v6477
    %v8700 = vunpack.c.h.b16 %v6477
    %v8701 = vunpack.c.l.b16 %v6478
    %v8702 = vunpack.c.h.b16 %v6478
    %v8703 = vunpack.c.l.b16 %v6479
    %v8704 = vunpack.c.h.b16 %v6479
    %v8705 = vunpack.c.l.b16 %v6480
    %v8706 = vunpack.c.h.b16 %v6480
    %v8707 = vunpack.c.l.b16 %v6481
    %v8708 = vunpack.c.h.b16 %v6481
    %v8709 = vunpack.c.l.b16 %v6482
    %v8710 = vunpack.c.h.b16 %v6482
    %v8711 = vunpack.c.l.b16 %v6483
    %v8712 = vunpack.c.h.b16 %v6483
    %v8713 = vunpack.c.l.b16 %v6484
    %v8714 = vunpack.c.h.b16 %v6484
    %v8715 = vunpack.c.l.b16 %v6485
    %v8716 = vunpack.c.h.b16 %v6485
    %v8717 = vunpack.c.l.b16 %v6486
    %v8718 = vunpack.c.h.b16 %v6486
    %v8719 = vunpack.c.l.b16 %v6487
    %v8720 = vunpack.c.h.b16 %v6487
    %v8721 = vunpack.c.l.b16 %v6488
    %v8722 = vunpack.c.h.b16 %v6488
    %v8723 = vunpack.c.l.b16 %v6489
    %v8724 = vunpack.c.h.b16 %v6489
    %v8725 = vunpack.c.l.b16 %v6490
    %v8726 = vunpack.c.h.b16 %v6490
    %v8727 = vunpack.c.l.b16 %v6491
    %v8728 = vunpack.c.h.b16 %v6491
    %v8729 = vunpack.c.l.b16 %v6492
    %v8730 = vunpack.c.h.b16 %v6492
    %v8731 = vunpack.c.l.b16 %v6493
    %v8732 = vunpack.c.h.b16 %v6493
    %v8733 = vunpack.c.l.b16 %v6494
    %v8734 = vunpack.c.h.b16 %v6494
    %v8735 = vunpack.c.l.b16 %v6495
    %v8736 = vunpack.c.h.b16 %v6495
    %v8737 = vunpack.c.l.b16 %v6496
    %v8738 = vunpack.c.h.b16 %v6496
    %v8739 = vunpack.c.l.b16 %v6497
    %v8740 = vunpack.c.h.b16 %v6497
    %v8741 = vunpack.c.l.b16 %v6498
    %v8742 = vunpack.c.h.b16 %v6498
    %v8743 = vunpack.c.l.b16 %v6499
    %v8744 = vunpack.c.h.b16 %v6499
    %v8745 = vunpack.c.l.b16 %v6500
    %v8746 = vunpack.c.h.b16 %v6500
    %v8747 = vunpack.c.l.b16 %v6501
    %v8748 = vunpack.c.h.b16 %v6501
    %v8749 = vunpack.c.l.b16 %v6502
    %v8750 = vunpack.c.h.b16 %v6502
    %v8751 = vunpack.c.l.b16 %v6503
    %v8752 = vunpack.c.h.b16 %v6503
    %v8753 = vunpack.c.l.b16 %v6504
    %v8754 = vunpack.c.h.b16 %v6504
    %v8755 = vunpack.c.l.b16 %v6505
    %v8756 = vunpack.c.h.b16 %v6505
    %v8757 = vunpack.c.l.b16 %v6506
    %v8758 = vunpack.c.h.b16 %v6506
    %v8759 = vunpack.c.l.b16 %v6507
    %v8760 = vunpack.c.h.b16 %v6507
    %v8761 = vunpack.c.l.b16 %v6508
    %v8762 = vunpack.c.h.b16 %v6508
    %v8763 = vunpack.c.l.b16 %v6509
    %v8764 = vunpack.c.h.b16 %v6509
    %v8765 = vunpack.c.l.b16 %v6510
    %v8766 = vunpack.c.h.b16 %v6510
    %v8767 = vunpack.c.l.b16 %v6511
    %v8768 = vunpack.c.h.b16 %v6511
    %v8769 = vunpack.c.l.b16 %v6512
    %v8770 = vunpack.c.h.b16 %v6512
    %v8771 = vunpack.c.l.b16 %v6513
    %v8772 = vunpack.c.h.b16 %v6513
    %v8773 = vunpack.c.l.b16 %v6514
    %v8774 = vunpack.c.h.b16 %v6514
    %v8775 = vunpack.c.l.b16 %v6515
    %v8776 = vunpack.c.h.b16 %v6515
    %v8777 = vunpack.c.l.b16 %v6516
    %v8778 = vunpack.c.h.b16 %v6516
    %v8779 = vunpack.c.l.b16 %v6517
    %v8780 = vunpack.c.h.b16 %v6517
    %v8781 = vunpack.c.l.b16 %v6518
    %v8782 = vunpack.c.h.b16 %v6518
    %v8783 = vunpack.c.l.b16 %v6519
    %v8784 = vunpack.c.h.b16 %v6519
    %v8785 = vunpack.c.l.b16 %v6520
    %v8786 = vunpack.c.h.b16 %v6520
    %v8787 = vunpack.c.l.b16 %v6521
    %v8788 = vunpack.c.h.b16 %v6521
    %v8789 = vunpack.c.l.b16 %v6522
    %v8790 = vunpack.c.h.b16 %v6522
    %v8791 = vunpack.c.l.b16 %v6523
    %v8792 = vunpack.c.h.b16 %v6523
    %v8793 = vunpack.c.l.b16 %v6524
    %v8794 = vunpack.c.h.b16 %v6524
    %v8795 = vunpack.c.l.b16 %v6525
    %v8796 = vunpack.c.h.b16 %v6525
    %v8797 = vunpack.c.l.b16 %v6526
    %v8798 = vunpack.c.h.b16 %v6526
    %v8799 = vunpack.c.l.b16 %v6527
    %v8800 = vunpack.c.h.b16 %v6527
    %v8801 = vunpack.c.l.b16 %v6528
    %v8802 = vunpack.c.h.b16 %v6528
    %v8803 = vunpack.c.l.b16 %v6529
    %v8804 = vunpack.c.h.b16 %v6529
    %v8805 = vunpack.c.l.b16 %v6530
    %v8806 = vunpack.c.h.b16 %v6530
    %v8807 = vunpack.c.l.b16 %v6531
    %v8808 = vunpack.c.h.b16 %v6531
    %v8809 = vunpack.c.l.b16 %v6532
    %v8810 = vunpack.c.h.b16 %v6532
    %v8811 = vunpack.c.l.b16 %v6533
    %v8812 = vunpack.c.h.b16 %v6533
    %v8813 = vunpack.c.l.b16 %v6534
    %v8814 = vunpack.c.h.b16 %v6534
    %v8815 = vunpack.c.l.b16 %v6535
    %v8816 = vunpack.c.h.b16 %v6535
    %v8817 = vunpack.c.l.b16 %v6536
    %v8818 = vunpack.c.h.b16 %v6536
    %v8819 = vunpack.c.l.b16 %v6537
    %v8820 = vunpack.c.h.b16 %v6537
    %v8821 = vunpack.c.l.b16 %v6538
    %v8822 = vunpack.c.h.b16 %v6538
    %v8823 = vunpack.c.l.b16 %v6539
    %v8824 = vunpack.c.h.b16 %v6539
    %v8825 = vunpack.c.l.b16 %v6540
    %v8826 = vunpack.c.h.b16 %v6540
    %v8827 = vunpack.c.l.b16 %v6541
    %v8828 = vunpack.c.h.b16 %v6541
    %v8829 = vunpack.c.l.b16 %v6542
    %v8830 = vunpack.c.h.b16 %v6542
    %v8831 = vunpack.c.l.b16 %v6543
    %v8832 = vunpack.c.h.b16 %v6543
    %v8833 = vunpack.c.l.b16 %v6544
    %v8834 = vunpack.c.h.b16 %v6544
    %v8835 = vunpack.c.l.b16 %v6545
    %v8836 = vunpack.c.h.b16 %v6545
    %v8837 = vunpack.c.l.b16 %v6546
    %v8838 = vunpack.c.h.b16 %v6546
    %v8839 = vunpack.c.l.b16 %v6547
    %v8840 = vunpack.c.h.b16 %v6547
    %v8841 = vunpack.c.l.b16 %v6548
    %v8842 = vunpack.c.h.b16 %v6548
    %v8843 = vunpack.c.l.b16 %v6549
    %v8844 = vunpack.c.h.b16 %v6549
    %v8845 = vunpack.c.l.b16 %v6550
    %v8846 = vunpack.c.h.b16 %v6550
    %v8847 = vunpack.c.l.b16 %v6551
    %v8848 = vunpack.c.h.b16 %v6551
    %v8849 = vunpack.c.l.b16 %v6552
    %v8850 = vunpack.c.h.b16 %v6552
    %v8851 = vunpack.c.l.b16 %v6553
    %v8852 = vunpack.c.h.b16 %v6553
    %v8853 = vunpack.c.l.b16 %v6554
    %v8854 = vunpack.c.h.b16 %v6554
    %v8855 = vunpack.c.l.b16 %v6555
    %v8856 = vunpack.c.h.b16 %v6555
    %v8857 = vunpack.c.l.b16 %v6556
    %v8858 = vunpack.c.h.b16 %v6556
    %v8859 = vunpack.c.l.b16 %v6557
    %v8860 = vunpack.c.h.b16 %v6557
    %v8861 = vunpack.c.l.b16 %v6558
    %v8862 = vunpack.c.h.b16 %v6558
    %v8863 = vpack.c.b16 %v7333, %v7327
    %v8864 = vpack.c.b16 %v7334, %v7328
    %v8865 = vpack.c.b16 %v7335, %v7329
    %v8866 = vpack.c.b16 %v7336, %v7330
    %v8867 = vpack.c.b16 %v7337, %v7331
    %v8868 = vpack.c.b16 %v7338, %v7332
    %v8869 = vpack.c.b16 %v7345, %v7339
    %v8870 = vpack.c.b16 %v7346, %v7340
    %v8871 = vpack.c.b16 %v7347, %v7341
    %v8872 = vpack.c.b16 %v7348, %v7342
    %v8873 = vpack.c.b16 %v7349, %v7343
    %v8874 = vpack.c.b16 %v7350, %v7344
    %v8875 = vpack.c.b16 %v7357, %v7351
    %v8876 = vpack.c.b16 %v7358, %v7352
    %v8877 = vpack.c.b16 %v7359, %v7353
    %v8878 = vpack.c.b16 %v7360, %v7354
    %v8879 = vpack.c.b16 %v7361, %v7355
    %v8880 = vpack.c.b16 %v7362, %v7356
    %v8881 = vpack.c.b16 %v7369, %v7363
    %v8882 = vpack.c.b16 %v7370, %v7364
    %v8883 = vpack.c.b16 %v7371, %v7365
    %v8884 = vpack.c.b16 %v7372, %v7366
    %v8885 = vpack.c.b16 %v7373, %v7367
    %v8886 = vpack.c.b16 %v7374, %v7368
    %v8887 = vpack.c.b16 %v7381, %v7375
    %v8888 = vpack.c.b16 %v7382, %v7376
    %v8889 = vpack.c.b16 %v7383, %v7377
    %v8890 = vpack.c.b16 %v7384, %v7378
    %v8891 = vpack.c.b16 %v7385, %v7379
    %v8892 = vpack.c.b16 %v7386, %v7380
    %v8893 = vpack.c.b16 %v7393, %v7387
    %v8894 = vpack.c.b16 %v7394, %v7388
    %v8895 = vpack.c.b16 %v7395, %v7389
    %v8896 = vpack.c.b16 %v7396, %v7390
    %v8897 = vpack.c.b16 %v7397, %v7391
    %v8898 = vpack.c.b16 %v7398, %v7392
    %v8899 = vpack.c.b16 %v7405, %v7399
    %v8900 = vpack.c.b16 %v7406, %v7400
    %v8901 = vpack.c.b16 %v7407, %v7401
    %v8902 = vpack.c.b16 %v7408, %v7402
    %v8903 = vpack.c.b16 %v7409, %v7403
    %v8904 = vpack.c.b16 %v7410, %v7404
    %v8905 = vpack.c.b16 %v7417, %v7411
    %v8906 = vpack.c.b16 %v7418, %v7412
    %v8907 = vpack.c.b16 %v7419, %v7413
    %v8908 = vpack.c.b16 %v7420, %v7414
    %v8909 = vpack.c.b16 %v7421, %v7415
    %v8910 = vpack.c.b16 %v7422, %v7416
    %v8911 = vpack.c.b16 %v7429, %v7423
    %v8912 = vpack.c.b16 %v7430, %v7424
    %v8913 = vpack.c.b16 %v7431, %v7425
    %v8914 = vpack.c.b16 %v7432, %v7426
    %v8915 = vpack.c.b16 %v7433, %v7427
    %v8916 = vpack.c.b16 %v7434, %v7428
    %v8917 = vpack.c.b16 %v7441, %v7435
    %v8918 = vpack.c.b16 %v7442, %v7436
    %v8919 = vpack.c.b16 %v7443, %v7437
    %v8920 = vpack.c.b16 %v7444, %v7438
    %v8921 = vpack.c.b16 %v7445, %v7439
    %v8922 = vpack.c.b16 %v7446, %v7440
    %v8923 = vpack.c.b16 %v7453, %v7447
    %v8924 = vpack.c.b16 %v7454, %v7448
    %v8925 = vpack.c.b16 %v7455, %v7449
    %v8926 = vpack.c.b16 %v7456, %v7450
    %v8927 = vpack.c.b16 %v7457, %v7451
    %v8928 = vpack.c.b16 %v7458, %v7452
    %v8929 = vpack.c.b16 %v7465, %v7459
    %v8930 = vpack.c.b16 %v7466, %v7460
    %v8931 = vpack.c.b16 %v7467, %v7461
    %v8932 = vpack.c.b16 %v7468, %v7462
    %v8933 = vpack.c.b16 %v7469, %v7463
    %v8934 = vpack.c.b16 %v7470, %v7464
    %v8935 = vpack.c.b16 %v7477, %v7471
    %v8936 = vpack.c.b16 %v7478, %v7472
    %v8937 = vpack.c.b16 %v7479, %v7473
    %v8938 = vpack.c.b16 %v7480, %v7474
    %v8939 = vpack.c.b16 %v7481, %v7475
    %v8940 = vpack.c.b16 %v7482, %v7476
    %v8941 = vpack.c.b16 %v7489, %v7483
    %v8942 = vpack.c.b16 %v7490, %v7484
    %v8943 = vpack.c.b16 %v7491, %v7485
    %v8944 = vpack.c.b16 %v7492, %v7486
    %v8945 = vpack.c.b16 %v7493, %v7487
    %v8946 = vpack.c.b16 %v7494, %v7488
    %v8947 = vpack.c.b16 %v7501, %v7495
    %v8948 = vpack.c.b16 %v7502, %v7496
    %v8949 = vpack.c.b16 %v7503, %v7497
    %v8950 = vpack.c.b16 %v7504, %v7498
    %v8951 = vpack.c.b16 %v7505, %v7499
    %v8952 = vpack.c.b16 %v7506, %v7500
    %v8953 = vpack.c.b16 %v7513, %v7507
    %v8954 = vpack.c.b16 %v7514, %v7508
    %v8955 = vpack.c.b16 %v7515, %v7509
    %v8956 = vpack.c.b16 %v7516, %v7510
    %v8957 = vpack.c.b16 %v7517, %v7511
    %v8958 = vpack.c.b16 %v7518, %v7512
    %v8959 = vpack.c.b16 %v7525, %v7519
    %v8960 = vpack.c.b16 %v7526, %v7520
    %v8961 = vpack.c.b16 %v7527, %v7521
    %v8962 = vpack.c.b16 %v7528, %v7522
    %v8963 = vpack.c.b16 %v7529, %v7523
    %v8964 = vpack.c.b16 %v7530, %v7524
    %v8965 = vpack.c.b16 %v7537, %v7531
    %v8966 = vpack.c.b16 %v7538, %v7532
    %v8967 = vpack.c.b16 %v7539, %v7533
    %v8968 = vpack.c.b16 %v7540, %v7534
    %v8969 = vpack.c.b16 %v7541, %v7535
    %v8970 = vpack.c.b16 %v7542, %v7536
    %v8971 = vpack.c.b16 %v7549, %v7543
    %v8972 = vpack.c.b16 %v7550, %v7544
    %v8973 = vpack.c.b16 %v7551, %v7545
    %v8974 = vpack.c.b16 %v7552, %v7546
    %v8975 = vpack.c.b16 %v7553, %v7547
    %v8976 = vpack.c.b16 %v7554, %v7548
    %v8977 = vpack.c.b16 %v7561, %v7555
    %v8978 = vpack.c.b16 %v7562, %v7556
    %v8979 = vpack.c.b16 %v7563, %v7557
    %v8980 = vpack.c.b16 %v7564, %v7558
    %v8981 = vpack.c.b16 %v7565, %v7559
    %v8982 = vpack.c.b16 %v7566, %v7560
    %v8983 = vpack.c.b16 %v7573, %v7567
    %v8984 = vpack.c.b16 %v7574, %v7568
    %v8985 = vpack.c.b16 %v7575, %v7569
    %v8986 = vpack.c.b16 %v7576, %v7570
    %v8987 = vpack.c.b16 %v7577, %v7571
    %v8988 = vpack.c.b16 %v7578, %v7572
    %v8989 = vpack.c.b16 %v7585, %v7579
    %v8990 = vpack.c.b16 %v7586, %v7580
    %v8991 = vpack.c.b16 %v7587, %v7581
    %v8992 = vpack.c.b16 %v7588, %v7582
    %v8993 = vpack.c.b16 %v7589, %v7583
    %v8994 = vpack.c.b16 %v7590, %v7584
    %v8995 = vpack.c.b16 %v7597, %v7591
    %v8996 = vpack.c.b16 %v7598, %v7592
    %v8997 = vpack.c.b16 %v7599, %v7593
    %v8998 = vpack.c.b16 %v7600, %v7594
    %v8999 = vpack.c.b16 %v7601, %v7595
    %v9000 = vpack.c.b16 %v7602, %v7596
    %v9001 = vpack.c.b16 %v7609, %v7603
    %v9002 = vpack.c.b16 %v7610, %v7604
    %v9003 = vpack.c.b16 %v7611, %v7605
    %v9004 = vpack.c.b16 %v7612, %v7606
    %v9005 = vpack.c.b16 %v7613, %v7607
    %v9006 = vpack.c.b16 %v7614, %v7608
    %v9007 = vpack.c.b16 %v7621, %v7615
    %v9008 = vpack.c.b16 %v7622, %v7616
    %v9009 = vpack.c.b16 %v7623, %v7617
    %v9010 = vpack.c.b16 %v7624, %v7618
    %v9011 = vpack.c.b16 %v7625, %v7619
    %v9012 = vpack.c.b16 %v7626, %v7620
    %v9013 = vpack.c.b16 %v7633, %v7627
    %v9014 = vpack.c.b16 %v7634, %v7628
    %v9015 = vpack.c.b16 %v7635, %v7629
    %v9016 = vpack.c.b16 %v7636, %v7630
    %v9017 = vpack.c.b16 %v7637, %v7631
    %v9018 = vpack.c.b16 %v7638, %v7632
    %v9019 = vpack.c.b16 %v7645, %v7639
    %v9020 = vpack.c.b16 %v7646, %v7640
    %v9021 = vpack.c.b16 %v7647, %v7641
    %v9022 = vpack.c.b16 %v7648, %v7642
    %v9023 = vpack.c.b16 %v7649, %v7643
    %v9024 = vpack.c.b16 %v7650, %v7644
    %v9025 = vpack.c.b16 %v7657, %v7651
    %v9026 = vpack.c.b16 %v7658, %v7652
    %v9027 = vpack.c.b16 %v7659, %v7653
    %v9028 = vpack.c.b16 %v7660, %v7654
    %v9029 = vpack.c.b16 %v7661, %v7655
    %v9030 = vpack.c.b16 %v7662, %v7656
    %v9031 = vpack.c.b16 %v7669, %v7663
    %v9032 = vpack.c.b16 %v7670, %v7664
    %v9033 = vpack.c.b16 %v7671, %v7665
    %v9034 = vpack.c.b16 %v7672, %v7666
    %v9035 = vpack.c.b16 %v7673, %v7667
    %v9036 = vpack.c.b16 %v7674, %v7668
    %v9037 = vpack.c.b16 %v7681, %v7675
    %v9038 = vpack.c.b16 %v7682, %v7676
    %v9039 = vpack.c.b16 %v7683, %v7677
    %v9040 = vpack.c.b16 %v7684, %v7678
    %v9041 = vpack.c.b16 %v7685, %v7679
    %v9042 = vpack.c.b16 %v7686, %v7680
    %v9043 = vpack.c.b16 %v7693, %v7687
    %v9044 = vpack.c.b16 %v7694, %v7688
    %v9045 = vpack.c.b16 %v7695, %v7689
    %v9046 = vpack.c.b16 %v7696, %v7690
    %v9047 = vpack.c.b16 %v7697, %v7691
    %v9048 = vpack.c.b16 %v7698, %v7692
    %v9049 = vpack.c.b16 %v7705, %v7699
    %v9050 = vpack.c.b16 %v7706, %v7700
    %v9051 = vpack.c.b16 %v7707, %v7701
    %v9052 = vpack.c.b16 %v7708, %v7702
    %v9053 = vpack.c.b16 %v7709, %v7703
    %v9054 = vpack.c.b16 %v7710, %v7704
    %v9055 = vpack.c.b16 %v7717, %v7711
    %v9056 = vpack.c.b16 %v7718, %v7712
    %v9057 = vpack.c.b16 %v7719, %v7713
    %v9058 = vpack.c.b16 %v7720, %v7714
    %v9059 = vpack.c.b16 %v7721, %v7715
    %v9060 = vpack.c.b16 %v7722, %v7716
    %v9061 = vpack.c.b16 %v7729, %v7723
    %v9062 = vpack.c.b16 %v7730, %v7724
    %v9063 = vpack.c.b16 %v7731, %v7725
    %v9064 = vpack.c.b16 %v7732, %v7726
    %v9065 = vpack.c.b16 %v7733, %v7727
    %v9066 = vpack.c.b16 %v7734, %v7728
    %v9067 = vpack.c.b16 %v7741, %v7735
    %v9068 = vpack.c.b16 %v7742, %v7736
    %v9069 = vpack.c.b16 %v7743, %v7737
    %v9070 = vpack.c.b16 %v7744, %v7738
    %v9071 = vpack.c.b16 %v7745, %v7739
    %v9072 = vpack.c.b16 %v7746, %v7740
    %v9073 = vpack.c.b16 %v7753, %v7747
    %v9074 = vpack.c.b16 %v7754, %v7748
    %v9075 = vpack.c.b16 %v7755, %v7749
    %v9076 = vpack.c.b16 %v7756, %v7750
    %v9077 = vpack.c.b16 %v7757, %v7751
    %v9078 = vpack.c.b16 %v7758, %v7752
    %v9079 = vpack.c.b16 %v7765, %v7759
    %v9080 = vpack.c.b16 %v7766, %v7760
    %v9081 = vpack.c.b16 %v7767, %v7761
    %v9082 = vpack.c.b16 %v7768, %v7762
    %v9083 = vpack.c.b16 %v7769, %v7763
    %v9084 = vpack.c.b16 %v7770, %v7764
    %v9085 = vpack.c.b16 %v7777, %v7771
    %v9086 = vpack.c.b16 %v7778, %v7772
    %v9087 = vpack.c.b16 %v7779, %v7773
    %v9088 = vpack.c.b16 %v7780, %v7774
    %v9089 = vpack.c.b16 %v7781, %v7775
    %v9090 = vpack.c.b16 %v7782, %v7776
    %v9091 = vpack.c.b16 %v7789, %v7783
    %v9092 = vpack.c.b16 %v7790, %v7784
    %v9093 = vpack.c.b16 %v7791, %v7785
    %v9094 = vpack.c.b16 %v7792, %v7786
    %v9095 = vpack.c.b16 %v7793, %v7787
    %v9096 = vpack.c.b16 %v7794, %v7788
    %v9097 = vpack.c.b16 %v7801, %v7795
    %v9098 = vpack.c.b16 %v7802, %v7796
    %v9099 = vpack.c.b16 %v7803, %v7797
    %v9100 = vpack.c.b16 %v7804, %v7798
    %v9101 = vpack.c.b16 %v7805, %v7799
    %v9102 = vpack.c.b16 %v7806, %v7800
    %v9103 = vpack.c.b16 %v7813, %v7807
    %v9104 = vpack.c.b16 %v7814, %v7808
    %v9105 = vpack.c.b16 %v7815, %v7809
    %v9106 = vpack.c.b16 %v7816, %v7810
    %v9107 = vpack.c.b16 %v7817, %v7811
    %v9108 = vpack.c.b16 %v7818, %v7812
    %v9109 = vpack.c.b16 %v7825, %v7819
    %v9110 = vpack.c.b16 %v7826, %v7820
    %v9111 = vpack.c.b16 %v7827, %v7821
    %v9112 = vpack.c.b16 %v7828, %v7822
    %v9113 = vpack.c.b16 %v7829, %v7823
    %v9114 = vpack.c.b16 %v7830, %v7824
    %v9115 = vpack.c.b16 %v7837, %v7831
    %v9116 = vpack.c.b16 %v7838, %v7832
    %v9117 = vpack.c.b16 %v7839, %v7833
    %v9118 = vpack.c.b16 %v7840, %v7834
    %v9119 = vpack.c.b16 %v7841, %v7835
    %v9120 = vpack.c.b16 %v7842, %v7836
    %v9121 = vpack.c.b16 %v7849, %v7843
    %v9122 = vpack.c.b16 %v7850, %v7844
    %v9123 = vpack.c.b16 %v7851, %v7845
    %v9124 = vpack.c.b16 %v7852, %v7846
    %v9125 = vpack.c.b16 %v7853, %v7847
    %v9126 = vpack.c.b16 %v7854, %v7848
    %v9127 = vpack.c.b16 %v7861, %v7855
    %v9128 = vpack.c.b16 %v7862, %v7856
    %v9129 = vpack.c.b16 %v7863, %v7857
    %v9130 = vpack.c.b16 %v7864, %v7858
    %v9131 = vpack.c.b16 %v7865, %v7859
    %v9132 = vpack.c.b16 %v7866, %v7860
    %v9133 = vpack.c.b16 %v7873, %v7867
    %v9134 = vpack.c.b16 %v7874, %v7868
    %v9135 = vpack.c.b16 %v7875, %v7869
    %v9136 = vpack.c.b16 %v7876, %v7870
    %v9137 = vpack.c.b16 %v7877, %v7871
    %v9138 = vpack.c.b16 %v7878, %v7872
    %v9139 = vpack.c.b16 %v7885, %v7879
    %v9140 = vpack.c.b16 %v7886, %v7880
    %v9141 = vpack.c.b16 %v7887, %v7881
    %v9142 = vpack.c.b16 %v7888, %v7882
    %v9143 = vpack.c.b16 %v7889, %v7883
    %v9144 = vpack.c.b16 %v7890, %v7884
    %v9145 = vpack.c.b16 %v7897, %v7891
    %v9146 = vpack.c.b16 %v7898, %v7892
    %v9147 = vpack.c.b16 %v7899, %v7893
    %v9148 = vpack.c.b16 %v7900, %v7894
    %v9149 = vpack.c.b16 %v7901, %v7895
    %v9150 = vpack.c.b16 %v7902, %v7896
    %v9151 = vpack.c.b16 %v7909, %v7903
    %v9152 = vpack.c.b16 %v7910, %v7904
    %v9153 = vpack.c.b16 %v7911, %v7905
    %v9154 = vpack.c.b16 %v7912, %v7906
    %v9155 = vpack.c.b16 %v7913, %v7907
    %v9156 = vpack.c.b16 %v7914, %v7908
    %v9157 = vpack.c.b16 %v7921, %v7915
    %v9158 = vpack.c.b16 %v7922, %v7916
    %v9159 = vpack.c.b16 %v7923, %v7917
    %v9160 = vpack.c.b16 %v7924, %v7918
    %v9161 = vpack.c.b16 %v7925, %v7919
    %v9162 = vpack.c.b16 %v7926, %v7920
    %v9163 = vpack.c.b16 %v7933, %v7927
    %v9164 = vpack.c.b16 %v7934, %v7928
    %v9165 = vpack.c.b16 %v7935, %v7929
    %v9166 = vpack.c.b16 %v7936, %v7930
    %v9167 = vpack.c.b16 %v7937, %v7931
    %v9168 = vpack.c.b16 %v7938, %v7932
    %v9169 = vpack.c.b16 %v7945, %v7939
    %v9170 = vpack.c.b16 %v7946, %v7940
    %v9171 = vpack.c.b16 %v7947, %v7941
    %v9172 = vpack.c.b16 %v7948, %v7942
    %v9173 = vpack.c.b16 %v7949, %v7943
    %v9174 = vpack.c.b16 %v7950, %v7944
    %v9175 = vpack.c.b16 %v7957, %v7951
    %v9176 = vpack.c.b16 %v7958, %v7952
    %v9177 = vpack.c.b16 %v7959, %v7953
    %v9178 = vpack.c.b16 %v7960, %v7954
    %v9179 = vpack.c.b16 %v7961, %v7955
    %v9180 = vpack.c.b16 %v7962, %v7956
    %v9181 = vpack.c.b16 %v7969, %v7963
    %v9182 = vpack.c.b16 %v7970, %v7964
    %v9183 = vpack.c.b16 %v7971, %v7965
    %v9184 = vpack.c.b16 %v7972, %v7966
    %v9185 = vpack.c.b16 %v7973, %v7967
    %v9186 = vpack.c.b16 %v7974, %v7968
    %v9187 = vpack.c.b16 %v7981, %v7975
    %v9188 = vpack.c.b16 %v7982, %v7976
    %v9189 = vpack.c.b16 %v7983, %v7977
    %v9190 = vpack.c.b16 %v7984, %v7978
    %v9191 = vpack.c.b16 %v7985, %v7979
    %v9192 = vpack.c.b16 %v7986, %v7980
    %v9193 = vpack.c.b16 %v7993, %v7987
    %v9194 = vpack.c.b16 %v7994, %v7988
    %v9195 = vpack.c.b16 %v7995, %v7989
    %v9196 = vpack.c.b16 %v7996, %v7990
    %v9197 = vpack.c.b16 %v7997, %v7991
    %v9198 = vpack.c.b16 %v7998, %v7992
    %v9199 = vpack.c.b16 %v8005, %v7999
    %v9200 = vpack.c.b16 %v8006, %v8000
    %v9201 = vpack.c.b16 %v8007, %v8001
    %v9202 = vpack.c.b16 %v8008, %v8002
    %v9203 = vpack.c.b16 %v8009, %v8003
    %v9204 = vpack.c.b16 %v8010, %v8004
    %v9205 = vpack.c.b16 %v8017, %v8011
    %v9206 = vpack.c.b16 %v8018, %v8012
    %v9207 = vpack.c.b16 %v8019, %v8013
    %v9208 = vpack.c.b16 %v8020, %v8014
    %v9209 = vpack.c.b16 %v8021, %v8015
    %v9210 = vpack.c.b16 %v8022, %v8016
    %v9211 = vpack.c.b16 %v8029, %v8023
    %v9212 = vpack.c.b16 %v8030, %v8024
    %v9213 = vpack.c.b16 %v8031, %v8025
    %v9214 = vpack.c.b16 %v8032, %v8026
    %v9215 = vpack.c.b16 %v8033, %v8027
    %v9216 = vpack.c.b16 %v8034, %v8028
    %v9217 = vpack.c.b16 %v8041, %v8035
    %v9218 = vpack.c.b16 %v8042, %v8036
    %v9219 = vpack.c.b16 %v8043, %v8037
    %v9220 = vpack.c.b16 %v8044, %v8038
    %v9221 = vpack.c.b16 %v8045, %v8039
    %v9222 = vpack.c.b16 %v8046, %v8040
    %v9223 = vpack.c.b16 %v8053, %v8047
    %v9224 = vpack.c.b16 %v8054, %v8048
    %v9225 = vpack.c.b16 %v8055, %v8049
    %v9226 = vpack.c.b16 %v8056, %v8050
    %v9227 = vpack.c.b16 %v8057, %v8051
    %v9228 = vpack.c.b16 %v8058, %v8052
    %v9229 = vpack.c.b16 %v8065, %v8059
    %v9230 = vpack.c.b16 %v8066, %v8060
    %v9231 = vpack.c.b16 %v8067, %v8061
    %v9232 = vpack.c.b16 %v8068, %v8062
    %v9233 = vpack.c.b16 %v8069, %v8063
    %v9234 = vpack.c.b16 %v8070, %v8064
    %v9235 = vpack.c.b16 %v8077, %v8071
    %v9236 = vpack.c.b16 %v8078, %v8072
    %v9237 = vpack.c.b16 %v8079, %v8073
    %v9238 = vpack.c.b16 %v8080, %v8074
    %v9239 = vpack.c.b16 %v8081, %v8075
    %v9240 = vpack.c.b16 %v8082, %v8076
    %v9241 = vpack.c.b16 %v8089, %v8083
    %v9242 = vpack.c.b16 %v8090, %v8084
    %v9243 = vpack.c.b16 %v8091, %v8085
    %v9244 = vpack.c.b16 %v8092, %v8086
    %v9245 = vpack.c.b16 %v8093, %v8087
    %v9246 = vpack.c.b16 %v8094, %v8088
    %v9247 = vpack.c.b16 %v8101, %v8095
    %v9248 = vpack.c.b16 %v8102, %v8096
    %v9249 = vpack.c.b16 %v8103, %v8097
    %v9250 = vpack.c.b16 %v8104, %v8098
    %v9251 = vpack.c.b16 %v8105, %v8099
    %v9252 = vpack.c.b16 %v8106, %v8100
    %v9253 = vpack.c.b16 %v8113, %v8107
    %v9254 = vpack.c.b16 %v8114, %v8108
    %v9255 = vpack.c.b16 %v8115, %v8109
    %v9256 = vpack.c.b16 %v8116, %v8110
    %v9257 = vpack.c.b16 %v8117, %v8111
    %v9258 = vpack.c.b16 %v8118, %v8112
    %v9259 = vpack.c.b16 %v8125, %v8119
    %v9260 = vpack.c.b16 %v8126, %v8120
    %v9261 = vpack.c.b16 %v8127, %v8121
    %v9262 = vpack.c.b16 %v8128, %v8122
    %v9263 = vpack.c.b16 %v8129, %v8123
    %v9264 = vpack.c.b16 %v8130, %v8124
    %v9265 = vpack.c.b16 %v8137, %v8131
    %v9266 = vpack.c.b16 %v8138, %v8132
    %v9267 = vpack.c.b16 %v8139, %v8133
    %v9268 = vpack.c.b16 %v8140, %v8134
    %v9269 = vpack.c.b16 %v8141, %v8135
    %v9270 = vpack.c.b16 %v8142, %v8136
    %v9271 = vpack.c.b16 %v8149, %v8143
    %v9272 = vpack.c.b16 %v8150, %v8144
    %v9273 = vpack.c.b16 %v8151, %v8145
    %v9274 = vpack.c.b16 %v8152, %v8146
    %v9275 = vpack.c.b16 %v8153, %v8147
    %v9276 = vpack.c.b16 %v8154, %v8148
    %v9277 = vpack.c.b16 %v8161, %v8155
    %v9278 = vpack.c.b16 %v8162, %v8156
    %v9279 = vpack.c.b16 %v8163, %v8157
    %v9280 = vpack.c.b16 %v8164, %v8158
    %v9281 = vpack.c.b16 %v8165, %v8159
    %v9282 = vpack.c.b16 %v8166, %v8160
    %v9283 = vpack.c.b16 %v8173, %v8167
    %v9284 = vpack.c.b16 %v8174, %v8168
    %v9285 = vpack.c.b16 %v8175, %v8169
    %v9286 = vpack.c.b16 %v8176, %v8170
    %v9287 = vpack.c.b16 %v8177, %v8171
    %v9288 = vpack.c.b16 %v8178, %v8172
    %v9289 = vpack.c.b16 %v8185, %v8179
    %v9290 = vpack.c.b16 %v8186, %v8180
    %v9291 = vpack.c.b16 %v8187, %v8181
    %v9292 = vpack.c.b16 %v8188, %v8182
    %v9293 = vpack.c.b16 %v8189, %v8183
    %v9294 = vpack.c.b16 %v8190, %v8184
    %v9295 = vpack.c.b16 %v8197, %v8191
    %v9296 = vpack.c.b16 %v8198, %v8192
    %v9297 = vpack.c.b16 %v8199, %v8193
    %v9298 = vpack.c.b16 %v8200, %v8194
    %v9299 = vpack.c.b16 %v8201, %v8195
    %v9300 = vpack.c.b16 %v8202, %v8196
    %v9301 = vpack.c.b16 %v8209, %v8203
    %v9302 = vpack.c.b16 %v8210, %v8204
    %v9303 = vpack.c.b16 %v8211, %v8205
    %v9304 = vpack.c.b16 %v8212, %v8206
    %v9305 = vpack.c.b16 %v8213, %v8207
    %v9306 = vpack.c.b16 %v8214, %v8208
    %v9307 = vpack.c.b16 %v8221, %v8215
    %v9308 = vpack.c.b16 %v8222, %v8216
    %v9309 = vpack.c.b16 %v8223, %v8217
    %v9310 = vpack.c.b16 %v8224, %v8218
    %v9311 = vpack.c.b16 %v8225, %v8219
    %v9312 = vpack.c.b16 %v8226, %v8220
    %v9313 = vpack.c.b16 %v8233, %v8227
    %v9314 = vpack.c.b16 %v8234, %v8228
    %v9315 = vpack.c.b16 %v8235, %v8229
    %v9316 = vpack.c.b16 %v8236, %v8230
    %v9317 = vpack.c.b16 %v8237, %v8231
    %v9318 = vpack.c.b16 %v8238, %v8232
    %v9319 = vpack.c.b16 %v8245, %v8239
    %v9320 = vpack.c.b16 %v8246, %v8240
    %v9321 = vpack.c.b16 %v8247, %v8241
    %v9322 = vpack.c.b16 %v8248, %v8242
    %v9323 = vpack.c.b16 %v8249, %v8243
    %v9324 = vpack.c.b16 %v8250, %v8244
    %v9325 = vpack.c.b16 %v8257, %v8251
    %v9326 = vpack.c.b16 %v8258, %v8252
    %v9327 = vpack.c.b16 %v8259, %v8253
    %v9328 = vpack.c.b16 %v8260, %v8254
    %v9329 = vpack.c.b16 %v8261, %v8255
    %v9330 = vpack.c.b16 %v8262, %v8256
    %v9331 = vpack.c.b16 %v8269, %v8263
    %v9332 = vpack.c.b16 %v8270, %v8264
    %v9333 = vpack.c.b16 %v8271, %v8265
    %v9334 = vpack.c.b16 %v8272, %v8266
    %v9335 = vpack.c.b16 %v8273, %v8267
    %v9336 = vpack.c.b16 %v8274, %v8268
    %v9337 = vpack.c.b16 %v8281, %v8275
    %v9338 = vpack.c.b16 %v8282, %v8276
    %v9339 = vpack.c.b16 %v8283, %v8277
    %v9340 = vpack.c.b16 %v8284, %v8278
    %v9341 = vpack.c.b16 %v8285, %v8279
    %v9342 = vpack.c.b16 %v8286, %v8280
    %v9343 = vpack.c.b16 %v8293, %v8287
    %v9344 = vpack.c.b16 %v8294, %v8288
    %v9345 = vpack.c.b16 %v8295, %v8289
    %v9346 = vpack.c.b16 %v8296, %v8290
    %v9347 = vpack.c.b16 %v8297, %v8291
    %v9348 = vpack.c.b16 %v8298, %v8292
    %v9349 = vpack.c.b16 %v8305, %v8299
    %v9350 = vpack.c.b16 %v8306, %v8300
    %v9351 = vpack.c.b16 %v8307, %v8301
    %v9352 = vpack.c.b16 %v8308, %v8302
    %v9353 = vpack.c.b16 %v8309, %v8303
    %v9354 = vpack.c.b16 %v8310, %v8304
    %v9355 = vpack.c.b16 %v8317, %v8311
    %v9356 = vpack.c.b16 %v8318, %v8312
    %v9357 = vpack.c.b16 %v8319, %v8313
    %v9358 = vpack.c.b16 %v8320, %v8314
    %v9359 = vpack.c.b16 %v8321, %v8315
    %v9360 = vpack.c.b16 %v8322, %v8316
    %v9361 = vpack.c.b16 %v8329, %v8323
    %v9362 = vpack.c.b16 %v8330, %v8324
    %v9363 = vpack.c.b16 %v8331, %v8325
    %v9364 = vpack.c.b16 %v8332, %v8326
    %v9365 = vpack.c.b16 %v8333, %v8327
    %v9366 = vpack.c.b16 %v8334, %v8328
    %v9367 = vpack.c.b16 %v8341, %v8335
    %v9368 = vpack.c.b16 %v8342, %v8336
    %v9369 = vpack.c.b16 %v8343, %v8337
    %v9370 = vpack.c.b16 %v8344, %v8338
    %v9371 = vpack.c.b16 %v8345, %v8339
    %v9372 = vpack.c.b16 %v8346, %v8340
    %v9373 = vpack.c.b16 %v8353, %v8347
    %v9374 = vpack.c.b16 %v8354, %v8348
    %v9375 = vpack.c.b16 %v8355, %v8349
    %v9376 = vpack.c.b16 %v8356, %v8350
    %v9377 = vpack.c.b16 %v8357, %v8351
    %v9378 = vpack.c.b16 %v8358, %v8352
    %v9379 = vpack.c.b16 %v8365, %v8359
    %v9380 = vpack.c.b16 %v8366, %v8360
    %v9381 = vpack.c.b16 %v8367, %v8361
    %v9382 = vpack.c.b16 %v8368, %v8362
    %v9383 = vpack.c.b16 %v8369, %v8363
    %v9384 = vpack.c.b16 %v8370, %v8364
    %v9385 = vpack.c.b16 %v8377, %v8371
    %v9386 = vpack.c.b16 %v8378, %v8372
    %v9387 = vpack.c.b16 %v8379, %v8373
    %v9388 = vpack.c.b16 %v8380, %v8374
    %v9389 = vpack.c.b16 %v8381, %v8375
    %v9390 = vpack.c.b16 %v8382, %v8376
    %v9391 = vpack.c.b16 %v8389, %v8383
    %v9392 = vpack.c.b16 %v8390, %v8384
    %v9393 = vpack.c.b16 %v8391, %v8385
    %v9394 = vpack.c.b16 %v8392, %v8386
    %v9395 = vpack.c.b16 %v8393, %v8387
    %v9396 = vpack.c.b16 %v8394, %v8388
    %v9397 = vpack.c.b16 %v8401, %v8395
    %v9398 = vpack.c.b16 %v8402, %v8396
    %v9399 = vpack.c.b16 %v8403, %v8397
    %v9400 = vpack.c.b16 %v8404, %v8398
    %v9401 = vpack.c.b16 %v8405, %v8399
    %v9402 = vpack.c.b16 %v8406, %v8400
    %v9403 = vpack.c.b16 %v8413, %v8407
    %v9404 = vpack.c.b16 %v8414, %v8408
    %v9405 = vpack.c.b16 %v8415, %v8409
    %v9406 = vpack.c.b16 %v8416, %v8410
    %v9407 = vpack.c.b16 %v8417, %v8411
    %v9408 = vpack.c.b16 %v8418, %v8412
    %v9409 = vpack.c.b16 %v8425, %v8419
    %v9410 = vpack.c.b16 %v8426, %v8420
    %v9411 = vpack.c.b16 %v8427, %v8421
    %v9412 = vpack.c.b16 %v8428, %v8422
    %v9413 = vpack.c.b16 %v8429, %v8423
    %v9414 = vpack.c.b16 %v8430, %v8424
    %v9415 = vpack.c.b16 %v8437, %v8431
    %v9416 = vpack.c.b16 %v8438, %v8432
    %v9417 = vpack.c.b16 %v8439, %v8433
    %v9418 = vpack.c.b16 %v8440, %v8434
    %v9419 = vpack.c.b16 %v8441, %v8435
    %v9420 = vpack.c.b16 %v8442, %v8436
    %v9421 = vpack.c.b16 %v8449, %v8443
    %v9422 = vpack.c.b16 %v8450, %v8444
    %v9423 = vpack.c.b16 %v8451, %v8445
    %v9424 = vpack.c.b16 %v8452, %v8446
    %v9425 = vpack.c.b16 %v8453, %v8447
    %v9426 = vpack.c.b16 %v8454, %v8448
    %v9427 = vpack.c.b16 %v8461, %v8455
    %v9428 = vpack.c.b16 %v8462, %v8456
    %v9429 = vpack.c.b16 %v8463, %v8457
    %v9430 = vpack.c.b16 %v8464, %v8458
    %v9431 = vpack.c.b16 %v8465, %v8459
    %v9432 = vpack.c.b16 %v8466, %v8460
    %v9433 = vpack.c.b16 %v8473, %v8467
    %v9434 = vpack.c.b16 %v8474, %v8468
    %v9435 = vpack.c.b16 %v8475, %v8469
    %v9436 = vpack.c.b16 %v8476, %v8470
    %v9437 = vpack.c.b16 %v8477, %v8471
    %v9438 = vpack.c.b16 %v8478, %v8472
    %v9439 = vpack.c.b16 %v8485, %v8479
    %v9440 = vpack.c.b16 %v8486, %v8480
    %v9441 = vpack.c.b16 %v8487, %v8481
    %v9442 = vpack.c.b16 %v8488, %v8482
    %v9443 = vpack.c.b16 %v8489, %v8483
    %v9444 = vpack.c.b16 %v8490, %v8484
    %v9445 = vpack.c.b16 %v8497, %v8491
    %v9446 = vpack.c.b16 %v8498, %v8492
    %v9447 = vpack.c.b16 %v8499, %v8493
    %v9448 = vpack.c.b16 %v8500, %v8494
    %v9449 = vpack.c.b16 %v8501, %v8495
    %v9450 = vpack.c.b16 %v8502, %v8496
    %v9451 = vpack.c.b16 %v8509, %v8503
    %v9452 = vpack.c.b16 %v8510, %v8504
    %v9453 = vpack.c.b16 %v8511, %v8505
    %v9454 = vpack.c.b16 %v8512, %v8506
    %v9455 = vpack.c.b16 %v8513, %v8507
    %v9456 = vpack.c.b16 %v8514, %v8508
    %v9457 = vpack.c.b16 %v8521, %v8515
    %v9458 = vpack.c.b16 %v8522, %v8516
    %v9459 = vpack.c.b16 %v8523, %v8517
    %v9460 = vpack.c.b16 %v8524, %v8518
    %v9461 = vpack.c.b16 %v8525, %v8519
    %v9462 = vpack.c.b16 %v8526, %v8520
    %v9463 = vpack.c.b16 %v8533, %v8527
    %v9464 = vpack.c.b16 %v8534, %v8528
    %v9465 = vpack.c.b16 %v8535, %v8529
    %v9466 = vpack.c.b16 %v8536, %v8530
    %v9467 = vpack.c.b16 %v8537, %v8531
    %v9468 = vpack.c.b16 %v8538, %v8532
    %v9469 = vpack.c.b16 %v8545, %v8539
    %v9470 = vpack.c.b16 %v8546, %v8540
    %v9471 = vpack.c.b16 %v8547, %v8541
    %v9472 = vpack.c.b16 %v8548, %v8542
    %v9473 = vpack.c.b16 %v8549, %v8543
    %v9474 = vpack.c.b16 %v8550, %v8544
    %v9475 = vpack.c.b16 %v8557, %v8551
    %v9476 = vpack.c.b16 %v8558, %v8552
    %v9477 = vpack.c.b16 %v8559, %v8553
    %v9478 = vpack.c.b16 %v8560, %v8554
    %v9479 = vpack.c.b16 %v8561, %v8555
    %v9480 = vpack.c.b16 %v8562, %v8556
    %v9481 = vpack.c.b16 %v8569, %v8563
    %v9482 = vpack.c.b16 %v8570, %v8564
    %v9483 = vpack.c.b16 %v8571, %v8565
    %v9484 = vpack.c.b16 %v8572, %v8566
    %v9485 = vpack.c.b16 %v8573, %v8567
    %v9486 = vpack.c.b16 %v8574, %v8568
    %v9487 = vpack.c.b16 %v8581, %v8575
    %v9488 = vpack.c.b16 %v8582, %v8576
    %v9489 = vpack.c.b16 %v8583, %v8577
    %v9490 = vpack.c.b16 %v8584, %v8578
    %v9491 = vpack.c.b16 %v8585, %v8579
    %v9492 = vpack.c.b16 %v8586, %v8580
    %v9493 = vpack.c.b16 %v8593, %v8587
    %v9494 = vpack.c.b16 %v8594, %v8588
    %v9495 = vpack.c.b16 %v8595, %v8589
    %v9496 = vpack.c.b16 %v8596, %v8590
    %v9497 = vpack.c.b16 %v8597, %v8591
    %v9498 = vpack.c.b16 %v8598, %v8592
    %v9499 = vpack.c.b16 %v8605, %v8599
    %v9500 = vpack.c.b16 %v8606, %v8600
    %v9501 = vpack.c.b16 %v8607, %v8601
    %v9502 = vpack.c.b16 %v8608, %v8602
    %v9503 = vpack.c.b16 %v8609, %v8603
    %v9504 = vpack.c.b16 %v8610, %v8604
    %v9505 = vpack.c.b16 %v8617, %v8611
    %v9506 = vpack.c.b16 %v8618, %v8612
    %v9507 = vpack.c.b16 %v8619, %v8613
    %v9508 = vpack.c.b16 %v8620, %v8614
    %v9509 = vpack.c.b16 %v8621, %v8615
    %v9510 = vpack.c.b16 %v8622, %v8616
    %v9511 = vpack.c.b16 %v8629, %v8623
    %v9512 = vpack.c.b16 %v8630, %v8624
    %v9513 = vpack.c.b16 %v8631, %v8625
    %v9514 = vpack.c.b16 %v8632, %v8626
    %v9515 = vpack.c.b16 %v8633, %v8627
    %v9516 = vpack.c.b16 %v8634, %v8628
    %v9517 = vpack.c.b16 %v8641, %v8635
    %v9518 = vpack.c.b16 %v8642, %v8636
    %v9519 = vpack.c.b16 %v8643, %v8637
    %v9520 = vpack.c.b16 %v8644, %v8638
    %v9521 = vpack.c.b16 %v8645, %v8639
    %v9522 = vpack.c.b16 %v8646, %v8640
    %v9523 = vpack.c.b16 %v8653, %v8647
    %v9524 = vpack.c.b16 %v8654, %v8648
    %v9525 = vpack.c.b16 %v8655, %v8649
    %v9526 = vpack.c.b16 %v8656, %v8650
    %v9527 = vpack.c.b16 %v8657, %v8651
    %v9528 = vpack.c.b16 %v8658, %v8652
    %v9529 = vpack.c.b16 %v8665, %v8659
    %v9530 = vpack.c.b16 %v8666, %v8660
    %v9531 = vpack.c.b16 %v8667, %v8661
    %v9532 = vpack.c.b16 %v8668, %v8662
    %v9533 = vpack.c.b16 %v8669, %v8663
    %v9534 = vpack.c.b16 %v8670, %v8664
    %v9535 = vpack.c.b16 %v8677, %v8671
    %v9536 = vpack.c.b16 %v8678, %v8672
    %v9537 = vpack.c.b16 %v8679, %v8673
    %v9538 = vpack.c.b16 %v8680, %v8674
    %v9539 = vpack.c.b16 %v8681, %v8675
    %v9540 = vpack.c.b16 %v8682, %v8676
    %v9541 = vpack.c.b16 %v8689, %v8683
    %v9542 = vpack.c.b16 %v8690, %v8684
    %v9543 = vpack.c.b16 %v8691, %v8685
    %v9544 = vpack.c.b16 %v8692, %v8686
    %v9545 = vpack.c.b16 %v8693, %v8687
    %v9546 = vpack.c.b16 %v8694, %v8688
    %v9547 = vpack.c.b16 %v8701, %v8695
    %v9548 = vpack.c.b16 %v8702, %v8696
    %v9549 = vpack.c.b16 %v8703, %v8697
    %v9550 = vpack.c.b16 %v8704, %v8698
    %v9551 = vpack.c.b16 %v8705, %v8699
    %v9552 = vpack.c.b16 %v8706, %v8700
    %v9553 = vpack.c.b16 %v8713, %v8707
    %v9554 = vpack.c.b16 %v8714, %v8708
    %v9555 = vpack.c.b16 %v8715, %v8709
    %v9556 = vpack.c.b16 %v8716, %v8710
    %v9557 = vpack.c.b16 %v8717, %v8711
    %v9558 = vpack.c.b16 %v8718, %v8712
    %v9559 = vpack.c.b16 %v8725, %v8719
    %v9560 = vpack.c.b16 %v8726, %v8720
    %v9561 = vpack.c.b16 %v8727, %v8721
    %v9562 = vpack.c.b16 %v8728, %v8722
    %v9563 = vpack.c.b16 %v8729, %v8723
    %v9564 = vpack.c.b16 %v8730, %v8724
    %v9565 = vpack.c.b16 %v8737, %v8731
    %v9566 = vpack.c.b16 %v8738, %v8732
    %v9567 = vpack.c.b16 %v8739, %v8733
    %v9568 = vpack.c.b16 %v8740, %v8734
    %v9569 = vpack.c.b16 %v8741, %v8735
    %v9570 = vpack.c.b16 %v8742, %v8736
    %v9571 = vpack.c.b16 %v8749, %v8743
    %v9572 = vpack.c.b16 %v8750, %v8744
    %v9573 = vpack.c.b16 %v8751, %v8745
    %v9574 = vpack.c.b16 %v8752, %v8746
    %v9575 = vpack.c.b16 %v8753, %v8747
    %v9576 = vpack.c.b16 %v8754, %v8748
    %v9577 = vpack.c.b16 %v8761, %v8755
    %v9578 = vpack.c.b16 %v8762, %v8756
    %v9579 = vpack.c.b16 %v8763, %v8757
    %v9580 = vpack.c.b16 %v8764, %v8758
    %v9581 = vpack.c.b16 %v8765, %v8759
    %v9582 = vpack.c.b16 %v8766, %v8760
    %v9583 = vpack.c.b16 %v8773, %v8767
    %v9584 = vpack.c.b16 %v8774, %v8768
    %v9585 = vpack.c.b16 %v8775, %v8769
    %v9586 = vpack.c.b16 %v8776, %v8770
    %v9587 = vpack.c.b16 %v8777, %v8771
    %v9588 = vpack.c.b16 %v8778, %v8772
    %v9589 = vpack.c.b16 %v8785, %v8779
    %v9590 = vpack.c.b16 %v8786, %v8780
    %v9591 = vpack.c.b16 %v8787, %v8781
    %v9592 = vpack.c.b16 %v8788, %v8782
    %v9593 = vpack.c.b16 %v8789, %v8783
    %v9594 = vpack.c.b16 %v8790, %v8784
    %v9595 = vpack.c.b16 %v8797, %v8791
    %v9596 = vpack.c.b16 %v8798, %v8792
    %v9597 = vpack.c.b16 %v8799, %v8793
    %v9598 = vpack.c.b16 %v8800, %v8794
    %v9599 = vpack.c.b16 %v8801, %v8795
    %v9600 = vpack.c.b16 %v8802, %v8796
    %v9601 = vpack.c.b16 %v8809, %v8803
    %v9602 = vpack.c.b16 %v8810, %v8804
    %v9603 = vpack.c.b16 %v8811, %v8805
    %v9604 = vpack.c.b16 %v8812, %v8806
    %v9605 = vpack.c.b16 %v8813, %v8807
    %v9606 = vpack.c.b16 %v8814, %v8808
    %v9607 = vpack.c.b16 %v8821, %v8815
    %v9608 = vpack.c.b16 %v8822, %v8816
    %v9609 = vpack.c.b16 %v8823, %v8817
    %v9610 = vpack.c.b16 %v8824, %v8818
    %v9611 = vpack.c.b16 %v8825, %v8819
    %v9612 = vpack.c.b16 %v8826, %v8820
    %v9613 = vpack.c.b16 %v8833, %v8827
    %v9614 = vpack.c.b16 %v8834, %v8828
    %v9615 = vpack.c.b16 %v8835, %v8829
    %v9616 = vpack.c.b16 %v8836, %v8830
    %v9617 = vpack.c.b16 %v8837, %v8831
    %v9618 = vpack.c.b16 %v8838, %v8832
    %v9619 = vpack.c.b16 %v8845, %v8839
    %v9620 = vpack.c.b16 %v8846, %v8840
    %v9621 = vpack.c.b16 %v8847, %v8841
    %v9622 = vpack.c.b16 %v8848, %v8842
    %v9623 = vpack.c.b16 %v8849, %v8843
    %v9624 = vpack.c.b16 %v8850, %v8844
    %v9625 = vpack.c.b16 %v8857, %v8851
    %v9626 = vpack.c.b16 %v8858, %v8852
    %v9627 = vpack.c.b16 %v8859, %v8853
    %v9628 = vpack.c.b16 %v8860, %v8854
    %v9629 = vpack.c.b16 %v8861, %v8855
    %v9630 = vpack.c.b16 %v8862, %v8856
    %10399 = vmatprep.subr.bf16.mxu0 %v8864
    %10400 = vmatpush1.bf16.msra.mxu0 %v8863
    %10401 = vmatprep.subr.bf16.mxu0 %v8870
    %10402 = vmatpush1.bf16.msra.mxu0 %v8869
    %10403 = vmatprep.subr.bf16.mxu0 %v8876
    %10404 = vmatpush1.bf16.msra.mxu0 %v8875
    %10405 = vmatprep.subr.bf16.mxu0 %v8882
    %10406 = vmatpush1.bf16.msra.mxu0 %v8881
    %10407 = vmatprep.subr.bf16.mxu0 %v8888
    %10408 = vmatpush1.bf16.msra.mxu0 %v8887
    %10409 = vmatprep.subr.bf16.mxu0 %v8894
    %10410 = vmatpush1.bf16.msra.mxu0 %v8893
    %10411 = vmatprep.subr.bf16.mxu0 %v8900
    %10412 = vmatpush1.bf16.msra.mxu0 %v8899
    %10413 = vmatprep.subr.bf16.mxu0 %v8906
    %10414 = vmatpush1.bf16.msra.mxu0 %v8905
    %10415 = vmatprep.subr.bf16.mxu0 %v8912
    %10416 = vmatpush1.bf16.msra.mxu0 %v8911
    %10417 = vmatprep.subr.bf16.mxu0 %v8918
    %10418 = vmatpush1.bf16.msra.mxu0 %v8917
    %10419 = vmatprep.subr.bf16.mxu0 %v8924
    %10420 = vmatpush1.bf16.msra.mxu0 %v8923
    %10421 = vmatprep.subr.bf16.mxu0 %v8930
    %10422 = vmatpush1.bf16.msra.mxu0 %v8929
    %10423 = vmatprep.subr.bf16.mxu0 %v8936
    %10424 = vmatpush1.bf16.msra.mxu0 %v8935
    %10425 = vmatprep.subr.bf16.mxu0 %v8942
    %10426 = vmatpush1.bf16.msra.mxu0 %v8941
    %10427 = vmatprep.subr.bf16.mxu0 %v8948
    %10428 = vmatpush1.bf16.msra.mxu0 %v8947
    %10429 = vmatprep.subr.bf16.mxu0 %v8954
    %10430 = vmatpush1.bf16.msra.mxu0 %v8953
    %10431 = vmatprep.mubr.bf16.mxu0 %v5776
    %10432 = vmatmul.mubr.bf16.gmra.mrb[0].mxu0 %v5775
    %v10433 = vpop.f32.mrb[0].mxu0
    %v10434 = vadd.f32 %v85, %v10433
    %v10435 = vpop.f32.mrb[0].mxu0
    %v10436 = vadd.f32 %v86, %v10435
    %v10437 = vpop.f32.mrb[0].mxu0
    %v10438 = vadd.f32 %v91, %v10437
    %v10439 = vpop.f32.mrb[0].mxu0
    %v10440 = vadd.f32 %v92, %v10439
    %10441 = vdwg.mxu0
    %10442 = vmatprep.subr.bf16.mxu0 %v8960
    %10443 = vmatpush1.bf16.msra.mxu0 %v8959
    %10444 = vmatprep.subr.bf16.mxu0 %v8966
    %10445 = vmatpush1.bf16.msra.mxu0 %v8965
    %10446 = vmatprep.subr.bf16.mxu0 %v8972
    %10447 = vmatpush1.bf16.msra.mxu0 %v8971
    %10448 = vmatprep.subr.bf16.mxu0 %v8978
    %10449 = vmatpush1.bf16.msra.mxu0 %v8977
    %10450 = vmatprep.subr.bf16.mxu0 %v8984
    %10451 = vmatpush1.bf16.msra.mxu0 %v8983
    %10452 = vmatprep.subr.bf16.mxu0 %v8990
    %10453 = vmatpush1.bf16.msra.mxu0 %v8989
    %10454 = vmatprep.subr.bf16.mxu0 %v8996
    %10455 = vmatpush1.bf16.msra.mxu0 %v8995
    %10456 = vmatprep.subr.bf16.mxu0 %v9002
    %10457 = vmatpush1.bf16.msra.mxu0 %v9001
    %10458 = vmatprep.subr.bf16.mxu0 %v9008
    %10459 = vmatpush1.bf16.msra.mxu0 %v9007
    %10460 = vmatprep.subr.bf16.mxu0 %v9014
    %10461 = vmatpush1.bf16.msra.mxu0 %v9013
    %10462 = vmatprep.subr.bf16.mxu0 %v9020
    %10463 = vmatpush1.bf16.msra.mxu0 %v9019
    %10464 = vmatprep.subr.bf16.mxu0 %v9026
    %10465 = vmatpush1.bf16.msra.mxu0 %v9025
    %10466 = vmatprep.subr.bf16.mxu0 %v9032
    %10467 = vmatpush1.bf16.msra.mxu0 %v9031
    %10468 = vmatprep.subr.bf16.mxu0 %v9038
    %10469 = vmatpush1.bf16.msra.mxu0 %v9037
    %10470 = vmatprep.subr.bf16.mxu0 %v9044
    %10471 = vmatpush1.bf16.msra.mxu0 %v9043
    %10472 = vmatprep.subr.bf16.mxu0 %v9050
    %10473 = vmatpush1.bf16.msra.mxu0 %v9049
    %10474 = vmatprep.mubr.bf16.mxu0 %v5778
    %10475 = vmatmul.mubr.bf16.gmra.mrb[0].mxu0 %v5777
    %v10476 = vpop.f32.mrb[0].mxu0
    %v10477 = vadd.f32 %v10434, %v10476
    %v10478 = vpop.f32.mrb[0].mxu0
    %v10479 = vadd.f32 %v10436, %v10478
    %v10480 = vpop.f32.mrb[0].mxu0
    %v10481 = vadd.f32 %v10438, %v10480
    %v10482 = vpop.f32.mrb[0].mxu0
    %v10483 = vadd.f32 %v10440, %v10482
    %10484 = vdwg.mxu0
    %10485 = vmatprep.subr.bf16.mxu0 %v9056
    %10486 = vmatpush1.bf16.msra.mxu0 %v9055
    %10487 = vmatprep.subr.bf16.mxu0 %v9062
    %10488 = vmatpush1.bf16.msra.mxu0 %v9061
    %10489 = vmatprep.subr.bf16.mxu0 %v9068
    %10490 = vmatpush1.bf16.msra.mxu0 %v9067
    %10491 = vmatprep.subr.bf16.mxu0 %v9074
    %10492 = vmatpush1.bf16.msra.mxu0 %v9073
    %10493 = vmatprep.subr.bf16.mxu0 %v9080
    %10494 = vmatpush1.bf16.msra.mxu0 %v9079
    %10495 = vmatprep.subr.bf16.mxu0 %v9086
    %10496 = vmatpush1.bf16.msra.mxu0 %v9085
    %10497 = vmatprep.subr.bf16.mxu0 %v9092
    %10498 = vmatpush1.bf16.msra.mxu0 %v9091
    %10499 = vmatprep.subr.bf16.mxu0 %v9098
    %10500 = vmatpush1.bf16.msra.mxu0 %v9097
    %10501 = vmatprep.subr.bf16.mxu0 %v9104
    %10502 = vmatpush1.bf16.msra.mxu0 %v9103
    %10503 = vmatprep.subr.bf16.mxu0 %v9110
    %10504 = vmatpush1.bf16.msra.mxu0 %v9109
    %10505 = vmatprep.subr.bf16.mxu0 %v9116
    %10506 = vmatpush1.bf16.msra.mxu0 %v9115
    %10507 = vmatprep.subr.bf16.mxu0 %v9122
    %10508 = vmatpush1.bf16.msra.mxu0 %v9121
    %10509 = vmatprep.subr.bf16.mxu0 %v9128
    %10510 = vmatpush1.bf16.msra.mxu0 %v9127
    %10511 = vmatprep.subr.bf16.mxu0 %v9134
    %10512 = vmatpush1.bf16.msra.mxu0 %v9133
    %10513 = vmatprep.subr.bf16.mxu0 %v9140
    %10514 = vmatpush1.bf16.msra.mxu0 %v9139
    %10515 = vmatprep.subr.bf16.mxu0 %v9146
    %10516 = vmatpush1.bf16.msra.mxu0 %v9145
    %10517 = vmatprep.mubr.bf16.mxu0 %v5780
    %10518 = vmatmul.mubr.bf16.gmra.mrb[0].mxu0 %v5779
    %v10519 = vpop.f32.mrb[0].mxu0
    %v10520 = vadd.f32 %v10477, %v10519
    %v10521 = vpop.f32.mrb[0].mxu0
    %v10522 = vadd.f32 %v10479, %v10521
    %v10523 = vpop.f32.mrb[0].mxu0
    %v10524 = vadd.f32 %v10481, %v10523
    %v10525 = vpop.f32.mrb[0].mxu0
    %v10526 = vadd.f32 %v10483, %v10525
    %10527 = vdwg.mxu0
    %10528 = vmatprep.subr.bf16.mxu0 %v9152
    %10529 = vmatpush1.bf16.msra.mxu0 %v9151
    %10530 = vmatprep.subr.bf16.mxu0 %v9158
    %10531 = vmatpush1.bf16.msra.mxu0 %v9157
    %10532 = vmatprep.subr.bf16.mxu0 %v9164
    %10533 = vmatpush1.bf16.msra.mxu0 %v9163
    %10534 = vmatprep.subr.bf16.mxu0 %v9170
    %10535 = vmatpush1.bf16.msra.mxu0 %v9169
    %10536 = vmatprep.subr.bf16.mxu0 %v9176
    %10537 = vmatpush1.bf16.msra.mxu0 %v9175
    %10538 = vmatprep.subr.bf16.mxu0 %v9182
    %10539 = vmatpush1.bf16.msra.mxu0 %v9181
    %10540 = vmatprep.subr.bf16.mxu0 %v9188
    %10541 = vmatpush1.bf16.msra.mxu0 %v9187
    %10542 = vmatprep.subr.bf16.mxu0 %v9194
    %10543 = vmatpush1.bf16.msra.mxu0 %v9193
    %10544 = vmatprep.subr.bf16.mxu0 %v9200
    %10545 = vmatpush1.bf16.msra.mxu0 %v9199
    %10546 = vmatprep.subr.bf16.mxu0 %v9206
    %10547 = vmatpush1.bf16.msra.mxu0 %v9205
    %10548 = vmatprep.subr.bf16.mxu0 %v9212
    %10549 = vmatpush1.bf16.msra.mxu0 %v9211
    %10550 = vmatprep.subr.bf16.mxu0 %v9218
    %10551 = vmatpush1.bf16.msra.mxu0 %v9217
    %10552 = vmatprep.subr.bf16.mxu0 %v9224
    %10553 = vmatpush1.bf16.msra.mxu0 %v9223
    %10554 = vmatprep.subr.bf16.mxu0 %v9230
    %10555 = vmatpush1.bf16.msra.mxu0 %v9229
    %10556 = vmatprep.subr.bf16.mxu0 %v9236
    %10557 = vmatpush1.bf16.msra.mxu0 %v9235
    %10558 = vmatprep.subr.bf16.mxu0 %v9242
    %10559 = vmatpush1.bf16.msra.mxu0 %v9241
    %10560 = vmatprep.mubr.bf16.mxu0 %v5782
    %10561 = vmatmul.mubr.bf16.gmra.mrb[0].mxu0 %v5781
    %v10562 = vpop.f32.mrb[0].mxu0
    %v10563 = vadd.f32 %v10520, %v10562
    %v10564 = vpop.f32.mrb[0].mxu0
    %v10565 = vadd.f32 %v10522, %v10564
    %v10566 = vpop.f32.mrb[0].mxu0
    %v10567 = vadd.f32 %v10524, %v10566
    %v10568 = vpop.f32.mrb[0].mxu0
    %v10569 = vadd.f32 %v10526, %v10568
    %10570 = vdwg.mxu0
    %10571 = vmatprep.subr.bf16.mxu0 %v9248
    %10572 = vmatpush1.bf16.msra.mxu0 %v9247
    %10573 = vmatprep.subr.bf16.mxu0 %v9254
    %10574 = vmatpush1.bf16.msra.mxu0 %v9253
    %10575 = vmatprep.subr.bf16.mxu0 %v9260
    %10576 = vmatpush1.bf16.msra.mxu0 %v9259
    %10577 = vmatprep.subr.bf16.mxu0 %v9266
    %10578 = vmatpush1.bf16.msra.mxu0 %v9265
    %10579 = vmatprep.subr.bf16.mxu0 %v9272
    %10580 = vmatpush1.bf16.msra.mxu0 %v9271
    %10581 = vmatprep.subr.bf16.mxu0 %v9278
    %10582 = vmatpush1.bf16.msra.mxu0 %v9277
    %10583 = vmatprep.subr.bf16.mxu0 %v9284
    %10584 = vmatpush1.bf16.msra.mxu0 %v9283
    %10585 = vmatprep.subr.bf16.mxu0 %v9290
    %10586 = vmatpush1.bf16.msra.mxu0 %v9289
    %10587 = vmatprep.subr.bf16.mxu0 %v9296
    %10588 = vmatpush1.bf16.msra.mxu0 %v9295
    %10589 = vmatprep.subr.bf16.mxu0 %v9302
    %10590 = vmatpush1.bf16.msra.mxu0 %v9301
    %10591 = vmatprep.subr.bf16.mxu0 %v9308
    %10592 = vmatpush1.bf16.msra.mxu0 %v9307
    %10593 = vmatprep.subr.bf16.mxu0 %v9314
    %10594 = vmatpush1.bf16.msra.mxu0 %v9313
    %10595 = vmatprep.subr.bf16.mxu0 %v9320
    %10596 = vmatpush1.bf16.msra.mxu0 %v9319
    %10597 = vmatprep.subr.bf16.mxu0 %v9326
    %10598 = vmatpush1.bf16.msra.mxu0 %v9325
    %10599 = vmatprep.subr.bf16.mxu0 %v9332
    %10600 = vmatpush1.bf16.msra.mxu0 %v9331
    %10601 = vmatprep.subr.bf16.mxu0 %v9338
    %10602 = vmatpush1.bf16.msra.mxu0 %v9337
    %10603 = vmatprep.mubr.bf16.mxu0 %v5784
    %10604 = vmatmul.mubr.bf16.gmra.mrb[0].mxu0 %v5783
    %v10605 = vpop.f32.mrb[0].mxu0
    %v10606 = vadd.f32 %v10563, %v10605
    %v10607 = vpop.f32.mrb[0].mxu0
    %v10608 = vadd.f32 %v10565, %v10607
    %v10609 = vpop.f32.mrb[0].mxu0
    %v10610 = vadd.f32 %v10567, %v10609
    %v10611 = vpop.f32.mrb[0].mxu0
    %v10612 = vadd.f32 %v10569, %v10611
    %10613 = vdwg.mxu0
    %10614 = vmatprep.subr.bf16.mxu0 %v9344
    %10615 = vmatpush1.bf16.msra.mxu0 %v9343
    %10616 = vmatprep.subr.bf16.mxu0 %v9350
    %10617 = vmatpush1.bf16.msra.mxu0 %v9349
    %10618 = vmatprep.subr.bf16.mxu0 %v9356
    %10619 = vmatpush1.bf16.msra.mxu0 %v9355
    %10620 = vmatprep.subr.bf16.mxu0 %v9362
    %10621 = vmatpush1.bf16.msra.mxu0 %v9361
    %10622 = vmatprep.subr.bf16.mxu0 %v9368
    %10623 = vmatpush1.bf16.msra.mxu0 %v9367
    %10624 = vmatprep.subr.bf16.mxu0 %v9374
    %10625 = vmatpush1.bf16.msra.mxu0 %v9373
    %10626 = vmatprep.subr.bf16.mxu0 %v9380
    %10627 = vmatpush1.bf16.msra.mxu0 %v9379
    %10628 = vmatprep.subr.bf16.mxu0 %v9386
    %10629 = vmatpush1.bf16.msra.mxu0 %v9385
    %10630 = vmatprep.subr.bf16.mxu0 %v9392
    %10631 = vmatpush1.bf16.msra.mxu0 %v9391
    %10632 = vmatprep.subr.bf16.mxu0 %v9398
    %10633 = vmatpush1.bf16.msra.mxu0 %v9397
    %10634 = vmatprep.subr.bf16.mxu0 %v9404
    %10635 = vmatpush1.bf16.msra.mxu0 %v9403
    %10636 = vmatprep.subr.bf16.mxu0 %v9410
    %10637 = vmatpush1.bf16.msra.mxu0 %v9409
    %10638 = vmatprep.subr.bf16.mxu0 %v9416
    %10639 = vmatpush1.bf16.msra.mxu0 %v9415
    %10640 = vmatprep.subr.bf16.mxu0 %v9422
    %10641 = vmatpush1.bf16.msra.mxu0 %v9421
    %10642 = vmatprep.subr.bf16.mxu0 %v9428
    %10643 = vmatpush1.bf16.msra.mxu0 %v9427
    %10644 = vmatprep.subr.bf16.mxu0 %v9434
    %10645 = vmatpush1.bf16.msra.mxu0 %v9433
    %10646 = vmatprep.mubr.bf16.mxu0 %v5786
    %10647 = vmatmul.mubr.bf16.gmra.mrb[0].mxu0 %v5785
    %v10648 = vpop.f32.mrb[0].mxu0
    %v10649 = vadd.f32 %v10606, %v10648
    %v10650 = vpop.f32.mrb[0].mxu0
    %v10651 = vadd.f32 %v10608, %v10650
    %v10652 = vpop.f32.mrb[0].mxu0
    %v10653 = vadd.f32 %v10610, %v10652
    %v10654 = vpop.f32.mrb[0].mxu0
    %v10655 = vadd.f32 %v10612, %v10654
    %10656 = vdwg.mxu0
    %10657 = vmatprep.subr.bf16.mxu0 %v9440
    %10658 = vmatpush1.bf16.msra.mxu0 %v9439
    %10659 = vmatprep.subr.bf16.mxu0 %v9446
    %10660 = vmatpush1.bf16.msra.mxu0 %v9445
    %10661 = vmatprep.subr.bf16.mxu0 %v9452
    %10662 = vmatpush1.bf16.msra.mxu0 %v9451
    %10663 = vmatprep.subr.bf16.mxu0 %v9458
    %10664 = vmatpush1.bf16.msra.mxu0 %v9457
    %10665 = vmatprep.subr.bf16.mxu0 %v9464
    %10666 = vmatpush1.bf16.msra.mxu0 %v9463
    %10667 = vmatprep.subr.bf16.mxu0 %v9470
    %10668 = vmatpush1.bf16.msra.mxu0 %v9469
    %10669 = vmatprep.subr.bf16.mxu0 %v9476
    %10670 = vmatpush1.bf16.msra.mxu0 %v9475
    %10671 = vmatprep.subr.bf16.mxu0 %v9482
    %10672 = vmatpush1.bf16.msra.mxu0 %v9481
    %10673 = vmatprep.subr.bf16.mxu0 %v9488
    %10674 = vmatpush1.bf16.msra.mxu0 %v9487
    %10675 = vmatprep.subr.bf16.mxu0 %v9494
    %10676 = vmatpush1.bf16.msra.mxu0 %v9493
    %10677 = vmatprep.subr.bf16.mxu0 %v9500
    %10678 = vmatpush1.bf16.msra.mxu0 %v9499
    %10679 = vmatprep.subr.bf16.mxu0 %v9506
    %10680 = vmatpush1.bf16.msra.mxu0 %v9505
    %10681 = vmatprep.subr.bf16.mxu0 %v9512
    %10682 = vmatpush1.bf16.msra.mxu0 %v9511
    %10683 = vmatprep.subr.bf16.mxu0 %v9518
    %10684 = vmatpush1.bf16.msra.mxu0 %v9517
    %10685 = vmatprep.subr.bf16.mxu0 %v9524
    %10686 = vmatpush1.bf16.msra.mxu0 %v9523
    %10687 = vmatprep.subr.bf16.mxu0 %v9530
    %10688 = vmatpush1.bf16.msra.mxu0 %v9529
    %10689 = vmatprep.mubr.bf16.mxu0 %v5788
    %10690 = vmatmul.mubr.bf16.gmra.mrb[0].mxu0 %v5787
    %v10691 = vpop.f32.mrb[0].mxu0
    %v10692 = vadd.f32 %v10649, %v10691
    %v10693 = vpop.f32.mrb[0].mxu0
    %v10694 = vadd.f32 %v10651, %v10693
    %v10695 = vpop.f32.mrb[0].mxu0
    %v10696 = vadd.f32 %v10653, %v10695
    %v10697 = vpop.f32.mrb[0].mxu0
    %v10698 = vadd.f32 %v10655, %v10697
    %10699 = vdwg.mxu0
    %10700 = vmatprep.subr.bf16.mxu0 %v9536
    %10701 = vmatpush1.bf16.msra.mxu0 %v9535
    %10702 = vmatprep.subr.bf16.mxu0 %v9542
    %10703 = vmatpush1.bf16.msra.mxu0 %v9541
    %10704 = vmatprep.subr.bf16.mxu0 %v9548
    %10705 = vmatpush1.bf16.msra.mxu0 %v9547
    %10706 = vmatprep.subr.bf16.mxu0 %v9554
    %10707 = vmatpush1.bf16.msra.mxu0 %v9553
    %10708 = vmatprep.subr.bf16.mxu0 %v9560
    %10709 = vmatpush1.bf16.msra.mxu0 %v9559
    %10710 = vmatprep.subr.bf16.mxu0 %v9566
    %10711 = vmatpush1.bf16.msra.mxu0 %v9565
    %10712 = vmatprep.subr.bf16.mxu0 %v9572
    %10713 = vmatpush1.bf16.msra.mxu0 %v9571
    %10714 = vmatprep.subr.bf16.mxu0 %v9578
    %10715 = vmatpush1.bf16.msra.mxu0 %v9577
    %10716 = vmatprep.subr.bf16.mxu0 %v9584
    %10717 = vmatpush1.bf16.msra.mxu0 %v9583
    %10718 = vmatprep.subr.bf16.mxu0 %v9590
    %10719 = vmatpush1.bf16.msra.mxu0 %v9589
    %10720 = vmatprep.subr.bf16.mxu0 %v9596
    %10721 = vmatpush1.bf16.msra.mxu0 %v9595
    %10722 = vmatprep.subr.bf16.mxu0 %v9602
    %10723 = vmatpush1.bf16.msra.mxu0 %v9601
    %10724 = vmatprep.subr.bf16.mxu0 %v9608
    %10725 = vmatpush1.bf16.msra.mxu0 %v9607
    %10726 = vmatprep.subr.bf16.mxu0 %v9614
    %10727 = vmatpush1.bf16.msra.mxu0 %v9613
    %10728 = vmatprep.subr.bf16.mxu0 %v9620
    %10729 = vmatpush1.bf16.msra.mxu0 %v9619
    %10730 = vmatprep.subr.bf16.mxu0 %v9626
    %10731 = vmatpush1.bf16.msra.mxu0 %v9625
    %10732 = vmatprep.mubr.bf16.mxu0 %v5790
    %10733 = vmatmul.mubr.bf16.gmra.mrb[0].mxu0 %v5789
    %v10734 = vpop.f32.mrb[0].mxu0
    %v10735 = vadd.f32 %v10692, %v10734
    %v10736 = vpop.f32.mrb[0].mxu0
    %v10737 = vadd.f32 %v10694, %v10736
    %v10738 = vpop.f32.mrb[0].mxu0
    %v10739 = vadd.f32 %v10696, %v10738
    %v10740 = vpop.f32.mrb[0].mxu0
    %v10741 = vadd.f32 %v10698, %v10740
    %10742 = vdwg.mxu0
    %10743 = vmatprep.subr.bf16.mxu0 %v8866
    %10744 = vmatpush1.bf16.msra.mxu0 %v8865
    %10745 = vmatprep.subr.bf16.mxu0 %v8872
    %10746 = vmatpush1.bf16.msra.mxu0 %v8871
    %10747 = vmatprep.subr.bf16.mxu0 %v8878
    %10748 = vmatpush1.bf16.msra.mxu0 %v8877
    %10749 = vmatprep.subr.bf16.mxu0 %v8884
    %10750 = vmatpush1.bf16.msra.mxu0 %v8883
    %10751 = vmatprep.subr.bf16.mxu0 %v8890
    %10752 = vmatpush1.bf16.msra.mxu0 %v8889
    %10753 = vmatprep.subr.bf16.mxu0 %v8896
    %10754 = vmatpush1.bf16.msra.mxu0 %v8895
    %10755 = vmatprep.subr.bf16.mxu0 %v8902
    %10756 = vmatpush1.bf16.msra.mxu0 %v8901
    %10757 = vmatprep.subr.bf16.mxu0 %v8908
    %10758 = vmatpush1.bf16.msra.mxu0 %v8907
    %10759 = vmatprep.subr.bf16.mxu0 %v8914
    %10760 = vmatpush1.bf16.msra.mxu0 %v8913
    %10761 = vmatprep.subr.bf16.mxu0 %v8920
    %10762 = vmatpush1.bf16.msra.mxu0 %v8919
    %10763 = vmatprep.subr.bf16.mxu0 %v8926
    %10764 = vmatpush1.bf16.msra.mxu0 %v8925
    %10765 = vmatprep.subr.bf16.mxu0 %v8932
    %10766 = vmatpush1.bf16.msra.mxu0 %v8931
    %10767 = vmatprep.subr.bf16.mxu0 %v8938
    %10768 = vmatpush1.bf16.msra.mxu0 %v8937
    %10769 = vmatprep.subr.bf16.mxu0 %v8944
    %10770 = vmatpush1.bf16.msra.mxu0 %v8943
    %10771 = vmatprep.subr.bf16.mxu0 %v8950
    %10772 = vmatpush1.bf16.msra.mxu0 %v8949
    %10773 = vmatprep.subr.bf16.mxu0 %v8956
    %10774 = vmatpush1.bf16.msra.mxu0 %v8955
    %10775 = vmatprep.mubr.bf16.mxu0 %v5776
    %10776 = vmatmul.mubr.bf16.gmra.mrb[0].mxu0 %v5775
    %v10777 = vpop.f32.mrb[0].mxu0
    %v10778 = vadd.f32 %v87, %v10777
    %v10779 = vpop.f32.mrb[0].mxu0
    %v10780 = vadd.f32 %v88, %v10779
    %v10781 = vpop.f32.mrb[0].mxu0
    %v10782 = vadd.f32 %v93, %v10781
    %v10783 = vpop.f32.mrb[0].mxu0
    %v10784 = vadd.f32 %v94, %v10783
    %10785 = vdwg.mxu0
    %10786 = vmatprep.subr.bf16.mxu0 %v8962
    %10787 = vmatpush1.bf16.msra.mxu0 %v8961
    %10788 = vmatprep.subr.bf16.mxu0 %v8968
    %10789 = vmatpush1.bf16.msra.mxu0 %v8967
    %10790 = vmatprep.subr.bf16.mxu0 %v8974
    %10791 = vmatpush1.bf16.msra.mxu0 %v8973
    %10792 = vmatprep.subr.bf16.mxu0 %v8980
    %10793 = vmatpush1.bf16.msra.mxu0 %v8979
    %10794 = vmatprep.subr.bf16.mxu0 %v8986
    %10795 = vmatpush1.bf16.msra.mxu0 %v8985
    %10796 = vmatprep.subr.bf16.mxu0 %v8992
    %10797 = vmatpush1.bf16.msra.mxu0 %v8991
    %10798 = vmatprep.subr.bf16.mxu0 %v8998
    %10799 = vmatpush1.bf16.msra.mxu0 %v8997
    %10800 = vmatprep.subr.bf16.mxu0 %v9004
    %10801 = vmatpush1.bf16.msra.mxu0 %v9003
    %10802 = vmatprep.subr.bf16.mxu0 %v9010
    %10803 = vmatpush1.bf16.msra.mxu0 %v9009
    %10804 = vmatprep.subr.bf16.mxu0 %v9016
    %10805 = vmatpush1.bf16.msra.mxu0 %v9015
    %10806 = vmatprep.subr.bf16.mxu0 %v9022
    %10807 = vmatpush1.bf16.msra.mxu0 %v9021
    %10808 = vmatprep.subr.bf16.mxu0 %v9028
    %10809 = vmatpush1.bf16.msra.mxu0 %v9027
    %10810 = vmatprep.subr.bf16.mxu0 %v9034
    %10811 = vmatpush1.bf16.msra.mxu0 %v9033
    %10812 = vmatprep.subr.bf16.mxu0 %v9040
    %10813 = vmatpush1.bf16.msra.mxu0 %v9039
    %10814 = vmatprep.subr.bf16.mxu0 %v9046
    %10815 = vmatpush1.bf16.msra.mxu0 %v9045
    %10816 = vmatprep.subr.bf16.mxu0 %v9052
    %10817 = vmatpush1.bf16.msra.mxu0 %v9051
    %10818 = vmatprep.mubr.bf16.mxu0 %v5778
    %10819 = vmatmul.mubr.bf16.gmra.mrb[0].mxu0 %v5777
    %v10820 = vpop.f32.mrb[0].mxu0
    %v10821 = vadd.f32 %v10778, %v10820
    %v10822 = vpop.f32.mrb[0].mxu0
    %v10823 = vadd.f32 %v10780, %v10822
    %v10824 = vpop.f32.mrb[0].mxu0
    %v10825 = vadd.f32 %v10782, %v10824
    %v10826 = vpop.f32.mrb[0].mxu0
    %v10827 = vadd.f32 %v10784, %v10826
    %10828 = vdwg.mxu0
    %10829 = vmatprep.subr.bf16.mxu0 %v9058
    %10830 = vmatpush1.bf16.msra.mxu0 %v9057
    %10831 = vmatprep.subr.bf16.mxu0 %v9064
    %10832 = vmatpush1.bf16.msra.mxu0 %v9063
    %10833 = vmatprep.subr.bf16.mxu0 %v9070
    %10834 = vmatpush1.bf16.msra.mxu0 %v9069
    %10835 = vmatprep.subr.bf16.mxu0 %v9076
    %10836 = vmatpush1.bf16.msra.mxu0 %v9075
    %10837 = vmatprep.subr.bf16.mxu0 %v9082
    %10838 = vmatpush1.bf16.msra.mxu0 %v9081
    %10839 = vmatprep.subr.bf16.mxu0 %v9088
    %10840 = vmatpush1.bf16.msra.mxu0 %v9087
    %10841 = vmatprep.subr.bf16.mxu0 %v9094
    %10842 = vmatpush1.bf16.msra.mxu0 %v9093
    %10843 = vmatprep.subr.bf16.mxu0 %v9100
    %10844 = vmatpush1.bf16.msra.mxu0 %v9099
    %10845 = vmatprep.subr.bf16.mxu0 %v9106
    %10846 = vmatpush1.bf16.msra.mxu0 %v9105
    %10847 = vmatprep.subr.bf16.mxu0 %v9112
    %10848 = vmatpush1.bf16.msra.mxu0 %v9111
    %10849 = vmatprep.subr.bf16.mxu0 %v9118
    %10850 = vmatpush1.bf16.msra.mxu0 %v9117
    %10851 = vmatprep.subr.bf16.mxu0 %v9124
    %10852 = vmatpush1.bf16.msra.mxu0 %v9123
    %10853 = vmatprep.subr.bf16.mxu0 %v9130
    %10854 = vmatpush1.bf16.msra.mxu0 %v9129
    %10855 = vmatprep.subr.bf16.mxu0 %v9136
    %10856 = vmatpush1.bf16.msra.mxu0 %v9135
    %10857 = vmatprep.subr.bf16.mxu0 %v9142
    %10858 = vmatpush1.bf16.msra.mxu0 %v9141
    %10859 = vmatprep.subr.bf16.mxu0 %v9148
    %10860 = vmatpush1.bf16.msra.mxu0 %v9147
    %10861 = vmatprep.mubr.bf16.mxu0 %v5780
    %10862 = vmatmul.mubr.bf16.gmra.mrb[0].mxu0 %v5779
    %v10863 = vpop.f32.mrb[0].mxu0
    %v10864 = vadd.f32 %v10821, %v10863
    %v10865 = vpop.f32.mrb[0].mxu0
    %v10866 = vadd.f32 %v10823, %v10865
    %v10867 = vpop.f32.mrb[0].mxu0
    %v10868 = vadd.f32 %v10825, %v10867
    %v10869 = vpop.f32.mrb[0].mxu0
    %v10870 = vadd.f32 %v10827, %v10869
    %10871 = vdwg.mxu0
    %10872 = vmatprep.subr.bf16.mxu0 %v9154
    %10873 = vmatpush1.bf16.msra.mxu0 %v9153
    %10874 = vmatprep.subr.bf16.mxu0 %v9160
    %10875 = vmatpush1.bf16.msra.mxu0 %v9159
    %10876 = vmatprep.subr.bf16.mxu0 %v9166
    %10877 = vmatpush1.bf16.msra.mxu0 %v9165
    %10878 = vmatprep.subr.bf16.mxu0 %v9172
    %10879 = vmatpush1.bf16.msra.mxu0 %v9171
    %10880 = vmatprep.subr.bf16.mxu0 %v9178
    %10881 = vmatpush1.bf16.msra.mxu0 %v9177
    %10882 = vmatprep.subr.bf16.mxu0 %v9184
    %10883 = vmatpush1.bf16.msra.mxu0 %v9183
    %10884 = vmatprep.subr.bf16.mxu0 %v9190
    %10885 = vmatpush1.bf16.msra.mxu0 %v9189
    %10886 = vmatprep.subr.bf16.mxu0 %v9196
    %10887 = vmatpush1.bf16.msra.mxu0 %v9195
    %10888 = vmatprep.subr.bf16.mxu0 %v9202
    %10889 = vmatpush1.bf16.msra.mxu0 %v9201
    %10890 = vmatprep.subr.bf16.mxu0 %v9208
    %10891 = vmatpush1.bf16.msra.mxu0 %v9207
    %10892 = vmatprep.subr.bf16.mxu0 %v9214
    %10893 = vmatpush1.bf16.msra.mxu0 %v9213
    %10894 = vmatprep.subr.bf16.mxu0 %v9220
    %10895 = vmatpush1.bf16.msra.mxu0 %v9219
    %10896 = vmatprep.subr.bf16.mxu0 %v9226
    %10897 = vmatpush1.bf16.msra.mxu0 %v9225
    %10898 = vmatprep.subr.bf16.mxu0 %v9232
    %10899 = vmatpush1.bf16.msra.mxu0 %v9231
    %10900 = vmatprep.subr.bf16.mxu0 %v9238
    %10901 = vmatpush1.bf16.msra.mxu0 %v9237
    %10902 = vmatprep.subr.bf16.mxu0 %v9244
    %10903 = vmatpush1.bf16.msra.mxu0 %v9243
    %10904 = vmatprep.mubr.bf16.mxu0 %v5782
    %10905 = vmatmul.mubr.bf16.gmra.mrb[0].mxu0 %v5781
    %v10906 = vpop.f32.mrb[0].mxu0
    %v10907 = vadd.f32 %v10864, %v10906
    %v10908 = vpop.f32.mrb[0].mxu0
    %v10909 = vadd.f32 %v10866, %v10908
    %v10910 = vpop.f32.mrb[0].mxu0
    %v10911 = vadd.f32 %v10868, %v10910
    %v10912 = vpop.f32.mrb[0].mxu0
    %v10913 = vadd.f32 %v10870, %v10912
    %10914 = vdwg.mxu0
    %10915 = vmatprep.subr.bf16.mxu0 %v9250
    %10916 = vmatpush1.bf16.msra.mxu0 %v9249
    %10917 = vmatprep.subr.bf16.mxu0 %v9256
    %10918 = vmatpush1.bf16.msra.mxu0 %v9255
    %10919 = vmatprep.subr.bf16.mxu0 %v9262
    %10920 = vmatpush1.bf16.msra.mxu0 %v9261
    %10921 = vmatprep.subr.bf16.mxu0 %v9268
    %10922 = vmatpush1.bf16.msra.mxu0 %v9267
    %10923 = vmatprep.subr.bf16.mxu0 %v9274
    %10924 = vmatpush1.bf16.msra.mxu0 %v9273
    %10925 = vmatprep.subr.bf16.mxu0 %v9280
    %10926 = vmatpush1.bf16.msra.mxu0 %v9279
    %10927 = vmatprep.subr.bf16.mxu0 %v9286
    %10928 = vmatpush1.bf16.msra.mxu0 %v9285
    %10929 = vmatprep.subr.bf16.mxu0 %v9292
    %10930 = vmatpush1.bf16.msra.mxu0 %v9291
    %10931 = vmatprep.subr.bf16.mxu0 %v9298
    %10932 = vmatpush1.bf16.msra.mxu0 %v9297
    %10933 = vmatprep.subr.bf16.mxu0 %v9304
    %10934 = vmatpush1.bf16.msra.mxu0 %v9303
    %10935 = vmatprep.subr.bf16.mxu0 %v9310
    %10936 = vmatpush1.bf16.msra.mxu0 %v9309
    %10937 = vmatprep.subr.bf16.mxu0 %v9316
    %10938 = vmatpush1.bf16.msra.mxu0 %v9315
    %10939 = vmatprep.subr.bf16.mxu0 %v9322
    %10940 = vmatpush1.bf16.msra.mxu0 %v9321
    %10941 = vmatprep.subr.bf16.mxu0 %v9328
    %10942 = vmatpush1.bf16.msra.mxu0 %v9327
    %10943 = vmatprep.subr.bf16.mxu0 %v9334
    %10944 = vmatpush1.bf16.msra.mxu0 %v9333
    %10945 = vmatprep.subr.bf16.mxu0 %v9340
    %10946 = vmatpush1.bf16.msra.mxu0 %v9339
    %10947 = vmatprep.mubr.bf16.mxu0 %v5784
    %10948 = vmatmul.mubr.bf16.gmra.mrb[0].mxu0 %v5783
    %v10949 = vpop.f32.mrb[0].mxu0
    %v10950 = vadd.f32 %v10907, %v10949
    %v10951 = vpop.f32.mrb[0].mxu0
    %v10952 = vadd.f32 %v10909, %v10951
    %v10953 = vpop.f32.mrb[0].mxu0
    %v10954 = vadd.f32 %v10911, %v10953
    %v10955 = vpop.f32.mrb[0].mxu0
    %v10956 = vadd.f32 %v10913, %v10955
    %10957 = vdwg.mxu0
    %10958 = vmatprep.subr.bf16.mxu0 %v9346
    %10959 = vmatpush1.bf16.msra.mxu0 %v9345
    %10960 = vmatprep.subr.bf16.mxu0 %v9352
    %10961 = vmatpush1.bf16.msra.mxu0 %v9351
    %10962 = vmatprep.subr.bf16.mxu0 %v9358
    %10963 = vmatpush1.bf16.msra.mxu0 %v9357
    %10964 = vmatprep.subr.bf16.mxu0 %v9364
    %10965 = vmatpush1.bf16.msra.mxu0 %v9363
    %10966 = vmatprep.subr.bf16.mxu0 %v9370
    %10967 = vmatpush1.bf16.msra.mxu0 %v9369
    %10968 = vmatprep.subr.bf16.mxu0 %v9376
    %10969 = vmatpush1.bf16.msra.mxu0 %v9375
    %10970 = vmatprep.subr.bf16.mxu0 %v9382
    %10971 = vmatpush1.bf16.msra.mxu0 %v9381
    %10972 = vmatprep.subr.bf16.mxu0 %v9388
    %10973 = vmatpush1.bf16.msra.mxu0 %v9387
    %10974 = vmatprep.subr.bf16.mxu0 %v9394
    %10975 = vmatpush1.bf16.msra.mxu0 %v9393
    %10976 = vmatprep.subr.bf16.mxu0 %v9400
    %10977 = vmatpush1.bf16.msra.mxu0 %v9399
    %10978 = vmatprep.subr.bf16.mxu0 %v9406
    %10979 = vmatpush1.bf16.msra.mxu0 %v9405
    %10980 = vmatprep.subr.bf16.mxu0 %v9412
    %10981 = vmatpush1.bf16.msra.mxu0 %v9411
    %10982 = vmatprep.subr.bf16.mxu0 %v9418
    %10983 = vmatpush1.bf16.msra.mxu0 %v9417
    %10984 = vmatprep.subr.bf16.mxu0 %v9424
    %10985 = vmatpush1.bf16.msra.mxu0 %v9423
    %10986 = vmatprep.subr.bf16.mxu0 %v9430
    %10987 = vmatpush1.bf16.msra.mxu0 %v9429
    %10988 = vmatprep.subr.bf16.mxu0 %v9436
    %10989 = vmatpush1.bf16.msra.mxu0 %v9435
    %10990 = vmatprep.mubr.bf16.mxu0 %v5786
    %10991 = vmatmul.mubr.bf16.gmra.mrb[0].mxu0 %v5785
    %v10992 = vpop.f32.mrb[0].mxu0
    %v10993 = vadd.f32 %v10950, %v10992
    %v10994 = vpop.f32.mrb[0].mxu0
    %v10995 = vadd.f32 %v10952, %v10994
    %v10996 = vpop.f32.mrb[0].mxu0
    %v10997 = vadd.f32 %v10954, %v10996
    %v10998 = vpop.f32.mrb[0].mxu0
    %v10999 = vadd.f32 %v10956, %v10998
    %11000 = vdwg.mxu0
    %11001 = vmatprep.subr.bf16.mxu0 %v9442
    %11002 = vmatpush1.bf16.msra.mxu0 %v9441
    %11003 = vmatprep.subr.bf16.mxu0 %v9448
    %11004 = vmatpush1.bf16.msra.mxu0 %v9447
    %11005 = vmatprep.subr.bf16.mxu0 %v9454
    %11006 = vmatpush1.bf16.msra.mxu0 %v9453
    %11007 = vmatprep.subr.bf16.mxu0 %v9460
    %11008 = vmatpush1.bf16.msra.mxu0 %v9459
    %11009 = vmatprep.subr.bf16.mxu0 %v9466
    %11010 = vmatpush1.bf16.msra.mxu0 %v9465
    %11011 = vmatprep.subr.bf16.mxu0 %v9472
    %11012 = vmatpush1.bf16.msra.mxu0 %v9471
    %11013 = vmatprep.subr.bf16.mxu0 %v9478
    %11014 = vmatpush1.bf16.msra.mxu0 %v9477
    %11015 = vmatprep.subr.bf16.mxu0 %v9484
    %11016 = vmatpush1.bf16.msra.mxu0 %v9483
    %11017 = vmatprep.subr.bf16.mxu0 %v9490
    %11018 = vmatpush1.bf16.msra.mxu0 %v9489
    %11019 = vmatprep.subr.bf16.mxu0 %v9496
    %11020 = vmatpush1.bf16.msra.mxu0 %v9495
    %11021 = vmatprep.subr.bf16.mxu0 %v9502
    %11022 = vmatpush1.bf16.msra.mxu0 %v9501
    %11023 = vmatprep.subr.bf16.mxu0 %v9508
    %11024 = vmatpush1.bf16.msra.mxu0 %v9507
    %11025 = vmatprep.subr.bf16.mxu0 %v9514
    %11026 = vmatpush1.bf16.msra.mxu0 %v9513
    %11027 = vmatprep.subr.bf16.mxu0 %v9520
    %11028 = vmatpush1.bf16.msra.mxu0 %v9519
    %11029 = vmatprep.subr.bf16.mxu0 %v9526
    %11030 = vmatpush1.bf16.msra.mxu0 %v9525
    %11031 = vmatprep.subr.bf16.mxu0 %v9532
    %11032 = vmatpush1.bf16.msra.mxu0 %v9531
    %11033 = vmatprep.mubr.bf16.mxu0 %v5788
    %11034 = vmatmul.mubr.bf16.gmra.mrb[0].mxu0 %v5787
    %v11035 = vpop.f32.mrb[0].mxu0
    %v11036 = vadd.f32 %v10993, %v11035
    %v11037 = vpop.f32.mrb[0].mxu0
    %v11038 = vadd.f32 %v10995, %v11037
    %v11039 = vpop.f32.mrb[0].mxu0
    %v11040 = vadd.f32 %v10997, %v11039
    %v11041 = vpop.f32.mrb[0].mxu0
    %v11042 = vadd.f32 %v10999, %v11041
    %11043 = vdwg.mxu0
    %11044 = vmatprep.subr.bf16.mxu0 %v9538
    %11045 = vmatpush1.bf16.msra.mxu0 %v9537
    %11046 = vmatprep.subr.bf16.mxu0 %v9544
    %11047 = vmatpush1.bf16.msra.mxu0 %v9543
    %11048 = vmatprep.subr.bf16.mxu0 %v9550
    %11049 = vmatpush1.bf16.msra.mxu0 %v9549
    %11050 = vmatprep.subr.bf16.mxu0 %v9556
    %11051 = vmatpush1.bf16.msra.mxu0 %v9555
    %11052 = vmatprep.subr.bf16.mxu0 %v9562
    %11053 = vmatpush1.bf16.msra.mxu0 %v9561
    %11054 = vmatprep.subr.bf16.mxu0 %v9568
    %11055 = vmatpush1.bf16.msra.mxu0 %v9567
    %11056 = vmatprep.subr.bf16.mxu0 %v9574
    %11057 = vmatpush1.bf16.msra.mxu0 %v9573
    %11058 = vmatprep.subr.bf16.mxu0 %v9580
    %11059 = vmatpush1.bf16.msra.mxu0 %v9579
    %11060 = vmatprep.subr.bf16.mxu0 %v9586
    %11061 = vmatpush1.bf16.msra.mxu0 %v9585
    %11062 = vmatprep.subr.bf16.mxu0 %v9592
    %11063 = vmatpush1.bf16.msra.mxu0 %v9591
    %11064 = vmatprep.subr.bf16.mxu0 %v9598
    %11065 = vmatpush1.bf16.msra.mxu0 %v9597
    %11066 = vmatprep.subr.bf16.mxu0 %v9604
    %11067 = vmatpush1.bf16.msra.mxu0 %v9603
    %11068 = vmatprep.subr.bf16.mxu0 %v9610
    %11069 = vmatpush1.bf16.msra.mxu0 %v9609
    %11070 = vmatprep.subr.bf16.mxu0 %v9616
    %11071 = vmatpush1.bf16.msra.mxu0 %v9615
    %11072 = vmatprep.subr.bf16.mxu0 %v9622
    %11073 = vmatpush1.bf16.msra.mxu0 %v9621
    %11074 = vmatprep.subr.bf16.mxu0 %v9628
    %11075 = vmatpush1.bf16.msra.mxu0 %v9627
    %11076 = vmatprep.mubr.bf16.mxu0 %v5790
    %11077 = vmatmul.mubr.bf16.gmra.mrb[0].mxu0 %v5789
    %v11078 = vpop.f32.mrb[0].mxu0
    %v11079 = vadd.f32 %v11036, %v11078
    %v11080 = vpop.f32.mrb[0].mxu0
    %v11081 = vadd.f32 %v11038, %v11080
    %v11082 = vpop.f32.mrb[0].mxu0
    %v11083 = vadd.f32 %v11040, %v11082
    %v11084 = vpop.f32.mrb[0].mxu0
    %v11085 = vadd.f32 %v11042, %v11084
    %11086 = vdwg.mxu0
    %11087 = vmatprep.subr.bf16.mxu0 %v8868
    %11088 = vmatpush1.bf16.msra.mxu0 %v8867
    %11089 = vmatprep.subr.bf16.mxu0 %v8874
    %11090 = vmatpush1.bf16.msra.mxu0 %v8873
    %11091 = vmatprep.subr.bf16.mxu0 %v8880
    %11092 = vmatpush1.bf16.msra.mxu0 %v8879
    %11093 = vmatprep.subr.bf16.mxu0 %v8886
    %11094 = vmatpush1.bf16.msra.mxu0 %v8885
    %11095 = vmatprep.subr.bf16.mxu0 %v8892
    %11096 = vmatpush1.bf16.msra.mxu0 %v8891
    %11097 = vmatprep.subr.bf16.mxu0 %v8898
    %11098 = vmatpush1.bf16.msra.mxu0 %v8897
    %11099 = vmatprep.subr.bf16.mxu0 %v8904
    %11100 = vmatpush1.bf16.msra.mxu0 %v8903
    %11101 = vmatprep.subr.bf16.mxu0 %v8910
    %11102 = vmatpush1.bf16.msra.mxu0 %v8909
    %11103 = vmatprep.subr.bf16.mxu0 %v8916
    %11104 = vmatpush1.bf16.msra.mxu0 %v8915
    %11105 = vmatprep.subr.bf16.mxu0 %v8922
    %11106 = vmatpush1.bf16.msra.mxu0 %v8921
    %11107 = vmatprep.subr.bf16.mxu0 %v8928
    %11108 = vmatpush1.bf16.msra.mxu0 %v8927
    %11109 = vmatprep.subr.bf16.mxu0 %v8934
    %11110 = vmatpush1.bf16.msra.mxu0 %v8933
    %11111 = vmatprep.subr.bf16.mxu0 %v8940
    %11112 = vmatpush1.bf16.msra.mxu0 %v8939
    %11113 = vmatprep.subr.bf16.mxu0 %v8946
    %11114 = vmatpush1.bf16.msra.mxu0 %v8945
    %11115 = vmatprep.subr.bf16.mxu0 %v8952
    %11116 = vmatpush1.bf16.msra.mxu0 %v8951
    %11117 = vmatprep.subr.bf16.mxu0 %v8958
    %11118 = vmatpush1.bf16.msra.mxu0 %v8957
    %11119 = vmatprep.mubr.bf16.mxu0 %v5776
    %11120 = vmatmul.mubr.bf16.gmra.mrb[0].mxu0 %v5775
    %v11121 = vpop.f32.mrb[0].mxu0
    %v11122 = vadd.f32 %v89, %v11121
    %v11123 = vpop.f32.mrb[0].mxu0
    %v11124 = vadd.f32 %v90, %v11123
    %v11125 = vpop.f32.mrb[0].mxu0
    %v11126 = vadd.f32 %v95, %v11125
    %v11127 = vpop.f32.mrb[0].mxu0
    %v11128 = vadd.f32 %v96, %v11127
    %11129 = vdwg.mxu0
    %11130 = vmatprep.subr.bf16.mxu0 %v8964
    %11131 = vmatpush1.bf16.msra.mxu0 %v8963
    %11132 = vmatprep.subr.bf16.mxu0 %v8970
    %11133 = vmatpush1.bf16.msra.mxu0 %v8969
    %11134 = vmatprep.subr.bf16.mxu0 %v8976
    %11135 = vmatpush1.bf16.msra.mxu0 %v8975
    %11136 = vmatprep.subr.bf16.mxu0 %v8982
    %11137 = vmatpush1.bf16.msra.mxu0 %v8981
    %11138 = vmatprep.subr.bf16.mxu0 %v8988
    %11139 = vmatpush1.bf16.msra.mxu0 %v8987
    %11140 = vmatprep.subr.bf16.mxu0 %v8994
    %11141 = vmatpush1.bf16.msra.mxu0 %v8993
    %11142 = vmatprep.subr.bf16.mxu0 %v9000
    %11143 = vmatpush1.bf16.msra.mxu0 %v8999
    %11144 = vmatprep.subr.bf16.mxu0 %v9006
    %11145 = vmatpush1.bf16.msra.mxu0 %v9005
    %11146 = vmatprep.subr.bf16.mxu0 %v9012
    %11147 = vmatpush1.bf16.msra.mxu0 %v9011
    %11148 = vmatprep.subr.bf16.mxu0 %v9018
    %11149 = vmatpush1.bf16.msra.mxu0 %v9017
    %11150 = vmatprep.subr.bf16.mxu0 %v9024
    %11151 = vmatpush1.bf16.msra.mxu0 %v9023
    %11152 = vmatprep.subr.bf16.mxu0 %v9030
    %11153 = vmatpush1.bf16.msra.mxu0 %v9029
    %11154 = vmatprep.subr.bf16.mxu0 %v9036
    %11155 = vmatpush1.bf16.msra.mxu0 %v9035
    %11156 = vmatprep.subr.bf16.mxu0 %v9042
    %11157 = vmatpush1.bf16.msra.mxu0 %v9041
    %11158 = vmatprep.subr.bf16.mxu0 %v9048
    %11159 = vmatpush1.bf16.msra.mxu0 %v9047
    %11160 = vmatprep.subr.bf16.mxu0 %v9054
    %11161 = vmatpush1.bf16.msra.mxu0 %v9053
    %11162 = vmatprep.mubr.bf16.mxu0 %v5778
    %11163 = vmatmul.mubr.bf16.gmra.mrb[0].mxu0 %v5777
    %v11164 = vpop.f32.mrb[0].mxu0
    %v11165 = vadd.f32 %v11122, %v11164
    %v11166 = vpop.f32.mrb[0].mxu0
    %v11167 = vadd.f32 %v11124, %v11166
    %v11168 = vpop.f32.mrb[0].mxu0
    %v11169 = vadd.f32 %v11126, %v11168
    %v11170 = vpop.f32.mrb[0].mxu0
    %v11171 = vadd.f32 %v11128, %v11170
    %11172 = vdwg.mxu0
    %11173 = vmatprep.subr.bf16.mxu0 %v9060
    %11174 = vmatpush1.bf16.msra.mxu0 %v9059
    %11175 = vmatprep.subr.bf16.mxu0 %v9066
    %11176 = vmatpush1.bf16.msra.mxu0 %v9065
    %11177 = vmatprep.subr.bf16.mxu0 %v9072
    %11178 = vmatpush1.bf16.msra.mxu0 %v9071
    %11179 = vmatprep.subr.bf16.mxu0 %v9078
    %11180 = vmatpush1.bf16.msra.mxu0 %v9077
    %11181 = vmatprep.subr.bf16.mxu0 %v9084
    %11182 = vmatpush1.bf16.msra.mxu0 %v9083
    %11183 = vmatprep.subr.bf16.mxu0 %v9090
    %11184 = vmatpush1.bf16.msra.mxu0 %v9089
    %11185 = vmatprep.subr.bf16.mxu0 %v9096
    %11186 = vmatpush1.bf16.msra.mxu0 %v9095
    %11187 = vmatprep.subr.bf16.mxu0 %v9102
    %11188 = vmatpush1.bf16.msra.mxu0 %v9101
    %11189 = vmatprep.subr.bf16.mxu0 %v9108
    %11190 = vmatpush1.bf16.msra.mxu0 %v9107
    %11191 = vmatprep.subr.bf16.mxu0 %v9114
    %11192 = vmatpush1.bf16.msra.mxu0 %v9113
    %11193 = vmatprep.subr.bf16.mxu0 %v9120
    %11194 = vmatpush1.bf16.msra.mxu0 %v9119
    %11195 = vmatprep.subr.bf16.mxu0 %v9126
    %11196 = vmatpush1.bf16.msra.mxu0 %v9125
    %11197 = vmatprep.subr.bf16.mxu0 %v9132
    %11198 = vmatpush1.bf16.msra.mxu0 %v9131
    %11199 = vmatprep.subr.bf16.mxu0 %v9138
    %11200 = vmatpush1.bf16.msra.mxu0 %v9137
    %11201 = vmatprep.subr.bf16.mxu0 %v9144
    %11202 = vmatpush1.bf16.msra.mxu0 %v9143
    %11203 = vmatprep.subr.bf16.mxu0 %v9150
    %11204 = vmatpush1.bf16.msra.mxu0 %v9149
    %11205 = vmatprep.mubr.bf16.mxu0 %v5780
    %11206 = vmatmul.mubr.bf16.gmra.mrb[0].mxu0 %v5779
    %v11207 = vpop.f32.mrb[0].mxu0
    %v11208 = vadd.f32 %v11165, %v11207
    %v11209 = vpop.f32.mrb[0].mxu0
    %v11210 = vadd.f32 %v11167, %v11209
    %v11211 = vpop.f32.mrb[0].mxu0
    %v11212 = vadd.f32 %v11169, %v11211
    %v11213 = vpop.f32.mrb[0].mxu0
    %v11214 = vadd.f32 %v11171, %v11213
    %11215 = vdwg.mxu0
    %11216 = vmatprep.subr.bf16.mxu0 %v9156
    %11217 = vmatpush1.bf16.msra.mxu0 %v9155
    %11218 = vmatprep.subr.bf16.mxu0 %v9162
    %11219 = vmatpush1.bf16.msra.mxu0 %v9161
    %11220 = vmatprep.subr.bf16.mxu0 %v9168
    %11221 = vmatpush1.bf16.msra.mxu0 %v9167
    %11222 = vmatprep.subr.bf16.mxu0 %v9174
    %11223 = vmatpush1.bf16.msra.mxu0 %v9173
    %11224 = vmatprep.subr.bf16.mxu0 %v9180
    %11225 = vmatpush1.bf16.msra.mxu0 %v9179
    %11226 = vmatprep.subr.bf16.mxu0 %v9186
    %11227 = vmatpush1.bf16.msra.mxu0 %v9185
    %11228 = vmatprep.subr.bf16.mxu0 %v9192
    %11229 = vmatpush1.bf16.msra.mxu0 %v9191
    %11230 = vmatprep.subr.bf16.mxu0 %v9198
    %11231 = vmatpush1.bf16.msra.mxu0 %v9197
    %11232 = vmatprep.subr.bf16.mxu0 %v9204
    %11233 = vmatpush1.bf16.msra.mxu0 %v9203
    %11234 = vmatprep.subr.bf16.mxu0 %v9210
    %11235 = vmatpush1.bf16.msra.mxu0 %v9209
    %11236 = vmatprep.subr.bf16.mxu0 %v9216
    %11237 = vmatpush1.bf16.msra.mxu0 %v9215
    %11238 = vmatprep.subr.bf16.mxu0 %v9222
    %11239 = vmatpush1.bf16.msra.mxu0 %v9221
    %11240 = vmatprep.subr.bf16.mxu0 %v9228
    %11241 = vmatpush1.bf16.msra.mxu0 %v9227
    %11242 = vmatprep.subr.bf16.mxu0 %v9234
    %11243 = vmatpush1.bf16.msra.mxu0 %v9233
    %11244 = vmatprep.subr.bf16.mxu0 %v9240
    %11245 = vmatpush1.bf16.msra.mxu0 %v9239
    %11246 = vmatprep.subr.bf16.mxu0 %v9246
    %11247 = vmatpush1.bf16.msra.mxu0 %v9245
    %11248 = vmatprep.mubr.bf16.mxu0 %v5782
    %11249 = vmatmul.mubr.bf16.gmra.mrb[0].mxu0 %v5781
    %v11250 = vpop.f32.mrb[0].mxu0
    %v11251 = vadd.f32 %v11208, %v11250
    %v11252 = vpop.f32.mrb[0].mxu0
    %v11253 = vadd.f32 %v11210, %v11252
    %v11254 = vpop.f32.mrb[0].mxu0
    %v11255 = vadd.f32 %v11212, %v11254
    %v11256 = vpop.f32.mrb[0].mxu0
    %v11257 = vadd.f32 %v11214, %v11256
    %11258 = vdwg.mxu0
    %11259 = vmatprep.subr.bf16.mxu0 %v9252
    %11260 = vmatpush1.bf16.msra.mxu0 %v9251
    %11261 = vmatprep.subr.bf16.mxu0 %v9258
    %11262 = vmatpush1.bf16.msra.mxu0 %v9257
    %11263 = vmatprep.subr.bf16.mxu0 %v9264
    %11264 = vmatpush1.bf16.msra.mxu0 %v9263
    %11265 = vmatprep.subr.bf16.mxu0 %v9270
    %11266 = vmatpush1.bf16.msra.mxu0 %v9269
    %11267 = vmatprep.subr.bf16.mxu0 %v9276
    %11268 = vmatpush1.bf16.msra.mxu0 %v9275
    %11269 = vmatprep.subr.bf16.mxu0 %v9282
    %11270 = vmatpush1.bf16.msra.mxu0 %v9281
    %11271 = vmatprep.subr.bf16.mxu0 %v9288
    %11272 = vmatpush1.bf16.msra.mxu0 %v9287
    %11273 = vmatprep.subr.bf16.mxu0 %v9294
    %11274 = vmatpush1.bf16.msra.mxu0 %v9293
    %11275 = vmatprep.subr.bf16.mxu0 %v9300
    %11276 = vmatpush1.bf16.msra.mxu0 %v9299
    %11277 = vmatprep.subr.bf16.mxu0 %v9306
    %11278 = vmatpush1.bf16.msra.mxu0 %v9305
    %11279 = vmatprep.subr.bf16.mxu0 %v9312
    %11280 = vmatpush1.bf16.msra.mxu0 %v9311
    %11281 = vmatprep.subr.bf16.mxu0 %v9318
    %11282 = vmatpush1.bf16.msra.mxu0 %v9317
    %11283 = vmatprep.subr.bf16.mxu0 %v9324
    %11284 = vmatpush1.bf16.msra.mxu0 %v9323
    %11285 = vmatprep.subr.bf16.mxu0 %v9330
    %11286 = vmatpush1.bf16.msra.mxu0 %v9329
    %11287 = vmatprep.subr.bf16.mxu0 %v9336
    %11288 = vmatpush1.bf16.msra.mxu0 %v9335
    %11289 = vmatprep.subr.bf16.mxu0 %v9342
    %11290 = vmatpush1.bf16.msra.mxu0 %v9341
    %11291 = vmatprep.mubr.bf16.mxu0 %v5784
    %11292 = vmatmul.mubr.bf16.gmra.mrb[0].mxu0 %v5783
    %v11293 = vpop.f32.mrb[0].mxu0
    %v11294 = vadd.f32 %v11251, %v11293
    %v11295 = vpop.f32.mrb[0].mxu0
    %v11296 = vadd.f32 %v11253, %v11295
    %v11297 = vpop.f32.mrb[0].mxu0
    %v11298 = vadd.f32 %v11255, %v11297
    %v11299 = vpop.f32.mrb[0].mxu0
    %v11300 = vadd.f32 %v11257, %v11299
    %11301 = vdwg.mxu0
    %11302 = vmatprep.subr.bf16.mxu0 %v9348
    %11303 = vmatpush1.bf16.msra.mxu0 %v9347
    %11304 = vmatprep.subr.bf16.mxu0 %v9354
    %11305 = vmatpush1.bf16.msra.mxu0 %v9353
    %11306 = vmatprep.subr.bf16.mxu0 %v9360
    %11307 = vmatpush1.bf16.msra.mxu0 %v9359
    %11308 = vmatprep.subr.bf16.mxu0 %v9366
    %11309 = vmatpush1.bf16.msra.mxu0 %v9365
    %11310 = vmatprep.subr.bf16.mxu0 %v9372
    %11311 = vmatpush1.bf16.msra.mxu0 %v9371
    %11312 = vmatprep.subr.bf16.mxu0 %v9378
    %11313 = vmatpush1.bf16.msra.mxu0 %v9377
    %11314 = vmatprep.subr.bf16.mxu0 %v9384
    %11315 = vmatpush1.bf16.msra.mxu0 %v9383
    %11316 = vmatprep.subr.bf16.mxu0 %v9390
    %11317 = vmatpush1.bf16.msra.mxu0 %v9389
    %11318 = vmatprep.subr.bf16.mxu0 %v9396
    %11319 = vmatpush1.bf16.msra.mxu0 %v9395
    %11320 = vmatprep.subr.bf16.mxu0 %v9402
    %11321 = vmatpush1.bf16.msra.mxu0 %v9401
    %11322 = vmatprep.subr.bf16.mxu0 %v9408
    %11323 = vmatpush1.bf16.msra.mxu0 %v9407
    %11324 = vmatprep.subr.bf16.mxu0 %v9414
    %11325 = vmatpush1.bf16.msra.mxu0 %v9413
    %11326 = vmatprep.subr.bf16.mxu0 %v9420
    %11327 = vmatpush1.bf16.msra.mxu0 %v9419
    %11328 = vmatprep.subr.bf16.mxu0 %v9426
    %11329 = vmatpush1.bf16.msra.mxu0 %v9425
    %11330 = vmatprep.subr.bf16.mxu0 %v9432
    %11331 = vmatpush1.bf16.msra.mxu0 %v9431
    %11332 = vmatprep.subr.bf16.mxu0 %v9438
    %11333 = vmatpush1.bf16.msra.mxu0 %v9437
    %11334 = vmatprep.mubr.bf16.mxu0 %v5786
    %11335 = vmatmul.mubr.bf16.gmra.mrb[0].mxu0 %v5785
    %v11336 = vpop.f32.mrb[0].mxu0
    %v11337 = vadd.f32 %v11294, %v11336
    %v11338 = vpop.f32.mrb[0].mxu0
    %v11339 = vadd.f32 %v11296, %v11338
    %v11340 = vpop.f32.mrb[0].mxu0
    %v11341 = vadd.f32 %v11298, %v11340
    %v11342 = vpop.f32.mrb[0].mxu0
    %v11343 = vadd.f32 %v11300, %v11342
    %11344 = vdwg.mxu0
    %11345 = vmatprep.subr.bf16.mxu0 %v9444
    %11346 = vmatpush1.bf16.msra.mxu0 %v9443
    %11347 = vmatprep.subr.bf16.mxu0 %v9450
    %11348 = vmatpush1.bf16.msra.mxu0 %v9449
    %11349 = vmatprep.subr.bf16.mxu0 %v9456
    %11350 = vmatpush1.bf16.msra.mxu0 %v9455
    %11351 = vmatprep.subr.bf16.mxu0 %v9462
    %11352 = vmatpush1.bf16.msra.mxu0 %v9461
    %11353 = vmatprep.subr.bf16.mxu0 %v9468
    %11354 = vmatpush1.bf16.msra.mxu0 %v9467
    %11355 = vmatprep.subr.bf16.mxu0 %v9474
    %11356 = vmatpush1.bf16.msra.mxu0 %v9473
    %11357 = vmatprep.subr.bf16.mxu0 %v9480
    %11358 = vmatpush1.bf16.msra.mxu0 %v9479
    %11359 = vmatprep.subr.bf16.mxu0 %v9486
    %11360 = vmatpush1.bf16.msra.mxu0 %v9485
    %11361 = vmatprep.subr.bf16.mxu0 %v9492
    %11362 = vmatpush1.bf16.msra.mxu0 %v9491
    %11363 = vmatprep.subr.bf16.mxu0 %v9498
    %11364 = vmatpush1.bf16.msra.mxu0 %v9497
    %11365 = vmatprep.subr.bf16.mxu0 %v9504
    %11366 = vmatpush1.bf16.msra.mxu0 %v9503
    %11367 = vmatprep.subr.bf16.mxu0 %v9510
    %11368 = vmatpush1.bf16.msra.mxu0 %v9509
    %11369 = vmatprep.subr.bf16.mxu0 %v9516
    %11370 = vmatpush1.bf16.msra.mxu0 %v9515
    %11371 = vmatprep.subr.bf16.mxu0 %v9522
    %11372 = vmatpush1.bf16.msra.mxu0 %v9521
    %11373 = vmatprep.subr.bf16.mxu0 %v9528
    %11374 = vmatpush1.bf16.msra.mxu0 %v9527
    %11375 = vmatprep.subr.bf16.mxu0 %v9534
    %11376 = vmatpush1.bf16.msra.mxu0 %v9533
    %11377 = vmatprep.mubr.bf16.mxu0 %v5788
    %11378 = vmatmul.mubr.bf16.gmra.mrb[0].mxu0 %v5787
    %v11379 = vpop.f32.mrb[0].mxu0
    %v11380 = vadd.f32 %v11337, %v11379
    %v11381 = vpop.f32.mrb[0].mxu0
    %v11382 = vadd.f32 %v11339, %v11381
    %v11383 = vpop.f32.mrb[0].mxu0
    %v11384 = vadd.f32 %v11341, %v11383
    %v11385 = vpop.f32.mrb[0].mxu0
    %v11386 = vadd.f32 %v11343, %v11385
    %11387 = vdwg.mxu0
    %11388 = vmatprep.subr.bf16.mxu0 %v9540
    %11389 = vmatpush1.bf16.msra.mxu0 %v9539
    %11390 = vmatprep.subr.bf16.mxu0 %v9546
    %11391 = vmatpush1.bf16.msra.mxu0 %v9545
    %11392 = vmatprep.subr.bf16.mxu0 %v9552
    %11393 = vmatpush1.bf16.msra.mxu0 %v9551
    %11394 = vmatprep.subr.bf16.mxu0 %v9558
    %11395 = vmatpush1.bf16.msra.mxu0 %v9557
    %11396 = vmatprep.subr.bf16.mxu0 %v9564
    %11397 = vmatpush1.bf16.msra.mxu0 %v9563
    %11398 = vmatprep.subr.bf16.mxu0 %v9570
    %11399 = vmatpush1.bf16.msra.mxu0 %v9569
    %11400 = vmatprep.subr.bf16.mxu0 %v9576
    %11401 = vmatpush1.bf16.msra.mxu0 %v9575
    %11402 = vmatprep.subr.bf16.mxu0 %v9582
    %11403 = vmatpush1.bf16.msra.mxu0 %v9581
    %11404 = vmatprep.subr.bf16.mxu0 %v9588
    %11405 = vmatpush1.bf16.msra.mxu0 %v9587
    %11406 = vmatprep.subr.bf16.mxu0 %v9594
    %11407 = vmatpush1.bf16.msra.mxu0 %v9593
    %11408 = vmatprep.subr.bf16.mxu0 %v9600
    %11409 = vmatpush1.bf16.msra.mxu0 %v9599
    %11410 = vmatprep.subr.bf16.mxu0 %v9606
    %11411 = vmatpush1.bf16.msra.mxu0 %v9605
    %11412 = vmatprep.subr.bf16.mxu0 %v9612
    %11413 = vmatpush1.bf16.msra.mxu0 %v9611
    %11414 = vmatprep.subr.bf16.mxu0 %v9618
    %11415 = vmatpush1.bf16.msra.mxu0 %v9617
    %11416 = vmatprep.subr.bf16.mxu0 %v9624
    %11417 = vmatpush1.bf16.msra.mxu0 %v9623
    %11418 = vmatprep.subr.bf16.mxu0 %v9630
    %11419 = vmatpush1.bf16.msra.mxu0 %v9629
    %11420 = vmatprep.mubr.bf16.mxu0 %v5790
    %11421 = vmatmul.mubr.bf16.gmra.mrb[0].mxu0 %v5789
    %v11422 = vpop.f32.mrb[0].mxu0
    %v11423 = vadd.f32 %v11380, %v11422
    %v11424 = vpop.f32.mrb[0].mxu0
    %v11425 = vadd.f32 %v11382, %v11424
    %v11426 = vpop.f32.mrb[0].mxu0
    %v11427 = vadd.f32 %v11384, %v11426
    %v11428 = vpop.f32.mrb[0].mxu0
    %v11429 = vadd.f32 %v11386, %v11428
    %11430 = vdwg.mxu0
    %v11431 = vadd.f32 %v10735, %v10737
    %v11432 = vadd.f32 %v11431, %v11079
    %v11433 = vadd.f32 %v11432, %v11081
    %v11434 = vadd.f32 %v11433, %v11423
    %v11435 = vadd.f32 %v11434, %v11425
    %11436 = vadd.xlane.f32.xlu0 %v11435
    %v11437 = vpop.xlane.xlu0 %11436
    %v11438 = vadd.f32 %v10739, %v10741
    %v11439 = vadd.f32 %v11438, %v11083
    %v11440 = vadd.f32 %v11439, %v11085
    %v11441 = vadd.f32 %v11440, %v11427
    %v11442 = vadd.f32 %v11441, %v11429
    %11443 = vadd.xlane.f32.xlu0 %v11442
    %v11444 = vpop.xlane.xlu0 %11443
    %v11445 = vrcp.pop 768.0
    %v11446 = vmul.f32 %v11437, %v11445
    %v11447 = vmul.f32 %v11444, %v11445
    %v11448 = vsub.f32 %v10735, %v11446
    %v11449 = vsub.f32 %v10737, %v11446
    %v11450 = vsub.f32 %v11079, %v11446
    %v11451 = vsub.f32 %v11081, %v11446
    %v11452 = vsub.f32 %v11423, %v11446
    %v11453 = vsub.f32 %v11425, %v11446
    %v11454 = vsub.f32 %v10739, %v11447
    %v11455 = vsub.f32 %v10741, %v11447
    %v11456 = vsub.f32 %v11083, %v11447
    %v11457 = vsub.f32 %v11085, %v11447
    %v11458 = vsub.f32 %v11427, %v11447
    %v11459 = vsub.f32 %v11429, %v11447
    %v11460 = vmul.f32 %v11448, %v11448
    %v11461 = vmul.f32 %v11449, %v11449
    %v11462 = vmul.f32 %v11450, %v11450
    %v11463 = vmul.f32 %v11451, %v11451
    %v11464 = vmul.f32 %v11452, %v11452
    %v11465 = vmul.f32 %v11453, %v11453
    %v11466 = vmul.f32 %v11454, %v11454
    %v11467 = vmul.f32 %v11455, %v11455
    %v11468 = vmul.f32 %v11456, %v11456
    %v11469 = vmul.f32 %v11457, %v11457
    %v11470 = vmul.f32 %v11458, %v11458
    %v11471 = vmul.f32 %v11459, %v11459
    %v11472 = vadd.f32 %v11460, %v11461
    %v11473 = vadd.f32 %v11472, %v11462
    %v11474 = vadd.f32 %v11473, %v11463
    %v11475 = vadd.f32 %v11474, %v11464
    %v11476 = vadd.f32 %v11475, %v11465
    %11477 = vadd.xlane.f32.xlu0 %v11476
    %v11478 = vpop.xlane.xlu0 %11477
    %v11479 = vadd.f32 %v11466, %v11467
    %v11480 = vadd.f32 %v11479, %v11468
    %v11481 = vadd.f32 %v11480, %v11469
    %v11482 = vadd.f32 %v11481, %v11470
    %v11483 = vadd.f32 %v11482, %v11471
    %11484 = vadd.xlane.f32.xlu0 %v11483
    %v11485 = vpop.xlane.xlu0 %11484
    %v11486 = vmul.f32 %v11478, %v11445
    %v11487 = vmul.f32 %v11485, %v11445
    %v11488 = vadd.f32 %v11486, 1e-05
    %v11489 = vadd.f32 %v11487, 1e-05
    %v11490 = vrsqrt.pop %v11488
    %v11491 = vrsqrt.pop %v11489
    %v11492 = vmul.f32 %v11448, %v11490
    %v11493 = vmul.f32 %v11449, %v11490
    %v11494 = vmul.f32 %v11450, %v11490
    %v11495 = vmul.f32 %v11451, %v11490
    %v11496 = vmul.f32 %v11452, %v11490
    %v11497 = vmul.f32 %v11453, %v11490
    %v11498 = vmul.f32 %v11454, %v11491
    %v11499 = vmul.f32 %v11455, %v11491
    %v11500 = vmul.f32 %v11456, %v11491
    %v11501 = vmul.f32 %v11457, %v11491
    %v11502 = vmul.f32 %v11458, %v11491
    %v11503 = vmul.f32 %v11459, %v11491
    %v11504 = vld [vmem:[#allocation8] sm:$0x3f]
    %v11506 = vlaneseq
    %v11507 = vshrl.u32 %v11506, 7
    %v11508 = vsub.s32 0, %v11507
    %v11509 = vrot.slane %v11504, %v11508
    %v11510 = vlaneseq
    %v11511 = vshrl.u32 %v11510, 7
    %v11512 = vsub.s32 1, %v11511
    %v11513 = vrot.slane %v11504, %v11512
    %v11514 = vlaneseq
    %v11515 = vshrl.u32 %v11514, 7
    %v11516 = vsub.s32 2, %v11515
    %v11517 = vrot.slane %v11504, %v11516
    %v11518 = vlaneseq
    %v11519 = vshrl.u32 %v11518, 7
    %v11520 = vsub.s32 3, %v11519
    %v11521 = vrot.slane %v11504, %v11520
    %v11522 = vlaneseq
    %v11523 = vshrl.u32 %v11522, 7
    %v11524 = vsub.s32 4, %v11523
    %v11525 = vrot.slane %v11504, %v11524
    %v11526 = vlaneseq
    %v11527 = vshrl.u32 %v11526, 7
    %v11528 = vsub.s32 5, %v11527
    %v11529 = vrot.slane %v11504, %v11528
    %v11536 = vmul.f32 %v11492, %v11509
    %v11537 = vmul.f32 %v11493, %v11513
    %v11538 = vmul.f32 %v11494, %v11517
    %v11539 = vmul.f32 %v11495, %v11521
    %v11540 = vmul.f32 %v11496, %v11525
    %v11541 = vmul.f32 %v11497, %v11529
    %v11542 = vmul.f32 %v11498, %v11509
    %v11543 = vmul.f32 %v11499, %v11513
    %v11544 = vmul.f32 %v11500, %v11517
    %v11545 = vmul.f32 %v11501, %v11521
    %v11546 = vmul.f32 %v11502, %v11525
    %v11547 = vmul.f32 %v11503, %v11529
    %v11548 = vld [vmem:[#allocation10] sm:$0x3f]
    %v11550 = vlaneseq
    %v11551 = vshrl.u32 %v11550, 7
    %v11552 = vsub.s32 0, %v11551
    %v11553 = vrot.slane %v11548, %v11552
    %v11554 = vlaneseq
    %v11555 = vshrl.u32 %v11554, 7
    %v11556 = vsub.s32 1, %v11555
    %v11557 = vrot.slane %v11548, %v11556
    %v11558 = vlaneseq
    %v11559 = vshrl.u32 %v11558, 7
    %v11560 = vsub.s32 2, %v11559
    %v11561 = vrot.slane %v11548, %v11560
    %v11562 = vlaneseq
    %v11563 = vshrl.u32 %v11562, 7
    %v11564 = vsub.s32 3, %v11563
    %v11565 = vrot.slane %v11548, %v11564
    %v11566 = vlaneseq
    %v11567 = vshrl.u32 %v11566, 7
    %v11568 = vsub.s32 4, %v11567
    %v11569 = vrot.slane %v11548, %v11568
    %v11570 = vlaneseq
    %v11571 = vshrl.u32 %v11570, 7
    %v11572 = vsub.s32 5, %v11571
    %v11573 = vrot.slane %v11548, %v11572
    %v11580 = vadd.f32 %v11536, %v11553
    %v11581 = vadd.f32 %v11537, %v11557
    %v11582 = vadd.f32 %v11538, %v11561
    %v11583 = vadd.f32 %v11539, %v11565
    %v11584 = vadd.f32 %v11540, %v11569
    %v11585 = vadd.f32 %v11541, %v11573
    %v11586 = vadd.f32 %v11542, %v11553
    %v11587 = vadd.f32 %v11543, %v11557
    %v11588 = vadd.f32 %v11544, %v11561
    %v11589 = vadd.f32 %v11545, %v11565
    %v11590 = vadd.f32 %v11546, %v11569
    %v11591 = vadd.f32 %v11547, %v11573
    %11592 = vst [vmem:[#allocation11] sm:$0xff] %v11580
    %11593 = vst [vmem:[#allocation11 + $0x8] sm:$0xff] %v11581
    %11594 = vst [vmem:[#allocation11 + $0x10] sm:$0xff] %v11582
    %11595 = vst [vmem:[#allocation11 + $0x18] sm:$0xff] %v11583
    %11596 = vst [vmem:[#allocation11 + $0x20] sm:$0xff] %v11584
    %11597 = vst [vmem:[#allocation11 + $0x28] sm:$0xff] %v11585
    %11598 = vst [vmem:[#allocation11 + $0x30] sm:$0xff] %v11586
    %11599 = vst [vmem:[#allocation11 + $0x38] sm:$0xff] %v11587
    %11600 = vst [vmem:[#allocation11 + $0x40] sm:$0xff] %v11588
    %11601 = vst [vmem:[#allocation11 + $0x48] sm:$0xff] %v11589
    %11602 = vst [vmem:[#allocation11 + $0x50] sm:$0xff] %v11590
    %11603 = vst [vmem:[#allocation11 + $0x58] sm:$0xff] %v11591
    // Predicated region
    $region42: #{tpu_custom_call.1} parent=1 // pred_check
      _
    $region43: #{tpu_custom_call.1} parent=1 // pred_check_branch
      %11605 = sbr.rel (0) target = $region45
    $region44: #{tpu_custom_call.1} parent=1 // pred_region
      %s11607 = ssub.s32 1536, 1536
      %11608 = vsyncadd [#allocation4], %s11607
      %s11609 = sshll.u32 [#allocation11], 4
      %s11610 = int_to_ptr.vmem [resolvable:$true] %s11609
      %11615 = dma.vmem_to_hbm [thread:$0]  %s11610, 1536, %s5, [#allocation4], 768, 768, 48
    $region45: #{tpu_custom_call.1} parent=1 // pred_fallthru
      _
    // Predicated region
    $region46: #{tpu_custom_call.1} parent=1 // pred_check
      _
    $region47: #{tpu_custom_call.1} parent=1 // pred_check_branch
      %11617 = sbr.rel (0) target = $region49
    $region48: #{tpu_custom_call.1} parent=1 // pred_region
      %11618 = dma.done [#allocation4], 1536
    $region49: #{tpu_custom_call.1} parent=1 // pred_fallthru
      _
    %11619 = vsyncpa [#allocation3], 1
    %11620 = vsyncpa [#allocation6], 1
    %11621 = vsyncpa [#allocation9], 1
    %11622 = vsyncpa [#allocation4], 1

</llo_original>
